<compile_context>
chip_gen: v6e
topology: v6e:2x2x1
jax: 0.10.0
libtpu: 0.0.40
codegen_flags: <defaults>
</compile_context>

<pallas_src>
import functools

import jax
import jax.numpy as jnp
from jax.experimental import pallas as pl
from jax.experimental.pallas import tpu as pltpu

VMEM = pltpu.MemorySpace.VMEM


def _vmem_specs(k):
    return [pl.BlockSpec(memory_space=VMEM)] * k


# ----------------------------------------------------------------------------
# 1) fused GRU: whole recurrence in ONE kernel (input proj + hidden proj + gates)
# ----------------------------------------------------------------------------
def _gru_kernel(x_ref, wih_ref, bih_ref, wh_ref, bh_ref, o_ref, *, unit):
    u = unit
    seq_len = x_ref.shape[0]
    nb = x_ref.shape[1]
    h = jnp.zeros((nb, u), jnp.float32)
    # static unroll: seq_len == node count (small); full visibility for the scheduler
    for s in range(seq_len):
        xg = jnp.dot(x_ref[s], wih_ref[...], preferred_element_type=jnp.float32) + bih_ref[...]
        hg = jnp.dot(h, wh_ref[...], preferred_element_type=jnp.float32) + bh_ref[...]
        r = jax.nn.sigmoid(xg[:, :u] + hg[:, :u])
        z = jax.nn.sigmoid(xg[:, u:2 * u] + hg[:, u:2 * u])
        ng = jnp.tanh(xg[:, 2 * u:] + r * hg[:, 2 * u:])
        h = (1.0 - z) * ng + z * h
        o_ref[s] = h


def pallas_gru(x_seq, gru_p, unit):
    """torch-semantics single-layer GRU (gate order r,z,n), h0=0.  x_seq:(S,B,T) -> (S,B,U)."""
    s, b, _ = x_seq.shape
    kernel = functools.partial(_gru_kernel, unit=unit)
    return pl.pallas_call(
        kernel,
        out_shape=jax.ShapeDtypeStruct((s, b, unit), jnp.float32),
        in_specs=_vmem_specs(5),
        out_specs=pl.BlockSpec(memory_space=VMEM),
    )(x_seq, gru_p["wih_t"], gru_p["bih"].reshape(1, -1),
      gru_p["wh"], gru_p["bh"].reshape(1, -1))


# ----------------------------------------------------------------------------
# 2) fused self-graph-attention (all batches, batch-mean folded in)
# ----------------------------------------------------------------------------
def _attention_kernel(xp_ref, x_ref, wk_ref, wq_ref, o_ref, *, alpha, nb):
    acc = None
    for bi in range(nb):
        # key / query via VPU broadcast-mul + reductions (avoids width-1 MXU matmuls)
        key = jnp.sum(xp_ref[bi] * wk_ref[...], axis=-1, keepdims=True)   # (U, 1)
        qrow = jnp.sum(x_ref[bi] * wq_ref[...], axis=0, keepdims=True)    # (1, U)
        data = key + qrow                                                 # (U, U)
        data = jnp.where(data > 0, data, alpha * data)                    # LeakyReLU(alpha)
        data = data - jnp.max(data, axis=-1, keepdims=True)
        e = jnp.exp(data)
        att = e / jnp.sum(e, axis=-1, keepdims=True)                      # softmax(dim=2)
        acc = att if acc is None else acc + att
    # TODO(synk): nn.Dropout(p=0.5) on attention uses eval (identity) semantics here.
    o_ref[...] = acc * (1.0 / nb)


def pallas_attention(att_in, inp, wk, wq, alpha):
    """att_in = input.permute(0,2,1):(B,U,N); inp:(B,N,U). Returns mean-over-batch att (N,N)."""
    b, u, n = att_in.shape
    kernel = functools.partial(_attention_kernel, alpha=alpha, nb=b)
    return pl.pallas_call(
        kernel,
        out_shape=jax.ShapeDtypeStruct((u, u), jnp.float32),
        in_specs=_vmem_specs(4),
        out_specs=pl.BlockSpec(memory_space=VMEM),
    )(att_in, inp, wk.reshape(1, n), wq.reshape(n, 1))


# ----------------------------------------------------------------------------
# 3) fused StockBlockLayer: gfted + fft4 + GLU chain + irfft4 + igfted + heads
# ----------------------------------------------------------------------------
def _stock_block_kernel(x_ref, l_ref,
                        g0rw, g0rb, g0iw, g0ib,
                        g1rw, g1rb, g1iw, g1ib,
                        g2rw, g2rb, g2iw, g2ib,
                        wflat_ref, fw_ref, fb_ref, frw_ref, frb_ref,
                        *rest, nb, n, t, multi, has_backcast):
    if has_backcast:
        bscw_ref, bscb_ref, bw_ref, bb_ref, fore_ref, back_ref = rest
    else:
        (fore_ref,) = rest
    tm = t * multi

    def rowcat(parts):
        return parts[0] if len(parts) == 1 else jnp.concatenate(parts, axis=0)

    # -- gfted = mul_L @ x, per Chebyshev order, batches stacked b-major on rows --
    xb = [x_ref[bi, 0] for bi in range(nb)]                               # each (N, T)
    g = [rowcat([jnp.dot(l_ref[k], xb[bi], preferred_element_type=jnp.float32)
                 for bi in range(nb)]) for k in range(4)]                 # each (B*N, T)
    g0, g1, g2, g3 = g

    # -- closed-form length-4 FFT along the order axis (k-major on the lane axis) --
    r0 = g0 + g1 + g2 + g3
    r1 = g0 - g2
    r2 = g0 - g1 + g2 - g3
    i1 = g3 - g1
    zero = jnp.zeros_like(g0)
    real = jnp.concatenate([r0, r1, r2, r1], axis=1)                      # (B*N, 4T)
    img = jnp.concatenate([zero, i1, zero, -i1], axis=1)                  # (B*N, 4T)

    # -- 3-stage GLU chain; [W_left|W_right] fused -> single lane-dense matmul per GLU --
    def glu(v, w_ref, b_ref):
        y = jnp.dot(v, w_ref[...], preferred_element_type=jnp.float32) + b_ref[...]
        half = y.shape[-1] // 2
        return y[:, :half] * jax.nn.sigmoid(y[:, half:])

    real = glu(real, g0rw, g0rb)
    img = glu(img, g0iw, g0ib)
    real = glu(real, g1rw, g1rb)
    img = glu(img, g1iw, g1ib)
    real = glu(real, g2rw, g2rb)
    img = glu(img, g2iw, g2ib)                                            # each (B*N, 4*Tm)

    # -- irfft(n=4) along the order axis (bins 0,1,2; imag of DC/Nyquist ignored) --
    y0r = real[:, 0:tm]
    y1r = real[:, tm:2 * tm]
    y2r = real[:, 2 * tm:3 * tm]
    y1i = img[:, tm:2 * tm]
    if0 = (y0r + 2.0 * y1r + y2r) * 0.25
    if1 = (y0r - 2.0 * y1i - y2r) * 0.25
    if2 = (y0r - 2.0 * y1r + y2r) * 0.25
    if3 = (y0r + 2.0 * y1i - y2r) * 0.25
    iff = jnp.concatenate([if0, if1, if2, if3], axis=1)                   # (B*N, 4*Tm)

    # -- igfted: the sum over the 4 orders is folded into a single (4*Tm) contraction --
    igfted = jnp.dot(iff, wflat_ref[...], preferred_element_type=jnp.float32)   # (B*N, Tm)

    # -- forecast head --
    fsrc = jax.nn.sigmoid(
        jnp.dot(igfted, fw_ref[...], preferred_element_type=jnp.float32) + fb_ref[...])
    fore = jnp.dot(fsrc, frw_ref[...], preferred_element_type=jnp.float32) + frb_ref[...]
    for bi in range(nb):
        fore_ref[bi] = fore[bi * n:(bi + 1) * n, :]

    # -- backcast head (first stack only) --
    if has_backcast:
        xflat = rowcat(xb)                                                # (B*N, T)
        bshort = jnp.dot(xflat, bscw_ref[...],
                         preferred_element_type=jnp.float32) + bscb_ref[...]
        bcast = jnp.dot(igfted, bw_ref[...],
                        preferred_element_type=jnp.float32) + bb_ref[...]
        back = jax.nn.sigmoid(bcast - bshort)
        for bi in range(nb):
            back_ref[bi, 0] = back[bi * n:(bi + 1) * n, :]


def stock_block_forward(x_in, mul_l, blk, stack_i, t, multi):
    """StockBlockLayer.forward as ONE pallas_call.  x_in:(B,1,N,T), mul_l:(4,N,N)."""
    b, _, n, _ = x_in.shape
    has_backcast = (stack_i == 0)
    kernel = functools.partial(_stock_block_kernel, nb=b, n=n, t=t, multi=multi,
                               has_backcast=has_backcast)
    args = [x_in, mul_l]
    for g in blk["glus"]:                       # order: (real, img) per GLU stage, as in torch
        args += [g["w"], g["b"].reshape(1, -1)]
    args += [blk["weight_flat"],
             blk["forecast_w"], blk["forecast_b"].reshape(1, -1),
             blk["forecast_result_w"], blk["forecast_result_b"].reshape(1, -1)]
    if has_backcast:
        args += [blk["bsc_w"], blk["bsc_b"].reshape(1, -1),
                 blk["backcast_w"], blk["backcast_b"].reshape(1, -1)]
        out_shape = (jax.ShapeDtypeStruct((b, n, t), jnp.float32),
                     jax.ShapeDtypeStruct((b, 1, n, t), jnp.float32))
        out_specs = (pl.BlockSpec(memory_space=VMEM), pl.BlockSpec(memory_space=VMEM))
    else:
        out_shape = jax.ShapeDtypeStruct((b, n, t), jnp.float32)
        out_specs = pl.BlockSpec(memory_space=VMEM)
    res = pl.pallas_call(
        kernel,
        out_shape=out_shape,
        in_specs=_vmem_specs(len(args)),
        out_specs=out_specs,
    )(*args)
    if has_backcast:
        return res[0], res[1]
    return res, None


# ----------------------------------------------------------------------------
# 4) fused 2-layer fc head
# ----------------------------------------------------------------------------
def _fc_kernel(x_ref, w1_ref, b1_ref, w2_ref, b2_ref, o_ref, *, slope):
    h = jnp.dot(x_ref[...], w1_ref[...], preferred_element_type=jnp.float32) + b1_ref[...]
    h = jnp.where(h > 0, h, slope * h)                 # nn.LeakyReLU() default slope 0.01
    o_ref[...] = jnp.dot(h, w2_ref[...], preferred_element_type=jnp.float32) + b2_ref[...]


def pallas_fc(x, w1, b1, w2, b2, slope=0.01):
    m = x.shape[0]
    out_dim = w2.shape[1]
    kernel = functools.partial(_fc_kernel, slope=slope)
    return pl.pallas_call(
        kernel,
        out_shape=jax.ShapeDtypeStruct((m, out_dim), jnp.float32),
        in_specs=_vmem_specs(5),
        out_specs=pl.BlockSpec(memory_space=VMEM),
    )(x, w1, b1.reshape(1, -1), w2, b2.reshape(1, -1))


# ----------------------------------------------------------------------------
# Model forward (plain-JAX orchestration around 5 Pallas launches)
# ----------------------------------------------------------------------------
def model_forward(x, params, *, time_step, unit, multi, stack_cnt, horizon, leaky_rate=0.2):
    b, t, n = x.shape
    assert t == time_step and n == unit

    # ---- latent_correlation_layer ----
    x_seq = jnp.transpose(x, (2, 0, 1))                                   # (N, B, T)
    gru_out = pallas_gru(x_seq, params["gru"], unit)                      # (N, B, U)
    inp = jnp.transpose(gru_out, (1, 0, 2))                               # (B, N, U)
    att_in = jnp.transpose(inp, (0, 2, 1))                                # (B, U, N)
    attention = pallas_attention(att_in, inp, params["weight_key"],
                                 params["weight_query"], leaky_rate)      # (N, N) batch-mean
    degree = jnp.sum(attention, axis=1)
    attention = 0.5 * (attention + attention.T)
    degree_l = jnp.diag(degree)
    d_hat = jnp.diag(1.0 / (jnp.sqrt(degree) + 1e-7))
    laplacian = d_hat @ ((degree_l - attention) @ d_hat)
    l0 = jnp.zeros((n, n), jnp.float32)                                   # reference quirk: zeros
    l1 = laplacian
    l2 = 2.0 * laplacian @ l1 - l0
    l3 = 2.0 * laplacian @ l2 - l1
    mul_l = jnp.stack([l0, l1, l2, l3], axis=0)                           # (4, N, N)

    # ---- stacked stock blocks (one fused kernel each) ----
    cur = jnp.transpose(x[:, None, :, :], (0, 1, 3, 2))                   # (B, 1, N, T)
    results = []
    for s in range(stack_cnt):
        f, cur = stock_block_forward(cur, mul_l, params["blocks"][s], s, time_step, multi)
        results.append(f)
    forecast = results[0] + results[1]                                    # (B, N, T)
    forecast = jnp.transpose(forecast, (0, 2, 1))                         # (B, T, N)

    # ---- fused fc head ----
    out = pallas_fc(forecast.reshape(b * t, n),
                    params["fc1_w"], params["fc1_b"],
                    params["fc2_w"], params["fc2_b"]).reshape(b, t, horizon)
    return out, attention


# ----------------------------------------------------------------------------
# Deterministic parameter init (fused layouts; shapes follow the module's __init__)
# ----------------------------------------------------------------------------
def init_params(key, unit, time_step, multi, stack_cnt, horizon):
    t, u = time_step, unit
    tm = t * multi
    dout = t * 4 * multi                # GLU output width (== 4 * Tm)
    keys = iter(jax.random.split(key, 256))

    def nrm(shape, scale):
        return scale * jax.random.normal(next(keys), shape, jnp.float32)

    params = {
        "weight_key": nrm((u, 1), 0.3),
        "weight_query": nrm((u, 1), 0.3),
        "gru": {
            # W_ih.T (T,3U) and [W_hr.T | W_hz.T | W_hn.T] (U,3U); gate order (r,z,n) like torch
            "wih_t": nrm((t, 3 * u), 0.2),
            "bih": nrm((3 * u,), 0.1),
            "wh": nrm((u, 3 * u), 0.2),
            "bh": nrm((3 * u,), 0.1),
        },
        "fc1_w": nrm((u, u), 0.2), "fc1_b": nrm((u,), 0.05),
        "fc2_w": nrm((u, horizon), 0.2), "fc2_b": nrm((horizon,), 0.05),
        "blocks": [],
    }
    glu_din = [t * 4, dout, dout]
    for s in range(stack_cnt):
        blk = {
            # nn.Parameter (1,4,1,Tm,Tm) flattened k-major to (4*Tm, Tm): k-sum == contraction
            "weight_flat": nrm((4 * tm, tm), 0.1),
            "forecast_w": nrm((tm, tm), 0.15), "forecast_b": nrm((tm,), 0.05),
            "forecast_result_w": nrm((tm, t), 0.15), "forecast_result_b": nrm((t,), 0.05),
            "glus": [],
        }
        if s == 0:
            blk["bsc_w"] = nrm((t, t), 0.2)
            blk["bsc_b"] = nrm((t,), 0.05)
            blk["backcast_w"] = nrm((tm, t), 0.15)
            blk["backcast_b"] = nrm((t,), 0.05)
        for i in range(3):
            din = glu_din[i]
            for _ in range(2):          # GLUs[2i] -> real stream, GLUs[2i+1] -> imag stream
                # fused [W_left | W_right] (din, 2*dout) and [b_left | b_right]
                blk["glus"].append({"w": nrm((din, 2 * dout), 0.15),
                                    "b": nrm((2 * dout,), 0.05)})
        params["blocks"].append(blk)
    return params


# ----------------------------------------------------------------------------
if __name__ == "__main__":
    B, T, N = 2, 8, 16          # batch, time_step, node_cnt (= unit)
    MULTI = 2
    STACK_CNT = 2               # Model.forward does result[0] + result[1]
    HORIZON = 1

    root = jax.random.PRNGKey(0)
    kx, kp = jax.random.split(root)
    x = jax.random.normal(kx, (B, T, N), jnp.float32)
    params = init_params(kp, N, T, MULTI, STACK_CNT, HORIZON)

    fwd = jax.jit(functools.partial(model_forward, time_step=T, unit=N, multi=MULTI,
                                    stack_cnt=STACK_CNT, horizon=HORIZON, leaky_rate=0.2))
    forecast, attention = fwd(x, params)
    jax.block_until_ready((forecast, attention))

    assert forecast.shape == (B, T, HORIZON), forecast.shape
    assert attention.shape == (N, N), attention.shape
    assert jnp.all(jnp.isfinite(forecast)) and jnp.all(jnp.isfinite(attention))
    print("KERNEL_OK")
</pallas_src>

<mosaic_0001>
module attributes {stable_mosaic.version = 11 : i64} {
  func.func @_gru_kernel(%arg0: memref<16x2x8xf32, #tpu.memory_space<vmem>>, %arg1: memref<8x48xf32, #tpu.memory_space<vmem>>, %arg2: memref<1x48xf32, #tpu.memory_space<vmem>>, %arg3: memref<16x48xf32, #tpu.memory_space<vmem>>, %arg4: memref<1x48xf32, #tpu.memory_space<vmem>>, %arg5: memref<16x2x16xf32, #tpu.memory_space<vmem>>) attributes {dimension_semantics = [], scalar_prefetch = 0 : i64, scratch_operands = 0 : i64, tpu.core_type = #tpu.core_type<tc>} {
    %cst = arith.constant 0.000000e+00 : f32
    %0 = vector.broadcast %cst : f32 to vector<2x16xf32>
    %c0 = arith.constant 0 : index
    %c0_0 = arith.constant 0 : index
    %c0_1 = arith.constant 0 : index
    %1 = vector.load %arg0[%c0, %c0_0, %c0_1] : memref<16x2x8xf32, #tpu.memory_space<vmem>>, vector<1x2x8xf32>
    %2 = vector.shape_cast %1 : vector<1x2x8xf32> to vector<2x8xf32>
    %c0_2 = arith.constant 0 : index
    %c0_3 = arith.constant 0 : index
    %3 = vector.load %arg1[%c0_2, %c0_3] : memref<8x48xf32, #tpu.memory_space<vmem>>, vector<8x48xf32>
    %cst_4 = arith.constant dense<0.000000e+00> : vector<2x48xf32>
    %4 = tpu.matmul %2, %3, %cst_4 {dimension_numbers = #tpu.dot_dimension_numbers<[1], [0], [0], [1], [0, 0, 1, 1], [], []>} : vector<2x8xf32>, vector<8x48xf32>, vector<2x48xf32> -> vector<2x48xf32>
    %c0_5 = arith.constant 0 : index
    %c0_6 = arith.constant 0 : index
    %5 = vector.load %arg2[%c0_5, %c0_6] : memref<1x48xf32, #tpu.memory_space<vmem>>, vector<1x48xf32>
    %6 = vector.broadcast %5 : vector<1x48xf32> to vector<2x48xf32>
    %7 = arith.addf %4, %6 : vector<2x48xf32>
    %c0_7 = arith.constant 0 : index
    %c0_8 = arith.constant 0 : index
    %8 = vector.load %arg3[%c0_7, %c0_8] : memref<16x48xf32, #tpu.memory_space<vmem>>, vector<16x48xf32>
    %cst_9 = arith.constant dense<0.000000e+00> : vector<2x48xf32>
    %9 = tpu.matmul %0, %8, %cst_9 {dimension_numbers = #tpu.dot_dimension_numbers<[1], [0], [0], [1], [0, 0, 1, 1], [], []>} : vector<2x16xf32>, vector<16x48xf32>, vector<2x48xf32> -> vector<2x48xf32>
    %c0_10 = arith.constant 0 : index
    %c0_11 = arith.constant 0 : index
    %10 = vector.load %arg4[%c0_10, %c0_11] : memref<1x48xf32, #tpu.memory_space<vmem>>, vector<1x48xf32>
    %11 = vector.broadcast %10 : vector<1x48xf32> to vector<2x48xf32>
    %12 = arith.addf %9, %11 : vector<2x48xf32>
    %13 = vector.extract_strided_slice %7 {offsets = [0, 0], sizes = [2, 16], strides = [1, 1]} : vector<2x48xf32> to vector<2x16xf32>
    %14 = vector.extract_strided_slice %12 {offsets = [0, 0], sizes = [2, 16], strides = [1, 1]} : vector<2x48xf32> to vector<2x16xf32>
    %15 = arith.addf %13, %14 : vector<2x16xf32>
    %16 = arith.negf %15 : vector<2x16xf32>
    %17 = math.exp %16 : vector<2x16xf32>
    %cst_12 = arith.constant 1.000000e+00 : f32
    %18 = vector.broadcast %cst_12 : f32 to vector<2x16xf32>
    %19 = arith.addf %18, %17 : vector<2x16xf32>
    %20 = arith.divf %18, %19 : vector<2x16xf32>
    %21 = vector.extract_strided_slice %7 {offsets = [0, 16], sizes = [2, 16], strides = [1, 1]} : vector<2x48xf32> to vector<2x16xf32>
    %22 = vector.extract_strided_slice %12 {offsets = [0, 16], sizes = [2, 16], strides = [1, 1]} : vector<2x48xf32> to vector<2x16xf32>
    %23 = arith.addf %21, %22 : vector<2x16xf32>
    %24 = arith.negf %23 : vector<2x16xf32>
    %25 = math.exp %24 : vector<2x16xf32>
    %cst_13 = arith.constant 1.000000e+00 : f32
    %26 = vector.broadcast %cst_13 : f32 to vector<2x16xf32>
    %27 = arith.addf %26, %25 : vector<2x16xf32>
    %28 = arith.divf %26, %27 : vector<2x16xf32>
    %29 = vector.extract_strided_slice %7 {offsets = [0, 32], sizes = [2, 16], strides = [1, 1]} : vector<2x48xf32> to vector<2x16xf32>
    %30 = vector.extract_strided_slice %12 {offsets = [0, 32], sizes = [2, 16], strides = [1, 1]} : vector<2x48xf32> to vector<2x16xf32>
    %31 = arith.mulf %20, %30 : vector<2x16xf32>
    %32 = arith.addf %29, %31 : vector<2x16xf32>
    %33 = math.tanh %32 : vector<2x16xf32>
    %cst_14 = arith.constant 1.000000e+00 : f32
    %34 = vector.broadcast %cst_14 : f32 to vector<2x16xf32>
    %35 = arith.subf %34, %28 : vector<2x16xf32>
    %36 = arith.mulf %35, %33 : vector<2x16xf32>
    %37 = arith.mulf %28, %0 : vector<2x16xf32>
    %38 = arith.addf %36, %37 : vector<2x16xf32>
    %c0_15 = arith.constant 0 : index
    %c0_16 = arith.constant 0 : index
    %c0_17 = arith.constant 0 : index
    %39 = vector.load %arg5[%c0_15, %c0_16, %c0_17] : memref<16x2x16xf32, #tpu.memory_space<vmem>>, vector<1x2x16xf32>
    %40 = vector.shape_cast %39 : vector<1x2x16xf32> to vector<2x16xf32>
    %41 = vector.shape_cast %38 : vector<2x16xf32> to vector<1x2x16xf32>
    tpu.vector_store %arg5[%c0_15, %c0_16, %c0_17], %41 {strides = array<i32>} : memref<16x2x16xf32, #tpu.memory_space<vmem>>, vector<1x2x16xf32>,
    %c1 = arith.constant 1 : index
    %c0_18 = arith.constant 0 : index
    %c0_19 = arith.constant 0 : index
    %42 = vector.load %arg0[%c1, %c0_18, %c0_19] : memref<16x2x8xf32, #tpu.memory_space<vmem>>, vector<1x2x8xf32>
    %43 = vector.shape_cast %42 : vector<1x2x8xf32> to vector<2x8xf32>
    %c0_20 = arith.constant 0 : index
    %c0_21 = arith.constant 0 : index
    %44 = vector.load %arg1[%c0_20, %c0_21] : memref<8x48xf32, #tpu.memory_space<vmem>>, vector<8x48xf32>
    %cst_22 = arith.constant dense<0.000000e+00> : vector<2x48xf32>
    %45 = tpu.matmul %43, %44, %cst_22 {dimension_numbers = #tpu.dot_dimension_numbers<[1], [0], [0], [1], [0, 0, 1, 1], [], []>} : vector<2x8xf32>, vector<8x48xf32>, vector<2x48xf32> -> vector<2x48xf32>
    %c0_23 = arith.constant 0 : index
    %c0_24 = arith.constant 0 : index
    %46 = vector.load %arg2[%c0_23, %c0_24] : memref<1x48xf32, #tpu.memory_space<vmem>>, vector<1x48xf32>
    %47 = vector.broadcast %46 : vector<1x48xf32> to vector<2x48xf32>
    %48 = arith.addf %45, %47 : vector<2x48xf32>
    %c0_25 = arith.constant 0 : index
    %c0_26 = arith.constant 0 : index
    %49 = vector.load %arg3[%c0_25, %c0_26] : memref<16x48xf32, #tpu.memory_space<vmem>>, vector<16x48xf32>
    %cst_27 = arith.constant dense<0.000000e+00> : vector<2x48xf32>
    %50 = tpu.matmul %38, %49, %cst_27 {dimension_numbers = #tpu.dot_dimension_numbers<[1], [0], [0], [1], [0, 0, 1, 1], [], []>} : vector<2x16xf32>, vector<16x48xf32>, vector<2x48xf32> -> vector<2x48xf32>
    %c0_28 = arith.constant 0 : index
    %c0_29 = arith.constant 0 : index
    %51 = vector.load %arg4[%c0_28, %c0_29] : memref<1x48xf32, #tpu.memory_space<vmem>>, vector<1x48xf32>
    %52 = vector.broadcast %51 : vector<1x48xf32> to vector<2x48xf32>
    %53 = arith.addf %50, %52 : vector<2x48xf32>
    %54 = vector.extract_strided_slice %48 {offsets = [0, 0], sizes = [2, 16], strides = [1, 1]} : vector<2x48xf32> to vector<2x16xf32>
    %55 = vector.extract_strided_slice %53 {offsets = [0, 0], sizes = [2, 16], strides = [1, 1]} : vector<2x48xf32> to vector<2x16xf32>
    %56 = arith.addf %54, %55 : vector<2x16xf32>
    %57 = arith.negf %56 : vector<2x16xf32>
    %58 = math.exp %57 : vector<2x16xf32>
    %cst_30 = arith.constant 1.000000e+00 : f32
    %59 = vector.broadcast %cst_30 : f32 to vector<2x16xf32>
    %60 = arith.addf %59, %58 : vector<2x16xf32>
    %61 = arith.divf %59, %60 : vector<2x16xf32>
    %62 = vector.extract_strided_slice %48 {offsets = [0, 16], sizes = [2, 16], strides = [1, 1]} : vector<2x48xf32> to vector<2x16xf32>
    %63 = vector.extract_strided_slice %53 {offsets = [0, 16], sizes = [2, 16], strides = [1, 1]} : vector<2x48xf32> to vector<2x16xf32>
    %64 = arith.addf %62, %63 : vector<2x16xf32>
    %65 = arith.negf %64 : vector<2x16xf32>
    %66 = math.exp %65 : vector<2x16xf32>
    %cst_31 = arith.constant 1.000000e+00 : f32
    %67 = vector.broadcast %cst_31 : f32 to vector<2x16xf32>
    %68 = arith.addf %67, %66 : vector<2x16xf32>
    %69 = arith.divf %67, %68 : vector<2x16xf32>
    %70 = vector.extract_strided_slice %48 {offsets = [0, 32], sizes = [2, 16], strides = [1, 1]} : vector<2x48xf32> to vector<2x16xf32>
    %71 = vector.extract_strided_slice %53 {offsets = [0, 32], sizes = [2, 16], strides = [1, 1]} : vector<2x48xf32> to vector<2x16xf32>
    %72 = arith.mulf %61, %71 : vector<2x16xf32>
    %73 = arith.addf %70, %72 : vector<2x16xf32>
    %74 = math.tanh %73 : vector<2x16xf32>
    %cst_32 = arith.constant 1.000000e+00 : f32
    %75 = vector.broadcast %cst_32 : f32 to vector<2x16xf32>
    %76 = arith.subf %75, %69 : vector<2x16xf32>
    %77 = arith.mulf %76, %74 : vector<2x16xf32>
    %78 = arith.mulf %69, %38 : vector<2x16xf32>
    %79 = arith.addf %77, %78 : vector<2x16xf32>
    %c1_33 = arith.constant 1 : index
    %c0_34 = arith.constant 0 : index
    %c0_35 = arith.constant 0 : index
    %80 = vector.load %arg5[%c1_33, %c0_34, %c0_35] : memref<16x2x16xf32, #tpu.memory_space<vmem>>, vector<1x2x16xf32>
    %81 = vector.shape_cast %80 : vector<1x2x16xf32> to vector<2x16xf32>
    %82 = vector.shape_cast %79 : vector<2x16xf32> to vector<1x2x16xf32>
    tpu.vector_store %arg5[%c1_33, %c0_34, %c0_35], %82 {strides = array<i32>} : memref<16x2x16xf32, #tpu.memory_space<vmem>>, vector<1x2x16xf32>,
    %c2 = arith.constant 2 : index
    %c0_36 = arith.constant 0 : index
    %c0_37 = arith.constant 0 : index
    %83 = vector.load %arg0[%c2, %c0_36, %c0_37] : memref<16x2x8xf32, #tpu.memory_space<vmem>>, vector<1x2x8xf32>
    %84 = vector.shape_cast %83 : vector<1x2x8xf32> to vector<2x8xf32>
    %c0_38 = arith.constant 0 : index
    %c0_39 = arith.constant 0 : index
    %85 = vector.load %arg1[%c0_38, %c0_39] : memref<8x48xf32, #tpu.memory_space<vmem>>, vector<8x48xf32>
    %cst_40 = arith.constant dense<0.000000e+00> : vector<2x48xf32>
    %86 = tpu.matmul %84, %85, %cst_40 {dimension_numbers = #tpu.dot_dimension_numbers<[1], [0], [0], [1], [0, 0, 1, 1], [], []>} : vector<2x8xf32>, vector<8x48xf32>, vector<2x48xf32> -> vector<2x48xf32>
    %c0_41 = arith.constant 0 : index
    %c0_42 = arith.constant 0 : index
    %87 = vector.load %arg2[%c0_41, %c0_42] : memref<1x48xf32, #tpu.memory_space<vmem>>, vector<1x48xf32>
    %88 = vector.broadcast %87 : vector<1x48xf32> to vector<2x48xf32>
    %89 = arith.addf %86, %88 : vector<2x48xf32>
    %c0_43 = arith.constant 0 : index
    %c0_44 = arith.constant 0 : index
    %90 = vector.load %arg3[%c0_43, %c0_44] : memref<16x48xf32, #tpu.memory_space<vmem>>, vector<16x48xf32>
    %cst_45 = arith.constant dense<0.000000e+00> : vector<2x48xf32>
    %91 = tpu.matmul %79, %90, %cst_45 {dimension_numbers = #tpu.dot_dimension_numbers<[1], [0], [0], [1], [0, 0, 1, 1], [], []>} : vector<2x16xf32>, vector<16x48xf32>, vector<2x48xf32> -> vector<2x48xf32>
    %c0_46 = arith.constant 0 : index
    %c0_47 = arith.constant 0 : index
    %92 = vector.load %arg4[%c0_46, %c0_47] : memref<1x48xf32, #tpu.memory_space<vmem>>, vector<1x48xf32>
    %93 = vector.broadcast %92 : vector<1x48xf32> to vector<2x48xf32>
    %94 = arith.addf %91, %93 : vector<2x48xf32>
    %95 = vector.extract_strided_slice %89 {offsets = [0, 0], sizes = [2, 16], strides = [1, 1]} : vector<2x48xf32> to vector<2x16xf32>
    %96 = vector.extract_strided_slice %94 {offsets = [0, 0], sizes = [2, 16], strides = [1, 1]} : vector<2x48xf32> to vector<2x16xf32>
    %97 = arith.addf %95, %96 : vector<2x16xf32>
    %98 = arith.negf %97 : vector<2x16xf32>
    %99 = math.exp %98 : vector<2x16xf32>
    %cst_48 = arith.constant 1.000000e+00 : f32
    %100 = vector.broadcast %cst_48 : f32 to vector<2x16xf32>
    %101 = arith.addf %100, %99 : vector<2x16xf32>
    %102 = arith.divf %100, %101 : vector<2x16xf32>
    %103 = vector.extract_strided_slice %89 {offsets = [0, 16], sizes = [2, 16], strides = [1, 1]} : vector<2x48xf32> to vector<2x16xf32>
    %104 = vector.extract_strided_slice %94 {offsets = [0, 16], sizes = [2, 16], strides = [1, 1]} : vector<2x48xf32> to vector<2x16xf32>
    %105 = arith.addf %103, %104 : vector<2x16xf32>
    %106 = arith.negf %105 : vector<2x16xf32>
    %107 = math.exp %106 : vector<2x16xf32>
    %cst_49 = arith.constant 1.000000e+00 : f32
    %108 = vector.broadcast %cst_49 : f32 to vector<2x16xf32>
    %109 = arith.addf %108, %107 : vector<2x16xf32>
    %110 = arith.divf %108, %109 : vector<2x16xf32>
    %111 = vector.extract_strided_slice %89 {offsets = [0, 32], sizes = [2, 16], strides = [1, 1]} : vector<2x48xf32> to vector<2x16xf32>
    %112 = vector.extract_strided_slice %94 {offsets = [0, 32], sizes = [2, 16], strides = [1, 1]} : vector<2x48xf32> to vector<2x16xf32>
    %113 = arith.mulf %102, %112 : vector<2x16xf32>
    %114 = arith.addf %111, %113 : vector<2x16xf32>
    %115 = math.tanh %114 : vector<2x16xf32>
    %cst_50 = arith.constant 1.000000e+00 : f32
    %116 = vector.broadcast %cst_50 : f32 to vector<2x16xf32>
    %117 = arith.subf %116, %110 : vector<2x16xf32>
    %118 = arith.mulf %117, %115 : vector<2x16xf32>
    %119 = arith.mulf %110, %79 : vector<2x16xf32>
    %120 = arith.addf %118, %119 : vector<2x16xf32>
    %c2_51 = arith.constant 2 : index
    %c0_52 = arith.constant 0 : index
    %c0_53 = arith.constant 0 : index
    %121 = vector.load %arg5[%c2_51, %c0_52, %c0_53] : memref<16x2x16xf32, #tpu.memory_space<vmem>>, vector<1x2x16xf32>
    %122 = vector.shape_cast %121 : vector<1x2x16xf32> to vector<2x16xf32>
    %123 = vector.shape_cast %120 : vector<2x16xf32> to vector<1x2x16xf32>
    tpu.vector_store %arg5[%c2_51, %c0_52, %c0_53], %123 {strides = array<i32>} : memref<16x2x16xf32, #tpu.memory_space<vmem>>, vector<1x2x16xf32>,
    %c3 = arith.constant 3 : index
    %c0_54 = arith.constant 0 : index
    %c0_55 = arith.constant 0 : index
    %124 = vector.load %arg0[%c3, %c0_54, %c0_55] : memref<16x2x8xf32, #tpu.memory_space<vmem>>, vector<1x2x8xf32>
    %125 = vector.shape_cast %124 : vector<1x2x8xf32> to vector<2x8xf32>
    %c0_56 = arith.constant 0 : index
    %c0_57 = arith.constant 0 : index
    %126 = vector.load %arg1[%c0_56, %c0_57] : memref<8x48xf32, #tpu.memory_space<vmem>>, vector<8x48xf32>
    %cst_58 = arith.constant dense<0.000000e+00> : vector<2x48xf32>
    %127 = tpu.matmul %125, %126, %cst_58 {dimension_numbers = #tpu.dot_dimension_numbers<[1], [0], [0], [1], [0, 0, 1, 1], [], []>} : vector<2x8xf32>, vector<8x48xf32>, vector<2x48xf32> -> vector<2x48xf32>
    %c0_59 = arith.constant 0 : index
    %c0_60 = arith.constant 0 : index
    %128 = vector.load %arg2[%c0_59, %c0_60] : memref<1x48xf32, #tpu.memory_space<vmem>>, vector<1x48xf32>
    %129 = vector.broadcast %128 : vector<1x48xf32> to vector<2x48xf32>
    %130 = arith.addf %127, %129 : vector<2x48xf32>
    %c0_61 = arith.constant 0 : index
    %c0_62 = arith.constant 0 : index
    %131 = vector.load %arg3[%c0_61, %c0_62] : memref<16x48xf32, #tpu.memory_space<vmem>>, vector<16x48xf32>
    %cst_63 = arith.constant dense<0.000000e+00> : vector<2x48xf32>
    %132 = tpu.matmul %120, %131, %cst_63 {dimension_numbers = #tpu.dot_dimension_numbers<[1], [0], [0], [1], [0, 0, 1, 1], [], []>} : vector<2x16xf32>, vector<16x48xf32>, vector<2x48xf32> -> vector<2x48xf32>
    %c0_64 = arith.constant 0 : index
    %c0_65 = arith.constant 0 : index
    %133 = vector.load %arg4[%c0_64, %c0_65] : memref<1x48xf32, #tpu.memory_space<vmem>>, vector<1x48xf32>
    %134 = vector.broadcast %133 : vector<1x48xf32> to vector<2x48xf32>
    %135 = arith.addf %132, %134 : vector<2x48xf32>
    %136 = vector.extract_strided_slice %130 {offsets = [0, 0], sizes = [2, 16], strides = [1, 1]} : vector<2x48xf32> to vector<2x16xf32>
    %137 = vector.extract_strided_slice %135 {offsets = [0, 0], sizes = [2, 16], strides = [1, 1]} : vector<2x48xf32> to vector<2x16xf32>
    %138 = arith.addf %136, %137 : vector<2x16xf32>
    %139 = arith.negf %138 : vector<2x16xf32>
    %140 = math.exp %139 : vector<2x16xf32>
    %cst_66 = arith.constant 1.000000e+00 : f32
    %141 = vector.broadcast %cst_66 : f32 to vector<2x16xf32>
    %142 = arith.addf %141, %140 : vector<2x16xf32>
    %143 = arith.divf %141, %142 : vector<2x16xf32>
    %144 = vector.extract_strided_slice %130 {offsets = [0, 16], sizes = [2, 16], strides = [1, 1]} : vector<2x48xf32> to vector<2x16xf32>
    %145 = vector.extract_strided_slice %135 {offsets = [0, 16], sizes = [2, 16], strides = [1, 1]} : vector<2x48xf32> to vector<2x16xf32>
    %146 = arith.addf %144, %145 : vector<2x16xf32>
    %147 = arith.negf %146 : vector<2x16xf32>
    %148 = math.exp %147 : vector<2x16xf32>
    %cst_67 = arith.constant 1.000000e+00 : f32
    %149 = vector.broadcast %cst_67 : f32 to vector<2x16xf32>
    %150 = arith.addf %149, %148 : vector<2x16xf32>
    %151 = arith.divf %149, %150 : vector<2x16xf32>
    %152 = vector.extract_strided_slice %130 {offsets = [0, 32], sizes = [2, 16], strides = [1, 1]} : vector<2x48xf32> to vector<2x16xf32>
    %153 = vector.extract_strided_slice %135 {offsets = [0, 32], sizes = [2, 16], strides = [1, 1]} : vector<2x48xf32> to vector<2x16xf32>
    %154 = arith.mulf %143, %153 : vector<2x16xf32>
    %155 = arith.addf %152, %154 : vector<2x16xf32>
    %156 = math.tanh %155 : vector<2x16xf32>
    %cst_68 = arith.constant 1.000000e+00 : f32
    %157 = vector.broadcast %cst_68 : f32 to vector<2x16xf32>
    %158 = arith.subf %157, %151 : vector<2x16xf32>
    %159 = arith.mulf %158, %156 : vector<2x16xf32>
    %160 = arith.mulf %151, %120 : vector<2x16xf32>
    %161 = arith.addf %159, %160 : vector<2x16xf32>
    %c3_69 = arith.constant 3 : index
    %c0_70 = arith.constant 0 : index
    %c0_71 = arith.constant 0 : index
    %162 = vector.load %arg5[%c3_69, %c0_70, %c0_71] : memref<16x2x16xf32, #tpu.memory_space<vmem>>, vector<1x2x16xf32>
    %163 = vector.shape_cast %162 : vector<1x2x16xf32> to vector<2x16xf32>
    %164 = vector.shape_cast %161 : vector<2x16xf32> to vector<1x2x16xf32>
    tpu.vector_store %arg5[%c3_69, %c0_70, %c0_71], %164 {strides = array<i32>} : memref<16x2x16xf32, #tpu.memory_space<vmem>>, vector<1x2x16xf32>,
    %c4 = arith.constant 4 : index
    %c0_72 = arith.constant 0 : index
    %c0_73 = arith.constant 0 : index
    %165 = vector.load %arg0[%c4, %c0_72, %c0_73] : memref<16x2x8xf32, #tpu.memory_space<vmem>>, vector<1x2x8xf32>
    %166 = vector.shape_cast %165 : vector<1x2x8xf32> to vector<2x8xf32>
    %c0_74 = arith.constant 0 : index
    %c0_75 = arith.constant 0 : index
    %167 = vector.load %arg1[%c0_74, %c0_75] : memref<8x48xf32, #tpu.memory_space<vmem>>, vector<8x48xf32>
    %cst_76 = arith.constant dense<0.000000e+00> : vector<2x48xf32>
    %168 = tpu.matmul %166, %167, %cst_76 {dimension_numbers = #tpu.dot_dimension_numbers<[1], [0], [0], [1], [0, 0, 1, 1], [], []>} : vector<2x8xf32>, vector<8x48xf32>, vector<2x48xf32> -> vector<2x48xf32>
    %c0_77 = arith.constant 0 : index
    %c0_78 = arith.constant 0 : index
    %169 = vector.load %arg2[%c0_77, %c0_78] : memref<1x48xf32, #tpu.memory_space<vmem>>, vector<1x48xf32>
    %170 = vector.broadcast %169 : vector<1x48xf32> to vector<2x48xf32>
    %171 = arith.addf %168, %170 : vector<2x48xf32>
    %c0_79 = arith.constant 0 : index
    %c0_80 = arith.constant 0 : index
    %172 = vector.load %arg3[%c0_79, %c0_80] : memref<16x48xf32, #tpu.memory_space<vmem>>, vector<16x48xf32>
    %cst_81 = arith.constant dense<0.000000e+00> : vector<2x48xf32>
    %173 = tpu.matmul %161, %172, %cst_81 {dimension_numbers = #tpu.dot_dimension_numbers<[1], [0], [0], [1], [0, 0, 1, 1], [], []>} : vector<2x16xf32>, vector<16x48xf32>, vector<2x48xf32> -> vector<2x48xf32>
    %c0_82 = arith.constant 0 : index
    %c0_83 = arith.constant 0 : index
    %174 = vector.load %arg4[%c0_82, %c0_83] : memref<1x48xf32, #tpu.memory_space<vmem>>, vector<1x48xf32>
    %175 = vector.broadcast %174 : vector<1x48xf32> to vector<2x48xf32>
    %176 = arith.addf %173, %175 : vector<2x48xf32>
    %177 = vector.extract_strided_slice %171 {offsets = [0, 0], sizes = [2, 16], strides = [1, 1]} : vector<2x48xf32> to vector<2x16xf32>
    %178 = vector.extract_strided_slice %176 {offsets = [0, 0], sizes = [2, 16], strides = [1, 1]} : vector<2x48xf32> to vector<2x16xf32>
    %179 = arith.addf %177, %178 : vector<2x16xf32>
    %180 = arith.negf %179 : vector<2x16xf32>
    %181 = math.exp %180 : vector<2x16xf32>
    %cst_84 = arith.constant 1.000000e+00 : f32
    %182 = vector.broadcast %cst_84 : f32 to vector<2x16xf32>
    %183 = arith.addf %182, %181 : vector<2x16xf32>
    %184 = arith.divf %182, %183 : vector<2x16xf32>
    %185 = vector.extract_strided_slice %171 {offsets = [0, 16], sizes = [2, 16], strides = [1, 1]} : vector<2x48xf32> to vector<2x16xf32>
    %186 = vector.extract_strided_slice %176 {offsets = [0, 16], sizes = [2, 16], strides = [1, 1]} : vector<2x48xf32> to vector<2x16xf32>
    %187 = arith.addf %185, %186 : vector<2x16xf32>
    %188 = arith.negf %187 : vector<2x16xf32>
    %189 = math.exp %188 : vector<2x16xf32>
    %cst_85 = arith.constant 1.000000e+00 : f32
    %190 = vector.broadcast %cst_85 : f32 to vector<2x16xf32>
    %191 = arith.addf %190, %189 : vector<2x16xf32>
    %192 = arith.divf %190, %191 : vector<2x16xf32>
    %193 = vector.extract_strided_slice %171 {offsets = [0, 32], sizes = [2, 16], strides = [1, 1]} : vector<2x48xf32> to vector<2x16xf32>
    %194 = vector.extract_strided_slice %176 {offsets = [0, 32], sizes = [2, 16], strides = [1, 1]} : vector<2x48xf32> to vector<2x16xf32>
    %195 = arith.mulf %184, %194 : vector<2x16xf32>
    %196 = arith.addf %193, %195 : vector<2x16xf32>
    %197 = math.tanh %196 : vector<2x16xf32>
    %cst_86 = arith.constant 1.000000e+00 : f32
    %198 = vector.broadcast %cst_86 : f32 to vector<2x16xf32>
    %199 = arith.subf %198, %192 : vector<2x16xf32>
    %200 = arith.mulf %199, %197 : vector<2x16xf32>
    %201 = arith.mulf %192, %161 : vector<2x16xf32>
    %202 = arith.addf %200, %201 : vector<2x16xf32>
    %c4_87 = arith.constant 4 : index
    %c0_88 = arith.constant 0 : index
    %c0_89 = arith.constant 0 : index
    %203 = vector.load %arg5[%c4_87, %c0_88, %c0_89] : memref<16x2x16xf32, #tpu.memory_space<vmem>>, vector<1x2x16xf32>
    %204 = vector.shape_cast %203 : vector<1x2x16xf32> to vector<2x16xf32>
    %205 = vector.shape_cast %202 : vector<2x16xf32> to vector<1x2x16xf32>
    tpu.vector_store %arg5[%c4_87, %c0_88, %c0_89], %205 {strides = array<i32>} : memref<16x2x16xf32, #tpu.memory_space<vmem>>, vector<1x2x16xf32>,
    %c5 = arith.constant 5 : index
    %c0_90 = arith.constant 0 : index
    %c0_91 = arith.constant 0 : index
    %206 = vector.load %arg0[%c5, %c0_90, %c0_91] : memref<16x2x8xf32, #tpu.memory_space<vmem>>, vector<1x2x8xf32>
    %207 = vector.shape_cast %206 : vector<1x2x8xf32> to vector<2x8xf32>
    %c0_92 = arith.constant 0 : index
    %c0_93 = arith.constant 0 : index
    %208 = vector.load %arg1[%c0_92, %c0_93] : memref<8x48xf32, #tpu.memory_space<vmem>>, vector<8x48xf32>
    %cst_94 = arith.constant dense<0.000000e+00> : vector<2x48xf32>
    %209 = tpu.matmul %207, %208, %cst_94 {dimension_numbers = #tpu.dot_dimension_numbers<[1], [0], [0], [1], [0, 0, 1, 1], [], []>} : vector<2x8xf32>, vector<8x48xf32>, vector<2x48xf32> -> vector<2x48xf32>
    %c0_95 = arith.constant 0 : index
    %c0_96 = arith.constant 0 : index
    %210 = vector.load %arg2[%c0_95, %c0_96] : memref<1x48xf32, #tpu.memory_space<vmem>>, vector<1x48xf32>
    %211 = vector.broadcast %210 : vector<1x48xf32> to vector<2x48xf32>
    %212 = arith.addf %209, %211 : vector<2x48xf32>
    %c0_97 = arith.constant 0 : index
    %c0_98 = arith.constant 0 : index
    %213 = vector.load %arg3[%c0_97, %c0_98] : memref<16x48xf32, #tpu.memory_space<vmem>>, vector<16x48xf32>
    %cst_99 = arith.constant dense<0.000000e+00> : vector<2x48xf32>
    %214 = tpu.matmul %202, %213, %cst_99 {dimension_numbers = #tpu.dot_dimension_numbers<[1], [0], [0], [1], [0, 0, 1, 1], [], []>} : vector<2x16xf32>, vector<16x48xf32>, vector<2x48xf32> -> vector<2x48xf32>
    %c0_100 = arith.constant 0 : index
    %c0_101 = arith.constant 0 : index
    %215 = vector.load %arg4[%c0_100, %c0_101] : memref<1x48xf32, #tpu.memory_space<vmem>>, vector<1x48xf32>
    %216 = vector.broadcast %215 : vector<1x48xf32> to vector<2x48xf32>
    %217 = arith.addf %214, %216 : vector<2x48xf32>
    %218 = vector.extract_strided_slice %212 {offsets = [0, 0], sizes = [2, 16], strides = [1, 1]} : vector<2x48xf32> to vector<2x16xf32>
    %219 = vector.extract_strided_slice %217 {offsets = [0, 0], sizes = [2, 16], strides = [1, 1]} : vector<2x48xf32> to vector<2x16xf32>
    %220 = arith.addf %218, %219 : vector<2x16xf32>
    %221 = arith.negf %220 : vector<2x16xf32>
    %222 = math.exp %221 : vector<2x16xf32>
    %cst_102 = arith.constant 1.000000e+00 : f32
    %223 = vector.broadcast %cst_102 : f32 to vector<2x16xf32>
    %224 = arith.addf %223, %222 : vector<2x16xf32>
    %225 = arith.divf %223, %224 : vector<2x16xf32>
    %226 = vector.extract_strided_slice %212 {offsets = [0, 16], sizes = [2, 16], strides = [1, 1]} : vector<2x48xf32> to vector<2x16xf32>
    %227 = vector.extract_strided_slice %217 {offsets = [0, 16], sizes = [2, 16], strides = [1, 1]} : vector<2x48xf32> to vector<2x16xf32>
    %228 = arith.addf %226, %227 : vector<2x16xf32>
    %229 = arith.negf %228 : vector<2x16xf32>
    %230 = math.exp %229 : vector<2x16xf32>
    %cst_103 = arith.constant 1.000000e+00 : f32
    %231 = vector.broadcast %cst_103 : f32 to vector<2x16xf32>
    %232 = arith.addf %231, %230 : vector<2x16xf32>
    %233 = arith.divf %231, %232 : vector<2x16xf32>
    %234 = vector.extract_strided_slice %212 {offsets = [0, 32], sizes = [2, 16], strides = [1, 1]} : vector<2x48xf32> to vector<2x16xf32>
    %235 = vector.extract_strided_slice %217 {offsets = [0, 32], sizes = [2, 16], strides = [1, 1]} : vector<2x48xf32> to vector<2x16xf32>
    %236 = arith.mulf %225, %235 : vector<2x16xf32>
    %237 = arith.addf %234, %236 : vector<2x16xf32>
    %238 = math.tanh %237 : vector<2x16xf32>
    %cst_104 = arith.constant 1.000000e+00 : f32
    %239 = vector.broadcast %cst_104 : f32 to vector<2x16xf32>
    %240 = arith.subf %239, %233 : vector<2x16xf32>
    %241 = arith.mulf %240, %238 : vector<2x16xf32>
    %242 = arith.mulf %233, %202 : vector<2x16xf32>
    %243 = arith.addf %241, %242 : vector<2x16xf32>
    %c5_105 = arith.constant 5 : index
    %c0_106 = arith.constant 0 : index
    %c0_107 = arith.constant 0 : index
    %244 = vector.load %arg5[%c5_105, %c0_106, %c0_107] : memref<16x2x16xf32, #tpu.memory_space<vmem>>, vector<1x2x16xf32>
    %245 = vector.shape_cast %244 : vector<1x2x16xf32> to vector<2x16xf32>
    %246 = vector.shape_cast %243 : vector<2x16xf32> to vector<1x2x16xf32>
    tpu.vector_store %arg5[%c5_105, %c0_106, %c0_107], %246 {strides = array<i32>} : memref<16x2x16xf32, #tpu.memory_space<vmem>>, vector<1x2x16xf32>,
    %c6 = arith.constant 6 : index
    %c0_108 = arith.constant 0 : index
    %c0_109 = arith.constant 0 : index
    %247 = vector.load %arg0[%c6, %c0_108, %c0_109] : memref<16x2x8xf32, #tpu.memory_space<vmem>>, vector<1x2x8xf32>
    %248 = vector.shape_cast %247 : vector<1x2x8xf32> to vector<2x8xf32>
    %c0_110 = arith.constant 0 : index
    %c0_111 = arith.constant 0 : index
    %249 = vector.load %arg1[%c0_110, %c0_111] : memref<8x48xf32, #tpu.memory_space<vmem>>, vector<8x48xf32>
    %cst_112 = arith.constant dense<0.000000e+00> : vector<2x48xf32>
    %250 = tpu.matmul %248, %249, %cst_112 {dimension_numbers = #tpu.dot_dimension_numbers<[1], [0], [0], [1], [0, 0, 1, 1], [], []>} : vector<2x8xf32>, vector<8x48xf32>, vector<2x48xf32> -> vector<2x48xf32>
    %c0_113 = arith.constant 0 : index
    %c0_114 = arith.constant 0 : index
    %251 = vector.load %arg2[%c0_113, %c0_114] : memref<1x48xf32, #tpu.memory_space<vmem>>, vector<1x48xf32>
    %252 = vector.broadcast %251 : vector<1x48xf32> to vector<2x48xf32>
    %253 = arith.addf %250, %252 : vector<2x48xf32>
    %c0_115 = arith.constant 0 : index
    %c0_116 = arith.constant 0 : index
    %254 = vector.load %arg3[%c0_115, %c0_116] : memref<16x48xf32, #tpu.memory_space<vmem>>, vector<16x48xf32>
    %cst_117 = arith.constant dense<0.000000e+00> : vector<2x48xf32>
    %255 = tpu.matmul %243, %254, %cst_117 {dimension_numbers = #tpu.dot_dimension_numbers<[1], [0], [0], [1], [0, 0, 1, 1], [], []>} : vector<2x16xf32>, vector<16x48xf32>, vector<2x48xf32> -> vector<2x48xf32>
    %c0_118 = arith.constant 0 : index
    %c0_119 = arith.constant 0 : index
    %256 = vector.load %arg4[%c0_118, %c0_119] : memref<1x48xf32, #tpu.memory_space<vmem>>, vector<1x48xf32>
    %257 = vector.broadcast %256 : vector<1x48xf32> to vector<2x48xf32>
    %258 = arith.addf %255, %257 : vector<2x48xf32>
    %259 = vector.extract_strided_slice %253 {offsets = [0, 0], sizes = [2, 16], strides = [1, 1]} : vector<2x48xf32> to vector<2x16xf32>
    %260 = vector.extract_strided_slice %258 {offsets = [0, 0], sizes = [2, 16], strides = [1, 1]} : vector<2x48xf32> to vector<2x16xf32>
    %261 = arith.addf %259, %260 : vector<2x16xf32>
    %262 = arith.negf %261 : vector<2x16xf32>
    %263 = math.exp %262 : vector<2x16xf32>
    %cst_120 = arith.constant 1.000000e+00 : f32
    %264 = vector.broadcast %cst_120 : f32 to vector<2x16xf32>
    %265 = arith.addf %264, %263 : vector<2x16xf32>
    %266 = arith.divf %264, %265 : vector<2x16xf32>
    %267 = vector.extract_strided_slice %253 {offsets = [0, 16], sizes = [2, 16], strides = [1, 1]} : vector<2x48xf32> to vector<2x16xf32>
    %268 = vector.extract_strided_slice %258 {offsets = [0, 16], sizes = [2, 16], strides = [1, 1]} : vector<2x48xf32> to vector<2x16xf32>
    %269 = arith.addf %267, %268 : vector<2x16xf32>
    %270 = arith.negf %269 : vector<2x16xf32>
    %271 = math.exp %270 : vector<2x16xf32>
    %cst_121 = arith.constant 1.000000e+00 : f32
    %272 = vector.broadcast %cst_121 : f32 to vector<2x16xf32>
    %273 = arith.addf %272, %271 : vector<2x16xf32>
    %274 = arith.divf %272, %273 : vector<2x16xf32>
    %275 = vector.extract_strided_slice %253 {offsets = [0, 32], sizes = [2, 16], strides = [1, 1]} : vector<2x48xf32> to vector<2x16xf32>
    %276 = vector.extract_strided_slice %258 {offsets = [0, 32], sizes = [2, 16], strides = [1, 1]} : vector<2x48xf32> to vector<2x16xf32>
    %277 = arith.mulf %266, %276 : vector<2x16xf32>
    %278 = arith.addf %275, %277 : vector<2x16xf32>
    %279 = math.tanh %278 : vector<2x16xf32>
    %cst_122 = arith.constant 1.000000e+00 : f32
    %280 = vector.broadcast %cst_122 : f32 to vector<2x16xf32>
    %281 = arith.subf %280, %274 : vector<2x16xf32>
    %282 = arith.mulf %281, %279 : vector<2x16xf32>
    %283 = arith.mulf %274, %243 : vector<2x16xf32>
    %284 = arith.addf %282, %283 : vector<2x16xf32>
    %c6_123 = arith.constant 6 : index
    %c0_124 = arith.constant 0 : index
    %c0_125 = arith.constant 0 : index
    %285 = vector.load %arg5[%c6_123, %c0_124, %c0_125] : memref<16x2x16xf32, #tpu.memory_space<vmem>>, vector<1x2x16xf32>
    %286 = vector.shape_cast %285 : vector<1x2x16xf32> to vector<2x16xf32>
    %287 = vector.shape_cast %284 : vector<2x16xf32> to vector<1x2x16xf32>
    tpu.vector_store %arg5[%c6_123, %c0_124, %c0_125], %287 {strides = array<i32>} : memref<16x2x16xf32, #tpu.memory_space<vmem>>, vector<1x2x16xf32>,
    %c7 = arith.constant 7 : index
    %c0_126 = arith.constant 0 : index
    %c0_127 = arith.constant 0 : index
    %288 = vector.load %arg0[%c7, %c0_126, %c0_127] : memref<16x2x8xf32, #tpu.memory_space<vmem>>, vector<1x2x8xf32>
    %289 = vector.shape_cast %288 : vector<1x2x8xf32> to vector<2x8xf32>
    %c0_128 = arith.constant 0 : index
    %c0_129 = arith.constant 0 : index
    %290 = vector.load %arg1[%c0_128, %c0_129] : memref<8x48xf32, #tpu.memory_space<vmem>>, vector<8x48xf32>
    %cst_130 = arith.constant dense<0.000000e+00> : vector<2x48xf32>
    %291 = tpu.matmul %289, %290, %cst_130 {dimension_numbers = #tpu.dot_dimension_numbers<[1], [0], [0], [1], [0, 0, 1, 1], [], []>} : vector<2x8xf32>, vector<8x48xf32>, vector<2x48xf32> -> vector<2x48xf32>
    %c0_131 = arith.constant 0 : index
    %c0_132 = arith.constant 0 : index
    %292 = vector.load %arg2[%c0_131, %c0_132] : memref<1x48xf32, #tpu.memory_space<vmem>>, vector<1x48xf32>
    %293 = vector.broadcast %292 : vector<1x48xf32> to vector<2x48xf32>
    %294 = arith.addf %291, %293 : vector<2x48xf32>
    %c0_133 = arith.constant 0 : index
    %c0_134 = arith.constant 0 : index
    %295 = vector.load %arg3[%c0_133, %c0_134] : memref<16x48xf32, #tpu.memory_space<vmem>>, vector<16x48xf32>
    %cst_135 = arith.constant dense<0.000000e+00> : vector<2x48xf32>
    %296 = tpu.matmul %284, %295, %cst_135 {dimension_numbers = #tpu.dot_dimension_numbers<[1], [0], [0], [1], [0, 0, 1, 1], [], []>} : vector<2x16xf32>, vector<16x48xf32>, vector<2x48xf32> -> vector<2x48xf32>
    %c0_136 = arith.constant 0 : index
    %c0_137 = arith.constant 0 : index
    %297 = vector.load %arg4[%c0_136, %c0_137] : memref<1x48xf32, #tpu.memory_space<vmem>>, vector<1x48xf32>
    %298 = vector.broadcast %297 : vector<1x48xf32> to vector<2x48xf32>
    %299 = arith.addf %296, %298 : vector<2x48xf32>
    %300 = vector.extract_strided_slice %294 {offsets = [0, 0], sizes = [2, 16], strides = [1, 1]} : vector<2x48xf32> to vector<2x16xf32>
    %301 = vector.extract_strided_slice %299 {offsets = [0, 0], sizes = [2, 16], strides = [1, 1]} : vector<2x48xf32> to vector<2x16xf32>
    %302 = arith.addf %300, %301 : vector<2x16xf32>
    %303 = arith.negf %302 : vector<2x16xf32>
    %304 = math.exp %303 : vector<2x16xf32>
    %cst_138 = arith.constant 1.000000e+00 : f32
    %305 = vector.broadcast %cst_138 : f32 to vector<2x16xf32>
    %306 = arith.addf %305, %304 : vector<2x16xf32>
    %307 = arith.divf %305, %306 : vector<2x16xf32>
    %308 = vector.extract_strided_slice %294 {offsets = [0, 16], sizes = [2, 16], strides = [1, 1]} : vector<2x48xf32> to vector<2x16xf32>
    %309 = vector.extract_strided_slice %299 {offsets = [0, 16], sizes = [2, 16], strides = [1, 1]} : vector<2x48xf32> to vector<2x16xf32>
    %310 = arith.addf %308, %309 : vector<2x16xf32>
    %311 = arith.negf %310 : vector<2x16xf32>
    %312 = math.exp %311 : vector<2x16xf32>
    %cst_139 = arith.constant 1.000000e+00 : f32
    %313 = vector.broadcast %cst_139 : f32 to vector<2x16xf32>
    %314 = arith.addf %313, %312 : vector<2x16xf32>
    %315 = arith.divf %313, %314 : vector<2x16xf32>
    %316 = vector.extract_strided_slice %294 {offsets = [0, 32], sizes = [2, 16], strides = [1, 1]} : vector<2x48xf32> to vector<2x16xf32>
    %317 = vector.extract_strided_slice %299 {offsets = [0, 32], sizes = [2, 16], strides = [1, 1]} : vector<2x48xf32> to vector<2x16xf32>
    %318 = arith.mulf %307, %317 : vector<2x16xf32>
    %319 = arith.addf %316, %318 : vector<2x16xf32>
    %320 = math.tanh %319 : vector<2x16xf32>
    %cst_140 = arith.constant 1.000000e+00 : f32
    %321 = vector.broadcast %cst_140 : f32 to vector<2x16xf32>
    %322 = arith.subf %321, %315 : vector<2x16xf32>
    %323 = arith.mulf %322, %320 : vector<2x16xf32>
    %324 = arith.mulf %315, %284 : vector<2x16xf32>
    %325 = arith.addf %323, %324 : vector<2x16xf32>
    %c7_141 = arith.constant 7 : index
    %c0_142 = arith.constant 0 : index
    %c0_143 = arith.constant 0 : index
    %326 = vector.load %arg5[%c7_141, %c0_142, %c0_143] : memref<16x2x16xf32, #tpu.memory_space<vmem>>, vector<1x2x16xf32>
    %327 = vector.shape_cast %326 : vector<1x2x16xf32> to vector<2x16xf32>
    %328 = vector.shape_cast %325 : vector<2x16xf32> to vector<1x2x16xf32>
    tpu.vector_store %arg5[%c7_141, %c0_142, %c0_143], %328 {strides = array<i32>} : memref<16x2x16xf32, #tpu.memory_space<vmem>>, vector<1x2x16xf32>,
    %c8 = arith.constant 8 : index
    %c0_144 = arith.constant 0 : index
    %c0_145 = arith.constant 0 : index
    %329 = vector.load %arg0[%c8, %c0_144, %c0_145] : memref<16x2x8xf32, #tpu.memory_space<vmem>>, vector<1x2x8xf32>
    %330 = vector.shape_cast %329 : vector<1x2x8xf32> to vector<2x8xf32>
    %c0_146 = arith.constant 0 : index
    %c0_147 = arith.constant 0 : index
    %331 = vector.load %arg1[%c0_146, %c0_147] : memref<8x48xf32, #tpu.memory_space<vmem>>, vector<8x48xf32>
    %cst_148 = arith.constant dense<0.000000e+00> : vector<2x48xf32>
    %332 = tpu.matmul %330, %331, %cst_148 {dimension_numbers = #tpu.dot_dimension_numbers<[1], [0], [0], [1], [0, 0, 1, 1], [], []>} : vector<2x8xf32>, vector<8x48xf32>, vector<2x48xf32> -> vector<2x48xf32>
    %c0_149 = arith.constant 0 : index
    %c0_150 = arith.constant 0 : index
    %333 = vector.load %arg2[%c0_149, %c0_150] : memref<1x48xf32, #tpu.memory_space<vmem>>, vector<1x48xf32>
    %334 = vector.broadcast %333 : vector<1x48xf32> to vector<2x48xf32>
    %335 = arith.addf %332, %334 : vector<2x48xf32>
    %c0_151 = arith.constant 0 : index
    %c0_152 = arith.constant 0 : index
    %336 = vector.load %arg3[%c0_151, %c0_152] : memref<16x48xf32, #tpu.memory_space<vmem>>, vector<16x48xf32>
    %cst_153 = arith.constant dense<0.000000e+00> : vector<2x48xf32>
    %337 = tpu.matmul %325, %336, %cst_153 {dimension_numbers = #tpu.dot_dimension_numbers<[1], [0], [0], [1], [0, 0, 1, 1], [], []>} : vector<2x16xf32>, vector<16x48xf32>, vector<2x48xf32> -> vector<2x48xf32>
    %c0_154 = arith.constant 0 : index
    %c0_155 = arith.constant 0 : index
    %338 = vector.load %arg4[%c0_154, %c0_155] : memref<1x48xf32, #tpu.memory_space<vmem>>, vector<1x48xf32>
    %339 = vector.broadcast %338 : vector<1x48xf32> to vector<2x48xf32>
    %340 = arith.addf %337, %339 : vector<2x48xf32>
    %341 = vector.extract_strided_slice %335 {offsets = [0, 0], sizes = [2, 16], strides = [1, 1]} : vector<2x48xf32> to vector<2x16xf32>
    %342 = vector.extract_strided_slice %340 {offsets = [0, 0], sizes = [2, 16], strides = [1, 1]} : vector<2x48xf32> to vector<2x16xf32>
    %343 = arith.addf %341, %342 : vector<2x16xf32>
    %344 = arith.negf %343 : vector<2x16xf32>
    %345 = math.exp %344 : vector<2x16xf32>
    %cst_156 = arith.constant 1.000000e+00 : f32
    %346 = vector.broadcast %cst_156 : f32 to vector<2x16xf32>
    %347 = arith.addf %346, %345 : vector<2x16xf32>
    %348 = arith.divf %346, %347 : vector<2x16xf32>
    %349 = vector.extract_strided_slice %335 {offsets = [0, 16], sizes = [2, 16], strides = [1, 1]} : vector<2x48xf32> to vector<2x16xf32>
    %350 = vector.extract_strided_slice %340 {offsets = [0, 16], sizes = [2, 16], strides = [1, 1]} : vector<2x48xf32> to vector<2x16xf32>
    %351 = arith.addf %349, %350 : vector<2x16xf32>
    %352 = arith.negf %351 : vector<2x16xf32>
    %353 = math.exp %352 : vector<2x16xf32>
    %cst_157 = arith.constant 1.000000e+00 : f32
    %354 = vector.broadcast %cst_157 : f32 to vector<2x16xf32>
    %355 = arith.addf %354, %353 : vector<2x16xf32>
    %356 = arith.divf %354, %355 : vector<2x16xf32>
    %357 = vector.extract_strided_slice %335 {offsets = [0, 32], sizes = [2, 16], strides = [1, 1]} : vector<2x48xf32> to vector<2x16xf32>
    %358 = vector.extract_strided_slice %340 {offsets = [0, 32], sizes = [2, 16], strides = [1, 1]} : vector<2x48xf32> to vector<2x16xf32>
    %359 = arith.mulf %348, %358 : vector<2x16xf32>
    %360 = arith.addf %357, %359 : vector<2x16xf32>
    %361 = math.tanh %360 : vector<2x16xf32>
    %cst_158 = arith.constant 1.000000e+00 : f32
    %362 = vector.broadcast %cst_158 : f32 to vector<2x16xf32>
    %363 = arith.subf %362, %356 : vector<2x16xf32>
    %364 = arith.mulf %363, %361 : vector<2x16xf32>
    %365 = arith.mulf %356, %325 : vector<2x16xf32>
    %366 = arith.addf %364, %365 : vector<2x16xf32>
    %c8_159 = arith.constant 8 : index
    %c0_160 = arith.constant 0 : index
    %c0_161 = arith.constant 0 : index
    %367 = vector.load %arg5[%c8_159, %c0_160, %c0_161] : memref<16x2x16xf32, #tpu.memory_space<vmem>>, vector<1x2x16xf32>
    %368 = vector.shape_cast %367 : vector<1x2x16xf32> to vector<2x16xf32>
    %369 = vector.shape_cast %366 : vector<2x16xf32> to vector<1x2x16xf32>
    tpu.vector_store %arg5[%c8_159, %c0_160, %c0_161], %369 {strides = array<i32>} : memref<16x2x16xf32, #tpu.memory_space<vmem>>, vector<1x2x16xf32>,
    %c9 = arith.constant 9 : index
    %c0_162 = arith.constant 0 : index
    %c0_163 = arith.constant 0 : index
    %370 = vector.load %arg0[%c9, %c0_162, %c0_163] : memref<16x2x8xf32, #tpu.memory_space<vmem>>, vector<1x2x8xf32>
    %371 = vector.shape_cast %370 : vector<1x2x8xf32> to vector<2x8xf32>
    %c0_164 = arith.constant 0 : index
    %c0_165 = arith.constant 0 : index
    %372 = vector.load %arg1[%c0_164, %c0_165] : memref<8x48xf32, #tpu.memory_space<vmem>>, vector<8x48xf32>
    %cst_166 = arith.constant dense<0.000000e+00> : vector<2x48xf32>
    %373 = tpu.matmul %371, %372, %cst_166 {dimension_numbers = #tpu.dot_dimension_numbers<[1], [0], [0], [1], [0, 0, 1, 1], [], []>} : vector<2x8xf32>, vector<8x48xf32>, vector<2x48xf32> -> vector<2x48xf32>
    %c0_167 = arith.constant 0 : index
    %c0_168 = arith.constant 0 : index
    %374 = vector.load %arg2[%c0_167, %c0_168] : memref<1x48xf32, #tpu.memory_space<vmem>>, vector<1x48xf32>
    %375 = vector.broadcast %374 : vector<1x48xf32> to vector<2x48xf32>
    %376 = arith.addf %373, %375 : vector<2x48xf32>
    %c0_169 = arith.constant 0 : index
    %c0_170 = arith.constant 0 : index
    %377 = vector.load %arg3[%c0_169, %c0_170] : memref<16x48xf32, #tpu.memory_space<vmem>>, vector<16x48xf32>
    %cst_171 = arith.constant dense<0.000000e+00> : vector<2x48xf32>
    %378 = tpu.matmul %366, %377, %cst_171 {dimension_numbers = #tpu.dot_dimension_numbers<[1], [0], [0], [1], [0, 0, 1, 1], [], []>} : vector<2x16xf32>, vector<16x48xf32>, vector<2x48xf32> -> vector<2x48xf32>
    %c0_172 = arith.constant 0 : index
    %c0_173 = arith.constant 0 : index
    %379 = vector.load %arg4[%c0_172, %c0_173] : memref<1x48xf32, #tpu.memory_space<vmem>>, vector<1x48xf32>
    %380 = vector.broadcast %379 : vector<1x48xf32> to vector<2x48xf32>
    %381 = arith.addf %378, %380 : vector<2x48xf32>
    %382 = vector.extract_strided_slice %376 {offsets = [0, 0], sizes = [2, 16], strides = [1, 1]} : vector<2x48xf32> to vector<2x16xf32>
    %383 = vector.extract_strided_slice %381 {offsets = [0, 0], sizes = [2, 16], strides = [1, 1]} : vector<2x48xf32> to vector<2x16xf32>
    %384 = arith.addf %382, %383 : vector<2x16xf32>
    %385 = arith.negf %384 : vector<2x16xf32>
    %386 = math.exp %385 : vector<2x16xf32>
    %cst_174 = arith.constant 1.000000e+00 : f32
    %387 = vector.broadcast %cst_174 : f32 to vector<2x16xf32>
    %388 = arith.addf %387, %386 : vector<2x16xf32>
    %389 = arith.divf %387, %388 : vector<2x16xf32>
    %390 = vector.extract_strided_slice %376 {offsets = [0, 16], sizes = [2, 16], strides = [1, 1]} : vector<2x48xf32> to vector<2x16xf32>
    %391 = vector.extract_strided_slice %381 {offsets = [0, 16], sizes = [2, 16], strides = [1, 1]} : vector<2x48xf32> to vector<2x16xf32>
    %392 = arith.addf %390, %391 : vector<2x16xf32>
    %393 = arith.negf %392 : vector<2x16xf32>
    %394 = math.exp %393 : vector<2x16xf32>
    %cst_175 = arith.constant 1.000000e+00 : f32
    %395 = vector.broadcast %cst_175 : f32 to vector<2x16xf32>
    %396 = arith.addf %395, %394 : vector<2x16xf32>
    %397 = arith.divf %395, %396 : vector<2x16xf32>
    %398 = vector.extract_strided_slice %376 {offsets = [0, 32], sizes = [2, 16], strides = [1, 1]} : vector<2x48xf32> to vector<2x16xf32>
    %399 = vector.extract_strided_slice %381 {offsets = [0, 32], sizes = [2, 16], strides = [1, 1]} : vector<2x48xf32> to vector<2x16xf32>
    %400 = arith.mulf %389, %399 : vector<2x16xf32>
    %401 = arith.addf %398, %400 : vector<2x16xf32>
    %402 = math.tanh %401 : vector<2x16xf32>
    %cst_176 = arith.constant 1.000000e+00 : f32
    %403 = vector.broadcast %cst_176 : f32 to vector<2x16xf32>
    %404 = arith.subf %403, %397 : vector<2x16xf32>
    %405 = arith.mulf %404, %402 : vector<2x16xf32>
    %406 = arith.mulf %397, %366 : vector<2x16xf32>
    %407 = arith.addf %405, %406 : vector<2x16xf32>
    %c9_177 = arith.constant 9 : index
    %c0_178 = arith.constant 0 : index
    %c0_179 = arith.constant 0 : index
    %408 = vector.load %arg5[%c9_177, %c0_178, %c0_179] : memref<16x2x16xf32, #tpu.memory_space<vmem>>, vector<1x2x16xf32>
    %409 = vector.shape_cast %408 : vector<1x2x16xf32> to vector<2x16xf32>
    %410 = vector.shape_cast %407 : vector<2x16xf32> to vector<1x2x16xf32>
    tpu.vector_store %arg5[%c9_177, %c0_178, %c0_179], %410 {strides = array<i32>} : memref<16x2x16xf32, #tpu.memory_space<vmem>>, vector<1x2x16xf32>,
    %c10 = arith.constant 10 : index
    %c0_180 = arith.constant 0 : index
    %c0_181 = arith.constant 0 : index
    %411 = vector.load %arg0[%c10, %c0_180, %c0_181] : memref<16x2x8xf32, #tpu.memory_space<vmem>>, vector<1x2x8xf32>
    %412 = vector.shape_cast %411 : vector<1x2x8xf32> to vector<2x8xf32>
    %c0_182 = arith.constant 0 : index
    %c0_183 = arith.constant 0 : index
    %413 = vector.load %arg1[%c0_182, %c0_183] : memref<8x48xf32, #tpu.memory_space<vmem>>, vector<8x48xf32>
    %cst_184 = arith.constant dense<0.000000e+00> : vector<2x48xf32>
    %414 = tpu.matmul %412, %413, %cst_184 {dimension_numbers = #tpu.dot_dimension_numbers<[1], [0], [0], [1], [0, 0, 1, 1], [], []>} : vector<2x8xf32>, vector<8x48xf32>, vector<2x48xf32> -> vector<2x48xf32>
    %c0_185 = arith.constant 0 : index
    %c0_186 = arith.constant 0 : index
    %415 = vector.load %arg2[%c0_185, %c0_186] : memref<1x48xf32, #tpu.memory_space<vmem>>, vector<1x48xf32>
    %416 = vector.broadcast %415 : vector<1x48xf32> to vector<2x48xf32>
    %417 = arith.addf %414, %416 : vector<2x48xf32>
    %c0_187 = arith.constant 0 : index
    %c0_188 = arith.constant 0 : index
    %418 = vector.load %arg3[%c0_187, %c0_188] : memref<16x48xf32, #tpu.memory_space<vmem>>, vector<16x48xf32>
    %cst_189 = arith.constant dense<0.000000e+00> : vector<2x48xf32>
    %419 = tpu.matmul %407, %418, %cst_189 {dimension_numbers = #tpu.dot_dimension_numbers<[1], [0], [0], [1], [0, 0, 1, 1], [], []>} : vector<2x16xf32>, vector<16x48xf32>, vector<2x48xf32> -> vector<2x48xf32>
    %c0_190 = arith.constant 0 : index
    %c0_191 = arith.constant 0 : index
    %420 = vector.load %arg4[%c0_190, %c0_191] : memref<1x48xf32, #tpu.memory_space<vmem>>, vector<1x48xf32>
    %421 = vector.broadcast %420 : vector<1x48xf32> to vector<2x48xf32>
    %422 = arith.addf %419, %421 : vector<2x48xf32>
    %423 = vector.extract_strided_slice %417 {offsets = [0, 0], sizes = [2, 16], strides = [1, 1]} : vector<2x48xf32> to vector<2x16xf32>
    %424 = vector.extract_strided_slice %422 {offsets = [0, 0], sizes = [2, 16], strides = [1, 1]} : vector<2x48xf32> to vector<2x16xf32>
    %425 = arith.addf %423, %424 : vector<2x16xf32>
    %426 = arith.negf %425 : vector<2x16xf32>
    %427 = math.exp %426 : vector<2x16xf32>
    %cst_192 = arith.constant 1.000000e+00 : f32
    %428 = vector.broadcast %cst_192 : f32 to vector<2x16xf32>
    %429 = arith.addf %428, %427 : vector<2x16xf32>
    %430 = arith.divf %428, %429 : vector<2x16xf32>
    %431 = vector.extract_strided_slice %417 {offsets = [0, 16], sizes = [2, 16], strides = [1, 1]} : vector<2x48xf32> to vector<2x16xf32>
    %432 = vector.extract_strided_slice %422 {offsets = [0, 16], sizes = [2, 16], strides = [1, 1]} : vector<2x48xf32> to vector<2x16xf32>
    %433 = arith.addf %431, %432 : vector<2x16xf32>
    %434 = arith.negf %433 : vector<2x16xf32>
    %435 = math.exp %434 : vector<2x16xf32>
    %cst_193 = arith.constant 1.000000e+00 : f32
    %436 = vector.broadcast %cst_193 : f32 to vector<2x16xf32>
    %437 = arith.addf %436, %435 : vector<2x16xf32>
    %438 = arith.divf %436, %437 : vector<2x16xf32>
    %439 = vector.extract_strided_slice %417 {offsets = [0, 32], sizes = [2, 16], strides = [1, 1]} : vector<2x48xf32> to vector<2x16xf32>
    %440 = vector.extract_strided_slice %422 {offsets = [0, 32], sizes = [2, 16], strides = [1, 1]} : vector<2x48xf32> to vector<2x16xf32>
    %441 = arith.mulf %430, %440 : vector<2x16xf32>
    %442 = arith.addf %439, %441 : vector<2x16xf32>
    %443 = math.tanh %442 : vector<2x16xf32>
    %cst_194 = arith.constant 1.000000e+00 : f32
    %444 = vector.broadcast %cst_194 : f32 to vector<2x16xf32>
    %445 = arith.subf %444, %438 : vector<2x16xf32>
    %446 = arith.mulf %445, %443 : vector<2x16xf32>
    %447 = arith.mulf %438, %407 : vector<2x16xf32>
    %448 = arith.addf %446, %447 : vector<2x16xf32>
    %c10_195 = arith.constant 10 : index
    %c0_196 = arith.constant 0 : index
    %c0_197 = arith.constant 0 : index
    %449 = vector.load %arg5[%c10_195, %c0_196, %c0_197] : memref<16x2x16xf32, #tpu.memory_space<vmem>>, vector<1x2x16xf32>
    %450 = vector.shape_cast %449 : vector<1x2x16xf32> to vector<2x16xf32>
    %451 = vector.shape_cast %448 : vector<2x16xf32> to vector<1x2x16xf32>
    tpu.vector_store %arg5[%c10_195, %c0_196, %c0_197], %451 {strides = array<i32>} : memref<16x2x16xf32, #tpu.memory_space<vmem>>, vector<1x2x16xf32>,
    %c11 = arith.constant 11 : index
    %c0_198 = arith.constant 0 : index
    %c0_199 = arith.constant 0 : index
    %452 = vector.load %arg0[%c11, %c0_198, %c0_199] : memref<16x2x8xf32, #tpu.memory_space<vmem>>, vector<1x2x8xf32>
    %453 = vector.shape_cast %452 : vector<1x2x8xf32> to vector<2x8xf32>
    %c0_200 = arith.constant 0 : index
    %c0_201 = arith.constant 0 : index
    %454 = vector.load %arg1[%c0_200, %c0_201] : memref<8x48xf32, #tpu.memory_space<vmem>>, vector<8x48xf32>
    %cst_202 = arith.constant dense<0.000000e+00> : vector<2x48xf32>
    %455 = tpu.matmul %453, %454, %cst_202 {dimension_numbers = #tpu.dot_dimension_numbers<[1], [0], [0], [1], [0, 0, 1, 1], [], []>} : vector<2x8xf32>, vector<8x48xf32>, vector<2x48xf32> -> vector<2x48xf32>
    %c0_203 = arith.constant 0 : index
    %c0_204 = arith.constant 0 : index
    %456 = vector.load %arg2[%c0_203, %c0_204] : memref<1x48xf32, #tpu.memory_space<vmem>>, vector<1x48xf32>
    %457 = vector.broadcast %456 : vector<1x48xf32> to vector<2x48xf32>
    %458 = arith.addf %455, %457 : vector<2x48xf32>
    %c0_205 = arith.constant 0 : index
    %c0_206 = arith.constant 0 : index
    %459 = vector.load %arg3[%c0_205, %c0_206] : memref<16x48xf32, #tpu.memory_space<vmem>>, vector<16x48xf32>
    %cst_207 = arith.constant dense<0.000000e+00> : vector<2x48xf32>
    %460 = tpu.matmul %448, %459, %cst_207 {dimension_numbers = #tpu.dot_dimension_numbers<[1], [0], [0], [1], [0, 0, 1, 1], [], []>} : vector<2x16xf32>, vector<16x48xf32>, vector<2x48xf32> -> vector<2x48xf32>
    %c0_208 = arith.constant 0 : index
    %c0_209 = arith.constant 0 : index
    %461 = vector.load %arg4[%c0_208, %c0_209] : memref<1x48xf32, #tpu.memory_space<vmem>>, vector<1x48xf32>
    %462 = vector.broadcast %461 : vector<1x48xf32> to vector<2x48xf32>
    %463 = arith.addf %460, %462 : vector<2x48xf32>
    %464 = vector.extract_strided_slice %458 {offsets = [0, 0], sizes = [2, 16], strides = [1, 1]} : vector<2x48xf32> to vector<2x16xf32>
    %465 = vector.extract_strided_slice %463 {offsets = [0, 0], sizes = [2, 16], strides = [1, 1]} : vector<2x48xf32> to vector<2x16xf32>
    %466 = arith.addf %464, %465 : vector<2x16xf32>
    %467 = arith.negf %466 : vector<2x16xf32>
    %468 = math.exp %467 : vector<2x16xf32>
    %cst_210 = arith.constant 1.000000e+00 : f32
    %469 = vector.broadcast %cst_210 : f32 to vector<2x16xf32>
    %470 = arith.addf %469, %468 : vector<2x16xf32>
    %471 = arith.divf %469, %470 : vector<2x16xf32>
    %472 = vector.extract_strided_slice %458 {offsets = [0, 16], sizes = [2, 16], strides = [1, 1]} : vector<2x48xf32> to vector<2x16xf32>
    %473 = vector.extract_strided_slice %463 {offsets = [0, 16], sizes = [2, 16], strides = [1, 1]} : vector<2x48xf32> to vector<2x16xf32>
    %474 = arith.addf %472, %473 : vector<2x16xf32>
    %475 = arith.negf %474 : vector<2x16xf32>
    %476 = math.exp %475 : vector<2x16xf32>
    %cst_211 = arith.constant 1.000000e+00 : f32
    %477 = vector.broadcast %cst_211 : f32 to vector<2x16xf32>
    %478 = arith.addf %477, %476 : vector<2x16xf32>
    %479 = arith.divf %477, %478 : vector<2x16xf32>
    %480 = vector.extract_strided_slice %458 {offsets = [0, 32], sizes = [2, 16], strides = [1, 1]} : vector<2x48xf32> to vector<2x16xf32>
    %481 = vector.extract_strided_slice %463 {offsets = [0, 32], sizes = [2, 16], strides = [1, 1]} : vector<2x48xf32> to vector<2x16xf32>
    %482 = arith.mulf %471, %481 : vector<2x16xf32>
    %483 = arith.addf %480, %482 : vector<2x16xf32>
    %484 = math.tanh %483 : vector<2x16xf32>
    %cst_212 = arith.constant 1.000000e+00 : f32
    %485 = vector.broadcast %cst_212 : f32 to vector<2x16xf32>
    %486 = arith.subf %485, %479 : vector<2x16xf32>
    %487 = arith.mulf %486, %484 : vector<2x16xf32>
    %488 = arith.mulf %479, %448 : vector<2x16xf32>
    %489 = arith.addf %487, %488 : vector<2x16xf32>
    %c11_213 = arith.constant 11 : index
    %c0_214 = arith.constant 0 : index
    %c0_215 = arith.constant 0 : index
    %490 = vector.load %arg5[%c11_213, %c0_214, %c0_215] : memref<16x2x16xf32, #tpu.memory_space<vmem>>, vector<1x2x16xf32>
    %491 = vector.shape_cast %490 : vector<1x2x16xf32> to vector<2x16xf32>
    %492 = vector.shape_cast %489 : vector<2x16xf32> to vector<1x2x16xf32>
    tpu.vector_store %arg5[%c11_213, %c0_214, %c0_215], %492 {strides = array<i32>} : memref<16x2x16xf32, #tpu.memory_space<vmem>>, vector<1x2x16xf32>,
    %c12 = arith.constant 12 : index
    %c0_216 = arith.constant 0 : index
    %c0_217 = arith.constant 0 : index
    %493 = vector.load %arg0[%c12, %c0_216, %c0_217] : memref<16x2x8xf32, #tpu.memory_space<vmem>>, vector<1x2x8xf32>
    %494 = vector.shape_cast %493 : vector<1x2x8xf32> to vector<2x8xf32>
    %c0_218 = arith.constant 0 : index
    %c0_219 = arith.constant 0 : index
    %495 = vector.load %arg1[%c0_218, %c0_219] : memref<8x48xf32, #tpu.memory_space<vmem>>, vector<8x48xf32>
    %cst_220 = arith.constant dense<0.000000e+00> : vector<2x48xf32>
    %496 = tpu.matmul %494, %495, %cst_220 {dimension_numbers = #tpu.dot_dimension_numbers<[1], [0], [0], [1], [0, 0, 1, 1], [], []>} : vector<2x8xf32>, vector<8x48xf32>, vector<2x48xf32> -> vector<2x48xf32>
    %c0_221 = arith.constant 0 : index
    %c0_222 = arith.constant 0 : index
    %497 = vector.load %arg2[%c0_221, %c0_222] : memref<1x48xf32, #tpu.memory_space<vmem>>, vector<1x48xf32>
    %498 = vector.broadcast %497 : vector<1x48xf32> to vector<2x48xf32>
    %499 = arith.addf %496, %498 : vector<2x48xf32>
    %c0_223 = arith.constant 0 : index
    %c0_224 = arith.constant 0 : index
    %500 = vector.load %arg3[%c0_223, %c0_224] : memref<16x48xf32, #tpu.memory_space<vmem>>, vector<16x48xf32>
    %cst_225 = arith.constant dense<0.000000e+00> : vector<2x48xf32>
    %501 = tpu.matmul %489, %500, %cst_225 {dimension_numbers = #tpu.dot_dimension_numbers<[1], [0], [0], [1], [0, 0, 1, 1], [], []>} : vector<2x16xf32>, vector<16x48xf32>, vector<2x48xf32> -> vector<2x48xf32>
    %c0_226 = arith.constant 0 : index
    %c0_227 = arith.constant 0 : index
    %502 = vector.load %arg4[%c0_226, %c0_227] : memref<1x48xf32, #tpu.memory_space<vmem>>, vector<1x48xf32>
    %503 = vector.broadcast %502 : vector<1x48xf32> to vector<2x48xf32>
    %504 = arith.addf %501, %503 : vector<2x48xf32>
    %505 = vector.extract_strided_slice %499 {offsets = [0, 0], sizes = [2, 16], strides = [1, 1]} : vector<2x48xf32> to vector<2x16xf32>
    %506 = vector.extract_strided_slice %504 {offsets = [0, 0], sizes = [2, 16], strides = [1, 1]} : vector<2x48xf32> to vector<2x16xf32>
    %507 = arith.addf %505, %506 : vector<2x16xf32>
    %508 = arith.negf %507 : vector<2x16xf32>
    %509 = math.exp %508 : vector<2x16xf32>
    %cst_228 = arith.constant 1.000000e+00 : f32
    %510 = vector.broadcast %cst_228 : f32 to vector<2x16xf32>
    %511 = arith.addf %510, %509 : vector<2x16xf32>
    %512 = arith.divf %510, %511 : vector<2x16xf32>
    %513 = vector.extract_strided_slice %499 {offsets = [0, 16], sizes = [2, 16], strides = [1, 1]} : vector<2x48xf32> to vector<2x16xf32>
    %514 = vector.extract_strided_slice %504 {offsets = [0, 16], sizes = [2, 16], strides = [1, 1]} : vector<2x48xf32> to vector<2x16xf32>
    %515 = arith.addf %513, %514 : vector<2x16xf32>
    %516 = arith.negf %515 : vector<2x16xf32>
    %517 = math.exp %516 : vector<2x16xf32>
    %cst_229 = arith.constant 1.000000e+00 : f32
    %518 = vector.broadcast %cst_229 : f32 to vector<2x16xf32>
    %519 = arith.addf %518, %517 : vector<2x16xf32>
    %520 = arith.divf %518, %519 : vector<2x16xf32>
    %521 = vector.extract_strided_slice %499 {offsets = [0, 32], sizes = [2, 16], strides = [1, 1]} : vector<2x48xf32> to vector<2x16xf32>
    %522 = vector.extract_strided_slice %504 {offsets = [0, 32], sizes = [2, 16], strides = [1, 1]} : vector<2x48xf32> to vector<2x16xf32>
    %523 = arith.mulf %512, %522 : vector<2x16xf32>
    %524 = arith.addf %521, %523 : vector<2x16xf32>
    %525 = math.tanh %524 : vector<2x16xf32>
    %cst_230 = arith.constant 1.000000e+00 : f32
    %526 = vector.broadcast %cst_230 : f32 to vector<2x16xf32>
    %527 = arith.subf %526, %520 : vector<2x16xf32>
    %528 = arith.mulf %527, %525 : vector<2x16xf32>
    %529 = arith.mulf %520, %489 : vector<2x16xf32>
    %530 = arith.addf %528, %529 : vector<2x16xf32>
    %c12_231 = arith.constant 12 : index
    %c0_232 = arith.constant 0 : index
    %c0_233 = arith.constant 0 : index
    %531 = vector.load %arg5[%c12_231, %c0_232, %c0_233] : memref<16x2x16xf32, #tpu.memory_space<vmem>>, vector<1x2x16xf32>
    %532 = vector.shape_cast %531 : vector<1x2x16xf32> to vector<2x16xf32>
    %533 = vector.shape_cast %530 : vector<2x16xf32> to vector<1x2x16xf32>
    tpu.vector_store %arg5[%c12_231, %c0_232, %c0_233], %533 {strides = array<i32>} : memref<16x2x16xf32, #tpu.memory_space<vmem>>, vector<1x2x16xf32>,
    %c13 = arith.constant 13 : index
    %c0_234 = arith.constant 0 : index
    %c0_235 = arith.constant 0 : index
    %534 = vector.load %arg0[%c13, %c0_234, %c0_235] : memref<16x2x8xf32, #tpu.memory_space<vmem>>, vector<1x2x8xf32>
    %535 = vector.shape_cast %534 : vector<1x2x8xf32> to vector<2x8xf32>
    %c0_236 = arith.constant 0 : index
    %c0_237 = arith.constant 0 : index
    %536 = vector.load %arg1[%c0_236, %c0_237] : memref<8x48xf32, #tpu.memory_space<vmem>>, vector<8x48xf32>
    %cst_238 = arith.constant dense<0.000000e+00> : vector<2x48xf32>
    %537 = tpu.matmul %535, %536, %cst_238 {dimension_numbers = #tpu.dot_dimension_numbers<[1], [0], [0], [1], [0, 0, 1, 1], [], []>} : vector<2x8xf32>, vector<8x48xf32>, vector<2x48xf32> -> vector<2x48xf32>
    %c0_239 = arith.constant 0 : index
    %c0_240 = arith.constant 0 : index
    %538 = vector.load %arg2[%c0_239, %c0_240] : memref<1x48xf32, #tpu.memory_space<vmem>>, vector<1x48xf32>
    %539 = vector.broadcast %538 : vector<1x48xf32> to vector<2x48xf32>
    %540 = arith.addf %537, %539 : vector<2x48xf32>
    %c0_241 = arith.constant 0 : index
    %c0_242 = arith.constant 0 : index
    %541 = vector.load %arg3[%c0_241, %c0_242] : memref<16x48xf32, #tpu.memory_space<vmem>>, vector<16x48xf32>
    %cst_243 = arith.constant dense<0.000000e+00> : vector<2x48xf32>
    %542 = tpu.matmul %530, %541, %cst_243 {dimension_numbers = #tpu.dot_dimension_numbers<[1], [0], [0], [1], [0, 0, 1, 1], [], []>} : vector<2x16xf32>, vector<16x48xf32>, vector<2x48xf32> -> vector<2x48xf32>
    %c0_244 = arith.constant 0 : index
    %c0_245 = arith.constant 0 : index
    %543 = vector.load %arg4[%c0_244, %c0_245] : memref<1x48xf32, #tpu.memory_space<vmem>>, vector<1x48xf32>
    %544 = vector.broadcast %543 : vector<1x48xf32> to vector<2x48xf32>
    %545 = arith.addf %542, %544 : vector<2x48xf32>
    %546 = vector.extract_strided_slice %540 {offsets = [0, 0], sizes = [2, 16], strides = [1, 1]} : vector<2x48xf32> to vector<2x16xf32>
    %547 = vector.extract_strided_slice %545 {offsets = [0, 0], sizes = [2, 16], strides = [1, 1]} : vector<2x48xf32> to vector<2x16xf32>
    %548 = arith.addf %546, %547 : vector<2x16xf32>
    %549 = arith.negf %548 : vector<2x16xf32>
    %550 = math.exp %549 : vector<2x16xf32>
    %cst_246 = arith.constant 1.000000e+00 : f32
    %551 = vector.broadcast %cst_246 : f32 to vector<2x16xf32>
    %552 = arith.addf %551, %550 : vector<2x16xf32>
    %553 = arith.divf %551, %552 : vector<2x16xf32>
    %554 = vector.extract_strided_slice %540 {offsets = [0, 16], sizes = [2, 16], strides = [1, 1]} : vector<2x48xf32> to vector<2x16xf32>
    %555 = vector.extract_strided_slice %545 {offsets = [0, 16], sizes = [2, 16], strides = [1, 1]} : vector<2x48xf32> to vector<2x16xf32>
    %556 = arith.addf %554, %555 : vector<2x16xf32>
    %557 = arith.negf %556 : vector<2x16xf32>
    %558 = math.exp %557 : vector<2x16xf32>
    %cst_247 = arith.constant 1.000000e+00 : f32
    %559 = vector.broadcast %cst_247 : f32 to vector<2x16xf32>
    %560 = arith.addf %559, %558 : vector<2x16xf32>
    %561 = arith.divf %559, %560 : vector<2x16xf32>
    %562 = vector.extract_strided_slice %540 {offsets = [0, 32], sizes = [2, 16], strides = [1, 1]} : vector<2x48xf32> to vector<2x16xf32>
    %563 = vector.extract_strided_slice %545 {offsets = [0, 32], sizes = [2, 16], strides = [1, 1]} : vector<2x48xf32> to vector<2x16xf32>
    %564 = arith.mulf %553, %563 : vector<2x16xf32>
    %565 = arith.addf %562, %564 : vector<2x16xf32>
    %566 = math.tanh %565 : vector<2x16xf32>
    %cst_248 = arith.constant 1.000000e+00 : f32
    %567 = vector.broadcast %cst_248 : f32 to vector<2x16xf32>
    %568 = arith.subf %567, %561 : vector<2x16xf32>
    %569 = arith.mulf %568, %566 : vector<2x16xf32>
    %570 = arith.mulf %561, %530 : vector<2x16xf32>
    %571 = arith.addf %569, %570 : vector<2x16xf32>
    %c13_249 = arith.constant 13 : index
    %c0_250 = arith.constant 0 : index
    %c0_251 = arith.constant 0 : index
    %572 = vector.load %arg5[%c13_249, %c0_250, %c0_251] : memref<16x2x16xf32, #tpu.memory_space<vmem>>, vector<1x2x16xf32>
    %573 = vector.shape_cast %572 : vector<1x2x16xf32> to vector<2x16xf32>
    %574 = vector.shape_cast %571 : vector<2x16xf32> to vector<1x2x16xf32>
    tpu.vector_store %arg5[%c13_249, %c0_250, %c0_251], %574 {strides = array<i32>} : memref<16x2x16xf32, #tpu.memory_space<vmem>>, vector<1x2x16xf32>,
    %c14 = arith.constant 14 : index
    %c0_252 = arith.constant 0 : index
    %c0_253 = arith.constant 0 : index
    %575 = vector.load %arg0[%c14, %c0_252, %c0_253] : memref<16x2x8xf32, #tpu.memory_space<vmem>>, vector<1x2x8xf32>
    %576 = vector.shape_cast %575 : vector<1x2x8xf32> to vector<2x8xf32>
    %c0_254 = arith.constant 0 : index
    %c0_255 = arith.constant 0 : index
    %577 = vector.load %arg1[%c0_254, %c0_255] : memref<8x48xf32, #tpu.memory_space<vmem>>, vector<8x48xf32>
    %cst_256 = arith.constant dense<0.000000e+00> : vector<2x48xf32>
    %578 = tpu.matmul %576, %577, %cst_256 {dimension_numbers = #tpu.dot_dimension_numbers<[1], [0], [0], [1], [0, 0, 1, 1], [], []>} : vector<2x8xf32>, vector<8x48xf32>, vector<2x48xf32> -> vector<2x48xf32>
    %c0_257 = arith.constant 0 : index
    %c0_258 = arith.constant 0 : index
    %579 = vector.load %arg2[%c0_257, %c0_258] : memref<1x48xf32, #tpu.memory_space<vmem>>, vector<1x48xf32>
    %580 = vector.broadcast %579 : vector<1x48xf32> to vector<2x48xf32>
    %581 = arith.addf %578, %580 : vector<2x48xf32>
    %c0_259 = arith.constant 0 : index
    %c0_260 = arith.constant 0 : index
    %582 = vector.load %arg3[%c0_259, %c0_260] : memref<16x48xf32, #tpu.memory_space<vmem>>, vector<16x48xf32>
    %cst_261 = arith.constant dense<0.000000e+00> : vector<2x48xf32>
    %583 = tpu.matmul %571, %582, %cst_261 {dimension_numbers = #tpu.dot_dimension_numbers<[1], [0], [0], [1], [0, 0, 1, 1], [], []>} : vector<2x16xf32>, vector<16x48xf32>, vector<2x48xf32> -> vector<2x48xf32>
    %c0_262 = arith.constant 0 : index
    %c0_263 = arith.constant 0 : index
    %584 = vector.load %arg4[%c0_262, %c0_263] : memref<1x48xf32, #tpu.memory_space<vmem>>, vector<1x48xf32>
    %585 = vector.broadcast %584 : vector<1x48xf32> to vector<2x48xf32>
    %586 = arith.addf %583, %585 : vector<2x48xf32>
    %587 = vector.extract_strided_slice %581 {offsets = [0, 0], sizes = [2, 16], strides = [1, 1]} : vector<2x48xf32> to vector<2x16xf32>
    %588 = vector.extract_strided_slice %586 {offsets = [0, 0], sizes = [2, 16], strides = [1, 1]} : vector<2x48xf32> to vector<2x16xf32>
    %589 = arith.addf %587, %588 : vector<2x16xf32>
    %590 = arith.negf %589 : vector<2x16xf32>
    %591 = math.exp %590 : vector<2x16xf32>
    %cst_264 = arith.constant 1.000000e+00 : f32
    %592 = vector.broadcast %cst_264 : f32 to vector<2x16xf32>
    %593 = arith.addf %592, %591 : vector<2x16xf32>
    %594 = arith.divf %592, %593 : vector<2x16xf32>
    %595 = vector.extract_strided_slice %581 {offsets = [0, 16], sizes = [2, 16], strides = [1, 1]} : vector<2x48xf32> to vector<2x16xf32>
    %596 = vector.extract_strided_slice %586 {offsets = [0, 16], sizes = [2, 16], strides = [1, 1]} : vector<2x48xf32> to vector<2x16xf32>
    %597 = arith.addf %595, %596 : vector<2x16xf32>
    %598 = arith.negf %597 : vector<2x16xf32>
    %599 = math.exp %598 : vector<2x16xf32>
    %cst_265 = arith.constant 1.000000e+00 : f32
    %600 = vector.broadcast %cst_265 : f32 to vector<2x16xf32>
    %601 = arith.addf %600, %599 : vector<2x16xf32>
    %602 = arith.divf %600, %601 : vector<2x16xf32>
    %603 = vector.extract_strided_slice %581 {offsets = [0, 32], sizes = [2, 16], strides = [1, 1]} : vector<2x48xf32> to vector<2x16xf32>
    %604 = vector.extract_strided_slice %586 {offsets = [0, 32], sizes = [2, 16], strides = [1, 1]} : vector<2x48xf32> to vector<2x16xf32>
    %605 = arith.mulf %594, %604 : vector<2x16xf32>
    %606 = arith.addf %603, %605 : vector<2x16xf32>
    %607 = math.tanh %606 : vector<2x16xf32>
    %cst_266 = arith.constant 1.000000e+00 : f32
    %608 = vector.broadcast %cst_266 : f32 to vector<2x16xf32>
    %609 = arith.subf %608, %602 : vector<2x16xf32>
    %610 = arith.mulf %609, %607 : vector<2x16xf32>
    %611 = arith.mulf %602, %571 : vector<2x16xf32>
    %612 = arith.addf %610, %611 : vector<2x16xf32>
    %c14_267 = arith.constant 14 : index
    %c0_268 = arith.constant 0 : index
    %c0_269 = arith.constant 0 : index
    %613 = vector.load %arg5[%c14_267, %c0_268, %c0_269] : memref<16x2x16xf32, #tpu.memory_space<vmem>>, vector<1x2x16xf32>
    %614 = vector.shape_cast %613 : vector<1x2x16xf32> to vector<2x16xf32>
    %615 = vector.shape_cast %612 : vector<2x16xf32> to vector<1x2x16xf32>
    tpu.vector_store %arg5[%c14_267, %c0_268, %c0_269], %615 {strides = array<i32>} : memref<16x2x16xf32, #tpu.memory_space<vmem>>, vector<1x2x16xf32>,
    %c15 = arith.constant 15 : index
    %c0_270 = arith.constant 0 : index
    %c0_271 = arith.constant 0 : index
    %616 = vector.load %arg0[%c15, %c0_270, %c0_271] : memref<16x2x8xf32, #tpu.memory_space<vmem>>, vector<1x2x8xf32>
    %617 = vector.shape_cast %616 : vector<1x2x8xf32> to vector<2x8xf32>
    %c0_272 = arith.constant 0 : index
    %c0_273 = arith.constant 0 : index
    %618 = vector.load %arg1[%c0_272, %c0_273] : memref<8x48xf32, #tpu.memory_space<vmem>>, vector<8x48xf32>
    %cst_274 = arith.constant dense<0.000000e+00> : vector<2x48xf32>
    %619 = tpu.matmul %617, %618, %cst_274 {dimension_numbers = #tpu.dot_dimension_numbers<[1], [0], [0], [1], [0, 0, 1, 1], [], []>} : vector<2x8xf32>, vector<8x48xf32>, vector<2x48xf32> -> vector<2x48xf32>
    %c0_275 = arith.constant 0 : index
    %c0_276 = arith.constant 0 : index
    %620 = vector.load %arg2[%c0_275, %c0_276] : memref<1x48xf32, #tpu.memory_space<vmem>>, vector<1x48xf32>
    %621 = vector.broadcast %620 : vector<1x48xf32> to vector<2x48xf32>
    %622 = arith.addf %619, %621 : vector<2x48xf32>
    %c0_277 = arith.constant 0 : index
    %c0_278 = arith.constant 0 : index
    %623 = vector.load %arg3[%c0_277, %c0_278] : memref<16x48xf32, #tpu.memory_space<vmem>>, vector<16x48xf32>
    %cst_279 = arith.constant dense<0.000000e+00> : vector<2x48xf32>
    %624 = tpu.matmul %612, %623, %cst_279 {dimension_numbers = #tpu.dot_dimension_numbers<[1], [0], [0], [1], [0, 0, 1, 1], [], []>} : vector<2x16xf32>, vector<16x48xf32>, vector<2x48xf32> -> vector<2x48xf32>
    %c0_280 = arith.constant 0 : index
    %c0_281 = arith.constant 0 : index
    %625 = vector.load %arg4[%c0_280, %c0_281] : memref<1x48xf32, #tpu.memory_space<vmem>>, vector<1x48xf32>
    %626 = vector.broadcast %625 : vector<1x48xf32> to vector<2x48xf32>
    %627 = arith.addf %624, %626 : vector<2x48xf32>
    %628 = vector.extract_strided_slice %622 {offsets = [0, 0], sizes = [2, 16], strides = [1, 1]} : vector<2x48xf32> to vector<2x16xf32>
    %629 = vector.extract_strided_slice %627 {offsets = [0, 0], sizes = [2, 16], strides = [1, 1]} : vector<2x48xf32> to vector<2x16xf32>
    %630 = arith.addf %628, %629 : vector<2x16xf32>
    %631 = arith.negf %630 : vector<2x16xf32>
    %632 = math.exp %631 : vector<2x16xf32>
    %cst_282 = arith.constant 1.000000e+00 : f32
    %633 = vector.broadcast %cst_282 : f32 to vector<2x16xf32>
    %634 = arith.addf %633, %632 : vector<2x16xf32>
    %635 = arith.divf %633, %634 : vector<2x16xf32>
    %636 = vector.extract_strided_slice %622 {offsets = [0, 16], sizes = [2, 16], strides = [1, 1]} : vector<2x48xf32> to vector<2x16xf32>
    %637 = vector.extract_strided_slice %627 {offsets = [0, 16], sizes = [2, 16], strides = [1, 1]} : vector<2x48xf32> to vector<2x16xf32>
    %638 = arith.addf %636, %637 : vector<2x16xf32>
    %639 = arith.negf %638 : vector<2x16xf32>
    %640 = math.exp %639 : vector<2x16xf32>
    %cst_283 = arith.constant 1.000000e+00 : f32
    %641 = vector.broadcast %cst_283 : f32 to vector<2x16xf32>
    %642 = arith.addf %641, %640 : vector<2x16xf32>
    %643 = arith.divf %641, %642 : vector<2x16xf32>
    %644 = vector.extract_strided_slice %622 {offsets = [0, 32], sizes = [2, 16], strides = [1, 1]} : vector<2x48xf32> to vector<2x16xf32>
    %645 = vector.extract_strided_slice %627 {offsets = [0, 32], sizes = [2, 16], strides = [1, 1]} : vector<2x48xf32> to vector<2x16xf32>
    %646 = arith.mulf %635, %645 : vector<2x16xf32>
    %647 = arith.addf %644, %646 : vector<2x16xf32>
    %648 = math.tanh %647 : vector<2x16xf32>
    %cst_284 = arith.constant 1.000000e+00 : f32
    %649 = vector.broadcast %cst_284 : f32 to vector<2x16xf32>
    %650 = arith.subf %649, %643 : vector<2x16xf32>
    %651 = arith.mulf %650, %648 : vector<2x16xf32>
    %652 = arith.mulf %643, %612 : vector<2x16xf32>
    %653 = arith.addf %651, %652 : vector<2x16xf32>
    %c15_285 = arith.constant 15 : index
    %c0_286 = arith.constant 0 : index
    %c0_287 = arith.constant 0 : index
    %654 = vector.load %arg5[%c15_285, %c0_286, %c0_287] : memref<16x2x16xf32, #tpu.memory_space<vmem>>, vector<1x2x16xf32>
    %655 = vector.shape_cast %654 : vector<1x2x16xf32> to vector<2x16xf32>
    %656 = vector.shape_cast %653 : vector<2x16xf32> to vector<1x2x16xf32>
    tpu.vector_store %arg5[%c15_285, %c0_286, %c0_287], %656 {strides = array<i32>} : memref<16x2x16xf32, #tpu.memory_space<vmem>>, vector<1x2x16xf32>,
    return
  }
}

module attributes {stable_mosaic.version = 11 : i64} {
  func.func @_attention_kernel(%arg0: memref<2x16x16xf32, #tpu.memory_space<vmem>>, %arg1: memref<2x16x16xf32, #tpu.memory_space<vmem>>, %arg2: memref<1x16xf32, #tpu.memory_space<vmem>>, %arg3: memref<16x1xf32, #tpu.memory_space<vmem>>, %arg4: memref<16x16xf32, #tpu.memory_space<vmem>>) attributes {dimension_semantics = [], scalar_prefetch = 0 : i64, scratch_operands = 0 : i64, tpu.core_type = #tpu.core_type<tc>} {
    %c0 = arith.constant 0 : index
    %c0_0 = arith.constant 0 : index
    %c0_1 = arith.constant 0 : index
    %0 = vector.load %arg0[%c0, %c0_0, %c0_1] : memref<2x16x16xf32, #tpu.memory_space<vmem>>, vector<1x16x16xf32>
    %1 = vector.shape_cast %0 : vector<1x16x16xf32> to vector<16x16xf32>
    %c0_2 = arith.constant 0 : index
    %c0_3 = arith.constant 0 : index
    %2 = vector.load %arg2[%c0_2, %c0_3] : memref<1x16xf32, #tpu.memory_space<vmem>>, vector<1x16xf32>
    %3 = vector.broadcast %2 : vector<1x16xf32> to vector<16x16xf32>
    %4 = arith.mulf %1, %3 : vector<16x16xf32>
    %cst = arith.constant dense<0.000000e+00> : vector<16xf32>
    %5 = vector.multi_reduction <add>, %4, %cst [1] : vector<16x16xf32> to vector<16xf32>
    %6 = vector.shape_cast %5 : vector<16xf32> to vector<16x1xf32>
    %c0_4 = arith.constant 0 : index
    %c0_5 = arith.constant 0 : index
    %c0_6 = arith.constant 0 : index
    %7 = vector.load %arg1[%c0_4, %c0_5, %c0_6] : memref<2x16x16xf32, #tpu.memory_space<vmem>>, vector<1x16x16xf32>
    %8 = vector.shape_cast %7 : vector<1x16x16xf32> to vector<16x16xf32>
    %c0_7 = arith.constant 0 : index
    %c0_8 = arith.constant 0 : index
    %9 = vector.load %arg3[%c0_7, %c0_8] : memref<16x1xf32, #tpu.memory_space<vmem>>, vector<16x1xf32>
    %10 = vector.broadcast %9 : vector<16x1xf32> to vector<16x16xf32>
    %11 = arith.mulf %8, %10 : vector<16x16xf32>
    %cst_9 = arith.constant dense<0.000000e+00> : vector<16xf32>
    %12 = vector.multi_reduction <add>, %11, %cst_9 [0] : vector<16x16xf32> to vector<16xf32>
    %13 = vector.shape_cast %12 : vector<16xf32> to vector<1x16xf32>
    %14 = vector.broadcast %6 : vector<16x1xf32> to vector<16x16xf32>
    %15 = vector.broadcast %13 : vector<1x16xf32> to vector<16x16xf32>
    %16 = arith.addf %14, %15 : vector<16x16xf32>
    %cst_10 = arith.constant 0.000000e+00 : f32
    %17 = vector.broadcast %cst_10 : f32 to vector<16x16xf32>
    %18 = arith.cmpf ogt, %16, %17 : vector<16x16xf32>
    %cst_11 = arith.constant 2.000000e-01 : f32
    %19 = vector.broadcast %cst_11 : f32 to vector<16x16xf32>
    %20 = arith.mulf %19, %16 : vector<16x16xf32>
    %21 = arith.select %18, %16, %20 : vector<16x16xi1>, vector<16x16xf32>
    %cst_12 = arith.constant dense<0xFF800000> : vector<16xf32>
    %22 = vector.multi_reduction <maximumf>, %21, %cst_12 [1] : vector<16x16xf32> to vector<16xf32>
    %23 = vector.shape_cast %22 : vector<16xf32> to vector<16x1xf32>
    %24 = vector.broadcast %23 : vector<16x1xf32> to vector<16x16xf32>
    %25 = arith.subf %21, %24 : vector<16x16xf32>
    %26 = math.exp %25 : vector<16x16xf32>
    %cst_13 = arith.constant dense<0.000000e+00> : vector<16xf32>
    %27 = vector.multi_reduction <add>, %26, %cst_13 [1] : vector<16x16xf32> to vector<16xf32>
    %28 = vector.shape_cast %27 : vector<16xf32> to vector<16x1xf32>
    %29 = vector.broadcast %28 : vector<16x1xf32> to vector<16x16xf32>
    %30 = arith.divf %26, %29 : vector<16x16xf32>
    %c1 = arith.constant 1 : index
    %c0_14 = arith.constant 0 : index
    %c0_15 = arith.constant 0 : index
    %31 = vector.load %arg0[%c1, %c0_14, %c0_15] : memref<2x16x16xf32, #tpu.memory_space<vmem>>, vector<1x16x16xf32>
    %32 = vector.shape_cast %31 : vector<1x16x16xf32> to vector<16x16xf32>
    %c0_16 = arith.constant 0 : index
    %c0_17 = arith.constant 0 : index
    %33 = vector.load %arg2[%c0_16, %c0_17] : memref<1x16xf32, #tpu.memory_space<vmem>>, vector<1x16xf32>
    %34 = vector.broadcast %33 : vector<1x16xf32> to vector<16x16xf32>
    %35 = arith.mulf %32, %34 : vector<16x16xf32>
    %cst_18 = arith.constant dense<0.000000e+00> : vector<16xf32>
    %36 = vector.multi_reduction <add>, %35, %cst_18 [1] : vector<16x16xf32> to vector<16xf32>
    %37 = vector.shape_cast %36 : vector<16xf32> to vector<16x1xf32>
    %c1_19 = arith.constant 1 : index
    %c0_20 = arith.constant 0 : index
    %c0_21 = arith.constant 0 : index
    %38 = vector.load %arg1[%c1_19, %c0_20, %c0_21] : memref<2x16x16xf32, #tpu.memory_space<vmem>>, vector<1x16x16xf32>
    %39 = vector.shape_cast %38 : vector<1x16x16xf32> to vector<16x16xf32>
    %c0_22 = arith.constant 0 : index
    %c0_23 = arith.constant 0 : index
    %40 = vector.load %arg3[%c0_22, %c0_23] : memref<16x1xf32, #tpu.memory_space<vmem>>, vector<16x1xf32>
    %41 = vector.broadcast %40 : vector<16x1xf32> to vector<16x16xf32>
    %42 = arith.mulf %39, %41 : vector<16x16xf32>
    %cst_24 = arith.constant dense<0.000000e+00> : vector<16xf32>
    %43 = vector.multi_reduction <add>, %42, %cst_24 [0] : vector<16x16xf32> to vector<16xf32>
    %44 = vector.shape_cast %43 : vector<16xf32> to vector<1x16xf32>
    %45 = vector.broadcast %37 : vector<16x1xf32> to vector<16x16xf32>
    %46 = vector.broadcast %44 : vector<1x16xf32> to vector<16x16xf32>
    %47 = arith.addf %45, %46 : vector<16x16xf32>
    %cst_25 = arith.constant 0.000000e+00 : f32
    %48 = vector.broadcast %cst_25 : f32 to vector<16x16xf32>
    %49 = arith.cmpf ogt, %47, %48 : vector<16x16xf32>
    %cst_26 = arith.constant 2.000000e-01 : f32
    %50 = vector.broadcast %cst_26 : f32 to vector<16x16xf32>
    %51 = arith.mulf %50, %47 : vector<16x16xf32>
    %52 = arith.select %49, %47, %51 : vector<16x16xi1>, vector<16x16xf32>
    %cst_27 = arith.constant dense<0xFF800000> : vector<16xf32>
    %53 = vector.multi_reduction <maximumf>, %52, %cst_27 [1] : vector<16x16xf32> to vector<16xf32>
    %54 = vector.shape_cast %53 : vector<16xf32> to vector<16x1xf32>
    %55 = vector.broadcast %54 : vector<16x1xf32> to vector<16x16xf32>
    %56 = arith.subf %52, %55 : vector<16x16xf32>
    %57 = math.exp %56 : vector<16x16xf32>
    %cst_28 = arith.constant dense<0.000000e+00> : vector<16xf32>
    %58 = vector.multi_reduction <add>, %57, %cst_28 [1] : vector<16x16xf32> to vector<16xf32>
    %59 = vector.shape_cast %58 : vector<16xf32> to vector<16x1xf32>
    %60 = vector.broadcast %59 : vector<16x1xf32> to vector<16x16xf32>
    %61 = arith.divf %57, %60 : vector<16x16xf32>
    %62 = arith.addf %30, %61 : vector<16x16xf32>
    %cst_29 = arith.constant 5.000000e-01 : f32
    %63 = vector.broadcast %cst_29 : f32 to vector<16x16xf32>
    %64 = arith.mulf %62, %63 : vector<16x16xf32>
    %c0_30 = arith.constant 0 : index
    %c0_31 = arith.constant 0 : index
    %65 = vector.load %arg4[%c0_30, %c0_31] : memref<16x16xf32, #tpu.memory_space<vmem>>, vector<16x16xf32>
    tpu.vector_store %arg4[%c0_30, %c0_31], %64 {strides = array<i32>} : memref<16x16xf32, #tpu.memory_space<vmem>>, vector<16x16xf32>,
    return
  }
}

module attributes {stable_mosaic.version = 11 : i64} {
  func.func @_stock_block_kernel(%arg0: memref<2x1x16x8xf32, #tpu.memory_space<vmem>>, %arg1: memref<4x16x16xf32, #tpu.memory_space<vmem>>, %arg2: memref<32x128xf32, #tpu.memory_space<vmem>>, %arg3: memref<1x128xf32, #tpu.memory_space<vmem>>, %arg4: memref<32x128xf32, #tpu.memory_space<vmem>>, %arg5: memref<1x128xf32, #tpu.memory_space<vmem>>, %arg6: memref<64x128xf32, #tpu.memory_space<vmem>>, %arg7: memref<1x128xf32, #tpu.memory_space<vmem>>, %arg8: memref<64x128xf32, #tpu.memory_space<vmem>>, %arg9: memref<1x128xf32, #tpu.memory_space<vmem>>, %arg10: memref<64x128xf32, #tpu.memory_space<vmem>>, %arg11: memref<1x128xf32, #tpu.memory_space<vmem>>, %arg12: memref<64x128xf32, #tpu.memory_space<vmem>>, %arg13: memref<1x128xf32, #tpu.memory_space<vmem>>, %arg14: memref<64x16xf32, #tpu.memory_space<vmem>>, %arg15: memref<16x16xf32, #tpu.memory_space<vmem>>, %arg16: memref<1x16xf32, #tpu.memory_space<vmem>>, %arg17: memref<16x8xf32, #tpu.memory_space<vmem>>, %arg18: memref<1x8xf32, #tpu.memory_space<vmem>>, %arg19: memref<2x16x8xf32, #tpu.memory_space<vmem>>) attributes {dimension_semantics = [], scalar_prefetch = 0 : i64, scratch_operands = 0 : i64, tpu.core_type = #tpu.core_type<tc>} {
    %c0 = arith.constant 0 : index
    %c0_0 = arith.constant 0 : index
    %c0_1 = arith.constant 0 : index
    %c0_2 = arith.constant 0 : index
    %0 = vector.load %arg0[%c0, %c0_0, %c0_1, %c0_2] : memref<2x1x16x8xf32, #tpu.memory_space<vmem>>, vector<1x1x16x8xf32>
    %1 = vector.shape_cast %0 : vector<1x1x16x8xf32> to vector<16x8xf32>
    %c1 = arith.constant 1 : index
    %c0_3 = arith.constant 0 : index
    %c0_4 = arith.constant 0 : index
    %c0_5 = arith.constant 0 : index
    %2 = vector.load %arg0[%c1, %c0_3, %c0_4, %c0_5] : memref<2x1x16x8xf32, #tpu.memory_space<vmem>>, vector<1x1x16x8xf32>
    %3 = vector.shape_cast %2 : vector<1x1x16x8xf32> to vector<16x8xf32>
    %c0_6 = arith.constant 0 : index
    %c0_7 = arith.constant 0 : index
    %c0_8 = arith.constant 0 : index
    %4 = vector.load %arg1[%c0_6, %c0_7, %c0_8] : memref<4x16x16xf32, #tpu.memory_space<vmem>>, vector<1x16x16xf32>
    %5 = vector.shape_cast %4 : vector<1x16x16xf32> to vector<16x16xf32>
    %cst = arith.constant dense<0.000000e+00> : vector<16x8xf32>
    %6 = tpu.matmul %5, %1, %cst {dimension_numbers = #tpu.dot_dimension_numbers<[1], [0], [0], [1], [0, 0, 1, 1], [], []>} : vector<16x16xf32>, vector<16x8xf32>, vector<16x8xf32> -> vector<16x8xf32>
    %c0_9 = arith.constant 0 : index
    %c0_10 = arith.constant 0 : index
    %c0_11 = arith.constant 0 : index
    %7 = vector.load %arg1[%c0_9, %c0_10, %c0_11] : memref<4x16x16xf32, #tpu.memory_space<vmem>>, vector<1x16x16xf32>
    %8 = vector.shape_cast %7 : vector<1x16x16xf32> to vector<16x16xf32>
    %cst_12 = arith.constant dense<0.000000e+00> : vector<16x8xf32>
    %9 = tpu.matmul %8, %3, %cst_12 {dimension_numbers = #tpu.dot_dimension_numbers<[1], [0], [0], [1], [0, 0, 1, 1], [], []>} : vector<16x16xf32>, vector<16x8xf32>, vector<16x8xf32> -> vector<16x8xf32>
    %10 = tpu.concatenate %6, %9 in 0 : vector<16x8xf32>, vector<16x8xf32> -> vector<32x8xf32>
    %c1_13 = arith.constant 1 : index
    %c0_14 = arith.constant 0 : index
    %c0_15 = arith.constant 0 : index
    %11 = vector.load %arg1[%c1_13, %c0_14, %c0_15] : memref<4x16x16xf32, #tpu.memory_space<vmem>>, vector<1x16x16xf32>
    %12 = vector.shape_cast %11 : vector<1x16x16xf32> to vector<16x16xf32>
    %cst_16 = arith.constant dense<0.000000e+00> : vector<16x8xf32>
    %13 = tpu.matmul %12, %1, %cst_16 {dimension_numbers = #tpu.dot_dimension_numbers<[1], [0], [0], [1], [0, 0, 1, 1], [], []>} : vector<16x16xf32>, vector<16x8xf32>, vector<16x8xf32> -> vector<16x8xf32>
    %c1_17 = arith.constant 1 : index
    %c0_18 = arith.constant 0 : index
    %c0_19 = arith.constant 0 : index
    %14 = vector.load %arg1[%c1_17, %c0_18, %c0_19] : memref<4x16x16xf32, #tpu.memory_space<vmem>>, vector<1x16x16xf32>
    %15 = vector.shape_cast %14 : vector<1x16x16xf32> to vector<16x16xf32>
    %cst_20 = arith.constant dense<0.000000e+00> : vector<16x8xf32>
    %16 = tpu.matmul %15, %3, %cst_20 {dimension_numbers = #tpu.dot_dimension_numbers<[1], [0], [0], [1], [0, 0, 1, 1], [], []>} : vector<16x16xf32>, vector<16x8xf32>, vector<16x8xf32> -> vector<16x8xf32>
    %17 = tpu.concatenate %13, %16 in 0 : vector<16x8xf32>, vector<16x8xf32> -> vector<32x8xf32>
    %c2 = arith.constant 2 : index
    %c0_21 = arith.constant 0 : index
    %c0_22 = arith.constant 0 : index
    %18 = vector.load %arg1[%c2, %c0_21, %c0_22] : memref<4x16x16xf32, #tpu.memory_space<vmem>>, vector<1x16x16xf32>
    %19 = vector.shape_cast %18 : vector<1x16x16xf32> to vector<16x16xf32>
    %cst_23 = arith.constant dense<0.000000e+00> : vector<16x8xf32>
    %20 = tpu.matmul %19, %1, %cst_23 {dimension_numbers = #tpu.dot_dimension_numbers<[1], [0], [0], [1], [0, 0, 1, 1], [], []>} : vector<16x16xf32>, vector<16x8xf32>, vector<16x8xf32> -> vector<16x8xf32>
    %c2_24 = arith.constant 2 : index
    %c0_25 = arith.constant 0 : index
    %c0_26 = arith.constant 0 : index
    %21 = vector.load %arg1[%c2_24, %c0_25, %c0_26] : memref<4x16x16xf32, #tpu.memory_space<vmem>>, vector<1x16x16xf32>
    %22 = vector.shape_cast %21 : vector<1x16x16xf32> to vector<16x16xf32>
    %cst_27 = arith.constant dense<0.000000e+00> : vector<16x8xf32>
    %23 = tpu.matmul %22, %3, %cst_27 {dimension_numbers = #tpu.dot_dimension_numbers<[1], [0], [0], [1], [0, 0, 1, 1], [], []>} : vector<16x16xf32>, vector<16x8xf32>, vector<16x8xf32> -> vector<16x8xf32>
    %24 = tpu.concatenate %20, %23 in 0 : vector<16x8xf32>, vector<16x8xf32> -> vector<32x8xf32>
    %c3 = arith.constant 3 : index
    %c0_28 = arith.constant 0 : index
    %c0_29 = arith.constant 0 : index
    %25 = vector.load %arg1[%c3, %c0_28, %c0_29] : memref<4x16x16xf32, #tpu.memory_space<vmem>>, vector<1x16x16xf32>
    %26 = vector.shape_cast %25 : vector<1x16x16xf32> to vector<16x16xf32>
    %cst_30 = arith.constant dense<0.000000e+00> : vector<16x8xf32>
    %27 = tpu.matmul %26, %1, %cst_30 {dimension_numbers = #tpu.dot_dimension_numbers<[1], [0], [0], [1], [0, 0, 1, 1], [], []>} : vector<16x16xf32>, vector<16x8xf32>, vector<16x8xf32> -> vector<16x8xf32>
    %c3_31 = arith.constant 3 : index
    %c0_32 = arith.constant 0 : index
    %c0_33 = arith.constant 0 : index
    %28 = vector.load %arg1[%c3_31, %c0_32, %c0_33] : memref<4x16x16xf32, #tpu.memory_space<vmem>>, vector<1x16x16xf32>
    %29 = vector.shape_cast %28 : vector<1x16x16xf32> to vector<16x16xf32>
    %cst_34 = arith.constant dense<0.000000e+00> : vector<16x8xf32>
    %30 = tpu.matmul %29, %3, %cst_34 {dimension_numbers = #tpu.dot_dimension_numbers<[1], [0], [0], [1], [0, 0, 1, 1], [], []>} : vector<16x16xf32>, vector<16x8xf32>, vector<16x8xf32> -> vector<16x8xf32>
    %31 = tpu.concatenate %27, %30 in 0 : vector<16x8xf32>, vector<16x8xf32> -> vector<32x8xf32>
    %32 = arith.addf %10, %17 : vector<32x8xf32>
    %33 = arith.addf %32, %24 : vector<32x8xf32>
    %34 = arith.addf %33, %31 : vector<32x8xf32>
    %35 = arith.subf %10, %24 : vector<32x8xf32>
    %36 = arith.subf %10, %17 : vector<32x8xf32>
    %37 = arith.addf %36, %24 : vector<32x8xf32>
    %38 = arith.subf %37, %31 : vector<32x8xf32>
    %39 = arith.subf %31, %17 : vector<32x8xf32>
    %cst_35 = arith.constant 0.000000e+00 : f32
    %40 = vector.broadcast %cst_35 : f32 to vector<32x8xf32>
    %41 = tpu.concatenate %34, %35, %38, %35 in 1 : vector<32x8xf32>, vector<32x8xf32>, vector<32x8xf32>, vector<32x8xf32> -> vector<32x32xf32>
    %cst_36 = arith.constant 0.000000e+00 : f32
    %42 = vector.broadcast %cst_36 : f32 to vector<32x8xf32>
    %43 = arith.subf %42, %39 : vector<32x8xf32>
    %44 = tpu.concatenate %40, %39, %40, %43 in 1 : vector<32x8xf32>, vector<32x8xf32>, vector<32x8xf32>, vector<32x8xf32> -> vector<32x32xf32>
    %c0_37 = arith.constant 0 : index
    %c0_38 = arith.constant 0 : index
    %45 = vector.load %arg2[%c0_37, %c0_38] : memref<32x128xf32, #tpu.memory_space<vmem>>, vector<32x128xf32>
    %cst_39 = arith.constant dense<0.000000e+00> : vector<32x128xf32>
    %46 = tpu.matmul %41, %45, %cst_39 {dimension_numbers = #tpu.dot_dimension_numbers<[1], [0], [0], [1], [0, 0, 1, 1], [], []>} : vector<32x32xf32>, vector<32x128xf32>, vector<32x128xf32> -> vector<32x128xf32>
    %c0_40 = arith.constant 0 : index
    %c0_41 = arith.constant 0 : index
    %47 = vector.load %arg3[%c0_40, %c0_41] : memref<1x128xf32, #tpu.memory_space<vmem>>, vector<1x128xf32>
    %48 = vector.broadcast %47 : vector<1x128xf32> to vector<32x128xf32>
    %49 = arith.addf %46, %48 : vector<32x128xf32>
    %50 = vector.extract_strided_slice %49 {offsets = [0, 0], sizes = [32, 64], strides = [1, 1]} : vector<32x128xf32> to vector<32x64xf32>
    %51 = vector.extract_strided_slice %49 {offsets = [0, 64], sizes = [32, 64], strides = [1, 1]} : vector<32x128xf32> to vector<32x64xf32>
    %52 = arith.negf %51 : vector<32x64xf32>
    %53 = math.exp %52 : vector<32x64xf32>
    %cst_42 = arith.constant 1.000000e+00 : f32
    %54 = vector.broadcast %cst_42 : f32 to vector<32x64xf32>
    %55 = arith.addf %54, %53 : vector<32x64xf32>
    %56 = arith.divf %54, %55 : vector<32x64xf32>
    %57 = arith.mulf %50, %56 : vector<32x64xf32>
    %c0_43 = arith.constant 0 : index
    %c0_44 = arith.constant 0 : index
    %58 = vector.load %arg4[%c0_43, %c0_44] : memref<32x128xf32, #tpu.memory_space<vmem>>, vector<32x128xf32>
    %cst_45 = arith.constant dense<0.000000e+00> : vector<32x128xf32>
    %59 = tpu.matmul %44, %58, %cst_45 {dimension_numbers = #tpu.dot_dimension_numbers<[1], [0], [0], [1], [0, 0, 1, 1], [], []>} : vector<32x32xf32>, vector<32x128xf32>, vector<32x128xf32> -> vector<32x128xf32>
    %c0_46 = arith.constant 0 : index
    %c0_47 = arith.constant 0 : index
    %60 = vector.load %arg5[%c0_46, %c0_47] : memref<1x128xf32, #tpu.memory_space<vmem>>, vector<1x128xf32>
    %61 = vector.broadcast %60 : vector<1x128xf32> to vector<32x128xf32>
    %62 = arith.addf %59, %61 : vector<32x128xf32>
    %63 = vector.extract_strided_slice %62 {offsets = [0, 0], sizes = [32, 64], strides = [1, 1]} : vector<32x128xf32> to vector<32x64xf32>
    %64 = vector.extract_strided_slice %62 {offsets = [0, 64], sizes = [32, 64], strides = [1, 1]} : vector<32x128xf32> to vector<32x64xf32>
    %65 = arith.negf %64 : vector<32x64xf32>
    %66 = math.exp %65 : vector<32x64xf32>
    %cst_48 = arith.constant 1.000000e+00 : f32
    %67 = vector.broadcast %cst_48 : f32 to vector<32x64xf32>
    %68 = arith.addf %67, %66 : vector<32x64xf32>
    %69 = arith.divf %67, %68 : vector<32x64xf32>
    %70 = arith.mulf %63, %69 : vector<32x64xf32>
    %c0_49 = arith.constant 0 : index
    %c0_50 = arith.constant 0 : index
    %71 = vector.load %arg6[%c0_49, %c0_50] : memref<64x128xf32, #tpu.memory_space<vmem>>, vector<64x128xf32>
    %cst_51 = arith.constant dense<0.000000e+00> : vector<32x128xf32>
    %72 = tpu.matmul %57, %71, %cst_51 {dimension_numbers = #tpu.dot_dimension_numbers<[1], [0], [0], [1], [0, 0, 1, 1], [], []>} : vector<32x64xf32>, vector<64x128xf32>, vector<32x128xf32> -> vector<32x128xf32>
    %c0_52 = arith.constant 0 : index
    %c0_53 = arith.constant 0 : index
    %73 = vector.load %arg7[%c0_52, %c0_53] : memref<1x128xf32, #tpu.memory_space<vmem>>, vector<1x128xf32>
    %74 = vector.broadcast %73 : vector<1x128xf32> to vector<32x128xf32>
    %75 = arith.addf %72, %74 : vector<32x128xf32>
    %76 = vector.extract_strided_slice %75 {offsets = [0, 0], sizes = [32, 64], strides = [1, 1]} : vector<32x128xf32> to vector<32x64xf32>
    %77 = vector.extract_strided_slice %75 {offsets = [0, 64], sizes = [32, 64], strides = [1, 1]} : vector<32x128xf32> to vector<32x64xf32>
    %78 = arith.negf %77 : vector<32x64xf32>
    %79 = math.exp %78 : vector<32x64xf32>
    %cst_54 = arith.constant 1.000000e+00 : f32
    %80 = vector.broadcast %cst_54 : f32 to vector<32x64xf32>
    %81 = arith.addf %80, %79 : vector<32x64xf32>
    %82 = arith.divf %80, %81 : vector<32x64xf32>
    %83 = arith.mulf %76, %82 : vector<32x64xf32>
    %c0_55 = arith.constant 0 : index
    %c0_56 = arith.constant 0 : index
    %84 = vector.load %arg8[%c0_55, %c0_56] : memref<64x128xf32, #tpu.memory_space<vmem>>, vector<64x128xf32>
    %cst_57 = arith.constant dense<0.000000e+00> : vector<32x128xf32>
    %85 = tpu.matmul %70, %84, %cst_57 {dimension_numbers = #tpu.dot_dimension_numbers<[1], [0], [0], [1], [0, 0, 1, 1], [], []>} : vector<32x64xf32>, vector<64x128xf32>, vector<32x128xf32> -> vector<32x128xf32>
    %c0_58 = arith.constant 0 : index
    %c0_59 = arith.constant 0 : index
    %86 = vector.load %arg9[%c0_58, %c0_59] : memref<1x128xf32, #tpu.memory_space<vmem>>, vector<1x128xf32>
    %87 = vector.broadcast %86 : vector<1x128xf32> to vector<32x128xf32>
    %88 = arith.addf %85, %87 : vector<32x128xf32>
    %89 = vector.extract_strided_slice %88 {offsets = [0, 0], sizes = [32, 64], strides = [1, 1]} : vector<32x128xf32> to vector<32x64xf32>
    %90 = vector.extract_strided_slice %88 {offsets = [0, 64], sizes = [32, 64], strides = [1, 1]} : vector<32x128xf32> to vector<32x64xf32>
    %91 = arith.negf %90 : vector<32x64xf32>
    %92 = math.exp %91 : vector<32x64xf32>
    %cst_60 = arith.constant 1.000000e+00 : f32
    %93 = vector.broadcast %cst_60 : f32 to vector<32x64xf32>
    %94 = arith.addf %93, %92 : vector<32x64xf32>
    %95 = arith.divf %93, %94 : vector<32x64xf32>
    %96 = arith.mulf %89, %95 : vector<32x64xf32>
    %c0_61 = arith.constant 0 : index
    %c0_62 = arith.constant 0 : index
    %97 = vector.load %arg10[%c0_61, %c0_62] : memref<64x128xf32, #tpu.memory_space<vmem>>, vector<64x128xf32>
    %cst_63 = arith.constant dense<0.000000e+00> : vector<32x128xf32>
    %98 = tpu.matmul %83, %97, %cst_63 {dimension_numbers = #tpu.dot_dimension_numbers<[1], [0], [0], [1], [0, 0, 1, 1], [], []>} : vector<32x64xf32>, vector<64x128xf32>, vector<32x128xf32> -> vector<32x128xf32>
    %c0_64 = arith.constant 0 : index
    %c0_65 = arith.constant 0 : index
    %99 = vector.load %arg11[%c0_64, %c0_65] : memref<1x128xf32, #tpu.memory_space<vmem>>, vector<1x128xf32>
    %100 = vector.broadcast %99 : vector<1x128xf32> to vector<32x128xf32>
    %101 = arith.addf %98, %100 : vector<32x128xf32>
    %102 = vector.extract_strided_slice %101 {offsets = [0, 0], sizes = [32, 64], strides = [1, 1]} : vector<32x128xf32> to vector<32x64xf32>
    %103 = vector.extract_strided_slice %101 {offsets = [0, 64], sizes = [32, 64], strides = [1, 1]} : vector<32x128xf32> to vector<32x64xf32>
    %104 = arith.negf %103 : vector<32x64xf32>
    %105 = math.exp %104 : vector<32x64xf32>
    %cst_66 = arith.constant 1.000000e+00 : f32
    %106 = vector.broadcast %cst_66 : f32 to vector<32x64xf32>
    %107 = arith.addf %106, %105 : vector<32x64xf32>
    %108 = arith.divf %106, %107 : vector<32x64xf32>
    %109 = arith.mulf %102, %108 : vector<32x64xf32>
    %c0_67 = arith.constant 0 : index
    %c0_68 = arith.constant 0 : index
    %110 = vector.load %arg12[%c0_67, %c0_68] : memref<64x128xf32, #tpu.memory_space<vmem>>, vector<64x128xf32>
    %cst_69 = arith.constant dense<0.000000e+00> : vector<32x128xf32>
    %111 = tpu.matmul %96, %110, %cst_69 {dimension_numbers = #tpu.dot_dimension_numbers<[1], [0], [0], [1], [0, 0, 1, 1], [], []>} : vector<32x64xf32>, vector<64x128xf32>, vector<32x128xf32> -> vector<32x128xf32>
    %c0_70 = arith.constant 0 : index
    %c0_71 = arith.constant 0 : index
    %112 = vector.load %arg13[%c0_70, %c0_71] : memref<1x128xf32, #tpu.memory_space<vmem>>, vector<1x128xf32>
    %113 = vector.broadcast %112 : vector<1x128xf32> to vector<32x128xf32>
    %114 = arith.addf %111, %113 : vector<32x128xf32>
    %115 = vector.extract_strided_slice %114 {offsets = [0, 0], sizes = [32, 64], strides = [1, 1]} : vector<32x128xf32> to vector<32x64xf32>
    %116 = vector.extract_strided_slice %114 {offsets = [0, 64], sizes = [32, 64], strides = [1, 1]} : vector<32x128xf32> to vector<32x64xf32>
    %117 = arith.negf %116 : vector<32x64xf32>
    %118 = math.exp %117 : vector<32x64xf32>
    %cst_72 = arith.constant 1.000000e+00 : f32
    %119 = vector.broadcast %cst_72 : f32 to vector<32x64xf32>
    %120 = arith.addf %119, %118 : vector<32x64xf32>
    %121 = arith.divf %119, %120 : vector<32x64xf32>
    %122 = arith.mulf %115, %121 : vector<32x64xf32>
    %123 = vector.extract_strided_slice %109 {offsets = [0, 0], sizes = [32, 16], strides = [1, 1]} : vector<32x64xf32> to vector<32x16xf32>
    %124 = vector.extract_strided_slice %109 {offsets = [0, 16], sizes = [32, 16], strides = [1, 1]} : vector<32x64xf32> to vector<32x16xf32>
    %125 = vector.extract_strided_slice %109 {offsets = [0, 32], sizes = [32, 16], strides = [1, 1]} : vector<32x64xf32> to vector<32x16xf32>
    %126 = vector.extract_strided_slice %122 {offsets = [0, 16], sizes = [32, 16], strides = [1, 1]} : vector<32x64xf32> to vector<32x16xf32>
    %cst_73 = arith.constant 2.000000e+00 : f32
    %127 = vector.broadcast %cst_73 : f32 to vector<32x16xf32>
    %128 = arith.mulf %127, %124 : vector<32x16xf32>
    %129 = arith.addf %123, %128 : vector<32x16xf32>
    %130 = arith.addf %129, %125 : vector<32x16xf32>
    %cst_74 = arith.constant 2.500000e-01 : f32
    %131 = vector.broadcast %cst_74 : f32 to vector<32x16xf32>
    %132 = arith.mulf %130, %131 : vector<32x16xf32>
    %cst_75 = arith.constant 2.000000e+00 : f32
    %133 = vector.broadcast %cst_75 : f32 to vector<32x16xf32>
    %134 = arith.mulf %133, %126 : vector<32x16xf32>
    %135 = arith.subf %123, %134 : vector<32x16xf32>
    %136 = arith.subf %135, %125 : vector<32x16xf32>
    %cst_76 = arith.constant 2.500000e-01 : f32
    %137 = vector.broadcast %cst_76 : f32 to vector<32x16xf32>
    %138 = arith.mulf %136, %137 : vector<32x16xf32>
    %cst_77 = arith.constant 2.000000e+00 : f32
    %139 = vector.broadcast %cst_77 : f32 to vector<32x16xf32>
    %140 = arith.mulf %139, %124 : vector<32x16xf32>
    %141 = arith.subf %123, %140 : vector<32x16xf32>
    %142 = arith.addf %141, %125 : vector<32x16xf32>
    %cst_78 = arith.constant 2.500000e-01 : f32
    %143 = vector.broadcast %cst_78 : f32 to vector<32x16xf32>
    %144 = arith.mulf %142, %143 : vector<32x16xf32>
    %cst_79 = arith.constant 2.000000e+00 : f32
    %145 = vector.broadcast %cst_79 : f32 to vector<32x16xf32>
    %146 = arith.mulf %145, %126 : vector<32x16xf32>
    %147 = arith.addf %123, %146 : vector<32x16xf32>
    %148 = arith.subf %147, %125 : vector<32x16xf32>
    %cst_80 = arith.constant 2.500000e-01 : f32
    %149 = vector.broadcast %cst_80 : f32 to vector<32x16xf32>
    %150 = arith.mulf %148, %149 : vector<32x16xf32>
    %151 = tpu.concatenate %132, %138, %144, %150 in 1 : vector<32x16xf32>, vector<32x16xf32>, vector<32x16xf32>, vector<32x16xf32> -> vector<32x64xf32>
    %c0_81 = arith.constant 0 : index
    %c0_82 = arith.constant 0 : index
    %152 = vector.load %arg14[%c0_81, %c0_82] : memref<64x16xf32, #tpu.memory_space<vmem>>, vector<64x16xf32>
    %cst_83 = arith.constant dense<0.000000e+00> : vector<32x16xf32>
    %153 = tpu.matmul %151, %152, %cst_83 {dimension_numbers = #tpu.dot_dimension_numbers<[1], [0], [0], [1], [0, 0, 1, 1], [], []>} : vector<32x64xf32>, vector<64x16xf32>, vector<32x16xf32> -> vector<32x16xf32>
    %c0_84 = arith.constant 0 : index
    %c0_85 = arith.constant 0 : index
    %154 = vector.load %arg15[%c0_84, %c0_85] : memref<16x16xf32, #tpu.memory_space<vmem>>, vector<16x16xf32>
    %cst_86 = arith.constant dense<0.000000e+00> : vector<32x16xf32>
    %155 = tpu.matmul %153, %154, %cst_86 {dimension_numbers = #tpu.dot_dimension_numbers<[1], [0], [0], [1], [0, 0, 1, 1], [], []>} : vector<32x16xf32>, vector<16x16xf32>, vector<32x16xf32> -> vector<32x16xf32>
    %c0_87 = arith.constant 0 : index
    %c0_88 = arith.constant 0 : index
    %156 = vector.load %arg16[%c0_87, %c0_88] : memref<1x16xf32, #tpu.memory_space<vmem>>, vector<1x16xf32>
    %157 = vector.broadcast %156 : vector<1x16xf32> to vector<32x16xf32>
    %158 = arith.addf %155, %157 : vector<32x16xf32>
    %159 = arith.negf %158 : vector<32x16xf32>
    %160 = math.exp %159 : vector<32x16xf32>
    %cst_89 = arith.constant 1.000000e+00 : f32
    %161 = vector.broadcast %cst_89 : f32 to vector<32x16xf32>
    %162 = arith.addf %161, %160 : vector<32x16xf32>
    %163 = arith.divf %161, %162 : vector<32x16xf32>
    %c0_90 = arith.constant 0 : index
    %c0_91 = arith.constant 0 : index
    %164 = vector.load %arg17[%c0_90, %c0_91] : memref<16x8xf32, #tpu.memory_space<vmem>>, vector<16x8xf32>
    %cst_92 = arith.constant dense<0.000000e+00> : vector<32x8xf32>
    %165 = tpu.matmul %163, %164, %cst_92 {dimension_numbers = #tpu.dot_dimension_numbers<[1], [0], [0], [1], [0, 0, 1, 1], [], []>} : vector<32x16xf32>, vector<16x8xf32>, vector<32x8xf32> -> vector<32x8xf32>
    %c0_93 = arith.constant 0 : index
    %c0_94 = arith.constant 0 : index
    %166 = vector.load %arg18[%c0_93, %c0_94] : memref<1x8xf32, #tpu.memory_space<vmem>>, vector<1x8xf32>
    %167 = vector.broadcast %166 : vector<1x8xf32> to vector<32x8xf32>
    %168 = arith.addf %165, %167 : vector<32x8xf32>
    %169 = vector.extract_strided_slice %168 {offsets = [0, 0], sizes = [16, 8], strides = [1, 1]} : vector<32x8xf32> to vector<16x8xf32>
    %c0_95 = arith.constant 0 : index
    %c0_96 = arith.constant 0 : index
    %c0_97 = arith.constant 0 : index
    %170 = vector.load %arg19[%c0_95, %c0_96, %c0_97] : memref<2x16x8xf32, #tpu.memory_space<vmem>>, vector<1x16x8xf32>
    %171 = vector.shape_cast %170 : vector<1x16x8xf32> to vector<16x8xf32>
    %172 = vector.shape_cast %169 : vector<16x8xf32> to vector<1x16x8xf32>
    tpu.vector_store %arg19[%c0_95, %c0_96, %c0_97], %172 {strides = array<i32>} : memref<2x16x8xf32, #tpu.memory_space<vmem>>, vector<1x16x8xf32>,
    %173 = vector.extract_strided_slice %168 {offsets = [16, 0], sizes = [16, 8], strides = [1, 1]} : vector<32x8xf32> to vector<16x8xf32>
    %c1_98 = arith.constant 1 : index
    %c0_99 = arith.constant 0 : index
    %c0_100 = arith.constant 0 : index
    %174 = vector.load %arg19[%c1_98, %c0_99, %c0_100] : memref<2x16x8xf32, #tpu.memory_space<vmem>>, vector<1x16x8xf32>
    %175 = vector.shape_cast %174 : vector<1x16x8xf32> to vector<16x8xf32>
    %176 = vector.shape_cast %173 : vector<16x8xf32> to vector<1x16x8xf32>
    tpu.vector_store %arg19[%c1_98, %c0_99, %c0_100], %176 {strides = array<i32>} : memref<2x16x8xf32, #tpu.memory_space<vmem>>, vector<1x16x8xf32>,
    return
  }
}

module attributes {stable_mosaic.version = 11 : i64} {
  func.func @_stock_block_kernel(%arg0: memref<2x1x16x8xf32, #tpu.memory_space<vmem>>, %arg1: memref<4x16x16xf32, #tpu.memory_space<vmem>>, %arg2: memref<32x128xf32, #tpu.memory_space<vmem>>, %arg3: memref<1x128xf32, #tpu.memory_space<vmem>>, %arg4: memref<32x128xf32, #tpu.memory_space<vmem>>, %arg5: memref<1x128xf32, #tpu.memory_space<vmem>>, %arg6: memref<64x128xf32, #tpu.memory_space<vmem>>, %arg7: memref<1x128xf32, #tpu.memory_space<vmem>>, %arg8: memref<64x128xf32, #tpu.memory_space<vmem>>, %arg9: memref<1x128xf32, #tpu.memory_space<vmem>>, %arg10: memref<64x128xf32, #tpu.memory_space<vmem>>, %arg11: memref<1x128xf32, #tpu.memory_space<vmem>>, %arg12: memref<64x128xf32, #tpu.memory_space<vmem>>, %arg13: memref<1x128xf32, #tpu.memory_space<vmem>>, %arg14: memref<64x16xf32, #tpu.memory_space<vmem>>, %arg15: memref<16x16xf32, #tpu.memory_space<vmem>>, %arg16: memref<1x16xf32, #tpu.memory_space<vmem>>, %arg17: memref<16x8xf32, #tpu.memory_space<vmem>>, %arg18: memref<1x8xf32, #tpu.memory_space<vmem>>, %arg19: memref<8x8xf32, #tpu.memory_space<vmem>>, %arg20: memref<1x8xf32, #tpu.memory_space<vmem>>, %arg21: memref<16x8xf32, #tpu.memory_space<vmem>>, %arg22: memref<1x8xf32, #tpu.memory_space<vmem>>, %arg23: memref<2x16x8xf32, #tpu.memory_space<vmem>>, %arg24: memref<2x1x16x8xf32, #tpu.memory_space<vmem>>) attributes {dimension_semantics = [], scalar_prefetch = 0 : i64, scratch_operands = 0 : i64, tpu.core_type = #tpu.core_type<tc>} {
    %c0 = arith.constant 0 : index
    %c0_0 = arith.constant 0 : index
    %c0_1 = arith.constant 0 : index
    %c0_2 = arith.constant 0 : index
    %0 = vector.load %arg0[%c0, %c0_0, %c0_1, %c0_2] : memref<2x1x16x8xf32, #tpu.memory_space<vmem>>, vector<1x1x16x8xf32>
    %1 = vector.shape_cast %0 : vector<1x1x16x8xf32> to vector<16x8xf32>
    %c1 = arith.constant 1 : index
    %c0_3 = arith.constant 0 : index
    %c0_4 = arith.constant 0 : index
    %c0_5 = arith.constant 0 : index
    %2 = vector.load %arg0[%c1, %c0_3, %c0_4, %c0_5] : memref<2x1x16x8xf32, #tpu.memory_space<vmem>>, vector<1x1x16x8xf32>
    %3 = vector.shape_cast %2 : vector<1x1x16x8xf32> to vector<16x8xf32>
    %c0_6 = arith.constant 0 : index
    %c0_7 = arith.constant 0 : index
    %c0_8 = arith.constant 0 : index
    %4 = vector.load %arg1[%c0_6, %c0_7, %c0_8] : memref<4x16x16xf32, #tpu.memory_space<vmem>>, vector<1x16x16xf32>
    %5 = vector.shape_cast %4 : vector<1x16x16xf32> to vector<16x16xf32>
    %cst = arith.constant dense<0.000000e+00> : vector<16x8xf32>
    %6 = tpu.matmul %5, %1, %cst {dimension_numbers = #tpu.dot_dimension_numbers<[1], [0], [0], [1], [0, 0, 1, 1], [], []>} : vector<16x16xf32>, vector<16x8xf32>, vector<16x8xf32> -> vector<16x8xf32>
    %c0_9 = arith.constant 0 : index
    %c0_10 = arith.constant 0 : index
    %c0_11 = arith.constant 0 : index
    %7 = vector.load %arg1[%c0_9, %c0_10, %c0_11] : memref<4x16x16xf32, #tpu.memory_space<vmem>>, vector<1x16x16xf32>
    %8 = vector.shape_cast %7 : vector<1x16x16xf32> to vector<16x16xf32>
    %cst_12 = arith.constant dense<0.000000e+00> : vector<16x8xf32>
    %9 = tpu.matmul %8, %3, %cst_12 {dimension_numbers = #tpu.dot_dimension_numbers<[1], [0], [0], [1], [0, 0, 1, 1], [], []>} : vector<16x16xf32>, vector<16x8xf32>, vector<16x8xf32> -> vector<16x8xf32>
    %10 = tpu.concatenate %6, %9 in 0 : vector<16x8xf32>, vector<16x8xf32> -> vector<32x8xf32>
    %c1_13 = arith.constant 1 : index
    %c0_14 = arith.constant 0 : index
    %c0_15 = arith.constant 0 : index
    %11 = vector.load %arg1[%c1_13, %c0_14, %c0_15] : memref<4x16x16xf32, #tpu.memory_space<vmem>>, vector<1x16x16xf32>
    %12 = vector.shape_cast %11 : vector<1x16x16xf32> to vector<16x16xf32>
    %cst_16 = arith.constant dense<0.000000e+00> : vector<16x8xf32>
    %13 = tpu.matmul %12, %1, %cst_16 {dimension_numbers = #tpu.dot_dimension_numbers<[1], [0], [0], [1], [0, 0, 1, 1], [], []>} : vector<16x16xf32>, vector<16x8xf32>, vector<16x8xf32> -> vector<16x8xf32>
    %c1_17 = arith.constant 1 : index
    %c0_18 = arith.constant 0 : index
    %c0_19 = arith.constant 0 : index
    %14 = vector.load %arg1[%c1_17, %c0_18, %c0_19] : memref<4x16x16xf32, #tpu.memory_space<vmem>>, vector<1x16x16xf32>
    %15 = vector.shape_cast %14 : vector<1x16x16xf32> to vector<16x16xf32>
    %cst_20 = arith.constant dense<0.000000e+00> : vector<16x8xf32>
    %16 = tpu.matmul %15, %3, %cst_20 {dimension_numbers = #tpu.dot_dimension_numbers<[1], [0], [0], [1], [0, 0, 1, 1], [], []>} : vector<16x16xf32>, vector<16x8xf32>, vector<16x8xf32> -> vector<16x8xf32>
    %17 = tpu.concatenate %13, %16 in 0 : vector<16x8xf32>, vector<16x8xf32> -> vector<32x8xf32>
    %c2 = arith.constant 2 : index
    %c0_21 = arith.constant 0 : index
    %c0_22 = arith.constant 0 : index
    %18 = vector.load %arg1[%c2, %c0_21, %c0_22] : memref<4x16x16xf32, #tpu.memory_space<vmem>>, vector<1x16x16xf32>
    %19 = vector.shape_cast %18 : vector<1x16x16xf32> to vector<16x16xf32>
    %cst_23 = arith.constant dense<0.000000e+00> : vector<16x8xf32>
    %20 = tpu.matmul %19, %1, %cst_23 {dimension_numbers = #tpu.dot_dimension_numbers<[1], [0], [0], [1], [0, 0, 1, 1], [], []>} : vector<16x16xf32>, vector<16x8xf32>, vector<16x8xf32> -> vector<16x8xf32>
    %c2_24 = arith.constant 2 : index
    %c0_25 = arith.constant 0 : index
    %c0_26 = arith.constant 0 : index
    %21 = vector.load %arg1[%c2_24, %c0_25, %c0_26] : memref<4x16x16xf32, #tpu.memory_space<vmem>>, vector<1x16x16xf32>
    %22 = vector.shape_cast %21 : vector<1x16x16xf32> to vector<16x16xf32>
    %cst_27 = arith.constant dense<0.000000e+00> : vector<16x8xf32>
    %23 = tpu.matmul %22, %3, %cst_27 {dimension_numbers = #tpu.dot_dimension_numbers<[1], [0], [0], [1], [0, 0, 1, 1], [], []>} : vector<16x16xf32>, vector<16x8xf32>, vector<16x8xf32> -> vector<16x8xf32>
    %24 = tpu.concatenate %20, %23 in 0 : vector<16x8xf32>, vector<16x8xf32> -> vector<32x8xf32>
    %c3 = arith.constant 3 : index
    %c0_28 = arith.constant 0 : index
    %c0_29 = arith.constant 0 : index
    %25 = vector.load %arg1[%c3, %c0_28, %c0_29] : memref<4x16x16xf32, #tpu.memory_space<vmem>>, vector<1x16x16xf32>
    %26 = vector.shape_cast %25 : vector<1x16x16xf32> to vector<16x16xf32>
    %cst_30 = arith.constant dense<0.000000e+00> : vector<16x8xf32>
    %27 = tpu.matmul %26, %1, %cst_30 {dimension_numbers = #tpu.dot_dimension_numbers<[1], [0], [0], [1], [0, 0, 1, 1], [], []>} : vector<16x16xf32>, vector<16x8xf32>, vector<16x8xf32> -> vector<16x8xf32>
    %c3_31 = arith.constant 3 : index
    %c0_32 = arith.constant 0 : index
    %c0_33 = arith.constant 0 : index
    %28 = vector.load %arg1[%c3_31, %c0_32, %c0_33] : memref<4x16x16xf32, #tpu.memory_space<vmem>>, vector<1x16x16xf32>
    %29 = vector.shape_cast %28 : vector<1x16x16xf32> to vector<16x16xf32>
    %cst_34 = arith.constant dense<0.000000e+00> : vector<16x8xf32>
    %30 = tpu.matmul %29, %3, %cst_34 {dimension_numbers = #tpu.dot_dimension_numbers<[1], [0], [0], [1], [0, 0, 1, 1], [], []>} : vector<16x16xf32>, vector<16x8xf32>, vector<16x8xf32> -> vector<16x8xf32>
    %31 = tpu.concatenate %27, %30 in 0 : vector<16x8xf32>, vector<16x8xf32> -> vector<32x8xf32>
    %32 = arith.addf %10, %17 : vector<32x8xf32>
    %33 = arith.addf %32, %24 : vector<32x8xf32>
    %34 = arith.addf %33, %31 : vector<32x8xf32>
    %35 = arith.subf %10, %24 : vector<32x8xf32>
    %36 = arith.subf %10, %17 : vector<32x8xf32>
    %37 = arith.addf %36, %24 : vector<32x8xf32>
    %38 = arith.subf %37, %31 : vector<32x8xf32>
    %39 = arith.subf %31, %17 : vector<32x8xf32>
    %cst_35 = arith.constant 0.000000e+00 : f32
    %40 = vector.broadcast %cst_35 : f32 to vector<32x8xf32>
    %41 = tpu.concatenate %34, %35, %38, %35 in 1 : vector<32x8xf32>, vector<32x8xf32>, vector<32x8xf32>, vector<32x8xf32> -> vector<32x32xf32>
    %cst_36 = arith.constant 0.000000e+00 : f32
    %42 = vector.broadcast %cst_36 : f32 to vector<32x8xf32>
    %43 = arith.subf %42, %39 : vector<32x8xf32>
    %44 = tpu.concatenate %40, %39, %40, %43 in 1 : vector<32x8xf32>, vector<32x8xf32>, vector<32x8xf32>, vector<32x8xf32> -> vector<32x32xf32>
    %c0_37 = arith.constant 0 : index
    %c0_38 = arith.constant 0 : index
    %45 = vector.load %arg2[%c0_37, %c0_38] : memref<32x128xf32, #tpu.memory_space<vmem>>, vector<32x128xf32>
    %cst_39 = arith.constant dense<0.000000e+00> : vector<32x128xf32>
    %46 = tpu.matmul %41, %45, %cst_39 {dimension_numbers = #tpu.dot_dimension_numbers<[1], [0], [0], [1], [0, 0, 1, 1], [], []>} : vector<32x32xf32>, vector<32x128xf32>, vector<32x128xf32> -> vector<32x128xf32>
    %c0_40 = arith.constant 0 : index
    %c0_41 = arith.constant 0 : index
    %47 = vector.load %arg3[%c0_40, %c0_41] : memref<1x128xf32, #tpu.memory_space<vmem>>, vector<1x128xf32>
    %48 = vector.broadcast %47 : vector<1x128xf32> to vector<32x128xf32>
    %49 = arith.addf %46, %48 : vector<32x128xf32>
    %50 = vector.extract_strided_slice %49 {offsets = [0, 0], sizes = [32, 64], strides = [1, 1]} : vector<32x128xf32> to vector<32x64xf32>
    %51 = vector.extract_strided_slice %49 {offsets = [0, 64], sizes = [32, 64], strides = [1, 1]} : vector<32x128xf32> to vector<32x64xf32>
    %52 = arith.negf %51 : vector<32x64xf32>
    %53 = math.exp %52 : vector<32x64xf32>
    %cst_42 = arith.constant 1.000000e+00 : f32
    %54 = vector.broadcast %cst_42 : f32 to vector<32x64xf32>
    %55 = arith.addf %54, %53 : vector<32x64xf32>
    %56 = arith.divf %54, %55 : vector<32x64xf32>
    %57 = arith.mulf %50, %56 : vector<32x64xf32>
    %c0_43 = arith.constant 0 : index
    %c0_44 = arith.constant 0 : index
    %58 = vector.load %arg4[%c0_43, %c0_44] : memref<32x128xf32, #tpu.memory_space<vmem>>, vector<32x128xf32>
    %cst_45 = arith.constant dense<0.000000e+00> : vector<32x128xf32>
    %59 = tpu.matmul %44, %58, %cst_45 {dimension_numbers = #tpu.dot_dimension_numbers<[1], [0], [0], [1], [0, 0, 1, 1], [], []>} : vector<32x32xf32>, vector<32x128xf32>, vector<32x128xf32> -> vector<32x128xf32>
    %c0_46 = arith.constant 0 : index
    %c0_47 = arith.constant 0 : index
    %60 = vector.load %arg5[%c0_46, %c0_47] : memref<1x128xf32, #tpu.memory_space<vmem>>, vector<1x128xf32>
    %61 = vector.broadcast %60 : vector<1x128xf32> to vector<32x128xf32>
    %62 = arith.addf %59, %61 : vector<32x128xf32>
    %63 = vector.extract_strided_slice %62 {offsets = [0, 0], sizes = [32, 64], strides = [1, 1]} : vector<32x128xf32> to vector<32x64xf32>
    %64 = vector.extract_strided_slice %62 {offsets = [0, 64], sizes = [32, 64], strides = [1, 1]} : vector<32x128xf32> to vector<32x64xf32>
    %65 = arith.negf %64 : vector<32x64xf32>
    %66 = math.exp %65 : vector<32x64xf32>
    %cst_48 = arith.constant 1.000000e+00 : f32
    %67 = vector.broadcast %cst_48 : f32 to vector<32x64xf32>
    %68 = arith.addf %67, %66 : vector<32x64xf32>
    %69 = arith.divf %67, %68 : vector<32x64xf32>
    %70 = arith.mulf %63, %69 : vector<32x64xf32>
    %c0_49 = arith.constant 0 : index
    %c0_50 = arith.constant 0 : index
    %71 = vector.load %arg6[%c0_49, %c0_50] : memref<64x128xf32, #tpu.memory_space<vmem>>, vector<64x128xf32>
    %cst_51 = arith.constant dense<0.000000e+00> : vector<32x128xf32>
    %72 = tpu.matmul %57, %71, %cst_51 {dimension_numbers = #tpu.dot_dimension_numbers<[1], [0], [0], [1], [0, 0, 1, 1], [], []>} : vector<32x64xf32>, vector<64x128xf32>, vector<32x128xf32> -> vector<32x128xf32>
    %c0_52 = arith.constant 0 : index
    %c0_53 = arith.constant 0 : index
    %73 = vector.load %arg7[%c0_52, %c0_53] : memref<1x128xf32, #tpu.memory_space<vmem>>, vector<1x128xf32>
    %74 = vector.broadcast %73 : vector<1x128xf32> to vector<32x128xf32>
    %75 = arith.addf %72, %74 : vector<32x128xf32>
    %76 = vector.extract_strided_slice %75 {offsets = [0, 0], sizes = [32, 64], strides = [1, 1]} : vector<32x128xf32> to vector<32x64xf32>
    %77 = vector.extract_strided_slice %75 {offsets = [0, 64], sizes = [32, 64], strides = [1, 1]} : vector<32x128xf32> to vector<32x64xf32>
    %78 = arith.negf %77 : vector<32x64xf32>
    %79 = math.exp %78 : vector<32x64xf32>
    %cst_54 = arith.constant 1.000000e+00 : f32
    %80 = vector.broadcast %cst_54 : f32 to vector<32x64xf32>
    %81 = arith.addf %80, %79 : vector<32x64xf32>
    %82 = arith.divf %80, %81 : vector<32x64xf32>
    %83 = arith.mulf %76, %82 : vector<32x64xf32>
    %c0_55 = arith.constant 0 : index
    %c0_56 = arith.constant 0 : index
    %84 = vector.load %arg8[%c0_55, %c0_56] : memref<64x128xf32, #tpu.memory_space<vmem>>, vector<64x128xf32>
    %cst_57 = arith.constant dense<0.000000e+00> : vector<32x128xf32>
    %85 = tpu.matmul %70, %84, %cst_57 {dimension_numbers = #tpu.dot_dimension_numbers<[1], [0], [0], [1], [0, 0, 1, 1], [], []>} : vector<32x64xf32>, vector<64x128xf32>, vector<32x128xf32> -> vector<32x128xf32>
    %c0_58 = arith.constant 0 : index
    %c0_59 = arith.constant 0 : index
    %86 = vector.load %arg9[%c0_58, %c0_59] : memref<1x128xf32, #tpu.memory_space<vmem>>, vector<1x128xf32>
    %87 = vector.broadcast %86 : vector<1x128xf32> to vector<32x128xf32>
    %88 = arith.addf %85, %87 : vector<32x128xf32>
    %89 = vector.extract_strided_slice %88 {offsets = [0, 0], sizes = [32, 64], strides = [1, 1]} : vector<32x128xf32> to vector<32x64xf32>
    %90 = vector.extract_strided_slice %88 {offsets = [0, 64], sizes = [32, 64], strides = [1, 1]} : vector<32x128xf32> to vector<32x64xf32>
    %91 = arith.negf %90 : vector<32x64xf32>
    %92 = math.exp %91 : vector<32x64xf32>
    %cst_60 = arith.constant 1.000000e+00 : f32
    %93 = vector.broadcast %cst_60 : f32 to vector<32x64xf32>
    %94 = arith.addf %93, %92 : vector<32x64xf32>
    %95 = arith.divf %93, %94 : vector<32x64xf32>
    %96 = arith.mulf %89, %95 : vector<32x64xf32>
    %c0_61 = arith.constant 0 : index
    %c0_62 = arith.constant 0 : index
    %97 = vector.load %arg10[%c0_61, %c0_62] : memref<64x128xf32, #tpu.memory_space<vmem>>, vector<64x128xf32>
    %cst_63 = arith.constant dense<0.000000e+00> : vector<32x128xf32>
    %98 = tpu.matmul %83, %97, %cst_63 {dimension_numbers = #tpu.dot_dimension_numbers<[1], [0], [0], [1], [0, 0, 1, 1], [], []>} : vector<32x64xf32>, vector<64x128xf32>, vector<32x128xf32> -> vector<32x128xf32>
    %c0_64 = arith.constant 0 : index
    %c0_65 = arith.constant 0 : index
    %99 = vector.load %arg11[%c0_64, %c0_65] : memref<1x128xf32, #tpu.memory_space<vmem>>, vector<1x128xf32>
    %100 = vector.broadcast %99 : vector<1x128xf32> to vector<32x128xf32>
    %101 = arith.addf %98, %100 : vector<32x128xf32>
    %102 = vector.extract_strided_slice %101 {offsets = [0, 0], sizes = [32, 64], strides = [1, 1]} : vector<32x128xf32> to vector<32x64xf32>
    %103 = vector.extract_strided_slice %101 {offsets = [0, 64], sizes = [32, 64], strides = [1, 1]} : vector<32x128xf32> to vector<32x64xf32>
    %104 = arith.negf %103 : vector<32x64xf32>
    %105 = math.exp %104 : vector<32x64xf32>
    %cst_66 = arith.constant 1.000000e+00 : f32
    %106 = vector.broadcast %cst_66 : f32 to vector<32x64xf32>
    %107 = arith.addf %106, %105 : vector<32x64xf32>
    %108 = arith.divf %106, %107 : vector<32x64xf32>
    %109 = arith.mulf %102, %108 : vector<32x64xf32>
    %c0_67 = arith.constant 0 : index
    %c0_68 = arith.constant 0 : index
    %110 = vector.load %arg12[%c0_67, %c0_68] : memref<64x128xf32, #tpu.memory_space<vmem>>, vector<64x128xf32>
    %cst_69 = arith.constant dense<0.000000e+00> : vector<32x128xf32>
    %111 = tpu.matmul %96, %110, %cst_69 {dimension_numbers = #tpu.dot_dimension_numbers<[1], [0], [0], [1], [0, 0, 1, 1], [], []>} : vector<32x64xf32>, vector<64x128xf32>, vector<32x128xf32> -> vector<32x128xf32>
    %c0_70 = arith.constant 0 : index
    %c0_71 = arith.constant 0 : index
    %112 = vector.load %arg13[%c0_70, %c0_71] : memref<1x128xf32, #tpu.memory_space<vmem>>, vector<1x128xf32>
    %113 = vector.broadcast %112 : vector<1x128xf32> to vector<32x128xf32>
    %114 = arith.addf %111, %113 : vector<32x128xf32>
    %115 = vector.extract_strided_slice %114 {offsets = [0, 0], sizes = [32, 64], strides = [1, 1]} : vector<32x128xf32> to vector<32x64xf32>
    %116 = vector.extract_strided_slice %114 {offsets = [0, 64], sizes = [32, 64], strides = [1, 1]} : vector<32x128xf32> to vector<32x64xf32>
    %117 = arith.negf %116 : vector<32x64xf32>
    %118 = math.exp %117 : vector<32x64xf32>
    %cst_72 = arith.constant 1.000000e+00 : f32
    %119 = vector.broadcast %cst_72 : f32 to vector<32x64xf32>
    %120 = arith.addf %119, %118 : vector<32x64xf32>
    %121 = arith.divf %119, %120 : vector<32x64xf32>
    %122 = arith.mulf %115, %121 : vector<32x64xf32>
    %123 = vector.extract_strided_slice %109 {offsets = [0, 0], sizes = [32, 16], strides = [1, 1]} : vector<32x64xf32> to vector<32x16xf32>
    %124 = vector.extract_strided_slice %109 {offsets = [0, 16], sizes = [32, 16], strides = [1, 1]} : vector<32x64xf32> to vector<32x16xf32>
    %125 = vector.extract_strided_slice %109 {offsets = [0, 32], sizes = [32, 16], strides = [1, 1]} : vector<32x64xf32> to vector<32x16xf32>
    %126 = vector.extract_strided_slice %122 {offsets = [0, 16], sizes = [32, 16], strides = [1, 1]} : vector<32x64xf32> to vector<32x16xf32>
    %cst_73 = arith.constant 2.000000e+00 : f32
    %127 = vector.broadcast %cst_73 : f32 to vector<32x16xf32>
    %128 = arith.mulf %127, %124 : vector<32x16xf32>
    %129 = arith.addf %123, %128 : vector<32x16xf32>
    %130 = arith.addf %129, %125 : vector<32x16xf32>
    %cst_74 = arith.constant 2.500000e-01 : f32
    %131 = vector.broadcast %cst_74 : f32 to vector<32x16xf32>
    %132 = arith.mulf %130, %131 : vector<32x16xf32>
    %cst_75 = arith.constant 2.000000e+00 : f32
    %133 = vector.broadcast %cst_75 : f32 to vector<32x16xf32>
    %134 = arith.mulf %133, %126 : vector<32x16xf32>
    %135 = arith.subf %123, %134 : vector<32x16xf32>
    %136 = arith.subf %135, %125 : vector<32x16xf32>
    %cst_76 = arith.constant 2.500000e-01 : f32
    %137 = vector.broadcast %cst_76 : f32 to vector<32x16xf32>
    %138 = arith.mulf %136, %137 : vector<32x16xf32>
    %cst_77 = arith.constant 2.000000e+00 : f32
    %139 = vector.broadcast %cst_77 : f32 to vector<32x16xf32>
    %140 = arith.mulf %139, %124 : vector<32x16xf32>
    %141 = arith.subf %123, %140 : vector<32x16xf32>
    %142 = arith.addf %141, %125 : vector<32x16xf32>
    %cst_78 = arith.constant 2.500000e-01 : f32
    %143 = vector.broadcast %cst_78 : f32 to vector<32x16xf32>
    %144 = arith.mulf %142, %143 : vector<32x16xf32>
    %cst_79 = arith.constant 2.000000e+00 : f32
    %145 = vector.broadcast %cst_79 : f32 to vector<32x16xf32>
    %146 = arith.mulf %145, %126 : vector<32x16xf32>
    %147 = arith.addf %123, %146 : vector<32x16xf32>
    %148 = arith.subf %147, %125 : vector<32x16xf32>
    %cst_80 = arith.constant 2.500000e-01 : f32
    %149 = vector.broadcast %cst_80 : f32 to vector<32x16xf32>
    %150 = arith.mulf %148, %149 : vector<32x16xf32>
    %151 = tpu.concatenate %132, %138, %144, %150 in 1 : vector<32x16xf32>, vector<32x16xf32>, vector<32x16xf32>, vector<32x16xf32> -> vector<32x64xf32>
    %c0_81 = arith.constant 0 : index
    %c0_82 = arith.constant 0 : index
    %152 = vector.load %arg14[%c0_81, %c0_82] : memref<64x16xf32, #tpu.memory_space<vmem>>, vector<64x16xf32>
    %cst_83 = arith.constant dense<0.000000e+00> : vector<32x16xf32>
    %153 = tpu.matmul %151, %152, %cst_83 {dimension_numbers = #tpu.dot_dimension_numbers<[1], [0], [0], [1], [0, 0, 1, 1], [], []>} : vector<32x64xf32>, vector<64x16xf32>, vector<32x16xf32> -> vector<32x16xf32>
    %c0_84 = arith.constant 0 : index
    %c0_85 = arith.constant 0 : index
    %154 = vector.load %arg15[%c0_84, %c0_85] : memref<16x16xf32, #tpu.memory_space<vmem>>, vector<16x16xf32>
    %cst_86 = arith.constant dense<0.000000e+00> : vector<32x16xf32>
    %155 = tpu.matmul %153, %154, %cst_86 {dimension_numbers = #tpu.dot_dimension_numbers<[1], [0], [0], [1], [0, 0, 1, 1], [], []>} : vector<32x16xf32>, vector<16x16xf32>, vector<32x16xf32> -> vector<32x16xf32>
    %c0_87 = arith.constant 0 : index
    %c0_88 = arith.constant 0 : index
    %156 = vector.load %arg16[%c0_87, %c0_88] : memref<1x16xf32, #tpu.memory_space<vmem>>, vector<1x16xf32>
    %157 = vector.broadcast %156 : vector<1x16xf32> to vector<32x16xf32>
    %158 = arith.addf %155, %157 : vector<32x16xf32>
    %159 = arith.negf %158 : vector<32x16xf32>
    %160 = math.exp %159 : vector<32x16xf32>
    %cst_89 = arith.constant 1.000000e+00 : f32
    %161 = vector.broadcast %cst_89 : f32 to vector<32x16xf32>
    %162 = arith.addf %161, %160 : vector<32x16xf32>
    %163 = arith.divf %161, %162 : vector<32x16xf32>
    %c0_90 = arith.constant 0 : index
    %c0_91 = arith.constant 0 : index
    %164 = vector.load %arg17[%c0_90, %c0_91] : memref<16x8xf32, #tpu.memory_space<vmem>>, vector<16x8xf32>
    %cst_92 = arith.constant dense<0.000000e+00> : vector<32x8xf32>
    %165 = tpu.matmul %163, %164, %cst_92 {dimension_numbers = #tpu.dot_dimension_numbers<[1], [0], [0], [1], [0, 0, 1, 1], [], []>} : vector<32x16xf32>, vector<16x8xf32>, vector<32x8xf32> -> vector<32x8xf32>
    %c0_93 = arith.constant 0 : index
    %c0_94 = arith.constant 0 : index
    %166 = vector.load %arg18[%c0_93, %c0_94] : memref<1x8xf32, #tpu.memory_space<vmem>>, vector<1x8xf32>
    %167 = vector.broadcast %166 : vector<1x8xf32> to vector<32x8xf32>
    %168 = arith.addf %165, %167 : vector<32x8xf32>
    %169 = vector.extract_strided_slice %168 {offsets = [0, 0], sizes = [16, 8], strides = [1, 1]} : vector<32x8xf32> to vector<16x8xf32>
    %c0_95 = arith.constant 0 : index
    %c0_96 = arith.constant 0 : index
    %c0_97 = arith.constant 0 : index
    %170 = vector.load %arg23[%c0_95, %c0_96, %c0_97] : memref<2x16x8xf32, #tpu.memory_space<vmem>>, vector<1x16x8xf32>
    %171 = vector.shape_cast %170 : vector<1x16x8xf32> to vector<16x8xf32>
    %172 = vector.shape_cast %169 : vector<16x8xf32> to vector<1x16x8xf32>
    tpu.vector_store %arg23[%c0_95, %c0_96, %c0_97], %172 {strides = array<i32>} : memref<2x16x8xf32, #tpu.memory_space<vmem>>, vector<1x16x8xf32>,
    %173 = vector.extract_strided_slice %168 {offsets = [16, 0], sizes = [16, 8], strides = [1, 1]} : vector<32x8xf32> to vector<16x8xf32>
    %c1_98 = arith.constant 1 : index
    %c0_99 = arith.constant 0 : index
    %c0_100 = arith.constant 0 : index
    %174 = vector.load %arg23[%c1_98, %c0_99, %c0_100] : memref<2x16x8xf32, #tpu.memory_space<vmem>>, vector<1x16x8xf32>
    %175 = vector.shape_cast %174 : vector<1x16x8xf32> to vector<16x8xf32>
    %176 = vector.shape_cast %173 : vector<16x8xf32> to vector<1x16x8xf32>
    tpu.vector_store %arg23[%c1_98, %c0_99, %c0_100], %176 {strides = array<i32>} : memref<2x16x8xf32, #tpu.memory_space<vmem>>, vector<1x16x8xf32>,
    %177 = tpu.concatenate %1, %3 in 0 : vector<16x8xf32>, vector<16x8xf32> -> vector<32x8xf32>
    %c0_101 = arith.constant 0 : index
    %c0_102 = arith.constant 0 : index
    %178 = vector.load %arg19[%c0_101, %c0_102] : memref<8x8xf32, #tpu.memory_space<vmem>>, vector<8x8xf32>
    %cst_103 = arith.constant dense<0.000000e+00> : vector<32x8xf32>
    %179 = tpu.matmul %177, %178, %cst_103 {dimension_numbers = #tpu.dot_dimension_numbers<[1], [0], [0], [1], [0, 0, 1, 1], [], []>} : vector<32x8xf32>, vector<8x8xf32>, vector<32x8xf32> -> vector<32x8xf32>
    %c0_104 = arith.constant 0 : index
    %c0_105 = arith.constant 0 : index
    %180 = vector.load %arg20[%c0_104, %c0_105] : memref<1x8xf32, #tpu.memory_space<vmem>>, vector<1x8xf32>
    %181 = vector.broadcast %180 : vector<1x8xf32> to vector<32x8xf32>
    %182 = arith.addf %179, %181 : vector<32x8xf32>
    %c0_106 = arith.constant 0 : index
    %c0_107 = arith.constant 0 : index
    %183 = vector.load %arg21[%c0_106, %c0_107] : memref<16x8xf32, #tpu.memory_space<vmem>>, vector<16x8xf32>
    %cst_108 = arith.constant dense<0.000000e+00> : vector<32x8xf32>
    %184 = tpu.matmul %153, %183, %cst_108 {dimension_numbers = #tpu.dot_dimension_numbers<[1], [0], [0], [1], [0, 0, 1, 1], [], []>} : vector<32x16xf32>, vector<16x8xf32>, vector<32x8xf32> -> vector<32x8xf32>
    %c0_109 = arith.constant 0 : index
    %c0_110 = arith.constant 0 : index
    %185 = vector.load %arg22[%c0_109, %c0_110] : memref<1x8xf32, #tpu.memory_space<vmem>>, vector<1x8xf32>
    %186 = vector.broadcast %185 : vector<1x8xf32> to vector<32x8xf32>
    %187 = arith.addf %184, %186 : vector<32x8xf32>
    %188 = arith.subf %187, %182 : vector<32x8xf32>
    %189 = arith.negf %188 : vector<32x8xf32>
    %190 = math.exp %189 : vector<32x8xf32>
    %cst_111 = arith.constant 1.000000e+00 : f32
    %191 = vector.broadcast %cst_111 : f32 to vector<32x8xf32>
    %192 = arith.addf %191, %190 : vector<32x8xf32>
    %193 = arith.divf %191, %192 : vector<32x8xf32>
    %194 = vector.extract_strided_slice %193 {offsets = [0, 0], sizes = [16, 8], strides = [1, 1]} : vector<32x8xf32> to vector<16x8xf32>
    %c0_112 = arith.constant 0 : index
    %c0_113 = arith.constant 0 : index
    %c0_114 = arith.constant 0 : index
    %c0_115 = arith.constant 0 : index
    %195 = vector.load %arg24[%c0_112, %c0_113, %c0_114, %c0_115] : memref<2x1x16x8xf32, #tpu.memory_space<vmem>>, vector<1x1x16x8xf32>
    %196 = vector.shape_cast %195 : vector<1x1x16x8xf32> to vector<16x8xf32>
    %197 = vector.shape_cast %194 : vector<16x8xf32> to vector<1x1x16x8xf32>
    tpu.vector_store %arg24[%c0_112, %c0_113, %c0_114, %c0_115], %197 {strides = array<i32>} : memref<2x1x16x8xf32, #tpu.memory_space<vmem>>, vector<1x1x16x8xf32>,
    %198 = vector.extract_strided_slice %193 {offsets = [16, 0], sizes = [16, 8], strides = [1, 1]} : vector<32x8xf32> to vector<16x8xf32>
    %c1_116 = arith.constant 1 : index
    %c0_117 = arith.constant 0 : index
    %c0_118 = arith.constant 0 : index
    %c0_119 = arith.constant 0 : index
    %199 = vector.load %arg24[%c1_116, %c0_117, %c0_118, %c0_119] : memref<2x1x16x8xf32, #tpu.memory_space<vmem>>, vector<1x1x16x8xf32>
    %200 = vector.shape_cast %199 : vector<1x1x16x8xf32> to vector<16x8xf32>
    %201 = vector.shape_cast %198 : vector<16x8xf32> to vector<1x1x16x8xf32>
    tpu.vector_store %arg24[%c1_116, %c0_117, %c0_118, %c0_119], %201 {strides = array<i32>} : memref<2x1x16x8xf32, #tpu.memory_space<vmem>>, vector<1x1x16x8xf32>,
    return
  }
}

module attributes {stable_mosaic.version = 11 : i64} {
  func.func @_fc_kernel(%arg0: memref<16x16xf32, #tpu.memory_space<vmem>>, %arg1: memref<16x16xf32, #tpu.memory_space<vmem>>, %arg2: memref<1x16xf32, #tpu.memory_space<vmem>>, %arg3: memref<16x1xf32, #tpu.memory_space<vmem>>, %arg4: memref<1x1xf32, #tpu.memory_space<vmem>>, %arg5: memref<16x1xf32, #tpu.memory_space<vmem>>) attributes {dimension_semantics = [], scalar_prefetch = 0 : i64, scratch_operands = 0 : i64, tpu.core_type = #tpu.core_type<tc>} {
    %c0 = arith.constant 0 : index
    %c0_0 = arith.constant 0 : index
    %0 = vector.load %arg0[%c0, %c0_0] : memref<16x16xf32, #tpu.memory_space<vmem>>, vector<16x16xf32>
    %c0_1 = arith.constant 0 : index
    %c0_2 = arith.constant 0 : index
    %1 = vector.load %arg1[%c0_1, %c0_2] : memref<16x16xf32, #tpu.memory_space<vmem>>, vector<16x16xf32>
    %cst = arith.constant dense<0.000000e+00> : vector<16x16xf32>
    %2 = tpu.matmul %0, %1, %cst {dimension_numbers = #tpu.dot_dimension_numbers<[1], [0], [0], [1], [0, 0, 1, 1], [], []>} : vector<16x16xf32>, vector<16x16xf32>, vector<16x16xf32> -> vector<16x16xf32>
    %c0_3 = arith.constant 0 : index
    %c0_4 = arith.constant 0 : index
    %3 = vector.load %arg2[%c0_3, %c0_4] : memref<1x16xf32, #tpu.memory_space<vmem>>, vector<1x16xf32>
    %4 = vector.broadcast %3 : vector<1x16xf32> to vector<16x16xf32>
    %5 = arith.addf %2, %4 : vector<16x16xf32>
    %cst_5 = arith.constant 0.000000e+00 : f32
    %6 = vector.broadcast %cst_5 : f32 to vector<16x16xf32>
    %7 = arith.cmpf ogt, %5, %6 : vector<16x16xf32>
    %cst_6 = arith.constant 0.00999999977 : f32
    %8 = vector.broadcast %cst_6 : f32 to vector<16x16xf32>
    %9 = arith.mulf %8, %5 : vector<16x16xf32>
    %10 = arith.select %7, %5, %9 : vector<16x16xi1>, vector<16x16xf32>
    %c0_7 = arith.constant 0 : index
    %c0_8 = arith.constant 0 : index
    %11 = vector.load %arg3[%c0_7, %c0_8] : memref<16x1xf32, #tpu.memory_space<vmem>>, vector<16x1xf32>
    %cst_9 = arith.constant dense<0.000000e+00> : vector<16x1xf32>
    %12 = tpu.matmul %10, %11, %cst_9 {dimension_numbers = #tpu.dot_dimension_numbers<[1], [0], [0], [1], [0, 0, 1, 1], [], []>} : vector<16x16xf32>, vector<16x1xf32>, vector<16x1xf32> -> vector<16x1xf32>
    %c0_10 = arith.constant 0 : index
    %c0_11 = arith.constant 0 : index
    %13 = vector.load %arg4[%c0_10, %c0_11] : memref<1x1xf32, #tpu.memory_space<vmem>>, vector<1x1xf32>
    %14 = vector.broadcast %13 : vector<1x1xf32> to vector<16x1xf32>
    %15 = arith.addf %12, %14 : vector<16x1xf32>
    %c0_12 = arith.constant 0 : index
    %c0_13 = arith.constant 0 : index
    %16 = vector.load %arg5[%c0_12, %c0_13] : memref<16x1xf32, #tpu.memory_space<vmem>>, vector<16x1xf32>
    tpu.vector_store %arg5[%c0_12, %c0_13], %15 {strides = array<i32>} : memref<16x1xf32, #tpu.memory_space<vmem>>, vector<16x1xf32>,
    return
  }
}

</mosaic_0001>

<llo_original>
// kernel: model_forward.6
$region0: #{model_forward.6}
  #allocation0 [shape = 'u32[]', space=smem, size = 0x4, offset = 0x4, fixed_abs, tag = 'smem constant byte address 0x4 - core index']
  #allocation1 [shape = 'u32[144,128]{1,0:T(1,128)}', space=vmem, size = 0x12000, scoped, tag = 'internal scratch']
  %s0 = inlined_call_operand.vmem [shape: f32[2,16,16], index: 0, kind: input, shape index: {}]
  %s1 = inlined_call_operand.vmem [shape: f32[2,16,16], index: 1, kind: input, shape index: {}]
  %s2 = inlined_call_operand.vmem [shape: f32[1,16], index: 2, kind: input, shape index: {}]
  %s3 = inlined_call_operand.vmem [shape: f32[16,1], index: 3, kind: input, shape index: {}]
  %s4 = inlined_call_operand.vmem [shape: f32[16,16], index: 4, kind: output, shape index: {}]
  %s5 = sld [smem:[#allocation0]]
  $region26: #{model_forward.6} parent=0
    _
  %s7 = ssub.s32 1, %s5
  %s8 = scalar_select 0, %s7, %s5
  // Predicated region
  $region2: #{model_forward.6} parent=0 // pred_check
    _
  $region3: #{model_forward.6} parent=0 // pred_check_branch
    %10 = sbr.rel (0) target = $region5
  $region4: #{model_forward.6} parent=0 // pred_region
    _
  $region5: #{model_forward.6} parent=0 // pred_fallthru
    _
  // Predicated region
  $region6: #{model_forward.6} parent=0 // pred_check
    _
  $region7: #{model_forward.6} parent=0 // pred_check_branch
    %12 = sbr.rel (0) target = $region9
  $region8: #{model_forward.6} parent=0 // pred_region
    _
  $region9: #{model_forward.6} parent=0 // pred_fallthru
    _
  // Predicated region
  $region10: #{model_forward.6} parent=0 // pred_check
    _
  $region11: #{model_forward.6} parent=0 // pred_check_branch
    %14 = sbr.rel (0) target = $region13
  $region12: #{model_forward.6} parent=0 // pred_region
    _
  $region13: #{model_forward.6} parent=0 // pred_fallthru
    _
  // Predicated region
  $region14: #{model_forward.6} parent=0 // pred_check
    _
  $region15: #{model_forward.6} parent=0 // pred_check_branch
    %16 = sbr.rel (0) target = $region17
  $region16: #{model_forward.6} parent=0 // pred_region
    _
  $region17: #{model_forward.6} parent=0 // pred_fallthru
    _
  %v17 = vld [vmem:[%s0] sm:$0xff]
  %v18 = vld [vmem:[%s0 + $0x8] sm:$0xff]
  %v19 = vld [vmem:[%s2] sm:$0x1]
  %v21 = vlaneseq
  %v22 = vshrl.u32 %v21, 7
  %v23 = vsub.s32 0, %v22
  %v24 = vrot.slane %v19, %v23
  %v26 = vmul.f32 %v17, %v24
  %v27 = vmul.f32 %v18, %v24
  %vm28 = vcmask 130048
  %v29 = vsel %vm28, %v26, 0.0
  %30 = vadd.xlane.f32.xlu0 %v29
  %v31 = vpop.xlane.xlu0 %30
  %v32 = vsel %vm28, %v27, 0.0
  %33 = vadd.xlane.f32.xlu0 %v32
  %v34 = vpop.xlane.xlu0 %33
  %v35 = vld [vmem:[%s1] sm:$0xff]
  %v36 = vld [vmem:[%s1 + $0x8] sm:$0xff]
  %v37 = vld [vmem:[%s3] sm:$0xff]
  %v38 = vld [vmem:[%s3 + $0x8] sm:$0xff]
  %40 = vset.pattern.permute.xlu0 0
  %41 = vperm.xlu0 %40, %v37
  %v42 = vpop.permute.xlu0 %41
  %45 = vset.pattern.permute.xlu0 0
  %46 = vperm.xlu0 %45, %v38
  %v47 = vpop.permute.xlu0 %46
  %v49 = vmul.f32 %v35, %v42
  %v50 = vmul.f32 %v36, %v47
  %v51 = vsel %vm28, %v49, 0.0
  %v52 = vsel %vm28, %v50, 0.0
  %v53 = vadd.f32 %v51, %v52
  %v54 = vrot.slane %v53, 4
  %v55 = vadd.f32 %v53, %v54
  %v56 = vrot.slane %v55, 2
  %v57 = vadd.f32 %v55, %v56
  %v58 = vrot.slane %v57, 1
  %v59 = vadd.f32 %v57, %v58
  %v60 = vadd.f32 %v31, %v59
  %v61 = vadd.f32 %v34, %v59
  %vm62 = vcmp.gt.f32.partialorder %v60, 0.0
  %vm63 = vcmp.gt.f32.partialorder %v61, 0.0
  %v64 = vmul.f32 %v60, 0.2
  %v65 = vmul.f32 %v61, 0.2
  %v66 = vsel %vm62, %v60, %v64
  %v67 = vsel %vm63, %v61, %v65
  %v68 = vsel %vm28, %v66, -inf
  %69 = vmax.xlane.f32.xlu0 %v68
  %v70 = vpop.xlane.xlu0 %69
  %v71 = vsel %vm28, %v67, -inf
  %72 = vmax.xlane.f32.xlu0 %v71
  %v73 = vpop.xlane.xlu0 %72
  %v74 = vsub.f32 %v66, %v70
  %v75 = vsub.f32 %v67, %v73
  %v76 = vmul.f32 %v74, 1.442695
  %v77 = vpow.pop %v76
  %v78 = vmul.f32 %v75, 1.442695
  %v79 = vpow.pop %v78
  %v80 = vsel %vm28, %v77, 0.0
  %81 = vadd.xlane.f32.xlu0 %v80
  %v82 = vpop.xlane.xlu0 %81
  %v83 = vsel %vm28, %v79, 0.0
  %84 = vadd.xlane.f32.xlu0 %v83
  %v85 = vpop.xlane.xlu0 %84
  %v86 = vrcp.pop %v82
  %v87 = vmul.f32 %v77, %v86
  %v88 = vrcp.pop %v85
  %v89 = vmul.f32 %v79, %v88
  %s90 = scalar_lea.vmem %s0, 16
  %v91 = vld [vmem:[%s90] sm:$0xff]
  %v92 = vld [vmem:[%s90 + $0x8] sm:$0xff]
  %v93 = vmul.f32 %v91, %v24
  %v94 = vmul.f32 %v92, %v24
  %v95 = vsel %vm28, %v93, 0.0
  %96 = vadd.xlane.f32.xlu0 %v95
  %v97 = vpop.xlane.xlu0 %96
  %v98 = vsel %vm28, %v94, 0.0
  %99 = vadd.xlane.f32.xlu0 %v98
  %v100 = vpop.xlane.xlu0 %99
  %s101 = scalar_lea.vmem %s1, 16
  %v102 = vld [vmem:[%s101] sm:$0xff]
  %v103 = vld [vmem:[%s101 + $0x8] sm:$0xff]
  %v104 = vmul.f32 %v102, %v42
  %v105 = vmul.f32 %v103, %v47
  %v106 = vsel %vm28, %v104, 0.0
  %v107 = vsel %vm28, %v105, 0.0
  %v108 = vadd.f32 %v106, %v107
  %v109 = vrot.slane %v108, 4
  %v110 = vadd.f32 %v108, %v109
  %v111 = vrot.slane %v110, 2
  %v112 = vadd.f32 %v110, %v111
  %v113 = vrot.slane %v112, 1
  %v114 = vadd.f32 %v112, %v113
  %v115 = vadd.f32 %v97, %v114
  %v116 = vadd.f32 %v100, %v114
  %vm117 = vcmp.gt.f32.partialorder %v115, 0.0
  %vm118 = vcmp.gt.f32.partialorder %v116, 0.0
  %v119 = vmul.f32 %v115, 0.2
  %v120 = vmul.f32 %v116, 0.2
  %v121 = vsel %vm117, %v115, %v119
  %v122 = vsel %vm118, %v116, %v120
  %v123 = vsel %vm28, %v121, -inf
  %124 = vmax.xlane.f32.xlu0 %v123
  %v125 = vpop.xlane.xlu0 %124
  %v126 = vsel %vm28, %v122, -inf
  %127 = vmax.xlane.f32.xlu0 %v126
  %v128 = vpop.xlane.xlu0 %127
  %v129 = vsub.f32 %v121, %v125
  %v130 = vsub.f32 %v122, %v128
  %v131 = vmul.f32 %v129, 1.442695
  %v132 = vpow.pop %v131
  %v133 = vmul.f32 %v130, 1.442695
  %v134 = vpow.pop %v133
  %v135 = vsel %vm28, %v132, 0.0
  %136 = vadd.xlane.f32.xlu0 %v135
  %v137 = vpop.xlane.xlu0 %136
  %v138 = vsel %vm28, %v134, 0.0
  %139 = vadd.xlane.f32.xlu0 %v138
  %v140 = vpop.xlane.xlu0 %139
  %v141 = vrcp.pop %v137
  %v142 = vmul.f32 %v132, %v141
  %v143 = vrcp.pop %v140
  %v144 = vmul.f32 %v134, %v143
  %v145 = vadd.f32 %v87, %v142
  %v146 = vadd.f32 %v89, %v144
  %v147 = vmul.f32 %v145, 0.5
  %v148 = vmul.f32 %v146, 0.5
  %149 = vst.msk [vmem:[%s4] sm:$0xff] %vm28, %v147
  %150 = vst.msk [vmem:[%s4 + $0x8] sm:$0xff] %vm28, %v148
  // Predicated region
  $region18: #{model_forward.6} parent=0 // pred_check
    _
  $region19: #{model_forward.6} parent=0 // pred_check_branch
    %152 = sbr.rel (0) target = $region21
  $region20: #{model_forward.6} parent=0 // pred_region
    _
  $region21: #{model_forward.6} parent=0 // pred_fallthru
    _
  // Predicated region
  $region22: #{model_forward.6} parent=0 // pred_check
    _
  $region23: #{model_forward.6} parent=0 // pred_check_branch
    %154 = sbr.rel (0) target = $region25
  $region24: #{model_forward.6} parent=0 // pred_region
    _
  $region25: #{model_forward.6} parent=0 // pred_fallthru
    _

// kernel: model_forward.9
$region0: #{model_forward.9}
  #allocation0 [shape = 'u32[]', space=smem, size = 0x4, offset = 0x4, fixed_abs, tag = 'smem constant byte address 0x4 - core index']
  #allocation1 [shape = 'u32[144,128]{1,0:T(1,128)}', space=vmem, size = 0x12000, scoped, tag = 'internal scratch']
  #allocation2 [shape = 'f32[1,1]{1,0:T(1,128)S(1)}', space=vmem, size = 0x200, scoped, tag = 'scoped memory for model_forward.9']
  %s0 = inlined_call_operand.vmem [shape: f32[16,16], index: 0, kind: input, shape index: {}]
  %s1 = inlined_call_operand.vmem [shape: f32[16,16], index: 1, kind: input, shape index: {}]
  %s2 = inlined_call_operand.vmem [shape: f32[1,16], index: 2, kind: input, shape index: {}]
  %s3 = inlined_call_operand.vmem [shape: f32[16,1], index: 3, kind: input, shape index: {}]
  %s4 = inlined_call_operand.<no memory space> [shape: f32[1,1], index: 4, kind: input, shape index: {}]
  %s5 = inlined_call_operand.vmem [shape: f32[16,1], index: 5, kind: output, shape index: {}]
  %s6 = sld [smem:[#allocation0]]
  $region30: #{model_forward.9} parent=0
    _
  %s8 = ssub.s32 1, %s6
  %s9 = scalar_select 0, %s8, %s6
  %v10 = vstv %s4
  %11 = vst [vmem:[#allocation2] sm:$0x1] %v10
  // Predicated region
  $region2: #{model_forward.9} parent=0 // pred_check
    _
  $region3: #{model_forward.9} parent=0 // pred_check_branch
    %13 = sbr.rel (0) target = $region5
  $region4: #{model_forward.9} parent=0 // pred_region
    _
  $region5: #{model_forward.9} parent=0 // pred_fallthru
    _
  // Predicated region
  $region6: #{model_forward.9} parent=0 // pred_check
    _
  $region7: #{model_forward.9} parent=0 // pred_check_branch
    %15 = sbr.rel (0) target = $region9
  $region8: #{model_forward.9} parent=0 // pred_region
    _
  $region9: #{model_forward.9} parent=0 // pred_fallthru
    _
  // Predicated region
  $region10: #{model_forward.9} parent=0 // pred_check
    _
  $region11: #{model_forward.9} parent=0 // pred_check_branch
    %17 = sbr.rel (0) target = $region13
  $region12: #{model_forward.9} parent=0 // pred_region
    _
  $region13: #{model_forward.9} parent=0 // pred_fallthru
    _
  // Predicated region
  $region14: #{model_forward.9} parent=0 // pred_check
    _
  $region15: #{model_forward.9} parent=0 // pred_check_branch
    %19 = sbr.rel (0) target = $region17
  $region16: #{model_forward.9} parent=0 // pred_region
    _
  $region17: #{model_forward.9} parent=0 // pred_fallthru
    _
  // Predicated region
  $region18: #{model_forward.9} parent=0 // pred_check
    _
  $region19: #{model_forward.9} parent=0 // pred_check_branch
    %21 = sbr.rel (0) target = $region21
  $region20: #{model_forward.9} parent=0 // pred_region
    _
  $region21: #{model_forward.9} parent=0 // pred_fallthru
    _
  %v22 = vld [vmem:[%s0] sm:$0xff]
  %v23 = vld [vmem:[%s0 + $0x8] sm:$0xff]
  %v24 = vld [vmem:[%s1] sm:$0xff]
  %v25 = vld [vmem:[%s1 + $0x8] sm:$0xff]
  %v26 = vld [vmem:[%s2] sm:$0x1]
  %v28 = vlaneseq
  %v29 = vshrl.u32 %v28, 7
  %v30 = vsub.s32 0, %v29
  %v31 = vrot.slane %v26, %v30
  %vm33 = vcmask 130048
  %v35 = vsel %vm33, %v22, 0
  %v38 = vsel %vm33, %v23, 0
  %40 = vmatprep.subr.mxu0 0.0
  %41 = vmatpush1.msra.mxu0 0.0
  %42 = vmatprep.subr.mxu0 0.0
  %43 = vmatpush1.msra.mxu0 0.0
  %44 = vmatprep.subr.mxu0 0.0
  %45 = vmatpush1.msra.mxu0 0.0
  %46 = vmatprep.subr.mxu0 0.0
  %47 = vmatpush1.msra.mxu0 0.0
  %48 = vmatprep.subr.mxu0 0.0
  %49 = vmatpush1.msra.mxu0 0.0
  %50 = vmatprep.subr.mxu0 0.0
  %51 = vmatpush1.msra.mxu0 0.0
  %52 = vmatprep.subr.mxu0 0.0
  %53 = vmatpush1.msra.mxu0 0.0
  %54 = vmatprep.subr.mxu0 0.0
  %55 = vmatpush1.msra.mxu0 0.0
  %56 = vmatprep.subr.mxu0 0.0
  %57 = vmatpush1.msra.mxu0 0.0
  %58 = vmatprep.subr.mxu0 0.0
  %59 = vmatpush1.msra.mxu0 0.0
  %60 = vmatprep.subr.mxu0 0.0
  %61 = vmatpush1.msra.mxu0 0.0
  %62 = vmatprep.subr.mxu0 0.0
  %63 = vmatpush1.msra.mxu0 0.0
  %64 = vmatprep.subr.mxu0 0.0
  %65 = vmatpush1.msra.mxu0 0.0
  %66 = vmatprep.subr.mxu0 0.0
  %67 = vmatpush1.msra.mxu0 0.0
  %68 = vmatprep.subr.mxu0 0.0
  %69 = vmatpush1.msra.mxu0 %v25
  %70 = vmatprep.subr.mxu0 0.0
  %71 = vmatpush1.msra.mxu0 %v24
  %72 = vmatprep.subr.mxu0 0.0
  %73 = vmatpush2.msra.mxu0 0.0
  %74 = vmatprep.subr.mxu0 0.0
  %75 = vmatpush2.msra.mxu0 0.0
  %76 = vmatprep.subr.mxu0 0.0
  %77 = vmatpush2.msra.mxu0 0.0
  %78 = vmatprep.subr.mxu0 0.0
  %79 = vmatpush2.msra.mxu0 0.0
  %80 = vmatprep.subr.mxu0 0.0
  %81 = vmatpush2.msra.mxu0 0.0
  %82 = vmatprep.subr.mxu0 0.0
  %83 = vmatpush2.msra.mxu0 0.0
  %84 = vmatprep.subr.mxu0 0.0
  %85 = vmatpush2.msra.mxu0 0.0
  %86 = vmatprep.subr.mxu0 0.0
  %87 = vmatpush2.msra.mxu0 0.0
  %88 = vmatprep.subr.mxu0 0.0
  %89 = vmatpush2.msra.mxu0 0.0
  %90 = vmatprep.subr.mxu0 0.0
  %91 = vmatpush2.msra.mxu0 0.0
  %92 = vmatprep.subr.mxu0 0.0
  %93 = vmatpush2.msra.mxu0 0.0
  %94 = vmatprep.subr.mxu0 0.0
  %95 = vmatpush2.msra.mxu0 0.0
  %96 = vmatprep.subr.mxu0 0.0
  %97 = vmatpush2.msra.mxu0 0.0
  %98 = vmatprep.subr.mxu0 0.0
  %99 = vmatpush2.msra.mxu0 0.0
  %100 = vmatprep.subr.mxu0 0.0
  %101 = vmatpush2.msra.mxu0 0.0
  %102 = vmatprep.subr.mxu0 0.0
  %103 = vmatpush2.msra.mxu0 0.0
  %104 = vmatprep.mubr.f32.mxu0 0.0
  %105 = vmatmul.mubr.f32.gmra.mxu0 %v35
  %v106 = vpop.f32.mrf.mxu0
  %v107 = vadd.f32 %v31, %v106
  %v108 = vpop.f32.mrf.mxu0
  %109 = vmatprep.mubr.f32.mxu0 0.0
  %110 = vmatmul.mubr.f32.gmra.mxu0 %v38
  %v111 = vpop.f32.mrf.mxu0
  %v112 = vadd.f32 %v31, %v111
  %v113 = vpop.f32.mrf.mxu0
  %114 = vdwg.mxu0
  %vm115 = vcmp.gt.f32.partialorder %v107, 0.0
  %vm116 = vcmp.gt.f32.partialorder %v112, 0.0
  %v117 = vmul.f32 %v107, 0.01
  %v118 = vmul.f32 %v112, 0.01
  %v119 = vsel %vm115, %v107, %v117
  %v120 = vsel %vm116, %v112, %v118
  %v121 = vld [vmem:[%s3] sm:$0xff]
  %v122 = vld [vmem:[%s3 + $0x8] sm:$0xff]
  %v123 = vld [vmem:[#allocation2] sm:$0x1]
  %v125 = vlaneseq
  %v126 = vshrl.u32 %v125, 7
  %v127 = vsub.s32 0, %v126
  %v128 = vrot.slane %v123, %v127
  %v131 = vsel %vm33, %v119, 0
  %v134 = vsel %vm33, %v120, 0
  %136 = vmatprep.subr.mxu0 0.0
  %137 = vmatpush1.msra.mxu0 0.0
  %138 = vmatprep.subr.mxu0 0.0
  %139 = vmatpush1.msra.mxu0 0.0
  %140 = vmatprep.subr.mxu0 0.0
  %141 = vmatpush1.msra.mxu0 0.0
  %142 = vmatprep.subr.mxu0 0.0
  %143 = vmatpush1.msra.mxu0 0.0
  %144 = vmatprep.subr.mxu0 0.0
  %145 = vmatpush1.msra.mxu0 0.0
  %146 = vmatprep.subr.mxu0 0.0
  %147 = vmatpush1.msra.mxu0 0.0
  %148 = vmatprep.subr.mxu0 0.0
  %149 = vmatpush1.msra.mxu0 0.0
  %150 = vmatprep.subr.mxu0 0.0
  %151 = vmatpush1.msra.mxu0 0.0
  %152 = vmatprep.subr.mxu0 0.0
  %153 = vmatpush1.msra.mxu0 0.0
  %154 = vmatprep.subr.mxu0 0.0
  %155 = vmatpush1.msra.mxu0 0.0
  %156 = vmatprep.subr.mxu0 0.0
  %157 = vmatpush1.msra.mxu0 0.0
  %158 = vmatprep.subr.mxu0 0.0
  %159 = vmatpush1.msra.mxu0 0.0
  %160 = vmatprep.subr.mxu0 0.0
  %161 = vmatpush1.msra.mxu0 0.0
  %162 = vmatprep.subr.mxu0 0.0
  %163 = vmatpush1.msra.mxu0 0.0
  %164 = vmatprep.subr.mxu0 0.0
  %165 = vmatpush1.msra.mxu0 %v122
  %166 = vmatprep.subr.mxu0 0.0
  %167 = vmatpush1.msra.mxu0 %v121
  %168 = vmatprep.subr.mxu0 0.0
  %169 = vmatpush2.msra.mxu0 0.0
  %170 = vmatprep.subr.mxu0 0.0
  %171 = vmatpush2.msra.mxu0 0.0
  %172 = vmatprep.subr.mxu0 0.0
  %173 = vmatpush2.msra.mxu0 0.0
  %174 = vmatprep.subr.mxu0 0.0
  %175 = vmatpush2.msra.mxu0 0.0
  %176 = vmatprep.subr.mxu0 0.0
  %177 = vmatpush2.msra.mxu0 0.0
  %178 = vmatprep.subr.mxu0 0.0
  %179 = vmatpush2.msra.mxu0 0.0
  %180 = vmatprep.subr.mxu0 0.0
  %181 = vmatpush2.msra.mxu0 0.0
  %182 = vmatprep.subr.mxu0 0.0
  %183 = vmatpush2.msra.mxu0 0.0
  %184 = vmatprep.subr.mxu0 0.0
  %185 = vmatpush2.msra.mxu0 0.0
  %186 = vmatprep.subr.mxu0 0.0
  %187 = vmatpush2.msra.mxu0 0.0
  %188 = vmatprep.subr.mxu0 0.0
  %189 = vmatpush2.msra.mxu0 0.0
  %190 = vmatprep.subr.mxu0 0.0
  %191 = vmatpush2.msra.mxu0 0.0
  %192 = vmatprep.subr.mxu0 0.0
  %193 = vmatpush2.msra.mxu0 0.0
  %194 = vmatprep.subr.mxu0 0.0
  %195 = vmatpush2.msra.mxu0 0.0
  %196 = vmatprep.subr.mxu0 0.0
  %197 = vmatpush2.msra.mxu0 0.0
  %198 = vmatprep.subr.mxu0 0.0
  %199 = vmatpush2.msra.mxu0 0.0
  %200 = vmatprep.mubr.f32.mxu0 0.0
  %201 = vmatmul.mubr.f32.gmra.mxu0 %v131
  %v202 = vpop.f32.mrf.mxu0
  %v203 = vadd.f32 %v128, %v202
  %v204 = vpop.f32.mrf.mxu0
  %205 = vmatprep.mubr.f32.mxu0 0.0
  %206 = vmatmul.mubr.f32.gmra.mxu0 %v134
  %v207 = vpop.f32.mrf.mxu0
  %v208 = vadd.f32 %v128, %v207
  %v209 = vpop.f32.mrf.mxu0
  %210 = vdwg.mxu0
  %vm211 = vcmask 7168
  %212 = vst.msk [vmem:[%s5] sm:$0xff] %vm211, %v203
  %213 = vst.msk [vmem:[%s5 + $0x8] sm:$0xff] %vm211, %v208
  // Predicated region
  $region22: #{model_forward.9} parent=0 // pred_check
    _
  $region23: #{model_forward.9} parent=0 // pred_check_branch
    %215 = sbr.rel (0) target = $region25
  $region24: #{model_forward.9} parent=0 // pred_region
    _
  $region25: #{model_forward.9} parent=0 // pred_fallthru
    _
  // Predicated region
  $region26: #{model_forward.9} parent=0 // pred_check
    _
  $region27: #{model_forward.9} parent=0 // pred_check_branch
    %217 = sbr.rel (0) target = $region29
  $region28: #{model_forward.9} parent=0 // pred_region
    _
  $region29: #{model_forward.9} parent=0 // pred_fallthru
    _

// kernel: model_forward.5
$region0: #{model_forward.5}
  #allocation0 [shape = 'u32[]', space=smem, size = 0x4, offset = 0x4, fixed_abs, tag = 'smem constant byte address 0x4 - core index']
  #allocation1 [shape = 'u32[144,128]{1,0:T(1,128)}', space=vmem, size = 0x12000, scoped, tag = 'internal scratch']
  %s0 = inlined_call_operand.vmem [shape: f32[16,2,8], index: 0, kind: input, shape index: {}]
  %s1 = inlined_call_operand.vmem [shape: f32[8,48], index: 1, kind: input, shape index: {}]
  %s2 = inlined_call_operand.vmem [shape: f32[1,48], index: 2, kind: input, shape index: {}]
  %s3 = inlined_call_operand.vmem [shape: f32[16,48], index: 3, kind: input, shape index: {}]
  %s4 = inlined_call_operand.vmem [shape: f32[1,48], index: 4, kind: input, shape index: {}]
  %s5 = inlined_call_operand.vmem [shape: f32[16,2,16], index: 5, kind: output, shape index: {}]
  %s6 = sld [smem:[#allocation0]]
  $region30: #{model_forward.5} parent=0
    _
  %s8 = ssub.s32 1, %s6
  %s9 = scalar_select 0, %s8, %s6
  // Predicated region
  $region2: #{model_forward.5} parent=0 // pred_check
    _
  $region3: #{model_forward.5} parent=0 // pred_check_branch
    %11 = sbr.rel (0) target = $region5
  $region4: #{model_forward.5} parent=0 // pred_region
    _
  $region5: #{model_forward.5} parent=0 // pred_fallthru
    _
  // Predicated region
  $region6: #{model_forward.5} parent=0 // pred_check
    _
  $region7: #{model_forward.5} parent=0 // pred_check_branch
    %13 = sbr.rel (0) target = $region9
  $region8: #{model_forward.5} parent=0 // pred_region
    _
  $region9: #{model_forward.5} parent=0 // pred_fallthru
    _
  // Predicated region
  $region10: #{model_forward.5} parent=0 // pred_check
    _
  $region11: #{model_forward.5} parent=0 // pred_check_branch
    %15 = sbr.rel (0) target = $region13
  $region12: #{model_forward.5} parent=0 // pred_region
    _
  $region13: #{model_forward.5} parent=0 // pred_fallthru
    _
  // Predicated region
  $region14: #{model_forward.5} parent=0 // pred_check
    _
  $region15: #{model_forward.5} parent=0 // pred_check_branch
    %17 = sbr.rel (0) target = $region17
  $region16: #{model_forward.5} parent=0 // pred_region
    _
  $region17: #{model_forward.5} parent=0 // pred_fallthru
    _
  // Predicated region
  $region18: #{model_forward.5} parent=0 // pred_check
    _
  $region19: #{model_forward.5} parent=0 // pred_check_branch
    %19 = sbr.rel (0) target = $region21
  $region20: #{model_forward.5} parent=0 // pred_region
    _
  $region21: #{model_forward.5} parent=0 // pred_fallthru
    _
  %v20 = vld [vmem:[%s0] sm:$0x3]
  %v21 = vld [vmem:[%s1] sm:$0xff]
  %v22 = vld [vmem:[%s2] sm:$0x1]
  %v24 = vlaneseq
  %v25 = vshrl.u32 %v24, 7
  %v26 = vsub.s32 0, %v25
  %v27 = vrot.slane %v22, %v26
  %vm29 = vcmask 64512
  %v31 = vsel %vm29, %v20, 0
  %33 = vmatprep.subr.mxu0 0.0
  %34 = vmatpush1.msra.mxu0 0.0
  %35 = vmatprep.subr.mxu0 0.0
  %36 = vmatpush1.msra.mxu0 0.0
  %37 = vmatprep.subr.mxu0 0.0
  %38 = vmatpush1.msra.mxu0 0.0
  %39 = vmatprep.subr.mxu0 0.0
  %40 = vmatpush1.msra.mxu0 0.0
  %41 = vmatprep.subr.mxu0 0.0
  %42 = vmatpush1.msra.mxu0 0.0
  %43 = vmatprep.subr.mxu0 0.0
  %44 = vmatpush1.msra.mxu0 0.0
  %45 = vmatprep.subr.mxu0 0.0
  %46 = vmatpush1.msra.mxu0 0.0
  %47 = vmatprep.subr.mxu0 0.0
  %48 = vmatpush1.msra.mxu0 0.0
  %49 = vmatprep.subr.mxu0 0.0
  %50 = vmatpush1.msra.mxu0 0.0
  %51 = vmatprep.subr.mxu0 0.0
  %52 = vmatpush1.msra.mxu0 0.0
  %53 = vmatprep.subr.mxu0 0.0
  %54 = vmatpush1.msra.mxu0 0.0
  %55 = vmatprep.subr.mxu0 0.0
  %56 = vmatpush1.msra.mxu0 0.0
  %57 = vmatprep.subr.mxu0 0.0
  %58 = vmatpush1.msra.mxu0 0.0
  %59 = vmatprep.subr.mxu0 0.0
  %60 = vmatpush1.msra.mxu0 0.0
  %61 = vmatprep.subr.mxu0 0.0
  %62 = vmatpush1.msra.mxu0 0.0
  %63 = vmatprep.subr.mxu0 0.0
  %64 = vmatpush1.msra.mxu0 %v21
  %65 = vmatprep.subr.mxu0 0.0
  %66 = vmatpush2.msra.mxu0 0.0
  %67 = vmatprep.subr.mxu0 0.0
  %68 = vmatpush2.msra.mxu0 0.0
  %69 = vmatprep.subr.mxu0 0.0
  %70 = vmatpush2.msra.mxu0 0.0
  %71 = vmatprep.subr.mxu0 0.0
  %72 = vmatpush2.msra.mxu0 0.0
  %73 = vmatprep.subr.mxu0 0.0
  %74 = vmatpush2.msra.mxu0 0.0
  %75 = vmatprep.subr.mxu0 0.0
  %76 = vmatpush2.msra.mxu0 0.0
  %77 = vmatprep.subr.mxu0 0.0
  %78 = vmatpush2.msra.mxu0 0.0
  %79 = vmatprep.subr.mxu0 0.0
  %80 = vmatpush2.msra.mxu0 0.0
  %81 = vmatprep.subr.mxu0 0.0
  %82 = vmatpush2.msra.mxu0 0.0
  %83 = vmatprep.subr.mxu0 0.0
  %84 = vmatpush2.msra.mxu0 0.0
  %85 = vmatprep.subr.mxu0 0.0
  %86 = vmatpush2.msra.mxu0 0.0
  %87 = vmatprep.subr.mxu0 0.0
  %88 = vmatpush2.msra.mxu0 0.0
  %89 = vmatprep.subr.mxu0 0.0
  %90 = vmatpush2.msra.mxu0 0.0
  %91 = vmatprep.subr.mxu0 0.0
  %92 = vmatpush2.msra.mxu0 0.0
  %93 = vmatprep.subr.mxu0 0.0
  %94 = vmatpush2.msra.mxu0 0.0
  %95 = vmatprep.subr.mxu0 0.0
  %96 = vmatpush2.msra.mxu0 0.0
  %97 = vmatprep.mubr.f32.mxu0 0.0
  %98 = vmatmul.mubr.f32.gmra.mxu0 %v31
  %v99 = vpop.f32.mrf.mxu0
  %v100 = vadd.f32 %v27, %v99
  %v101 = vpop.f32.mrf.mxu0
  %102 = vdwg.mxu0
  %v103 = vld [vmem:[%s3] sm:$0xff]
  %v104 = vld [vmem:[%s3 + $0x8] sm:$0xff]
  %v105 = vld [vmem:[%s4] sm:$0x1]
  %v107 = vlaneseq
  %v108 = vshrl.u32 %v107, 7
  %v109 = vsub.s32 0, %v108
  %v110 = vrot.slane %v105, %v109
  %vm112 = vcmask 130048
  %v114 = vsel %vm112, 0.0, 0
  %116 = vmatprep.subr.mxu0 0.0
  %117 = vmatpush1.msra.mxu0 0.0
  %118 = vmatprep.subr.mxu0 0.0
  %119 = vmatpush1.msra.mxu0 0.0
  %120 = vmatprep.subr.mxu0 0.0
  %121 = vmatpush1.msra.mxu0 0.0
  %122 = vmatprep.subr.mxu0 0.0
  %123 = vmatpush1.msra.mxu0 0.0
  %124 = vmatprep.subr.mxu0 0.0
  %125 = vmatpush1.msra.mxu0 0.0
  %126 = vmatprep.subr.mxu0 0.0
  %127 = vmatpush1.msra.mxu0 0.0
  %128 = vmatprep.subr.mxu0 0.0
  %129 = vmatpush1.msra.mxu0 0.0
  %130 = vmatprep.subr.mxu0 0.0
  %131 = vmatpush1.msra.mxu0 0.0
  %132 = vmatprep.subr.mxu0 0.0
  %133 = vmatpush1.msra.mxu0 0.0
  %134 = vmatprep.subr.mxu0 0.0
  %135 = vmatpush1.msra.mxu0 0.0
  %136 = vmatprep.subr.mxu0 0.0
  %137 = vmatpush1.msra.mxu0 0.0
  %138 = vmatprep.subr.mxu0 0.0
  %139 = vmatpush1.msra.mxu0 0.0
  %140 = vmatprep.subr.mxu0 0.0
  %141 = vmatpush1.msra.mxu0 0.0
  %142 = vmatprep.subr.mxu0 0.0
  %143 = vmatpush1.msra.mxu0 0.0
  %144 = vmatprep.subr.mxu0 0.0
  %145 = vmatpush1.msra.mxu0 %v104
  %146 = vmatprep.subr.mxu0 0.0
  %147 = vmatpush1.msra.mxu0 %v103
  %148 = vmatprep.subr.mxu0 0.0
  %149 = vmatpush2.msra.mxu0 0.0
  %150 = vmatprep.subr.mxu0 0.0
  %151 = vmatpush2.msra.mxu0 0.0
  %152 = vmatprep.subr.mxu0 0.0
  %153 = vmatpush2.msra.mxu0 0.0
  %154 = vmatprep.subr.mxu0 0.0
  %155 = vmatpush2.msra.mxu0 0.0
  %156 = vmatprep.subr.mxu0 0.0
  %157 = vmatpush2.msra.mxu0 0.0
  %158 = vmatprep.subr.mxu0 0.0
  %159 = vmatpush2.msra.mxu0 0.0
  %160 = vmatprep.subr.mxu0 0.0
  %161 = vmatpush2.msra.mxu0 0.0
  %162 = vmatprep.subr.mxu0 0.0
  %163 = vmatpush2.msra.mxu0 0.0
  %164 = vmatprep.subr.mxu0 0.0
  %165 = vmatpush2.msra.mxu0 0.0
  %166 = vmatprep.subr.mxu0 0.0
  %167 = vmatpush2.msra.mxu0 0.0
  %168 = vmatprep.subr.mxu0 0.0
  %169 = vmatpush2.msra.mxu0 0.0
  %170 = vmatprep.subr.mxu0 0.0
  %171 = vmatpush2.msra.mxu0 0.0
  %172 = vmatprep.subr.mxu0 0.0
  %173 = vmatpush2.msra.mxu0 0.0
  %174 = vmatprep.subr.mxu0 0.0
  %175 = vmatpush2.msra.mxu0 0.0
  %176 = vmatprep.subr.mxu0 0.0
  %177 = vmatpush2.msra.mxu0 0.0
  %178 = vmatprep.subr.mxu0 0.0
  %179 = vmatpush2.msra.mxu0 0.0
  %180 = vmatprep.mubr.f32.mxu0 0.0
  %181 = vmatmul.mubr.f32.gmra.mxu0 %v114
  %v182 = vpop.f32.mrf.mxu0
  %v183 = vadd.f32 %v110, %v182
  %v184 = vpop.f32.mrf.mxu0
  %185 = vdwg.mxu0
  %v186 = vadd.f32 %v100, %v183
  %v187 = vxor.u32 %v186, 2147483648
  %v188 = vmul.f32 %v187, 1.442695
  %v189 = vpow.pop %v188
  %v190 = vadd.f32 %v189, 1.0
  %v191 = vrcp.pop %v190
  %v192 = vmul.f32 1.0, %v191
  %194 = vrot.lane.b32.xlu0 %v183, 96
  %v195 = vpop.permute.xlu0 %194
  %v197 = vmul.f32 %v192, %v195
  %199 = vrot.lane.b32.xlu0 %v197, 32
  %v200 = vpop.permute.xlu0 %199
  %v202 = vadd.f32 %v100, %v200
  %v203 = vtanh.pop %v202
  %v204 = vsub.f32 1.0, %v192
  %206 = vrot.lane.b32.xlu0 %v203, 112
  %v207 = vpop.permute.xlu0 %206
  %v209 = vmul.f32 %v204, %v207
  %v210 = vmul.f32 %v192, 0.0
  %v211 = vadd.f32 %v209, %v210
  %213 = vrot.lane.b32.xlu0 %v211, 112
  %v214 = vpop.permute.xlu0 %213
  %vm216 = vcmask 123904
  %217 = vst.msk [vmem:[%s5] sm:$0x3] %vm216, %v214
  %s218 = scalar_lea.vmem %s0, 2
  %v219 = vld [vmem:[%s218] sm:$0x3]
  %v220 = vld [vmem:[%s1] sm:$0xff]
  %v221 = vld [vmem:[%s2] sm:$0x1]
  %v223 = vlaneseq
  %v224 = vshrl.u32 %v223, 7
  %v225 = vsub.s32 0, %v224
  %v226 = vrot.slane %v221, %v225
  %v229 = vsel %vm29, %v219, 0
  %231 = vmatprep.subr.mxu0 0.0
  %232 = vmatpush1.msra.mxu0 0.0
  %233 = vmatprep.subr.mxu0 0.0
  %234 = vmatpush1.msra.mxu0 0.0
  %235 = vmatprep.subr.mxu0 0.0
  %236 = vmatpush1.msra.mxu0 0.0
  %237 = vmatprep.subr.mxu0 0.0
  %238 = vmatpush1.msra.mxu0 0.0
  %239 = vmatprep.subr.mxu0 0.0
  %240 = vmatpush1.msra.mxu0 0.0
  %241 = vmatprep.subr.mxu0 0.0
  %242 = vmatpush1.msra.mxu0 0.0
  %243 = vmatprep.subr.mxu0 0.0
  %244 = vmatpush1.msra.mxu0 0.0
  %245 = vmatprep.subr.mxu0 0.0
  %246 = vmatpush1.msra.mxu0 0.0
  %247 = vmatprep.subr.mxu0 0.0
  %248 = vmatpush1.msra.mxu0 0.0
  %249 = vmatprep.subr.mxu0 0.0
  %250 = vmatpush1.msra.mxu0 0.0
  %251 = vmatprep.subr.mxu0 0.0
  %252 = vmatpush1.msra.mxu0 0.0
  %253 = vmatprep.subr.mxu0 0.0
  %254 = vmatpush1.msra.mxu0 0.0
  %255 = vmatprep.subr.mxu0 0.0
  %256 = vmatpush1.msra.mxu0 0.0
  %257 = vmatprep.subr.mxu0 0.0
  %258 = vmatpush1.msra.mxu0 0.0
  %259 = vmatprep.subr.mxu0 0.0
  %260 = vmatpush1.msra.mxu0 0.0
  %261 = vmatprep.subr.mxu0 0.0
  %262 = vmatpush1.msra.mxu0 %v220
  %263 = vmatprep.subr.mxu0 0.0
  %264 = vmatpush2.msra.mxu0 0.0
  %265 = vmatprep.subr.mxu0 0.0
  %266 = vmatpush2.msra.mxu0 0.0
  %267 = vmatprep.subr.mxu0 0.0
  %268 = vmatpush2.msra.mxu0 0.0
  %269 = vmatprep.subr.mxu0 0.0
  %270 = vmatpush2.msra.mxu0 0.0
  %271 = vmatprep.subr.mxu0 0.0
  %272 = vmatpush2.msra.mxu0 0.0
  %273 = vmatprep.subr.mxu0 0.0
  %274 = vmatpush2.msra.mxu0 0.0
  %275 = vmatprep.subr.mxu0 0.0
  %276 = vmatpush2.msra.mxu0 0.0
  %277 = vmatprep.subr.mxu0 0.0
  %278 = vmatpush2.msra.mxu0 0.0
  %279 = vmatprep.subr.mxu0 0.0
  %280 = vmatpush2.msra.mxu0 0.0
  %281 = vmatprep.subr.mxu0 0.0
  %282 = vmatpush2.msra.mxu0 0.0
  %283 = vmatprep.subr.mxu0 0.0
  %284 = vmatpush2.msra.mxu0 0.0
  %285 = vmatprep.subr.mxu0 0.0
  %286 = vmatpush2.msra.mxu0 0.0
  %287 = vmatprep.subr.mxu0 0.0
  %288 = vmatpush2.msra.mxu0 0.0
  %289 = vmatprep.subr.mxu0 0.0
  %290 = vmatpush2.msra.mxu0 0.0
  %291 = vmatprep.subr.mxu0 0.0
  %292 = vmatpush2.msra.mxu0 0.0
  %293 = vmatprep.subr.mxu0 0.0
  %294 = vmatpush2.msra.mxu0 0.0
  %295 = vmatprep.mubr.f32.mxu0 0.0
  %296 = vmatmul.mubr.f32.gmra.mxu0 %v229
  %v297 = vpop.f32.mrf.mxu0
  %v298 = vadd.f32 %v226, %v297
  %v299 = vpop.f32.mrf.mxu0
  %300 = vdwg.mxu0
  %v301 = vld [vmem:[%s3] sm:$0xff]
  %v302 = vld [vmem:[%s3 + $0x8] sm:$0xff]
  %v303 = vld [vmem:[%s4] sm:$0x1]
  %v305 = vlaneseq
  %v306 = vshrl.u32 %v305, 7
  %v307 = vsub.s32 0, %v306
  %v308 = vrot.slane %v303, %v307
  %v310 = vsel %vm112, %v214, 0
  %312 = vmatprep.subr.mxu0 0.0
  %313 = vmatpush1.msra.mxu0 0.0
  %314 = vmatprep.subr.mxu0 0.0
  %315 = vmatpush1.msra.mxu0 0.0
  %316 = vmatprep.subr.mxu0 0.0
  %317 = vmatpush1.msra.mxu0 0.0
  %318 = vmatprep.subr.mxu0 0.0
  %319 = vmatpush1.msra.mxu0 0.0
  %320 = vmatprep.subr.mxu0 0.0
  %321 = vmatpush1.msra.mxu0 0.0
  %322 = vmatprep.subr.mxu0 0.0
  %323 = vmatpush1.msra.mxu0 0.0
  %324 = vmatprep.subr.mxu0 0.0
  %325 = vmatpush1.msra.mxu0 0.0
  %326 = vmatprep.subr.mxu0 0.0
  %327 = vmatpush1.msra.mxu0 0.0
  %328 = vmatprep.subr.mxu0 0.0
  %329 = vmatpush1.msra.mxu0 0.0
  %330 = vmatprep.subr.mxu0 0.0
  %331 = vmatpush1.msra.mxu0 0.0
  %332 = vmatprep.subr.mxu0 0.0
  %333 = vmatpush1.msra.mxu0 0.0
  %334 = vmatprep.subr.mxu0 0.0
  %335 = vmatpush1.msra.mxu0 0.0
  %336 = vmatprep.subr.mxu0 0.0
  %337 = vmatpush1.msra.mxu0 0.0
  %338 = vmatprep.subr.mxu0 0.0
  %339 = vmatpush1.msra.mxu0 0.0
  %340 = vmatprep.subr.mxu0 0.0
  %341 = vmatpush1.msra.mxu0 %v302
  %342 = vmatprep.subr.mxu0 0.0
  %343 = vmatpush1.msra.mxu0 %v301
  %344 = vmatprep.subr.mxu0 0.0
  %345 = vmatpush2.msra.mxu0 0.0
  %346 = vmatprep.subr.mxu0 0.0
  %347 = vmatpush2.msra.mxu0 0.0
  %348 = vmatprep.subr.mxu0 0.0
  %349 = vmatpush2.msra.mxu0 0.0
  %350 = vmatprep.subr.mxu0 0.0
  %351 = vmatpush2.msra.mxu0 0.0
  %352 = vmatprep.subr.mxu0 0.0
  %353 = vmatpush2.msra.mxu0 0.0
  %354 = vmatprep.subr.mxu0 0.0
  %355 = vmatpush2.msra.mxu0 0.0
  %356 = vmatprep.subr.mxu0 0.0
  %357 = vmatpush2.msra.mxu0 0.0
  %358 = vmatprep.subr.mxu0 0.0
  %359 = vmatpush2.msra.mxu0 0.0
  %360 = vmatprep.subr.mxu0 0.0
  %361 = vmatpush2.msra.mxu0 0.0
  %362 = vmatprep.subr.mxu0 0.0
  %363 = vmatpush2.msra.mxu0 0.0
  %364 = vmatprep.subr.mxu0 0.0
  %365 = vmatpush2.msra.mxu0 0.0
  %366 = vmatprep.subr.mxu0 0.0
  %367 = vmatpush2.msra.mxu0 0.0
  %368 = vmatprep.subr.mxu0 0.0
  %369 = vmatpush2.msra.mxu0 0.0
  %370 = vmatprep.subr.mxu0 0.0
  %371 = vmatpush2.msra.mxu0 0.0
  %372 = vmatprep.subr.mxu0 0.0
  %373 = vmatpush2.msra.mxu0 0.0
  %374 = vmatprep.subr.mxu0 0.0
  %375 = vmatpush2.msra.mxu0 0.0
  %376 = vmatprep.mubr.f32.mxu0 0.0
  %377 = vmatmul.mubr.f32.gmra.mxu0 %v310
  %v378 = vpop.f32.mrf.mxu0
  %v379 = vadd.f32 %v308, %v378
  %v380 = vpop.f32.mrf.mxu0
  %381 = vdwg.mxu0
  %v382 = vadd.f32 %v298, %v379
  %v383 = vxor.u32 %v382, 2147483648
  %v384 = vmul.f32 %v383, 1.442695
  %v385 = vpow.pop %v384
  %v386 = vadd.f32 %v385, 1.0
  %v387 = vrcp.pop %v386
  %v388 = vmul.f32 1.0, %v387
  %390 = vrot.lane.b32.xlu0 %v379, 96
  %v391 = vpop.permute.xlu0 %390
  %v393 = vmul.f32 %v388, %v391
  %395 = vrot.lane.b32.xlu0 %v393, 32
  %v396 = vpop.permute.xlu0 %395
  %v398 = vadd.f32 %v298, %v396
  %v399 = vtanh.pop %v398
  %v400 = vsub.f32 1.0, %v388
  %402 = vrot.lane.b32.xlu0 %v399, 112
  %v403 = vpop.permute.xlu0 %402
  %v405 = vmul.f32 %v400, %v403
  %v406 = vmul.f32 %v388, %v211
  %v407 = vadd.f32 %v405, %v406
  %409 = vrot.lane.b32.xlu0 %v407, 112
  %v410 = vpop.permute.xlu0 %409
  %s412 = scalar_lea.vmem %s5, 2
  %413 = vst.msk [vmem:[%s412] sm:$0x3] %vm216, %v410
  %s414 = scalar_lea.vmem %s0, 4
  %v415 = vld [vmem:[%s414] sm:$0x3]
  %v416 = vld [vmem:[%s1] sm:$0xff]
  %v417 = vld [vmem:[%s2] sm:$0x1]
  %v419 = vlaneseq
  %v420 = vshrl.u32 %v419, 7
  %v421 = vsub.s32 0, %v420
  %v422 = vrot.slane %v417, %v421
  %v425 = vsel %vm29, %v415, 0
  %427 = vmatprep.subr.mxu0 0.0
  %428 = vmatpush1.msra.mxu0 0.0
  %429 = vmatprep.subr.mxu0 0.0
  %430 = vmatpush1.msra.mxu0 0.0
  %431 = vmatprep.subr.mxu0 0.0
  %432 = vmatpush1.msra.mxu0 0.0
  %433 = vmatprep.subr.mxu0 0.0
  %434 = vmatpush1.msra.mxu0 0.0
  %435 = vmatprep.subr.mxu0 0.0
  %436 = vmatpush1.msra.mxu0 0.0
  %437 = vmatprep.subr.mxu0 0.0
  %438 = vmatpush1.msra.mxu0 0.0
  %439 = vmatprep.subr.mxu0 0.0
  %440 = vmatpush1.msra.mxu0 0.0
  %441 = vmatprep.subr.mxu0 0.0
  %442 = vmatpush1.msra.mxu0 0.0
  %443 = vmatprep.subr.mxu0 0.0
  %444 = vmatpush1.msra.mxu0 0.0
  %445 = vmatprep.subr.mxu0 0.0
  %446 = vmatpush1.msra.mxu0 0.0
  %447 = vmatprep.subr.mxu0 0.0
  %448 = vmatpush1.msra.mxu0 0.0
  %449 = vmatprep.subr.mxu0 0.0
  %450 = vmatpush1.msra.mxu0 0.0
  %451 = vmatprep.subr.mxu0 0.0
  %452 = vmatpush1.msra.mxu0 0.0
  %453 = vmatprep.subr.mxu0 0.0
  %454 = vmatpush1.msra.mxu0 0.0
  %455 = vmatprep.subr.mxu0 0.0
  %456 = vmatpush1.msra.mxu0 0.0
  %457 = vmatprep.subr.mxu0 0.0
  %458 = vmatpush1.msra.mxu0 %v416
  %459 = vmatprep.subr.mxu0 0.0
  %460 = vmatpush2.msra.mxu0 0.0
  %461 = vmatprep.subr.mxu0 0.0
  %462 = vmatpush2.msra.mxu0 0.0
  %463 = vmatprep.subr.mxu0 0.0
  %464 = vmatpush2.msra.mxu0 0.0
  %465 = vmatprep.subr.mxu0 0.0
  %466 = vmatpush2.msra.mxu0 0.0
  %467 = vmatprep.subr.mxu0 0.0
  %468 = vmatpush2.msra.mxu0 0.0
  %469 = vmatprep.subr.mxu0 0.0
  %470 = vmatpush2.msra.mxu0 0.0
  %471 = vmatprep.subr.mxu0 0.0
  %472 = vmatpush2.msra.mxu0 0.0
  %473 = vmatprep.subr.mxu0 0.0
  %474 = vmatpush2.msra.mxu0 0.0
  %475 = vmatprep.subr.mxu0 0.0
  %476 = vmatpush2.msra.mxu0 0.0
  %477 = vmatprep.subr.mxu0 0.0
  %478 = vmatpush2.msra.mxu0 0.0
  %479 = vmatprep.subr.mxu0 0.0
  %480 = vmatpush2.msra.mxu0 0.0
  %481 = vmatprep.subr.mxu0 0.0
  %482 = vmatpush2.msra.mxu0 0.0
  %483 = vmatprep.subr.mxu0 0.0
  %484 = vmatpush2.msra.mxu0 0.0
  %485 = vmatprep.subr.mxu0 0.0
  %486 = vmatpush2.msra.mxu0 0.0
  %487 = vmatprep.subr.mxu0 0.0
  %488 = vmatpush2.msra.mxu0 0.0
  %489 = vmatprep.subr.mxu0 0.0
  %490 = vmatpush2.msra.mxu0 0.0
  %491 = vmatprep.mubr.f32.mxu0 0.0
  %492 = vmatmul.mubr.f32.gmra.mxu0 %v425
  %v493 = vpop.f32.mrf.mxu0
  %v494 = vadd.f32 %v422, %v493
  %v495 = vpop.f32.mrf.mxu0
  %496 = vdwg.mxu0
  %v497 = vld [vmem:[%s3] sm:$0xff]
  %v498 = vld [vmem:[%s3 + $0x8] sm:$0xff]
  %v499 = vld [vmem:[%s4] sm:$0x1]
  %v501 = vlaneseq
  %v502 = vshrl.u32 %v501, 7
  %v503 = vsub.s32 0, %v502
  %v504 = vrot.slane %v499, %v503
  %v506 = vsel %vm112, %v410, 0
  %508 = vmatprep.subr.mxu0 0.0
  %509 = vmatpush1.msra.mxu0 0.0
  %510 = vmatprep.subr.mxu0 0.0
  %511 = vmatpush1.msra.mxu0 0.0
  %512 = vmatprep.subr.mxu0 0.0
  %513 = vmatpush1.msra.mxu0 0.0
  %514 = vmatprep.subr.mxu0 0.0
  %515 = vmatpush1.msra.mxu0 0.0
  %516 = vmatprep.subr.mxu0 0.0
  %517 = vmatpush1.msra.mxu0 0.0
  %518 = vmatprep.subr.mxu0 0.0
  %519 = vmatpush1.msra.mxu0 0.0
  %520 = vmatprep.subr.mxu0 0.0
  %521 = vmatpush1.msra.mxu0 0.0
  %522 = vmatprep.subr.mxu0 0.0
  %523 = vmatpush1.msra.mxu0 0.0
  %524 = vmatprep.subr.mxu0 0.0
  %525 = vmatpush1.msra.mxu0 0.0
  %526 = vmatprep.subr.mxu0 0.0
  %527 = vmatpush1.msra.mxu0 0.0
  %528 = vmatprep.subr.mxu0 0.0
  %529 = vmatpush1.msra.mxu0 0.0
  %530 = vmatprep.subr.mxu0 0.0
  %531 = vmatpush1.msra.mxu0 0.0
  %532 = vmatprep.subr.mxu0 0.0
  %533 = vmatpush1.msra.mxu0 0.0
  %534 = vmatprep.subr.mxu0 0.0
  %535 = vmatpush1.msra.mxu0 0.0
  %536 = vmatprep.subr.mxu0 0.0
  %537 = vmatpush1.msra.mxu0 %v498
  %538 = vmatprep.subr.mxu0 0.0
  %539 = vmatpush1.msra.mxu0 %v497
  %540 = vmatprep.subr.mxu0 0.0
  %541 = vmatpush2.msra.mxu0 0.0
  %542 = vmatprep.subr.mxu0 0.0
  %543 = vmatpush2.msra.mxu0 0.0
  %544 = vmatprep.subr.mxu0 0.0
  %545 = vmatpush2.msra.mxu0 0.0
  %546 = vmatprep.subr.mxu0 0.0
  %547 = vmatpush2.msra.mxu0 0.0
  %548 = vmatprep.subr.mxu0 0.0
  %549 = vmatpush2.msra.mxu0 0.0
  %550 = vmatprep.subr.mxu0 0.0
  %551 = vmatpush2.msra.mxu0 0.0
  %552 = vmatprep.subr.mxu0 0.0
  %553 = vmatpush2.msra.mxu0 0.0
  %554 = vmatprep.subr.mxu0 0.0
  %555 = vmatpush2.msra.mxu0 0.0
  %556 = vmatprep.subr.mxu0 0.0
  %557 = vmatpush2.msra.mxu0 0.0
  %558 = vmatprep.subr.mxu0 0.0
  %559 = vmatpush2.msra.mxu0 0.0
  %560 = vmatprep.subr.mxu0 0.0
  %561 = vmatpush2.msra.mxu0 0.0
  %562 = vmatprep.subr.mxu0 0.0
  %563 = vmatpush2.msra.mxu0 0.0
  %564 = vmatprep.subr.mxu0 0.0
  %565 = vmatpush2.msra.mxu0 0.0
  %566 = vmatprep.subr.mxu0 0.0
  %567 = vmatpush2.msra.mxu0 0.0
  %568 = vmatprep.subr.mxu0 0.0
  %569 = vmatpush2.msra.mxu0 0.0
  %570 = vmatprep.subr.mxu0 0.0
  %571 = vmatpush2.msra.mxu0 0.0
  %572 = vmatprep.mubr.f32.mxu0 0.0
  %573 = vmatmul.mubr.f32.gmra.mxu0 %v506
  %v574 = vpop.f32.mrf.mxu0
  %v575 = vadd.f32 %v504, %v574
  %v576 = vpop.f32.mrf.mxu0
  %577 = vdwg.mxu0
  %v578 = vadd.f32 %v494, %v575
  %v579 = vxor.u32 %v578, 2147483648
  %v580 = vmul.f32 %v579, 1.442695
  %v581 = vpow.pop %v580
  %v582 = vadd.f32 %v581, 1.0
  %v583 = vrcp.pop %v582
  %v584 = vmul.f32 1.0, %v583
  %586 = vrot.lane.b32.xlu0 %v575, 96
  %v587 = vpop.permute.xlu0 %586
  %v589 = vmul.f32 %v584, %v587
  %591 = vrot.lane.b32.xlu0 %v589, 32
  %v592 = vpop.permute.xlu0 %591
  %v594 = vadd.f32 %v494, %v592
  %v595 = vtanh.pop %v594
  %v596 = vsub.f32 1.0, %v584
  %598 = vrot.lane.b32.xlu0 %v595, 112
  %v599 = vpop.permute.xlu0 %598
  %v601 = vmul.f32 %v596, %v599
  %v602 = vmul.f32 %v584, %v407
  %v603 = vadd.f32 %v601, %v602
  %605 = vrot.lane.b32.xlu0 %v603, 112
  %v606 = vpop.permute.xlu0 %605
  %s608 = scalar_lea.vmem %s5, 4
  %609 = vst.msk [vmem:[%s608] sm:$0x3] %vm216, %v606
  %s610 = scalar_lea.vmem %s0, 6
  %v611 = vld [vmem:[%s610] sm:$0x3]
  %v612 = vld [vmem:[%s1] sm:$0xff]
  %v613 = vld [vmem:[%s2] sm:$0x1]
  %v615 = vlaneseq
  %v616 = vshrl.u32 %v615, 7
  %v617 = vsub.s32 0, %v616
  %v618 = vrot.slane %v613, %v617
  %v621 = vsel %vm29, %v611, 0
  %623 = vmatprep.subr.mxu0 0.0
  %624 = vmatpush1.msra.mxu0 0.0
  %625 = vmatprep.subr.mxu0 0.0
  %626 = vmatpush1.msra.mxu0 0.0
  %627 = vmatprep.subr.mxu0 0.0
  %628 = vmatpush1.msra.mxu0 0.0
  %629 = vmatprep.subr.mxu0 0.0
  %630 = vmatpush1.msra.mxu0 0.0
  %631 = vmatprep.subr.mxu0 0.0
  %632 = vmatpush1.msra.mxu0 0.0
  %633 = vmatprep.subr.mxu0 0.0
  %634 = vmatpush1.msra.mxu0 0.0
  %635 = vmatprep.subr.mxu0 0.0
  %636 = vmatpush1.msra.mxu0 0.0
  %637 = vmatprep.subr.mxu0 0.0
  %638 = vmatpush1.msra.mxu0 0.0
  %639 = vmatprep.subr.mxu0 0.0
  %640 = vmatpush1.msra.mxu0 0.0
  %641 = vmatprep.subr.mxu0 0.0
  %642 = vmatpush1.msra.mxu0 0.0
  %643 = vmatprep.subr.mxu0 0.0
  %644 = vmatpush1.msra.mxu0 0.0
  %645 = vmatprep.subr.mxu0 0.0
  %646 = vmatpush1.msra.mxu0 0.0
  %647 = vmatprep.subr.mxu0 0.0
  %648 = vmatpush1.msra.mxu0 0.0
  %649 = vmatprep.subr.mxu0 0.0
  %650 = vmatpush1.msra.mxu0 0.0
  %651 = vmatprep.subr.mxu0 0.0
  %652 = vmatpush1.msra.mxu0 0.0
  %653 = vmatprep.subr.mxu0 0.0
  %654 = vmatpush1.msra.mxu0 %v612
  %655 = vmatprep.subr.mxu0 0.0
  %656 = vmatpush2.msra.mxu0 0.0
  %657 = vmatprep.subr.mxu0 0.0
  %658 = vmatpush2.msra.mxu0 0.0
  %659 = vmatprep.subr.mxu0 0.0
  %660 = vmatpush2.msra.mxu0 0.0
  %661 = vmatprep.subr.mxu0 0.0
  %662 = vmatpush2.msra.mxu0 0.0
  %663 = vmatprep.subr.mxu0 0.0
  %664 = vmatpush2.msra.mxu0 0.0
  %665 = vmatprep.subr.mxu0 0.0
  %666 = vmatpush2.msra.mxu0 0.0
  %667 = vmatprep.subr.mxu0 0.0
  %668 = vmatpush2.msra.mxu0 0.0
  %669 = vmatprep.subr.mxu0 0.0
  %670 = vmatpush2.msra.mxu0 0.0
  %671 = vmatprep.subr.mxu0 0.0
  %672 = vmatpush2.msra.mxu0 0.0
  %673 = vmatprep.subr.mxu0 0.0
  %674 = vmatpush2.msra.mxu0 0.0
  %675 = vmatprep.subr.mxu0 0.0
  %676 = vmatpush2.msra.mxu0 0.0
  %677 = vmatprep.subr.mxu0 0.0
  %678 = vmatpush2.msra.mxu0 0.0
  %679 = vmatprep.subr.mxu0 0.0
  %680 = vmatpush2.msra.mxu0 0.0
  %681 = vmatprep.subr.mxu0 0.0
  %682 = vmatpush2.msra.mxu0 0.0
  %683 = vmatprep.subr.mxu0 0.0
  %684 = vmatpush2.msra.mxu0 0.0
  %685 = vmatprep.subr.mxu0 0.0
  %686 = vmatpush2.msra.mxu0 0.0
  %687 = vmatprep.mubr.f32.mxu0 0.0
  %688 = vmatmul.mubr.f32.gmra.mxu0 %v621
  %v689 = vpop.f32.mrf.mxu0
  %v690 = vadd.f32 %v618, %v689
  %v691 = vpop.f32.mrf.mxu0
  %692 = vdwg.mxu0
  %v693 = vld [vmem:[%s3] sm:$0xff]
  %v694 = vld [vmem:[%s3 + $0x8] sm:$0xff]
  %v695 = vld [vmem:[%s4] sm:$0x1]
  %v697 = vlaneseq
  %v698 = vshrl.u32 %v697, 7
  %v699 = vsub.s32 0, %v698
  %v700 = vrot.slane %v695, %v699
  %v702 = vsel %vm112, %v606, 0
  %704 = vmatprep.subr.mxu0 0.0
  %705 = vmatpush1.msra.mxu0 0.0
  %706 = vmatprep.subr.mxu0 0.0
  %707 = vmatpush1.msra.mxu0 0.0
  %708 = vmatprep.subr.mxu0 0.0
  %709 = vmatpush1.msra.mxu0 0.0
  %710 = vmatprep.subr.mxu0 0.0
  %711 = vmatpush1.msra.mxu0 0.0
  %712 = vmatprep.subr.mxu0 0.0
  %713 = vmatpush1.msra.mxu0 0.0
  %714 = vmatprep.subr.mxu0 0.0
  %715 = vmatpush1.msra.mxu0 0.0
  %716 = vmatprep.subr.mxu0 0.0
  %717 = vmatpush1.msra.mxu0 0.0
  %718 = vmatprep.subr.mxu0 0.0
  %719 = vmatpush1.msra.mxu0 0.0
  %720 = vmatprep.subr.mxu0 0.0
  %721 = vmatpush1.msra.mxu0 0.0
  %722 = vmatprep.subr.mxu0 0.0
  %723 = vmatpush1.msra.mxu0 0.0
  %724 = vmatprep.subr.mxu0 0.0
  %725 = vmatpush1.msra.mxu0 0.0
  %726 = vmatprep.subr.mxu0 0.0
  %727 = vmatpush1.msra.mxu0 0.0
  %728 = vmatprep.subr.mxu0 0.0
  %729 = vmatpush1.msra.mxu0 0.0
  %730 = vmatprep.subr.mxu0 0.0
  %731 = vmatpush1.msra.mxu0 0.0
  %732 = vmatprep.subr.mxu0 0.0
  %733 = vmatpush1.msra.mxu0 %v694
  %734 = vmatprep.subr.mxu0 0.0
  %735 = vmatpush1.msra.mxu0 %v693
  %736 = vmatprep.subr.mxu0 0.0
  %737 = vmatpush2.msra.mxu0 0.0
  %738 = vmatprep.subr.mxu0 0.0
  %739 = vmatpush2.msra.mxu0 0.0
  %740 = vmatprep.subr.mxu0 0.0
  %741 = vmatpush2.msra.mxu0 0.0
  %742 = vmatprep.subr.mxu0 0.0
  %743 = vmatpush2.msra.mxu0 0.0
  %744 = vmatprep.subr.mxu0 0.0
  %745 = vmatpush2.msra.mxu0 0.0
  %746 = vmatprep.subr.mxu0 0.0
  %747 = vmatpush2.msra.mxu0 0.0
  %748 = vmatprep.subr.mxu0 0.0
  %749 = vmatpush2.msra.mxu0 0.0
  %750 = vmatprep.subr.mxu0 0.0
  %751 = vmatpush2.msra.mxu0 0.0
  %752 = vmatprep.subr.mxu0 0.0
  %753 = vmatpush2.msra.mxu0 0.0
  %754 = vmatprep.subr.mxu0 0.0
  %755 = vmatpush2.msra.mxu0 0.0
  %756 = vmatprep.subr.mxu0 0.0
  %757 = vmatpush2.msra.mxu0 0.0
  %758 = vmatprep.subr.mxu0 0.0
  %759 = vmatpush2.msra.mxu0 0.0
  %760 = vmatprep.subr.mxu0 0.0
  %761 = vmatpush2.msra.mxu0 0.0
  %762 = vmatprep.subr.mxu0 0.0
  %763 = vmatpush2.msra.mxu0 0.0
  %764 = vmatprep.subr.mxu0 0.0
  %765 = vmatpush2.msra.mxu0 0.0
  %766 = vmatprep.subr.mxu0 0.0
  %767 = vmatpush2.msra.mxu0 0.0
  %768 = vmatprep.mubr.f32.mxu0 0.0
  %769 = vmatmul.mubr.f32.gmra.mxu0 %v702
  %v770 = vpop.f32.mrf.mxu0
  %v771 = vadd.f32 %v700, %v770
  %v772 = vpop.f32.mrf.mxu0
  %773 = vdwg.mxu0
  %v774 = vadd.f32 %v690, %v771
  %v775 = vxor.u32 %v774, 2147483648
  %v776 = vmul.f32 %v775, 1.442695
  %v777 = vpow.pop %v776
  %v778 = vadd.f32 %v777, 1.0
  %v779 = vrcp.pop %v778
  %v780 = vmul.f32 1.0, %v779
  %782 = vrot.lane.b32.xlu0 %v771, 96
  %v783 = vpop.permute.xlu0 %782
  %v785 = vmul.f32 %v780, %v783
  %787 = vrot.lane.b32.xlu0 %v785, 32
  %v788 = vpop.permute.xlu0 %787
  %v790 = vadd.f32 %v690, %v788
  %v791 = vtanh.pop %v790
  %v792 = vsub.f32 1.0, %v780
  %794 = vrot.lane.b32.xlu0 %v791, 112
  %v795 = vpop.permute.xlu0 %794
  %v797 = vmul.f32 %v792, %v795
  %v798 = vmul.f32 %v780, %v603
  %v799 = vadd.f32 %v797, %v798
  %801 = vrot.lane.b32.xlu0 %v799, 112
  %v802 = vpop.permute.xlu0 %801
  %s804 = scalar_lea.vmem %s5, 6
  %805 = vst.msk [vmem:[%s804] sm:$0x3] %vm216, %v802
  %s806 = scalar_lea.vmem %s0, 8
  %v807 = vld [vmem:[%s806] sm:$0x3]
  %v808 = vld [vmem:[%s1] sm:$0xff]
  %v809 = vld [vmem:[%s2] sm:$0x1]
  %v811 = vlaneseq
  %v812 = vshrl.u32 %v811, 7
  %v813 = vsub.s32 0, %v812
  %v814 = vrot.slane %v809, %v813
  %v817 = vsel %vm29, %v807, 0
  %819 = vmatprep.subr.mxu0 0.0
  %820 = vmatpush1.msra.mxu0 0.0
  %821 = vmatprep.subr.mxu0 0.0
  %822 = vmatpush1.msra.mxu0 0.0
  %823 = vmatprep.subr.mxu0 0.0
  %824 = vmatpush1.msra.mxu0 0.0
  %825 = vmatprep.subr.mxu0 0.0
  %826 = vmatpush1.msra.mxu0 0.0
  %827 = vmatprep.subr.mxu0 0.0
  %828 = vmatpush1.msra.mxu0 0.0
  %829 = vmatprep.subr.mxu0 0.0
  %830 = vmatpush1.msra.mxu0 0.0
  %831 = vmatprep.subr.mxu0 0.0
  %832 = vmatpush1.msra.mxu0 0.0
  %833 = vmatprep.subr.mxu0 0.0
  %834 = vmatpush1.msra.mxu0 0.0
  %835 = vmatprep.subr.mxu0 0.0
  %836 = vmatpush1.msra.mxu0 0.0
  %837 = vmatprep.subr.mxu0 0.0
  %838 = vmatpush1.msra.mxu0 0.0
  %839 = vmatprep.subr.mxu0 0.0
  %840 = vmatpush1.msra.mxu0 0.0
  %841 = vmatprep.subr.mxu0 0.0
  %842 = vmatpush1.msra.mxu0 0.0
  %843 = vmatprep.subr.mxu0 0.0
  %844 = vmatpush1.msra.mxu0 0.0
  %845 = vmatprep.subr.mxu0 0.0
  %846 = vmatpush1.msra.mxu0 0.0
  %847 = vmatprep.subr.mxu0 0.0
  %848 = vmatpush1.msra.mxu0 0.0
  %849 = vmatprep.subr.mxu0 0.0
  %850 = vmatpush1.msra.mxu0 %v808
  %851 = vmatprep.subr.mxu0 0.0
  %852 = vmatpush2.msra.mxu0 0.0
  %853 = vmatprep.subr.mxu0 0.0
  %854 = vmatpush2.msra.mxu0 0.0
  %855 = vmatprep.subr.mxu0 0.0
  %856 = vmatpush2.msra.mxu0 0.0
  %857 = vmatprep.subr.mxu0 0.0
  %858 = vmatpush2.msra.mxu0 0.0
  %859 = vmatprep.subr.mxu0 0.0
  %860 = vmatpush2.msra.mxu0 0.0
  %861 = vmatprep.subr.mxu0 0.0
  %862 = vmatpush2.msra.mxu0 0.0
  %863 = vmatprep.subr.mxu0 0.0
  %864 = vmatpush2.msra.mxu0 0.0
  %865 = vmatprep.subr.mxu0 0.0
  %866 = vmatpush2.msra.mxu0 0.0
  %867 = vmatprep.subr.mxu0 0.0
  %868 = vmatpush2.msra.mxu0 0.0
  %869 = vmatprep.subr.mxu0 0.0
  %870 = vmatpush2.msra.mxu0 0.0
  %871 = vmatprep.subr.mxu0 0.0
  %872 = vmatpush2.msra.mxu0 0.0
  %873 = vmatprep.subr.mxu0 0.0
  %874 = vmatpush2.msra.mxu0 0.0
  %875 = vmatprep.subr.mxu0 0.0
  %876 = vmatpush2.msra.mxu0 0.0
  %877 = vmatprep.subr.mxu0 0.0
  %878 = vmatpush2.msra.mxu0 0.0
  %879 = vmatprep.subr.mxu0 0.0
  %880 = vmatpush2.msra.mxu0 0.0
  %881 = vmatprep.subr.mxu0 0.0
  %882 = vmatpush2.msra.mxu0 0.0
  %883 = vmatprep.mubr.f32.mxu0 0.0
  %884 = vmatmul.mubr.f32.gmra.mxu0 %v817
  %v885 = vpop.f32.mrf.mxu0
  %v886 = vadd.f32 %v814, %v885
  %v887 = vpop.f32.mrf.mxu0
  %888 = vdwg.mxu0
  %v889 = vld [vmem:[%s3] sm:$0xff]
  %v890 = vld [vmem:[%s3 + $0x8] sm:$0xff]
  %v891 = vld [vmem:[%s4] sm:$0x1]
  %v893 = vlaneseq
  %v894 = vshrl.u32 %v893, 7
  %v895 = vsub.s32 0, %v894
  %v896 = vrot.slane %v891, %v895
  %v898 = vsel %vm112, %v802, 0
  %900 = vmatprep.subr.mxu0 0.0
  %901 = vmatpush1.msra.mxu0 0.0
  %902 = vmatprep.subr.mxu0 0.0
  %903 = vmatpush1.msra.mxu0 0.0
  %904 = vmatprep.subr.mxu0 0.0
  %905 = vmatpush1.msra.mxu0 0.0
  %906 = vmatprep.subr.mxu0 0.0
  %907 = vmatpush1.msra.mxu0 0.0
  %908 = vmatprep.subr.mxu0 0.0
  %909 = vmatpush1.msra.mxu0 0.0
  %910 = vmatprep.subr.mxu0 0.0
  %911 = vmatpush1.msra.mxu0 0.0
  %912 = vmatprep.subr.mxu0 0.0
  %913 = vmatpush1.msra.mxu0 0.0
  %914 = vmatprep.subr.mxu0 0.0
  %915 = vmatpush1.msra.mxu0 0.0
  %916 = vmatprep.subr.mxu0 0.0
  %917 = vmatpush1.msra.mxu0 0.0
  %918 = vmatprep.subr.mxu0 0.0
  %919 = vmatpush1.msra.mxu0 0.0
  %920 = vmatprep.subr.mxu0 0.0
  %921 = vmatpush1.msra.mxu0 0.0
  %922 = vmatprep.subr.mxu0 0.0
  %923 = vmatpush1.msra.mxu0 0.0
  %924 = vmatprep.subr.mxu0 0.0
  %925 = vmatpush1.msra.mxu0 0.0
  %926 = vmatprep.subr.mxu0 0.0
  %927 = vmatpush1.msra.mxu0 0.0
  %928 = vmatprep.subr.mxu0 0.0
  %929 = vmatpush1.msra.mxu0 %v890
  %930 = vmatprep.subr.mxu0 0.0
  %931 = vmatpush1.msra.mxu0 %v889
  %932 = vmatprep.subr.mxu0 0.0
  %933 = vmatpush2.msra.mxu0 0.0
  %934 = vmatprep.subr.mxu0 0.0
  %935 = vmatpush2.msra.mxu0 0.0
  %936 = vmatprep.subr.mxu0 0.0
  %937 = vmatpush2.msra.mxu0 0.0
  %938 = vmatprep.subr.mxu0 0.0
  %939 = vmatpush2.msra.mxu0 0.0
  %940 = vmatprep.subr.mxu0 0.0
  %941 = vmatpush2.msra.mxu0 0.0
  %942 = vmatprep.subr.mxu0 0.0
  %943 = vmatpush2.msra.mxu0 0.0
  %944 = vmatprep.subr.mxu0 0.0
  %945 = vmatpush2.msra.mxu0 0.0
  %946 = vmatprep.subr.mxu0 0.0
  %947 = vmatpush2.msra.mxu0 0.0
  %948 = vmatprep.subr.mxu0 0.0
  %949 = vmatpush2.msra.mxu0 0.0
  %950 = vmatprep.subr.mxu0 0.0
  %951 = vmatpush2.msra.mxu0 0.0
  %952 = vmatprep.subr.mxu0 0.0
  %953 = vmatpush2.msra.mxu0 0.0
  %954 = vmatprep.subr.mxu0 0.0
  %955 = vmatpush2.msra.mxu0 0.0
  %956 = vmatprep.subr.mxu0 0.0
  %957 = vmatpush2.msra.mxu0 0.0
  %958 = vmatprep.subr.mxu0 0.0
  %959 = vmatpush2.msra.mxu0 0.0
  %960 = vmatprep.subr.mxu0 0.0
  %961 = vmatpush2.msra.mxu0 0.0
  %962 = vmatprep.subr.mxu0 0.0
  %963 = vmatpush2.msra.mxu0 0.0
  %964 = vmatprep.mubr.f32.mxu0 0.0
  %965 = vmatmul.mubr.f32.gmra.mxu0 %v898
  %v966 = vpop.f32.mrf.mxu0
  %v967 = vadd.f32 %v896, %v966
  %v968 = vpop.f32.mrf.mxu0
  %969 = vdwg.mxu0
  %v970 = vadd.f32 %v886, %v967
  %v971 = vxor.u32 %v970, 2147483648
  %v972 = vmul.f32 %v971, 1.442695
  %v973 = vpow.pop %v972
  %v974 = vadd.f32 %v973, 1.0
  %v975 = vrcp.pop %v974
  %v976 = vmul.f32 1.0, %v975
  %978 = vrot.lane.b32.xlu0 %v967, 96
  %v979 = vpop.permute.xlu0 %978
  %v981 = vmul.f32 %v976, %v979
  %983 = vrot.lane.b32.xlu0 %v981, 32
  %v984 = vpop.permute.xlu0 %983
  %v986 = vadd.f32 %v886, %v984
  %v987 = vtanh.pop %v986
  %v988 = vsub.f32 1.0, %v976
  %990 = vrot.lane.b32.xlu0 %v987, 112
  %v991 = vpop.permute.xlu0 %990
  %v993 = vmul.f32 %v988, %v991
  %v994 = vmul.f32 %v976, %v799
  %v995 = vadd.f32 %v993, %v994
  %997 = vrot.lane.b32.xlu0 %v995, 112
  %v998 = vpop.permute.xlu0 %997
  %s1000 = scalar_lea.vmem %s5, 8
  %1001 = vst.msk [vmem:[%s1000] sm:$0x3] %vm216, %v998
  %s1002 = scalar_lea.vmem %s0, 10
  %v1003 = vld [vmem:[%s1002] sm:$0x3]
  %v1004 = vld [vmem:[%s1] sm:$0xff]
  %v1005 = vld [vmem:[%s2] sm:$0x1]
  %v1007 = vlaneseq
  %v1008 = vshrl.u32 %v1007, 7
  %v1009 = vsub.s32 0, %v1008
  %v1010 = vrot.slane %v1005, %v1009
  %v1013 = vsel %vm29, %v1003, 0
  %1015 = vmatprep.subr.mxu0 0.0
  %1016 = vmatpush1.msra.mxu0 0.0
  %1017 = vmatprep.subr.mxu0 0.0
  %1018 = vmatpush1.msra.mxu0 0.0
  %1019 = vmatprep.subr.mxu0 0.0
  %1020 = vmatpush1.msra.mxu0 0.0
  %1021 = vmatprep.subr.mxu0 0.0
  %1022 = vmatpush1.msra.mxu0 0.0
  %1023 = vmatprep.subr.mxu0 0.0
  %1024 = vmatpush1.msra.mxu0 0.0
  %1025 = vmatprep.subr.mxu0 0.0
  %1026 = vmatpush1.msra.mxu0 0.0
  %1027 = vmatprep.subr.mxu0 0.0
  %1028 = vmatpush1.msra.mxu0 0.0
  %1029 = vmatprep.subr.mxu0 0.0
  %1030 = vmatpush1.msra.mxu0 0.0
  %1031 = vmatprep.subr.mxu0 0.0
  %1032 = vmatpush1.msra.mxu0 0.0
  %1033 = vmatprep.subr.mxu0 0.0
  %1034 = vmatpush1.msra.mxu0 0.0
  %1035 = vmatprep.subr.mxu0 0.0
  %1036 = vmatpush1.msra.mxu0 0.0
  %1037 = vmatprep.subr.mxu0 0.0
  %1038 = vmatpush1.msra.mxu0 0.0
  %1039 = vmatprep.subr.mxu0 0.0
  %1040 = vmatpush1.msra.mxu0 0.0
  %1041 = vmatprep.subr.mxu0 0.0
  %1042 = vmatpush1.msra.mxu0 0.0
  %1043 = vmatprep.subr.mxu0 0.0
  %1044 = vmatpush1.msra.mxu0 0.0
  %1045 = vmatprep.subr.mxu0 0.0
  %1046 = vmatpush1.msra.mxu0 %v1004
  %1047 = vmatprep.subr.mxu0 0.0
  %1048 = vmatpush2.msra.mxu0 0.0
  %1049 = vmatprep.subr.mxu0 0.0
  %1050 = vmatpush2.msra.mxu0 0.0
  %1051 = vmatprep.subr.mxu0 0.0
  %1052 = vmatpush2.msra.mxu0 0.0
  %1053 = vmatprep.subr.mxu0 0.0
  %1054 = vmatpush2.msra.mxu0 0.0
  %1055 = vmatprep.subr.mxu0 0.0
  %1056 = vmatpush2.msra.mxu0 0.0
  %1057 = vmatprep.subr.mxu0 0.0
  %1058 = vmatpush2.msra.mxu0 0.0
  %1059 = vmatprep.subr.mxu0 0.0
  %1060 = vmatpush2.msra.mxu0 0.0
  %1061 = vmatprep.subr.mxu0 0.0
  %1062 = vmatpush2.msra.mxu0 0.0
  %1063 = vmatprep.subr.mxu0 0.0
  %1064 = vmatpush2.msra.mxu0 0.0
  %1065 = vmatprep.subr.mxu0 0.0
  %1066 = vmatpush2.msra.mxu0 0.0
  %1067 = vmatprep.subr.mxu0 0.0
  %1068 = vmatpush2.msra.mxu0 0.0
  %1069 = vmatprep.subr.mxu0 0.0
  %1070 = vmatpush2.msra.mxu0 0.0
  %1071 = vmatprep.subr.mxu0 0.0
  %1072 = vmatpush2.msra.mxu0 0.0
  %1073 = vmatprep.subr.mxu0 0.0
  %1074 = vmatpush2.msra.mxu0 0.0
  %1075 = vmatprep.subr.mxu0 0.0
  %1076 = vmatpush2.msra.mxu0 0.0
  %1077 = vmatprep.subr.mxu0 0.0
  %1078 = vmatpush2.msra.mxu0 0.0
  %1079 = vmatprep.mubr.f32.mxu0 0.0
  %1080 = vmatmul.mubr.f32.gmra.mxu0 %v1013
  %v1081 = vpop.f32.mrf.mxu0
  %v1082 = vadd.f32 %v1010, %v1081
  %v1083 = vpop.f32.mrf.mxu0
  %1084 = vdwg.mxu0
  %v1085 = vld [vmem:[%s3] sm:$0xff]
  %v1086 = vld [vmem:[%s3 + $0x8] sm:$0xff]
  %v1087 = vld [vmem:[%s4] sm:$0x1]
  %v1089 = vlaneseq
  %v1090 = vshrl.u32 %v1089, 7
  %v1091 = vsub.s32 0, %v1090
  %v1092 = vrot.slane %v1087, %v1091
  %v1094 = vsel %vm112, %v998, 0
  %1096 = vmatprep.subr.mxu0 0.0
  %1097 = vmatpush1.msra.mxu0 0.0
  %1098 = vmatprep.subr.mxu0 0.0
  %1099 = vmatpush1.msra.mxu0 0.0
  %1100 = vmatprep.subr.mxu0 0.0
  %1101 = vmatpush1.msra.mxu0 0.0
  %1102 = vmatprep.subr.mxu0 0.0
  %1103 = vmatpush1.msra.mxu0 0.0
  %1104 = vmatprep.subr.mxu0 0.0
  %1105 = vmatpush1.msra.mxu0 0.0
  %1106 = vmatprep.subr.mxu0 0.0
  %1107 = vmatpush1.msra.mxu0 0.0
  %1108 = vmatprep.subr.mxu0 0.0
  %1109 = vmatpush1.msra.mxu0 0.0
  %1110 = vmatprep.subr.mxu0 0.0
  %1111 = vmatpush1.msra.mxu0 0.0
  %1112 = vmatprep.subr.mxu0 0.0
  %1113 = vmatpush1.msra.mxu0 0.0
  %1114 = vmatprep.subr.mxu0 0.0
  %1115 = vmatpush1.msra.mxu0 0.0
  %1116 = vmatprep.subr.mxu0 0.0
  %1117 = vmatpush1.msra.mxu0 0.0
  %1118 = vmatprep.subr.mxu0 0.0
  %1119 = vmatpush1.msra.mxu0 0.0
  %1120 = vmatprep.subr.mxu0 0.0
  %1121 = vmatpush1.msra.mxu0 0.0
  %1122 = vmatprep.subr.mxu0 0.0
  %1123 = vmatpush1.msra.mxu0 0.0
  %1124 = vmatprep.subr.mxu0 0.0
  %1125 = vmatpush1.msra.mxu0 %v1086
  %1126 = vmatprep.subr.mxu0 0.0
  %1127 = vmatpush1.msra.mxu0 %v1085
  %1128 = vmatprep.subr.mxu0 0.0
  %1129 = vmatpush2.msra.mxu0 0.0
  %1130 = vmatprep.subr.mxu0 0.0
  %1131 = vmatpush2.msra.mxu0 0.0
  %1132 = vmatprep.subr.mxu0 0.0
  %1133 = vmatpush2.msra.mxu0 0.0
  %1134 = vmatprep.subr.mxu0 0.0
  %1135 = vmatpush2.msra.mxu0 0.0
  %1136 = vmatprep.subr.mxu0 0.0
  %1137 = vmatpush2.msra.mxu0 0.0
  %1138 = vmatprep.subr.mxu0 0.0
  %1139 = vmatpush2.msra.mxu0 0.0
  %1140 = vmatprep.subr.mxu0 0.0
  %1141 = vmatpush2.msra.mxu0 0.0
  %1142 = vmatprep.subr.mxu0 0.0
  %1143 = vmatpush2.msra.mxu0 0.0
  %1144 = vmatprep.subr.mxu0 0.0
  %1145 = vmatpush2.msra.mxu0 0.0
  %1146 = vmatprep.subr.mxu0 0.0
  %1147 = vmatpush2.msra.mxu0 0.0
  %1148 = vmatprep.subr.mxu0 0.0
  %1149 = vmatpush2.msra.mxu0 0.0
  %1150 = vmatprep.subr.mxu0 0.0
  %1151 = vmatpush2.msra.mxu0 0.0
  %1152 = vmatprep.subr.mxu0 0.0
  %1153 = vmatpush2.msra.mxu0 0.0
  %1154 = vmatprep.subr.mxu0 0.0
  %1155 = vmatpush2.msra.mxu0 0.0
  %1156 = vmatprep.subr.mxu0 0.0
  %1157 = vmatpush2.msra.mxu0 0.0
  %1158 = vmatprep.subr.mxu0 0.0
  %1159 = vmatpush2.msra.mxu0 0.0
  %1160 = vmatprep.mubr.f32.mxu0 0.0
  %1161 = vmatmul.mubr.f32.gmra.mxu0 %v1094
  %v1162 = vpop.f32.mrf.mxu0
  %v1163 = vadd.f32 %v1092, %v1162
  %v1164 = vpop.f32.mrf.mxu0
  %1165 = vdwg.mxu0
  %v1166 = vadd.f32 %v1082, %v1163
  %v1167 = vxor.u32 %v1166, 2147483648
  %v1168 = vmul.f32 %v1167, 1.442695
  %v1169 = vpow.pop %v1168
  %v1170 = vadd.f32 %v1169, 1.0
  %v1171 = vrcp.pop %v1170
  %v1172 = vmul.f32 1.0, %v1171
  %1174 = vrot.lane.b32.xlu0 %v1163, 96
  %v1175 = vpop.permute.xlu0 %1174
  %v1177 = vmul.f32 %v1172, %v1175
  %1179 = vrot.lane.b32.xlu0 %v1177, 32
  %v1180 = vpop.permute.xlu0 %1179
  %v1182 = vadd.f32 %v1082, %v1180
  %v1183 = vtanh.pop %v1182
  %v1184 = vsub.f32 1.0, %v1172
  %1186 = vrot.lane.b32.xlu0 %v1183, 112
  %v1187 = vpop.permute.xlu0 %1186
  %v1189 = vmul.f32 %v1184, %v1187
  %v1190 = vmul.f32 %v1172, %v995
  %v1191 = vadd.f32 %v1189, %v1190
  %1193 = vrot.lane.b32.xlu0 %v1191, 112
  %v1194 = vpop.permute.xlu0 %1193
  %s1196 = scalar_lea.vmem %s5, 10
  %1197 = vst.msk [vmem:[%s1196] sm:$0x3] %vm216, %v1194
  %s1198 = scalar_lea.vmem %s0, 12
  %v1199 = vld [vmem:[%s1198] sm:$0x3]
  %v1200 = vld [vmem:[%s1] sm:$0xff]
  %v1201 = vld [vmem:[%s2] sm:$0x1]
  %v1203 = vlaneseq
  %v1204 = vshrl.u32 %v1203, 7
  %v1205 = vsub.s32 0, %v1204
  %v1206 = vrot.slane %v1201, %v1205
  %v1209 = vsel %vm29, %v1199, 0
  %1211 = vmatprep.subr.mxu0 0.0
  %1212 = vmatpush1.msra.mxu0 0.0
  %1213 = vmatprep.subr.mxu0 0.0
  %1214 = vmatpush1.msra.mxu0 0.0
  %1215 = vmatprep.subr.mxu0 0.0
  %1216 = vmatpush1.msra.mxu0 0.0
  %1217 = vmatprep.subr.mxu0 0.0
  %1218 = vmatpush1.msra.mxu0 0.0
  %1219 = vmatprep.subr.mxu0 0.0
  %1220 = vmatpush1.msra.mxu0 0.0
  %1221 = vmatprep.subr.mxu0 0.0
  %1222 = vmatpush1.msra.mxu0 0.0
  %1223 = vmatprep.subr.mxu0 0.0
  %1224 = vmatpush1.msra.mxu0 0.0
  %1225 = vmatprep.subr.mxu0 0.0
  %1226 = vmatpush1.msra.mxu0 0.0
  %1227 = vmatprep.subr.mxu0 0.0
  %1228 = vmatpush1.msra.mxu0 0.0
  %1229 = vmatprep.subr.mxu0 0.0
  %1230 = vmatpush1.msra.mxu0 0.0
  %1231 = vmatprep.subr.mxu0 0.0
  %1232 = vmatpush1.msra.mxu0 0.0
  %1233 = vmatprep.subr.mxu0 0.0
  %1234 = vmatpush1.msra.mxu0 0.0
  %1235 = vmatprep.subr.mxu0 0.0
  %1236 = vmatpush1.msra.mxu0 0.0
  %1237 = vmatprep.subr.mxu0 0.0
  %1238 = vmatpush1.msra.mxu0 0.0
  %1239 = vmatprep.subr.mxu0 0.0
  %1240 = vmatpush1.msra.mxu0 0.0
  %1241 = vmatprep.subr.mxu0 0.0
  %1242 = vmatpush1.msra.mxu0 %v1200
  %1243 = vmatprep.subr.mxu0 0.0
  %1244 = vmatpush2.msra.mxu0 0.0
  %1245 = vmatprep.subr.mxu0 0.0
  %1246 = vmatpush2.msra.mxu0 0.0
  %1247 = vmatprep.subr.mxu0 0.0
  %1248 = vmatpush2.msra.mxu0 0.0
  %1249 = vmatprep.subr.mxu0 0.0
  %1250 = vmatpush2.msra.mxu0 0.0
  %1251 = vmatprep.subr.mxu0 0.0
  %1252 = vmatpush2.msra.mxu0 0.0
  %1253 = vmatprep.subr.mxu0 0.0
  %1254 = vmatpush2.msra.mxu0 0.0
  %1255 = vmatprep.subr.mxu0 0.0
  %1256 = vmatpush2.msra.mxu0 0.0
  %1257 = vmatprep.subr.mxu0 0.0
  %1258 = vmatpush2.msra.mxu0 0.0
  %1259 = vmatprep.subr.mxu0 0.0
  %1260 = vmatpush2.msra.mxu0 0.0
  %1261 = vmatprep.subr.mxu0 0.0
  %1262 = vmatpush2.msra.mxu0 0.0
  %1263 = vmatprep.subr.mxu0 0.0
  %1264 = vmatpush2.msra.mxu0 0.0
  %1265 = vmatprep.subr.mxu0 0.0
  %1266 = vmatpush2.msra.mxu0 0.0
  %1267 = vmatprep.subr.mxu0 0.0
  %1268 = vmatpush2.msra.mxu0 0.0
  %1269 = vmatprep.subr.mxu0 0.0
  %1270 = vmatpush2.msra.mxu0 0.0
  %1271 = vmatprep.subr.mxu0 0.0
  %1272 = vmatpush2.msra.mxu0 0.0
  %1273 = vmatprep.subr.mxu0 0.0
  %1274 = vmatpush2.msra.mxu0 0.0
  %1275 = vmatprep.mubr.f32.mxu0 0.0
  %1276 = vmatmul.mubr.f32.gmra.mxu0 %v1209
  %v1277 = vpop.f32.mrf.mxu0
  %v1278 = vadd.f32 %v1206, %v1277
  %v1279 = vpop.f32.mrf.mxu0
  %1280 = vdwg.mxu0
  %v1281 = vld [vmem:[%s3] sm:$0xff]
  %v1282 = vld [vmem:[%s3 + $0x8] sm:$0xff]
  %v1283 = vld [vmem:[%s4] sm:$0x1]
  %v1285 = vlaneseq
  %v1286 = vshrl.u32 %v1285, 7
  %v1287 = vsub.s32 0, %v1286
  %v1288 = vrot.slane %v1283, %v1287
  %v1290 = vsel %vm112, %v1194, 0
  %1292 = vmatprep.subr.mxu0 0.0
  %1293 = vmatpush1.msra.mxu0 0.0
  %1294 = vmatprep.subr.mxu0 0.0
  %1295 = vmatpush1.msra.mxu0 0.0
  %1296 = vmatprep.subr.mxu0 0.0
  %1297 = vmatpush1.msra.mxu0 0.0
  %1298 = vmatprep.subr.mxu0 0.0
  %1299 = vmatpush1.msra.mxu0 0.0
  %1300 = vmatprep.subr.mxu0 0.0
  %1301 = vmatpush1.msra.mxu0 0.0
  %1302 = vmatprep.subr.mxu0 0.0
  %1303 = vmatpush1.msra.mxu0 0.0
  %1304 = vmatprep.subr.mxu0 0.0
  %1305 = vmatpush1.msra.mxu0 0.0
  %1306 = vmatprep.subr.mxu0 0.0
  %1307 = vmatpush1.msra.mxu0 0.0
  %1308 = vmatprep.subr.mxu0 0.0
  %1309 = vmatpush1.msra.mxu0 0.0
  %1310 = vmatprep.subr.mxu0 0.0
  %1311 = vmatpush1.msra.mxu0 0.0
  %1312 = vmatprep.subr.mxu0 0.0
  %1313 = vmatpush1.msra.mxu0 0.0
  %1314 = vmatprep.subr.mxu0 0.0
  %1315 = vmatpush1.msra.mxu0 0.0
  %1316 = vmatprep.subr.mxu0 0.0
  %1317 = vmatpush1.msra.mxu0 0.0
  %1318 = vmatprep.subr.mxu0 0.0
  %1319 = vmatpush1.msra.mxu0 0.0
  %1320 = vmatprep.subr.mxu0 0.0
  %1321 = vmatpush1.msra.mxu0 %v1282
  %1322 = vmatprep.subr.mxu0 0.0
  %1323 = vmatpush1.msra.mxu0 %v1281
  %1324 = vmatprep.subr.mxu0 0.0
  %1325 = vmatpush2.msra.mxu0 0.0
  %1326 = vmatprep.subr.mxu0 0.0
  %1327 = vmatpush2.msra.mxu0 0.0
  %1328 = vmatprep.subr.mxu0 0.0
  %1329 = vmatpush2.msra.mxu0 0.0
  %1330 = vmatprep.subr.mxu0 0.0
  %1331 = vmatpush2.msra.mxu0 0.0
  %1332 = vmatprep.subr.mxu0 0.0
  %1333 = vmatpush2.msra.mxu0 0.0
  %1334 = vmatprep.subr.mxu0 0.0
  %1335 = vmatpush2.msra.mxu0 0.0
  %1336 = vmatprep.subr.mxu0 0.0
  %1337 = vmatpush2.msra.mxu0 0.0
  %1338 = vmatprep.subr.mxu0 0.0
  %1339 = vmatpush2.msra.mxu0 0.0
  %1340 = vmatprep.subr.mxu0 0.0
  %1341 = vmatpush2.msra.mxu0 0.0
  %1342 = vmatprep.subr.mxu0 0.0
  %1343 = vmatpush2.msra.mxu0 0.0
  %1344 = vmatprep.subr.mxu0 0.0
  %1345 = vmatpush2.msra.mxu0 0.0
  %1346 = vmatprep.subr.mxu0 0.0
  %1347 = vmatpush2.msra.mxu0 0.0
  %1348 = vmatprep.subr.mxu0 0.0
  %1349 = vmatpush2.msra.mxu0 0.0
  %1350 = vmatprep.subr.mxu0 0.0
  %1351 = vmatpush2.msra.mxu0 0.0
  %1352 = vmatprep.subr.mxu0 0.0
  %1353 = vmatpush2.msra.mxu0 0.0
  %1354 = vmatprep.subr.mxu0 0.0
  %1355 = vmatpush2.msra.mxu0 0.0
  %1356 = vmatprep.mubr.f32.mxu0 0.0
  %1357 = vmatmul.mubr.f32.gmra.mxu0 %v1290
  %v1358 = vpop.f32.mrf.mxu0
  %v1359 = vadd.f32 %v1288, %v1358
  %v1360 = vpop.f32.mrf.mxu0
  %1361 = vdwg.mxu0
  %v1362 = vadd.f32 %v1278, %v1359
  %v1363 = vxor.u32 %v1362, 2147483648
  %v1364 = vmul.f32 %v1363, 1.442695
  %v1365 = vpow.pop %v1364
  %v1366 = vadd.f32 %v1365, 1.0
  %v1367 = vrcp.pop %v1366
  %v1368 = vmul.f32 1.0, %v1367
  %1370 = vrot.lane.b32.xlu0 %v1359, 96
  %v1371 = vpop.permute.xlu0 %1370
  %v1373 = vmul.f32 %v1368, %v1371
  %1375 = vrot.lane.b32.xlu0 %v1373, 32
  %v1376 = vpop.permute.xlu0 %1375
  %v1378 = vadd.f32 %v1278, %v1376
  %v1379 = vtanh.pop %v1378
  %v1380 = vsub.f32 1.0, %v1368
  %1382 = vrot.lane.b32.xlu0 %v1379, 112
  %v1383 = vpop.permute.xlu0 %1382
  %v1385 = vmul.f32 %v1380, %v1383
  %v1386 = vmul.f32 %v1368, %v1191
  %v1387 = vadd.f32 %v1385, %v1386
  %1389 = vrot.lane.b32.xlu0 %v1387, 112
  %v1390 = vpop.permute.xlu0 %1389
  %s1392 = scalar_lea.vmem %s5, 12
  %1393 = vst.msk [vmem:[%s1392] sm:$0x3] %vm216, %v1390
  %s1394 = scalar_lea.vmem %s0, 14
  %v1395 = vld [vmem:[%s1394] sm:$0x3]
  %v1396 = vld [vmem:[%s1] sm:$0xff]
  %v1397 = vld [vmem:[%s2] sm:$0x1]
  %v1399 = vlaneseq
  %v1400 = vshrl.u32 %v1399, 7
  %v1401 = vsub.s32 0, %v1400
  %v1402 = vrot.slane %v1397, %v1401
  %v1405 = vsel %vm29, %v1395, 0
  %1407 = vmatprep.subr.mxu0 0.0
  %1408 = vmatpush1.msra.mxu0 0.0
  %1409 = vmatprep.subr.mxu0 0.0
  %1410 = vmatpush1.msra.mxu0 0.0
  %1411 = vmatprep.subr.mxu0 0.0
  %1412 = vmatpush1.msra.mxu0 0.0
  %1413 = vmatprep.subr.mxu0 0.0
  %1414 = vmatpush1.msra.mxu0 0.0
  %1415 = vmatprep.subr.mxu0 0.0
  %1416 = vmatpush1.msra.mxu0 0.0
  %1417 = vmatprep.subr.mxu0 0.0
  %1418 = vmatpush1.msra.mxu0 0.0
  %1419 = vmatprep.subr.mxu0 0.0
  %1420 = vmatpush1.msra.mxu0 0.0
  %1421 = vmatprep.subr.mxu0 0.0
  %1422 = vmatpush1.msra.mxu0 0.0
  %1423 = vmatprep.subr.mxu0 0.0
  %1424 = vmatpush1.msra.mxu0 0.0
  %1425 = vmatprep.subr.mxu0 0.0
  %1426 = vmatpush1.msra.mxu0 0.0
  %1427 = vmatprep.subr.mxu0 0.0
  %1428 = vmatpush1.msra.mxu0 0.0
  %1429 = vmatprep.subr.mxu0 0.0
  %1430 = vmatpush1.msra.mxu0 0.0
  %1431 = vmatprep.subr.mxu0 0.0
  %1432 = vmatpush1.msra.mxu0 0.0
  %1433 = vmatprep.subr.mxu0 0.0
  %1434 = vmatpush1.msra.mxu0 0.0
  %1435 = vmatprep.subr.mxu0 0.0
  %1436 = vmatpush1.msra.mxu0 0.0
  %1437 = vmatprep.subr.mxu0 0.0
  %1438 = vmatpush1.msra.mxu0 %v1396
  %1439 = vmatprep.subr.mxu0 0.0
  %1440 = vmatpush2.msra.mxu0 0.0
  %1441 = vmatprep.subr.mxu0 0.0
  %1442 = vmatpush2.msra.mxu0 0.0
  %1443 = vmatprep.subr.mxu0 0.0
  %1444 = vmatpush2.msra.mxu0 0.0
  %1445 = vmatprep.subr.mxu0 0.0
  %1446 = vmatpush2.msra.mxu0 0.0
  %1447 = vmatprep.subr.mxu0 0.0
  %1448 = vmatpush2.msra.mxu0 0.0
  %1449 = vmatprep.subr.mxu0 0.0
  %1450 = vmatpush2.msra.mxu0 0.0
  %1451 = vmatprep.subr.mxu0 0.0
  %1452 = vmatpush2.msra.mxu0 0.0
  %1453 = vmatprep.subr.mxu0 0.0
  %1454 = vmatpush2.msra.mxu0 0.0
  %1455 = vmatprep.subr.mxu0 0.0
  %1456 = vmatpush2.msra.mxu0 0.0
  %1457 = vmatprep.subr.mxu0 0.0
  %1458 = vmatpush2.msra.mxu0 0.0
  %1459 = vmatprep.subr.mxu0 0.0
  %1460 = vmatpush2.msra.mxu0 0.0
  %1461 = vmatprep.subr.mxu0 0.0
  %1462 = vmatpush2.msra.mxu0 0.0
  %1463 = vmatprep.subr.mxu0 0.0
  %1464 = vmatpush2.msra.mxu0 0.0
  %1465 = vmatprep.subr.mxu0 0.0
  %1466 = vmatpush2.msra.mxu0 0.0
  %1467 = vmatprep.subr.mxu0 0.0
  %1468 = vmatpush2.msra.mxu0 0.0
  %1469 = vmatprep.subr.mxu0 0.0
  %1470 = vmatpush2.msra.mxu0 0.0
  %1471 = vmatprep.mubr.f32.mxu0 0.0
  %1472 = vmatmul.mubr.f32.gmra.mxu0 %v1405
  %v1473 = vpop.f32.mrf.mxu0
  %v1474 = vadd.f32 %v1402, %v1473
  %v1475 = vpop.f32.mrf.mxu0
  %1476 = vdwg.mxu0
  %v1477 = vld [vmem:[%s3] sm:$0xff]
  %v1478 = vld [vmem:[%s3 + $0x8] sm:$0xff]
  %v1479 = vld [vmem:[%s4] sm:$0x1]
  %v1481 = vlaneseq
  %v1482 = vshrl.u32 %v1481, 7
  %v1483 = vsub.s32 0, %v1482
  %v1484 = vrot.slane %v1479, %v1483
  %v1486 = vsel %vm112, %v1390, 0
  %1488 = vmatprep.subr.mxu0 0.0
  %1489 = vmatpush1.msra.mxu0 0.0
  %1490 = vmatprep.subr.mxu0 0.0
  %1491 = vmatpush1.msra.mxu0 0.0
  %1492 = vmatprep.subr.mxu0 0.0
  %1493 = vmatpush1.msra.mxu0 0.0
  %1494 = vmatprep.subr.mxu0 0.0
  %1495 = vmatpush1.msra.mxu0 0.0
  %1496 = vmatprep.subr.mxu0 0.0
  %1497 = vmatpush1.msra.mxu0 0.0
  %1498 = vmatprep.subr.mxu0 0.0
  %1499 = vmatpush1.msra.mxu0 0.0
  %1500 = vmatprep.subr.mxu0 0.0
  %1501 = vmatpush1.msra.mxu0 0.0
  %1502 = vmatprep.subr.mxu0 0.0
  %1503 = vmatpush1.msra.mxu0 0.0
  %1504 = vmatprep.subr.mxu0 0.0
  %1505 = vmatpush1.msra.mxu0 0.0
  %1506 = vmatprep.subr.mxu0 0.0
  %1507 = vmatpush1.msra.mxu0 0.0
  %1508 = vmatprep.subr.mxu0 0.0
  %1509 = vmatpush1.msra.mxu0 0.0
  %1510 = vmatprep.subr.mxu0 0.0
  %1511 = vmatpush1.msra.mxu0 0.0
  %1512 = vmatprep.subr.mxu0 0.0
  %1513 = vmatpush1.msra.mxu0 0.0
  %1514 = vmatprep.subr.mxu0 0.0
  %1515 = vmatpush1.msra.mxu0 0.0
  %1516 = vmatprep.subr.mxu0 0.0
  %1517 = vmatpush1.msra.mxu0 %v1478
  %1518 = vmatprep.subr.mxu0 0.0
  %1519 = vmatpush1.msra.mxu0 %v1477
  %1520 = vmatprep.subr.mxu0 0.0
  %1521 = vmatpush2.msra.mxu0 0.0
  %1522 = vmatprep.subr.mxu0 0.0
  %1523 = vmatpush2.msra.mxu0 0.0
  %1524 = vmatprep.subr.mxu0 0.0
  %1525 = vmatpush2.msra.mxu0 0.0
  %1526 = vmatprep.subr.mxu0 0.0
  %1527 = vmatpush2.msra.mxu0 0.0
  %1528 = vmatprep.subr.mxu0 0.0
  %1529 = vmatpush2.msra.mxu0 0.0
  %1530 = vmatprep.subr.mxu0 0.0
  %1531 = vmatpush2.msra.mxu0 0.0
  %1532 = vmatprep.subr.mxu0 0.0
  %1533 = vmatpush2.msra.mxu0 0.0
  %1534 = vmatprep.subr.mxu0 0.0
  %1535 = vmatpush2.msra.mxu0 0.0
  %1536 = vmatprep.subr.mxu0 0.0
  %1537 = vmatpush2.msra.mxu0 0.0
  %1538 = vmatprep.subr.mxu0 0.0
  %1539 = vmatpush2.msra.mxu0 0.0
  %1540 = vmatprep.subr.mxu0 0.0
  %1541 = vmatpush2.msra.mxu0 0.0
  %1542 = vmatprep.subr.mxu0 0.0
  %1543 = vmatpush2.msra.mxu0 0.0
  %1544 = vmatprep.subr.mxu0 0.0
  %1545 = vmatpush2.msra.mxu0 0.0
  %1546 = vmatprep.subr.mxu0 0.0
  %1547 = vmatpush2.msra.mxu0 0.0
  %1548 = vmatprep.subr.mxu0 0.0
  %1549 = vmatpush2.msra.mxu0 0.0
  %1550 = vmatprep.subr.mxu0 0.0
  %1551 = vmatpush2.msra.mxu0 0.0
  %1552 = vmatprep.mubr.f32.mxu0 0.0
  %1553 = vmatmul.mubr.f32.gmra.mxu0 %v1486
  %v1554 = vpop.f32.mrf.mxu0
  %v1555 = vadd.f32 %v1484, %v1554
  %v1556 = vpop.f32.mrf.mxu0
  %1557 = vdwg.mxu0
  %v1558 = vadd.f32 %v1474, %v1555
  %v1559 = vxor.u32 %v1558, 2147483648
  %v1560 = vmul.f32 %v1559, 1.442695
  %v1561 = vpow.pop %v1560
  %v1562 = vadd.f32 %v1561, 1.0
  %v1563 = vrcp.pop %v1562
  %v1564 = vmul.f32 1.0, %v1563
  %1566 = vrot.lane.b32.xlu0 %v1555, 96
  %v1567 = vpop.permute.xlu0 %1566
  %v1569 = vmul.f32 %v1564, %v1567
  %1571 = vrot.lane.b32.xlu0 %v1569, 32
  %v1572 = vpop.permute.xlu0 %1571
  %v1574 = vadd.f32 %v1474, %v1572
  %v1575 = vtanh.pop %v1574
  %v1576 = vsub.f32 1.0, %v1564
  %1578 = vrot.lane.b32.xlu0 %v1575, 112
  %v1579 = vpop.permute.xlu0 %1578
  %v1581 = vmul.f32 %v1576, %v1579
  %v1582 = vmul.f32 %v1564, %v1387
  %v1583 = vadd.f32 %v1581, %v1582
  %1585 = vrot.lane.b32.xlu0 %v1583, 112
  %v1586 = vpop.permute.xlu0 %1585
  %s1588 = scalar_lea.vmem %s5, 14
  %1589 = vst.msk [vmem:[%s1588] sm:$0x3] %vm216, %v1586
  %s1590 = scalar_lea.vmem %s0, 16
  %v1591 = vld [vmem:[%s1590] sm:$0x3]
  %v1592 = vld [vmem:[%s1] sm:$0xff]
  %v1593 = vld [vmem:[%s2] sm:$0x1]
  %v1595 = vlaneseq
  %v1596 = vshrl.u32 %v1595, 7
  %v1597 = vsub.s32 0, %v1596
  %v1598 = vrot.slane %v1593, %v1597
  %v1601 = vsel %vm29, %v1591, 0
  %1603 = vmatprep.subr.mxu0 0.0
  %1604 = vmatpush1.msra.mxu0 0.0
  %1605 = vmatprep.subr.mxu0 0.0
  %1606 = vmatpush1.msra.mxu0 0.0
  %1607 = vmatprep.subr.mxu0 0.0
  %1608 = vmatpush1.msra.mxu0 0.0
  %1609 = vmatprep.subr.mxu0 0.0
  %1610 = vmatpush1.msra.mxu0 0.0
  %1611 = vmatprep.subr.mxu0 0.0
  %1612 = vmatpush1.msra.mxu0 0.0
  %1613 = vmatprep.subr.mxu0 0.0
  %1614 = vmatpush1.msra.mxu0 0.0
  %1615 = vmatprep.subr.mxu0 0.0
  %1616 = vmatpush1.msra.mxu0 0.0
  %1617 = vmatprep.subr.mxu0 0.0
  %1618 = vmatpush1.msra.mxu0 0.0
  %1619 = vmatprep.subr.mxu0 0.0
  %1620 = vmatpush1.msra.mxu0 0.0
  %1621 = vmatprep.subr.mxu0 0.0
  %1622 = vmatpush1.msra.mxu0 0.0
  %1623 = vmatprep.subr.mxu0 0.0
  %1624 = vmatpush1.msra.mxu0 0.0
  %1625 = vmatprep.subr.mxu0 0.0
  %1626 = vmatpush1.msra.mxu0 0.0
  %1627 = vmatprep.subr.mxu0 0.0
  %1628 = vmatpush1.msra.mxu0 0.0
  %1629 = vmatprep.subr.mxu0 0.0
  %1630 = vmatpush1.msra.mxu0 0.0
  %1631 = vmatprep.subr.mxu0 0.0
  %1632 = vmatpush1.msra.mxu0 0.0
  %1633 = vmatprep.subr.mxu0 0.0
  %1634 = vmatpush1.msra.mxu0 %v1592
  %1635 = vmatprep.subr.mxu0 0.0
  %1636 = vmatpush2.msra.mxu0 0.0
  %1637 = vmatprep.subr.mxu0 0.0
  %1638 = vmatpush2.msra.mxu0 0.0
  %1639 = vmatprep.subr.mxu0 0.0
  %1640 = vmatpush2.msra.mxu0 0.0
  %1641 = vmatprep.subr.mxu0 0.0
  %1642 = vmatpush2.msra.mxu0 0.0
  %1643 = vmatprep.subr.mxu0 0.0
  %1644 = vmatpush2.msra.mxu0 0.0
  %1645 = vmatprep.subr.mxu0 0.0
  %1646 = vmatpush2.msra.mxu0 0.0
  %1647 = vmatprep.subr.mxu0 0.0
  %1648 = vmatpush2.msra.mxu0 0.0
  %1649 = vmatprep.subr.mxu0 0.0
  %1650 = vmatpush2.msra.mxu0 0.0
  %1651 = vmatprep.subr.mxu0 0.0
  %1652 = vmatpush2.msra.mxu0 0.0
  %1653 = vmatprep.subr.mxu0 0.0
  %1654 = vmatpush2.msra.mxu0 0.0
  %1655 = vmatprep.subr.mxu0 0.0
  %1656 = vmatpush2.msra.mxu0 0.0
  %1657 = vmatprep.subr.mxu0 0.0
  %1658 = vmatpush2.msra.mxu0 0.0
  %1659 = vmatprep.subr.mxu0 0.0
  %1660 = vmatpush2.msra.mxu0 0.0
  %1661 = vmatprep.subr.mxu0 0.0
  %1662 = vmatpush2.msra.mxu0 0.0
  %1663 = vmatprep.subr.mxu0 0.0
  %1664 = vmatpush2.msra.mxu0 0.0
  %1665 = vmatprep.subr.mxu0 0.0
  %1666 = vmatpush2.msra.mxu0 0.0
  %1667 = vmatprep.mubr.f32.mxu0 0.0
  %1668 = vmatmul.mubr.f32.gmra.mxu0 %v1601
  %v1669 = vpop.f32.mrf.mxu0
  %v1670 = vadd.f32 %v1598, %v1669
  %v1671 = vpop.f32.mrf.mxu0
  %1672 = vdwg.mxu0
  %v1673 = vld [vmem:[%s3] sm:$0xff]
  %v1674 = vld [vmem:[%s3 + $0x8] sm:$0xff]
  %v1675 = vld [vmem:[%s4] sm:$0x1]
  %v1677 = vlaneseq
  %v1678 = vshrl.u32 %v1677, 7
  %v1679 = vsub.s32 0, %v1678
  %v1680 = vrot.slane %v1675, %v1679
  %v1682 = vsel %vm112, %v1586, 0
  %1684 = vmatprep.subr.mxu0 0.0
  %1685 = vmatpush1.msra.mxu0 0.0
  %1686 = vmatprep.subr.mxu0 0.0
  %1687 = vmatpush1.msra.mxu0 0.0
  %1688 = vmatprep.subr.mxu0 0.0
  %1689 = vmatpush1.msra.mxu0 0.0
  %1690 = vmatprep.subr.mxu0 0.0
  %1691 = vmatpush1.msra.mxu0 0.0
  %1692 = vmatprep.subr.mxu0 0.0
  %1693 = vmatpush1.msra.mxu0 0.0
  %1694 = vmatprep.subr.mxu0 0.0
  %1695 = vmatpush1.msra.mxu0 0.0
  %1696 = vmatprep.subr.mxu0 0.0
  %1697 = vmatpush1.msra.mxu0 0.0
  %1698 = vmatprep.subr.mxu0 0.0
  %1699 = vmatpush1.msra.mxu0 0.0
  %1700 = vmatprep.subr.mxu0 0.0
  %1701 = vmatpush1.msra.mxu0 0.0
  %1702 = vmatprep.subr.mxu0 0.0
  %1703 = vmatpush1.msra.mxu0 0.0
  %1704 = vmatprep.subr.mxu0 0.0
  %1705 = vmatpush1.msra.mxu0 0.0
  %1706 = vmatprep.subr.mxu0 0.0
  %1707 = vmatpush1.msra.mxu0 0.0
  %1708 = vmatprep.subr.mxu0 0.0
  %1709 = vmatpush1.msra.mxu0 0.0
  %1710 = vmatprep.subr.mxu0 0.0
  %1711 = vmatpush1.msra.mxu0 0.0
  %1712 = vmatprep.subr.mxu0 0.0
  %1713 = vmatpush1.msra.mxu0 %v1674
  %1714 = vmatprep.subr.mxu0 0.0
  %1715 = vmatpush1.msra.mxu0 %v1673
  %1716 = vmatprep.subr.mxu0 0.0
  %1717 = vmatpush2.msra.mxu0 0.0
  %1718 = vmatprep.subr.mxu0 0.0
  %1719 = vmatpush2.msra.mxu0 0.0
  %1720 = vmatprep.subr.mxu0 0.0
  %1721 = vmatpush2.msra.mxu0 0.0
  %1722 = vmatprep.subr.mxu0 0.0
  %1723 = vmatpush2.msra.mxu0 0.0
  %1724 = vmatprep.subr.mxu0 0.0
  %1725 = vmatpush2.msra.mxu0 0.0
  %1726 = vmatprep.subr.mxu0 0.0
  %1727 = vmatpush2.msra.mxu0 0.0
  %1728 = vmatprep.subr.mxu0 0.0
  %1729 = vmatpush2.msra.mxu0 0.0
  %1730 = vmatprep.subr.mxu0 0.0
  %1731 = vmatpush2.msra.mxu0 0.0
  %1732 = vmatprep.subr.mxu0 0.0
  %1733 = vmatpush2.msra.mxu0 0.0
  %1734 = vmatprep.subr.mxu0 0.0
  %1735 = vmatpush2.msra.mxu0 0.0
  %1736 = vmatprep.subr.mxu0 0.0
  %1737 = vmatpush2.msra.mxu0 0.0
  %1738 = vmatprep.subr.mxu0 0.0
  %1739 = vmatpush2.msra.mxu0 0.0
  %1740 = vmatprep.subr.mxu0 0.0
  %1741 = vmatpush2.msra.mxu0 0.0
  %1742 = vmatprep.subr.mxu0 0.0
  %1743 = vmatpush2.msra.mxu0 0.0
  %1744 = vmatprep.subr.mxu0 0.0
  %1745 = vmatpush2.msra.mxu0 0.0
  %1746 = vmatprep.subr.mxu0 0.0
  %1747 = vmatpush2.msra.mxu0 0.0
  %1748 = vmatprep.mubr.f32.mxu0 0.0
  %1749 = vmatmul.mubr.f32.gmra.mxu0 %v1682
  %v1750 = vpop.f32.mrf.mxu0
  %v1751 = vadd.f32 %v1680, %v1750
  %v1752 = vpop.f32.mrf.mxu0
  %1753 = vdwg.mxu0
  %v1754 = vadd.f32 %v1670, %v1751
  %v1755 = vxor.u32 %v1754, 2147483648
  %v1756 = vmul.f32 %v1755, 1.442695
  %v1757 = vpow.pop %v1756
  %v1758 = vadd.f32 %v1757, 1.0
  %v1759 = vrcp.pop %v1758
  %v1760 = vmul.f32 1.0, %v1759
  %1762 = vrot.lane.b32.xlu0 %v1751, 96
  %v1763 = vpop.permute.xlu0 %1762
  %v1765 = vmul.f32 %v1760, %v1763
  %1767 = vrot.lane.b32.xlu0 %v1765, 32
  %v1768 = vpop.permute.xlu0 %1767
  %v1770 = vadd.f32 %v1670, %v1768
  %v1771 = vtanh.pop %v1770
  %v1772 = vsub.f32 1.0, %v1760
  %1774 = vrot.lane.b32.xlu0 %v1771, 112
  %v1775 = vpop.permute.xlu0 %1774
  %v1777 = vmul.f32 %v1772, %v1775
  %v1778 = vmul.f32 %v1760, %v1583
  %v1779 = vadd.f32 %v1777, %v1778
  %1781 = vrot.lane.b32.xlu0 %v1779, 112
  %v1782 = vpop.permute.xlu0 %1781
  %s1784 = scalar_lea.vmem %s5, 16
  %1785 = vst.msk [vmem:[%s1784] sm:$0x3] %vm216, %v1782
  %s1786 = scalar_lea.vmem %s0, 18
  %v1787 = vld [vmem:[%s1786] sm:$0x3]
  %v1788 = vld [vmem:[%s1] sm:$0xff]
  %v1789 = vld [vmem:[%s2] sm:$0x1]
  %v1791 = vlaneseq
  %v1792 = vshrl.u32 %v1791, 7
  %v1793 = vsub.s32 0, %v1792
  %v1794 = vrot.slane %v1789, %v1793
  %v1797 = vsel %vm29, %v1787, 0
  %1799 = vmatprep.subr.mxu0 0.0
  %1800 = vmatpush1.msra.mxu0 0.0
  %1801 = vmatprep.subr.mxu0 0.0
  %1802 = vmatpush1.msra.mxu0 0.0
  %1803 = vmatprep.subr.mxu0 0.0
  %1804 = vmatpush1.msra.mxu0 0.0
  %1805 = vmatprep.subr.mxu0 0.0
  %1806 = vmatpush1.msra.mxu0 0.0
  %1807 = vmatprep.subr.mxu0 0.0
  %1808 = vmatpush1.msra.mxu0 0.0
  %1809 = vmatprep.subr.mxu0 0.0
  %1810 = vmatpush1.msra.mxu0 0.0
  %1811 = vmatprep.subr.mxu0 0.0
  %1812 = vmatpush1.msra.mxu0 0.0
  %1813 = vmatprep.subr.mxu0 0.0
  %1814 = vmatpush1.msra.mxu0 0.0
  %1815 = vmatprep.subr.mxu0 0.0
  %1816 = vmatpush1.msra.mxu0 0.0
  %1817 = vmatprep.subr.mxu0 0.0
  %1818 = vmatpush1.msra.mxu0 0.0
  %1819 = vmatprep.subr.mxu0 0.0
  %1820 = vmatpush1.msra.mxu0 0.0
  %1821 = vmatprep.subr.mxu0 0.0
  %1822 = vmatpush1.msra.mxu0 0.0
  %1823 = vmatprep.subr.mxu0 0.0
  %1824 = vmatpush1.msra.mxu0 0.0
  %1825 = vmatprep.subr.mxu0 0.0
  %1826 = vmatpush1.msra.mxu0 0.0
  %1827 = vmatprep.subr.mxu0 0.0
  %1828 = vmatpush1.msra.mxu0 0.0
  %1829 = vmatprep.subr.mxu0 0.0
  %1830 = vmatpush1.msra.mxu0 %v1788
  %1831 = vmatprep.subr.mxu0 0.0
  %1832 = vmatpush2.msra.mxu0 0.0
  %1833 = vmatprep.subr.mxu0 0.0
  %1834 = vmatpush2.msra.mxu0 0.0
  %1835 = vmatprep.subr.mxu0 0.0
  %1836 = vmatpush2.msra.mxu0 0.0
  %1837 = vmatprep.subr.mxu0 0.0
  %1838 = vmatpush2.msra.mxu0 0.0
  %1839 = vmatprep.subr.mxu0 0.0
  %1840 = vmatpush2.msra.mxu0 0.0
  %1841 = vmatprep.subr.mxu0 0.0
  %1842 = vmatpush2.msra.mxu0 0.0
  %1843 = vmatprep.subr.mxu0 0.0
  %1844 = vmatpush2.msra.mxu0 0.0
  %1845 = vmatprep.subr.mxu0 0.0
  %1846 = vmatpush2.msra.mxu0 0.0
  %1847 = vmatprep.subr.mxu0 0.0
  %1848 = vmatpush2.msra.mxu0 0.0
  %1849 = vmatprep.subr.mxu0 0.0
  %1850 = vmatpush2.msra.mxu0 0.0
  %1851 = vmatprep.subr.mxu0 0.0
  %1852 = vmatpush2.msra.mxu0 0.0
  %1853 = vmatprep.subr.mxu0 0.0
  %1854 = vmatpush2.msra.mxu0 0.0
  %1855 = vmatprep.subr.mxu0 0.0
  %1856 = vmatpush2.msra.mxu0 0.0
  %1857 = vmatprep.subr.mxu0 0.0
  %1858 = vmatpush2.msra.mxu0 0.0
  %1859 = vmatprep.subr.mxu0 0.0
  %1860 = vmatpush2.msra.mxu0 0.0
  %1861 = vmatprep.subr.mxu0 0.0
  %1862 = vmatpush2.msra.mxu0 0.0
  %1863 = vmatprep.mubr.f32.mxu0 0.0
  %1864 = vmatmul.mubr.f32.gmra.mxu0 %v1797
  %v1865 = vpop.f32.mrf.mxu0
  %v1866 = vadd.f32 %v1794, %v1865
  %v1867 = vpop.f32.mrf.mxu0
  %1868 = vdwg.mxu0
  %v1869 = vld [vmem:[%s3] sm:$0xff]
  %v1870 = vld [vmem:[%s3 + $0x8] sm:$0xff]
  %v1871 = vld [vmem:[%s4] sm:$0x1]
  %v1873 = vlaneseq
  %v1874 = vshrl.u32 %v1873, 7
  %v1875 = vsub.s32 0, %v1874
  %v1876 = vrot.slane %v1871, %v1875
  %v1878 = vsel %vm112, %v1782, 0
  %1880 = vmatprep.subr.mxu0 0.0
  %1881 = vmatpush1.msra.mxu0 0.0
  %1882 = vmatprep.subr.mxu0 0.0
  %1883 = vmatpush1.msra.mxu0 0.0
  %1884 = vmatprep.subr.mxu0 0.0
  %1885 = vmatpush1.msra.mxu0 0.0
  %1886 = vmatprep.subr.mxu0 0.0
  %1887 = vmatpush1.msra.mxu0 0.0
  %1888 = vmatprep.subr.mxu0 0.0
  %1889 = vmatpush1.msra.mxu0 0.0
  %1890 = vmatprep.subr.mxu0 0.0
  %1891 = vmatpush1.msra.mxu0 0.0
  %1892 = vmatprep.subr.mxu0 0.0
  %1893 = vmatpush1.msra.mxu0 0.0
  %1894 = vmatprep.subr.mxu0 0.0
  %1895 = vmatpush1.msra.mxu0 0.0
  %1896 = vmatprep.subr.mxu0 0.0
  %1897 = vmatpush1.msra.mxu0 0.0
  %1898 = vmatprep.subr.mxu0 0.0
  %1899 = vmatpush1.msra.mxu0 0.0
  %1900 = vmatprep.subr.mxu0 0.0
  %1901 = vmatpush1.msra.mxu0 0.0
  %1902 = vmatprep.subr.mxu0 0.0
  %1903 = vmatpush1.msra.mxu0 0.0
  %1904 = vmatprep.subr.mxu0 0.0
  %1905 = vmatpush1.msra.mxu0 0.0
  %1906 = vmatprep.subr.mxu0 0.0
  %1907 = vmatpush1.msra.mxu0 0.0
  %1908 = vmatprep.subr.mxu0 0.0
  %1909 = vmatpush1.msra.mxu0 %v1870
  %1910 = vmatprep.subr.mxu0 0.0
  %1911 = vmatpush1.msra.mxu0 %v1869
  %1912 = vmatprep.subr.mxu0 0.0
  %1913 = vmatpush2.msra.mxu0 0.0
  %1914 = vmatprep.subr.mxu0 0.0
  %1915 = vmatpush2.msra.mxu0 0.0
  %1916 = vmatprep.subr.mxu0 0.0
  %1917 = vmatpush2.msra.mxu0 0.0
  %1918 = vmatprep.subr.mxu0 0.0
  %1919 = vmatpush2.msra.mxu0 0.0
  %1920 = vmatprep.subr.mxu0 0.0
  %1921 = vmatpush2.msra.mxu0 0.0
  %1922 = vmatprep.subr.mxu0 0.0
  %1923 = vmatpush2.msra.mxu0 0.0
  %1924 = vmatprep.subr.mxu0 0.0
  %1925 = vmatpush2.msra.mxu0 0.0
  %1926 = vmatprep.subr.mxu0 0.0
  %1927 = vmatpush2.msra.mxu0 0.0
  %1928 = vmatprep.subr.mxu0 0.0
  %1929 = vmatpush2.msra.mxu0 0.0
  %1930 = vmatprep.subr.mxu0 0.0
  %1931 = vmatpush2.msra.mxu0 0.0
  %1932 = vmatprep.subr.mxu0 0.0
  %1933 = vmatpush2.msra.mxu0 0.0
  %1934 = vmatprep.subr.mxu0 0.0
  %1935 = vmatpush2.msra.mxu0 0.0
  %1936 = vmatprep.subr.mxu0 0.0
  %1937 = vmatpush2.msra.mxu0 0.0
  %1938 = vmatprep.subr.mxu0 0.0
  %1939 = vmatpush2.msra.mxu0 0.0
  %1940 = vmatprep.subr.mxu0 0.0
  %1941 = vmatpush2.msra.mxu0 0.0
  %1942 = vmatprep.subr.mxu0 0.0
  %1943 = vmatpush2.msra.mxu0 0.0
  %1944 = vmatprep.mubr.f32.mxu0 0.0
  %1945 = vmatmul.mubr.f32.gmra.mxu0 %v1878
  %v1946 = vpop.f32.mrf.mxu0
  %v1947 = vadd.f32 %v1876, %v1946
  %v1948 = vpop.f32.mrf.mxu0
  %1949 = vdwg.mxu0
  %v1950 = vadd.f32 %v1866, %v1947
  %v1951 = vxor.u32 %v1950, 2147483648
  %v1952 = vmul.f32 %v1951, 1.442695
  %v1953 = vpow.pop %v1952
  %v1954 = vadd.f32 %v1953, 1.0
  %v1955 = vrcp.pop %v1954
  %v1956 = vmul.f32 1.0, %v1955
  %1958 = vrot.lane.b32.xlu0 %v1947, 96
  %v1959 = vpop.permute.xlu0 %1958
  %v1961 = vmul.f32 %v1956, %v1959
  %1963 = vrot.lane.b32.xlu0 %v1961, 32
  %v1964 = vpop.permute.xlu0 %1963
  %v1966 = vadd.f32 %v1866, %v1964
  %v1967 = vtanh.pop %v1966
  %v1968 = vsub.f32 1.0, %v1956
  %1970 = vrot.lane.b32.xlu0 %v1967, 112
  %v1971 = vpop.permute.xlu0 %1970
  %v1973 = vmul.f32 %v1968, %v1971
  %v1974 = vmul.f32 %v1956, %v1779
  %v1975 = vadd.f32 %v1973, %v1974
  %1977 = vrot.lane.b32.xlu0 %v1975, 112
  %v1978 = vpop.permute.xlu0 %1977
  %s1980 = scalar_lea.vmem %s5, 18
  %1981 = vst.msk [vmem:[%s1980] sm:$0x3] %vm216, %v1978
  %s1982 = scalar_lea.vmem %s0, 20
  %v1983 = vld [vmem:[%s1982] sm:$0x3]
  %v1984 = vld [vmem:[%s1] sm:$0xff]
  %v1985 = vld [vmem:[%s2] sm:$0x1]
  %v1987 = vlaneseq
  %v1988 = vshrl.u32 %v1987, 7
  %v1989 = vsub.s32 0, %v1988
  %v1990 = vrot.slane %v1985, %v1989
  %v1993 = vsel %vm29, %v1983, 0
  %1995 = vmatprep.subr.mxu0 0.0
  %1996 = vmatpush1.msra.mxu0 0.0
  %1997 = vmatprep.subr.mxu0 0.0
  %1998 = vmatpush1.msra.mxu0 0.0
  %1999 = vmatprep.subr.mxu0 0.0
  %2000 = vmatpush1.msra.mxu0 0.0
  %2001 = vmatprep.subr.mxu0 0.0
  %2002 = vmatpush1.msra.mxu0 0.0
  %2003 = vmatprep.subr.mxu0 0.0
  %2004 = vmatpush1.msra.mxu0 0.0
  %2005 = vmatprep.subr.mxu0 0.0
  %2006 = vmatpush1.msra.mxu0 0.0
  %2007 = vmatprep.subr.mxu0 0.0
  %2008 = vmatpush1.msra.mxu0 0.0
  %2009 = vmatprep.subr.mxu0 0.0
  %2010 = vmatpush1.msra.mxu0 0.0
  %2011 = vmatprep.subr.mxu0 0.0
  %2012 = vmatpush1.msra.mxu0 0.0
  %2013 = vmatprep.subr.mxu0 0.0
  %2014 = vmatpush1.msra.mxu0 0.0
  %2015 = vmatprep.subr.mxu0 0.0
  %2016 = vmatpush1.msra.mxu0 0.0
  %2017 = vmatprep.subr.mxu0 0.0
  %2018 = vmatpush1.msra.mxu0 0.0
  %2019 = vmatprep.subr.mxu0 0.0
  %2020 = vmatpush1.msra.mxu0 0.0
  %2021 = vmatprep.subr.mxu0 0.0
  %2022 = vmatpush1.msra.mxu0 0.0
  %2023 = vmatprep.subr.mxu0 0.0
  %2024 = vmatpush1.msra.mxu0 0.0
  %2025 = vmatprep.subr.mxu0 0.0
  %2026 = vmatpush1.msra.mxu0 %v1984
  %2027 = vmatprep.subr.mxu0 0.0
  %2028 = vmatpush2.msra.mxu0 0.0
  %2029 = vmatprep.subr.mxu0 0.0
  %2030 = vmatpush2.msra.mxu0 0.0
  %2031 = vmatprep.subr.mxu0 0.0
  %2032 = vmatpush2.msra.mxu0 0.0
  %2033 = vmatprep.subr.mxu0 0.0
  %2034 = vmatpush2.msra.mxu0 0.0
  %2035 = vmatprep.subr.mxu0 0.0
  %2036 = vmatpush2.msra.mxu0 0.0
  %2037 = vmatprep.subr.mxu0 0.0
  %2038 = vmatpush2.msra.mxu0 0.0
  %2039 = vmatprep.subr.mxu0 0.0
  %2040 = vmatpush2.msra.mxu0 0.0
  %2041 = vmatprep.subr.mxu0 0.0
  %2042 = vmatpush2.msra.mxu0 0.0
  %2043 = vmatprep.subr.mxu0 0.0
  %2044 = vmatpush2.msra.mxu0 0.0
  %2045 = vmatprep.subr.mxu0 0.0
  %2046 = vmatpush2.msra.mxu0 0.0
  %2047 = vmatprep.subr.mxu0 0.0
  %2048 = vmatpush2.msra.mxu0 0.0
  %2049 = vmatprep.subr.mxu0 0.0
  %2050 = vmatpush2.msra.mxu0 0.0
  %2051 = vmatprep.subr.mxu0 0.0
  %2052 = vmatpush2.msra.mxu0 0.0
  %2053 = vmatprep.subr.mxu0 0.0
  %2054 = vmatpush2.msra.mxu0 0.0
  %2055 = vmatprep.subr.mxu0 0.0
  %2056 = vmatpush2.msra.mxu0 0.0
  %2057 = vmatprep.subr.mxu0 0.0
  %2058 = vmatpush2.msra.mxu0 0.0
  %2059 = vmatprep.mubr.f32.mxu0 0.0
  %2060 = vmatmul.mubr.f32.gmra.mxu0 %v1993
  %v2061 = vpop.f32.mrf.mxu0
  %v2062 = vadd.f32 %v1990, %v2061
  %v2063 = vpop.f32.mrf.mxu0
  %2064 = vdwg.mxu0
  %v2065 = vld [vmem:[%s3] sm:$0xff]
  %v2066 = vld [vmem:[%s3 + $0x8] sm:$0xff]
  %v2067 = vld [vmem:[%s4] sm:$0x1]
  %v2069 = vlaneseq
  %v2070 = vshrl.u32 %v2069, 7
  %v2071 = vsub.s32 0, %v2070
  %v2072 = vrot.slane %v2067, %v2071
  %v2074 = vsel %vm112, %v1978, 0
  %2076 = vmatprep.subr.mxu0 0.0
  %2077 = vmatpush1.msra.mxu0 0.0
  %2078 = vmatprep.subr.mxu0 0.0
  %2079 = vmatpush1.msra.mxu0 0.0
  %2080 = vmatprep.subr.mxu0 0.0
  %2081 = vmatpush1.msra.mxu0 0.0
  %2082 = vmatprep.subr.mxu0 0.0
  %2083 = vmatpush1.msra.mxu0 0.0
  %2084 = vmatprep.subr.mxu0 0.0
  %2085 = vmatpush1.msra.mxu0 0.0
  %2086 = vmatprep.subr.mxu0 0.0
  %2087 = vmatpush1.msra.mxu0 0.0
  %2088 = vmatprep.subr.mxu0 0.0
  %2089 = vmatpush1.msra.mxu0 0.0
  %2090 = vmatprep.subr.mxu0 0.0
  %2091 = vmatpush1.msra.mxu0 0.0
  %2092 = vmatprep.subr.mxu0 0.0
  %2093 = vmatpush1.msra.mxu0 0.0
  %2094 = vmatprep.subr.mxu0 0.0
  %2095 = vmatpush1.msra.mxu0 0.0
  %2096 = vmatprep.subr.mxu0 0.0
  %2097 = vmatpush1.msra.mxu0 0.0
  %2098 = vmatprep.subr.mxu0 0.0
  %2099 = vmatpush1.msra.mxu0 0.0
  %2100 = vmatprep.subr.mxu0 0.0
  %2101 = vmatpush1.msra.mxu0 0.0
  %2102 = vmatprep.subr.mxu0 0.0
  %2103 = vmatpush1.msra.mxu0 0.0
  %2104 = vmatprep.subr.mxu0 0.0
  %2105 = vmatpush1.msra.mxu0 %v2066
  %2106 = vmatprep.subr.mxu0 0.0
  %2107 = vmatpush1.msra.mxu0 %v2065
  %2108 = vmatprep.subr.mxu0 0.0
  %2109 = vmatpush2.msra.mxu0 0.0
  %2110 = vmatprep.subr.mxu0 0.0
  %2111 = vmatpush2.msra.mxu0 0.0
  %2112 = vmatprep.subr.mxu0 0.0
  %2113 = vmatpush2.msra.mxu0 0.0
  %2114 = vmatprep.subr.mxu0 0.0
  %2115 = vmatpush2.msra.mxu0 0.0
  %2116 = vmatprep.subr.mxu0 0.0
  %2117 = vmatpush2.msra.mxu0 0.0
  %2118 = vmatprep.subr.mxu0 0.0
  %2119 = vmatpush2.msra.mxu0 0.0
  %2120 = vmatprep.subr.mxu0 0.0
  %2121 = vmatpush2.msra.mxu0 0.0
  %2122 = vmatprep.subr.mxu0 0.0
  %2123 = vmatpush2.msra.mxu0 0.0
  %2124 = vmatprep.subr.mxu0 0.0
  %2125 = vmatpush2.msra.mxu0 0.0
  %2126 = vmatprep.subr.mxu0 0.0
  %2127 = vmatpush2.msra.mxu0 0.0
  %2128 = vmatprep.subr.mxu0 0.0
  %2129 = vmatpush2.msra.mxu0 0.0
  %2130 = vmatprep.subr.mxu0 0.0
  %2131 = vmatpush2.msra.mxu0 0.0
  %2132 = vmatprep.subr.mxu0 0.0
  %2133 = vmatpush2.msra.mxu0 0.0
  %2134 = vmatprep.subr.mxu0 0.0
  %2135 = vmatpush2.msra.mxu0 0.0
  %2136 = vmatprep.subr.mxu0 0.0
  %2137 = vmatpush2.msra.mxu0 0.0
  %2138 = vmatprep.subr.mxu0 0.0
  %2139 = vmatpush2.msra.mxu0 0.0
  %2140 = vmatprep.mubr.f32.mxu0 0.0
  %2141 = vmatmul.mubr.f32.gmra.mxu0 %v2074
  %v2142 = vpop.f32.mrf.mxu0
  %v2143 = vadd.f32 %v2072, %v2142
  %v2144 = vpop.f32.mrf.mxu0
  %2145 = vdwg.mxu0
  %v2146 = vadd.f32 %v2062, %v2143
  %v2147 = vxor.u32 %v2146, 2147483648
  %v2148 = vmul.f32 %v2147, 1.442695
  %v2149 = vpow.pop %v2148
  %v2150 = vadd.f32 %v2149, 1.0
  %v2151 = vrcp.pop %v2150
  %v2152 = vmul.f32 1.0, %v2151
  %2154 = vrot.lane.b32.xlu0 %v2143, 96
  %v2155 = vpop.permute.xlu0 %2154
  %v2157 = vmul.f32 %v2152, %v2155
  %2159 = vrot.lane.b32.xlu0 %v2157, 32
  %v2160 = vpop.permute.xlu0 %2159
  %v2162 = vadd.f32 %v2062, %v2160
  %v2163 = vtanh.pop %v2162
  %v2164 = vsub.f32 1.0, %v2152
  %2166 = vrot.lane.b32.xlu0 %v2163, 112
  %v2167 = vpop.permute.xlu0 %2166
  %v2169 = vmul.f32 %v2164, %v2167
  %v2170 = vmul.f32 %v2152, %v1975
  %v2171 = vadd.f32 %v2169, %v2170
  %2173 = vrot.lane.b32.xlu0 %v2171, 112
  %v2174 = vpop.permute.xlu0 %2173
  %s2176 = scalar_lea.vmem %s5, 20
  %2177 = vst.msk [vmem:[%s2176] sm:$0x3] %vm216, %v2174
  %s2178 = scalar_lea.vmem %s0, 22
  %v2179 = vld [vmem:[%s2178] sm:$0x3]
  %v2180 = vld [vmem:[%s1] sm:$0xff]
  %v2181 = vld [vmem:[%s2] sm:$0x1]
  %v2183 = vlaneseq
  %v2184 = vshrl.u32 %v2183, 7
  %v2185 = vsub.s32 0, %v2184
  %v2186 = vrot.slane %v2181, %v2185
  %v2189 = vsel %vm29, %v2179, 0
  %2191 = vmatprep.subr.mxu0 0.0
  %2192 = vmatpush1.msra.mxu0 0.0
  %2193 = vmatprep.subr.mxu0 0.0
  %2194 = vmatpush1.msra.mxu0 0.0
  %2195 = vmatprep.subr.mxu0 0.0
  %2196 = vmatpush1.msra.mxu0 0.0
  %2197 = vmatprep.subr.mxu0 0.0
  %2198 = vmatpush1.msra.mxu0 0.0
  %2199 = vmatprep.subr.mxu0 0.0
  %2200 = vmatpush1.msra.mxu0 0.0
  %2201 = vmatprep.subr.mxu0 0.0
  %2202 = vmatpush1.msra.mxu0 0.0
  %2203 = vmatprep.subr.mxu0 0.0
  %2204 = vmatpush1.msra.mxu0 0.0
  %2205 = vmatprep.subr.mxu0 0.0
  %2206 = vmatpush1.msra.mxu0 0.0
  %2207 = vmatprep.subr.mxu0 0.0
  %2208 = vmatpush1.msra.mxu0 0.0
  %2209 = vmatprep.subr.mxu0 0.0
  %2210 = vmatpush1.msra.mxu0 0.0
  %2211 = vmatprep.subr.mxu0 0.0
  %2212 = vmatpush1.msra.mxu0 0.0
  %2213 = vmatprep.subr.mxu0 0.0
  %2214 = vmatpush1.msra.mxu0 0.0
  %2215 = vmatprep.subr.mxu0 0.0
  %2216 = vmatpush1.msra.mxu0 0.0
  %2217 = vmatprep.subr.mxu0 0.0
  %2218 = vmatpush1.msra.mxu0 0.0
  %2219 = vmatprep.subr.mxu0 0.0
  %2220 = vmatpush1.msra.mxu0 0.0
  %2221 = vmatprep.subr.mxu0 0.0
  %2222 = vmatpush1.msra.mxu0 %v2180
  %2223 = vmatprep.subr.mxu0 0.0
  %2224 = vmatpush2.msra.mxu0 0.0
  %2225 = vmatprep.subr.mxu0 0.0
  %2226 = vmatpush2.msra.mxu0 0.0
  %2227 = vmatprep.subr.mxu0 0.0
  %2228 = vmatpush2.msra.mxu0 0.0
  %2229 = vmatprep.subr.mxu0 0.0
  %2230 = vmatpush2.msra.mxu0 0.0
  %2231 = vmatprep.subr.mxu0 0.0
  %2232 = vmatpush2.msra.mxu0 0.0
  %2233 = vmatprep.subr.mxu0 0.0
  %2234 = vmatpush2.msra.mxu0 0.0
  %2235 = vmatprep.subr.mxu0 0.0
  %2236 = vmatpush2.msra.mxu0 0.0
  %2237 = vmatprep.subr.mxu0 0.0
  %2238 = vmatpush2.msra.mxu0 0.0
  %2239 = vmatprep.subr.mxu0 0.0
  %2240 = vmatpush2.msra.mxu0 0.0
  %2241 = vmatprep.subr.mxu0 0.0
  %2242 = vmatpush2.msra.mxu0 0.0
  %2243 = vmatprep.subr.mxu0 0.0
  %2244 = vmatpush2.msra.mxu0 0.0
  %2245 = vmatprep.subr.mxu0 0.0
  %2246 = vmatpush2.msra.mxu0 0.0
  %2247 = vmatprep.subr.mxu0 0.0
  %2248 = vmatpush2.msra.mxu0 0.0
  %2249 = vmatprep.subr.mxu0 0.0
  %2250 = vmatpush2.msra.mxu0 0.0
  %2251 = vmatprep.subr.mxu0 0.0
  %2252 = vmatpush2.msra.mxu0 0.0
  %2253 = vmatprep.subr.mxu0 0.0
  %2254 = vmatpush2.msra.mxu0 0.0
  %2255 = vmatprep.mubr.f32.mxu0 0.0
  %2256 = vmatmul.mubr.f32.gmra.mxu0 %v2189
  %v2257 = vpop.f32.mrf.mxu0
  %v2258 = vadd.f32 %v2186, %v2257
  %v2259 = vpop.f32.mrf.mxu0
  %2260 = vdwg.mxu0
  %v2261 = vld [vmem:[%s3] sm:$0xff]
  %v2262 = vld [vmem:[%s3 + $0x8] sm:$0xff]
  %v2263 = vld [vmem:[%s4] sm:$0x1]
  %v2265 = vlaneseq
  %v2266 = vshrl.u32 %v2265, 7
  %v2267 = vsub.s32 0, %v2266
  %v2268 = vrot.slane %v2263, %v2267
  %v2270 = vsel %vm112, %v2174, 0
  %2272 = vmatprep.subr.mxu0 0.0
  %2273 = vmatpush1.msra.mxu0 0.0
  %2274 = vmatprep.subr.mxu0 0.0
  %2275 = vmatpush1.msra.mxu0 0.0
  %2276 = vmatprep.subr.mxu0 0.0
  %2277 = vmatpush1.msra.mxu0 0.0
  %2278 = vmatprep.subr.mxu0 0.0
  %2279 = vmatpush1.msra.mxu0 0.0
  %2280 = vmatprep.subr.mxu0 0.0
  %2281 = vmatpush1.msra.mxu0 0.0
  %2282 = vmatprep.subr.mxu0 0.0
  %2283 = vmatpush1.msra.mxu0 0.0
  %2284 = vmatprep.subr.mxu0 0.0
  %2285 = vmatpush1.msra.mxu0 0.0
  %2286 = vmatprep.subr.mxu0 0.0
  %2287 = vmatpush1.msra.mxu0 0.0
  %2288 = vmatprep.subr.mxu0 0.0
  %2289 = vmatpush1.msra.mxu0 0.0
  %2290 = vmatprep.subr.mxu0 0.0
  %2291 = vmatpush1.msra.mxu0 0.0
  %2292 = vmatprep.subr.mxu0 0.0
  %2293 = vmatpush1.msra.mxu0 0.0
  %2294 = vmatprep.subr.mxu0 0.0
  %2295 = vmatpush1.msra.mxu0 0.0
  %2296 = vmatprep.subr.mxu0 0.0
  %2297 = vmatpush1.msra.mxu0 0.0
  %2298 = vmatprep.subr.mxu0 0.0
  %2299 = vmatpush1.msra.mxu0 0.0
  %2300 = vmatprep.subr.mxu0 0.0
  %2301 = vmatpush1.msra.mxu0 %v2262
  %2302 = vmatprep.subr.mxu0 0.0
  %2303 = vmatpush1.msra.mxu0 %v2261
  %2304 = vmatprep.subr.mxu0 0.0
  %2305 = vmatpush2.msra.mxu0 0.0
  %2306 = vmatprep.subr.mxu0 0.0
  %2307 = vmatpush2.msra.mxu0 0.0
  %2308 = vmatprep.subr.mxu0 0.0
  %2309 = vmatpush2.msra.mxu0 0.0
  %2310 = vmatprep.subr.mxu0 0.0
  %2311 = vmatpush2.msra.mxu0 0.0
  %2312 = vmatprep.subr.mxu0 0.0
  %2313 = vmatpush2.msra.mxu0 0.0
  %2314 = vmatprep.subr.mxu0 0.0
  %2315 = vmatpush2.msra.mxu0 0.0
  %2316 = vmatprep.subr.mxu0 0.0
  %2317 = vmatpush2.msra.mxu0 0.0
  %2318 = vmatprep.subr.mxu0 0.0
  %2319 = vmatpush2.msra.mxu0 0.0
  %2320 = vmatprep.subr.mxu0 0.0
  %2321 = vmatpush2.msra.mxu0 0.0
  %2322 = vmatprep.subr.mxu0 0.0
  %2323 = vmatpush2.msra.mxu0 0.0
  %2324 = vmatprep.subr.mxu0 0.0
  %2325 = vmatpush2.msra.mxu0 0.0
  %2326 = vmatprep.subr.mxu0 0.0
  %2327 = vmatpush2.msra.mxu0 0.0
  %2328 = vmatprep.subr.mxu0 0.0
  %2329 = vmatpush2.msra.mxu0 0.0
  %2330 = vmatprep.subr.mxu0 0.0
  %2331 = vmatpush2.msra.mxu0 0.0
  %2332 = vmatprep.subr.mxu0 0.0
  %2333 = vmatpush2.msra.mxu0 0.0
  %2334 = vmatprep.subr.mxu0 0.0
  %2335 = vmatpush2.msra.mxu0 0.0
  %2336 = vmatprep.mubr.f32.mxu0 0.0
  %2337 = vmatmul.mubr.f32.gmra.mxu0 %v2270
  %v2338 = vpop.f32.mrf.mxu0
  %v2339 = vadd.f32 %v2268, %v2338
  %v2340 = vpop.f32.mrf.mxu0
  %2341 = vdwg.mxu0
  %v2342 = vadd.f32 %v2258, %v2339
  %v2343 = vxor.u32 %v2342, 2147483648
  %v2344 = vmul.f32 %v2343, 1.442695
  %v2345 = vpow.pop %v2344
  %v2346 = vadd.f32 %v2345, 1.0
  %v2347 = vrcp.pop %v2346
  %v2348 = vmul.f32 1.0, %v2347
  %2350 = vrot.lane.b32.xlu0 %v2339, 96
  %v2351 = vpop.permute.xlu0 %2350
  %v2353 = vmul.f32 %v2348, %v2351
  %2355 = vrot.lane.b32.xlu0 %v2353, 32
  %v2356 = vpop.permute.xlu0 %2355
  %v2358 = vadd.f32 %v2258, %v2356
  %v2359 = vtanh.pop %v2358
  %v2360 = vsub.f32 1.0, %v2348
  %2362 = vrot.lane.b32.xlu0 %v2359, 112
  %v2363 = vpop.permute.xlu0 %2362
  %v2365 = vmul.f32 %v2360, %v2363
  %v2366 = vmul.f32 %v2348, %v2171
  %v2367 = vadd.f32 %v2365, %v2366
  %2369 = vrot.lane.b32.xlu0 %v2367, 112
  %v2370 = vpop.permute.xlu0 %2369
  %s2372 = scalar_lea.vmem %s5, 22
  %2373 = vst.msk [vmem:[%s2372] sm:$0x3] %vm216, %v2370
  %s2374 = scalar_lea.vmem %s0, 24
  %v2375 = vld [vmem:[%s2374] sm:$0x3]
  %v2376 = vld [vmem:[%s1] sm:$0xff]
  %v2377 = vld [vmem:[%s2] sm:$0x1]
  %v2379 = vlaneseq
  %v2380 = vshrl.u32 %v2379, 7
  %v2381 = vsub.s32 0, %v2380
  %v2382 = vrot.slane %v2377, %v2381
  %v2385 = vsel %vm29, %v2375, 0
  %2387 = vmatprep.subr.mxu0 0.0
  %2388 = vmatpush1.msra.mxu0 0.0
  %2389 = vmatprep.subr.mxu0 0.0
  %2390 = vmatpush1.msra.mxu0 0.0
  %2391 = vmatprep.subr.mxu0 0.0
  %2392 = vmatpush1.msra.mxu0 0.0
  %2393 = vmatprep.subr.mxu0 0.0
  %2394 = vmatpush1.msra.mxu0 0.0
  %2395 = vmatprep.subr.mxu0 0.0
  %2396 = vmatpush1.msra.mxu0 0.0
  %2397 = vmatprep.subr.mxu0 0.0
  %2398 = vmatpush1.msra.mxu0 0.0
  %2399 = vmatprep.subr.mxu0 0.0
  %2400 = vmatpush1.msra.mxu0 0.0
  %2401 = vmatprep.subr.mxu0 0.0
  %2402 = vmatpush1.msra.mxu0 0.0
  %2403 = vmatprep.subr.mxu0 0.0
  %2404 = vmatpush1.msra.mxu0 0.0
  %2405 = vmatprep.subr.mxu0 0.0
  %2406 = vmatpush1.msra.mxu0 0.0
  %2407 = vmatprep.subr.mxu0 0.0
  %2408 = vmatpush1.msra.mxu0 0.0
  %2409 = vmatprep.subr.mxu0 0.0
  %2410 = vmatpush1.msra.mxu0 0.0
  %2411 = vmatprep.subr.mxu0 0.0
  %2412 = vmatpush1.msra.mxu0 0.0
  %2413 = vmatprep.subr.mxu0 0.0
  %2414 = vmatpush1.msra.mxu0 0.0
  %2415 = vmatprep.subr.mxu0 0.0
  %2416 = vmatpush1.msra.mxu0 0.0
  %2417 = vmatprep.subr.mxu0 0.0
  %2418 = vmatpush1.msra.mxu0 %v2376
  %2419 = vmatprep.subr.mxu0 0.0
  %2420 = vmatpush2.msra.mxu0 0.0
  %2421 = vmatprep.subr.mxu0 0.0
  %2422 = vmatpush2.msra.mxu0 0.0
  %2423 = vmatprep.subr.mxu0 0.0
  %2424 = vmatpush2.msra.mxu0 0.0
  %2425 = vmatprep.subr.mxu0 0.0
  %2426 = vmatpush2.msra.mxu0 0.0
  %2427 = vmatprep.subr.mxu0 0.0
  %2428 = vmatpush2.msra.mxu0 0.0
  %2429 = vmatprep.subr.mxu0 0.0
  %2430 = vmatpush2.msra.mxu0 0.0
  %2431 = vmatprep.subr.mxu0 0.0
  %2432 = vmatpush2.msra.mxu0 0.0
  %2433 = vmatprep.subr.mxu0 0.0
  %2434 = vmatpush2.msra.mxu0 0.0
  %2435 = vmatprep.subr.mxu0 0.0
  %2436 = vmatpush2.msra.mxu0 0.0
  %2437 = vmatprep.subr.mxu0 0.0
  %2438 = vmatpush2.msra.mxu0 0.0
  %2439 = vmatprep.subr.mxu0 0.0
  %2440 = vmatpush2.msra.mxu0 0.0
  %2441 = vmatprep.subr.mxu0 0.0
  %2442 = vmatpush2.msra.mxu0 0.0
  %2443 = vmatprep.subr.mxu0 0.0
  %2444 = vmatpush2.msra.mxu0 0.0
  %2445 = vmatprep.subr.mxu0 0.0
  %2446 = vmatpush2.msra.mxu0 0.0
  %2447 = vmatprep.subr.mxu0 0.0
  %2448 = vmatpush2.msra.mxu0 0.0
  %2449 = vmatprep.subr.mxu0 0.0
  %2450 = vmatpush2.msra.mxu0 0.0
  %2451 = vmatprep.mubr.f32.mxu0 0.0
  %2452 = vmatmul.mubr.f32.gmra.mxu0 %v2385
  %v2453 = vpop.f32.mrf.mxu0
  %v2454 = vadd.f32 %v2382, %v2453
  %v2455 = vpop.f32.mrf.mxu0
  %2456 = vdwg.mxu0
  %v2457 = vld [vmem:[%s3] sm:$0xff]
  %v2458 = vld [vmem:[%s3 + $0x8] sm:$0xff]
  %v2459 = vld [vmem:[%s4] sm:$0x1]
  %v2461 = vlaneseq
  %v2462 = vshrl.u32 %v2461, 7
  %v2463 = vsub.s32 0, %v2462
  %v2464 = vrot.slane %v2459, %v2463
  %v2466 = vsel %vm112, %v2370, 0
  %2468 = vmatprep.subr.mxu0 0.0
  %2469 = vmatpush1.msra.mxu0 0.0
  %2470 = vmatprep.subr.mxu0 0.0
  %2471 = vmatpush1.msra.mxu0 0.0
  %2472 = vmatprep.subr.mxu0 0.0
  %2473 = vmatpush1.msra.mxu0 0.0
  %2474 = vmatprep.subr.mxu0 0.0
  %2475 = vmatpush1.msra.mxu0 0.0
  %2476 = vmatprep.subr.mxu0 0.0
  %2477 = vmatpush1.msra.mxu0 0.0
  %2478 = vmatprep.subr.mxu0 0.0
  %2479 = vmatpush1.msra.mxu0 0.0
  %2480 = vmatprep.subr.mxu0 0.0
  %2481 = vmatpush1.msra.mxu0 0.0
  %2482 = vmatprep.subr.mxu0 0.0
  %2483 = vmatpush1.msra.mxu0 0.0
  %2484 = vmatprep.subr.mxu0 0.0
  %2485 = vmatpush1.msra.mxu0 0.0
  %2486 = vmatprep.subr.mxu0 0.0
  %2487 = vmatpush1.msra.mxu0 0.0
  %2488 = vmatprep.subr.mxu0 0.0
  %2489 = vmatpush1.msra.mxu0 0.0
  %2490 = vmatprep.subr.mxu0 0.0
  %2491 = vmatpush1.msra.mxu0 0.0
  %2492 = vmatprep.subr.mxu0 0.0
  %2493 = vmatpush1.msra.mxu0 0.0
  %2494 = vmatprep.subr.mxu0 0.0
  %2495 = vmatpush1.msra.mxu0 0.0
  %2496 = vmatprep.subr.mxu0 0.0
  %2497 = vmatpush1.msra.mxu0 %v2458
  %2498 = vmatprep.subr.mxu0 0.0
  %2499 = vmatpush1.msra.mxu0 %v2457
  %2500 = vmatprep.subr.mxu0 0.0
  %2501 = vmatpush2.msra.mxu0 0.0
  %2502 = vmatprep.subr.mxu0 0.0
  %2503 = vmatpush2.msra.mxu0 0.0
  %2504 = vmatprep.subr.mxu0 0.0
  %2505 = vmatpush2.msra.mxu0 0.0
  %2506 = vmatprep.subr.mxu0 0.0
  %2507 = vmatpush2.msra.mxu0 0.0
  %2508 = vmatprep.subr.mxu0 0.0
  %2509 = vmatpush2.msra.mxu0 0.0
  %2510 = vmatprep.subr.mxu0 0.0
  %2511 = vmatpush2.msra.mxu0 0.0
  %2512 = vmatprep.subr.mxu0 0.0
  %2513 = vmatpush2.msra.mxu0 0.0
  %2514 = vmatprep.subr.mxu0 0.0
  %2515 = vmatpush2.msra.mxu0 0.0
  %2516 = vmatprep.subr.mxu0 0.0
  %2517 = vmatpush2.msra.mxu0 0.0
  %2518 = vmatprep.subr.mxu0 0.0
  %2519 = vmatpush2.msra.mxu0 0.0
  %2520 = vmatprep.subr.mxu0 0.0
  %2521 = vmatpush2.msra.mxu0 0.0
  %2522 = vmatprep.subr.mxu0 0.0
  %2523 = vmatpush2.msra.mxu0 0.0
  %2524 = vmatprep.subr.mxu0 0.0
  %2525 = vmatpush2.msra.mxu0 0.0
  %2526 = vmatprep.subr.mxu0 0.0
  %2527 = vmatpush2.msra.mxu0 0.0
  %2528 = vmatprep.subr.mxu0 0.0
  %2529 = vmatpush2.msra.mxu0 0.0
  %2530 = vmatprep.subr.mxu0 0.0
  %2531 = vmatpush2.msra.mxu0 0.0
  %2532 = vmatprep.mubr.f32.mxu0 0.0
  %2533 = vmatmul.mubr.f32.gmra.mxu0 %v2466
  %v2534 = vpop.f32.mrf.mxu0
  %v2535 = vadd.f32 %v2464, %v2534
  %v2536 = vpop.f32.mrf.mxu0
  %2537 = vdwg.mxu0
  %v2538 = vadd.f32 %v2454, %v2535
  %v2539 = vxor.u32 %v2538, 2147483648
  %v2540 = vmul.f32 %v2539, 1.442695
  %v2541 = vpow.pop %v2540
  %v2542 = vadd.f32 %v2541, 1.0
  %v2543 = vrcp.pop %v2542
  %v2544 = vmul.f32 1.0, %v2543
  %2546 = vrot.lane.b32.xlu0 %v2535, 96
  %v2547 = vpop.permute.xlu0 %2546
  %v2549 = vmul.f32 %v2544, %v2547
  %2551 = vrot.lane.b32.xlu0 %v2549, 32
  %v2552 = vpop.permute.xlu0 %2551
  %v2554 = vadd.f32 %v2454, %v2552
  %v2555 = vtanh.pop %v2554
  %v2556 = vsub.f32 1.0, %v2544
  %2558 = vrot.lane.b32.xlu0 %v2555, 112
  %v2559 = vpop.permute.xlu0 %2558
  %v2561 = vmul.f32 %v2556, %v2559
  %v2562 = vmul.f32 %v2544, %v2367
  %v2563 = vadd.f32 %v2561, %v2562
  %2565 = vrot.lane.b32.xlu0 %v2563, 112
  %v2566 = vpop.permute.xlu0 %2565
  %s2568 = scalar_lea.vmem %s5, 24
  %2569 = vst.msk [vmem:[%s2568] sm:$0x3] %vm216, %v2566
  %s2570 = scalar_lea.vmem %s0, 26
  %v2571 = vld [vmem:[%s2570] sm:$0x3]
  %v2572 = vld [vmem:[%s1] sm:$0xff]
  %v2573 = vld [vmem:[%s2] sm:$0x1]
  %v2575 = vlaneseq
  %v2576 = vshrl.u32 %v2575, 7
  %v2577 = vsub.s32 0, %v2576
  %v2578 = vrot.slane %v2573, %v2577
  %v2581 = vsel %vm29, %v2571, 0
  %2583 = vmatprep.subr.mxu0 0.0
  %2584 = vmatpush1.msra.mxu0 0.0
  %2585 = vmatprep.subr.mxu0 0.0
  %2586 = vmatpush1.msra.mxu0 0.0
  %2587 = vmatprep.subr.mxu0 0.0
  %2588 = vmatpush1.msra.mxu0 0.0
  %2589 = vmatprep.subr.mxu0 0.0
  %2590 = vmatpush1.msra.mxu0 0.0
  %2591 = vmatprep.subr.mxu0 0.0
  %2592 = vmatpush1.msra.mxu0 0.0
  %2593 = vmatprep.subr.mxu0 0.0
  %2594 = vmatpush1.msra.mxu0 0.0
  %2595 = vmatprep.subr.mxu0 0.0
  %2596 = vmatpush1.msra.mxu0 0.0
  %2597 = vmatprep.subr.mxu0 0.0
  %2598 = vmatpush1.msra.mxu0 0.0
  %2599 = vmatprep.subr.mxu0 0.0
  %2600 = vmatpush1.msra.mxu0 0.0
  %2601 = vmatprep.subr.mxu0 0.0
  %2602 = vmatpush1.msra.mxu0 0.0
  %2603 = vmatprep.subr.mxu0 0.0
  %2604 = vmatpush1.msra.mxu0 0.0
  %2605 = vmatprep.subr.mxu0 0.0
  %2606 = vmatpush1.msra.mxu0 0.0
  %2607 = vmatprep.subr.mxu0 0.0
  %2608 = vmatpush1.msra.mxu0 0.0
  %2609 = vmatprep.subr.mxu0 0.0
  %2610 = vmatpush1.msra.mxu0 0.0
  %2611 = vmatprep.subr.mxu0 0.0
  %2612 = vmatpush1.msra.mxu0 0.0
  %2613 = vmatprep.subr.mxu0 0.0
  %2614 = vmatpush1.msra.mxu0 %v2572
  %2615 = vmatprep.subr.mxu0 0.0
  %2616 = vmatpush2.msra.mxu0 0.0
  %2617 = vmatprep.subr.mxu0 0.0
  %2618 = vmatpush2.msra.mxu0 0.0
  %2619 = vmatprep.subr.mxu0 0.0
  %2620 = vmatpush2.msra.mxu0 0.0
  %2621 = vmatprep.subr.mxu0 0.0
  %2622 = vmatpush2.msra.mxu0 0.0
  %2623 = vmatprep.subr.mxu0 0.0
  %2624 = vmatpush2.msra.mxu0 0.0
  %2625 = vmatprep.subr.mxu0 0.0
  %2626 = vmatpush2.msra.mxu0 0.0
  %2627 = vmatprep.subr.mxu0 0.0
  %2628 = vmatpush2.msra.mxu0 0.0
  %2629 = vmatprep.subr.mxu0 0.0
  %2630 = vmatpush2.msra.mxu0 0.0
  %2631 = vmatprep.subr.mxu0 0.0
  %2632 = vmatpush2.msra.mxu0 0.0
  %2633 = vmatprep.subr.mxu0 0.0
  %2634 = vmatpush2.msra.mxu0 0.0
  %2635 = vmatprep.subr.mxu0 0.0
  %2636 = vmatpush2.msra.mxu0 0.0
  %2637 = vmatprep.subr.mxu0 0.0
  %2638 = vmatpush2.msra.mxu0 0.0
  %2639 = vmatprep.subr.mxu0 0.0
  %2640 = vmatpush2.msra.mxu0 0.0
  %2641 = vmatprep.subr.mxu0 0.0
  %2642 = vmatpush2.msra.mxu0 0.0
  %2643 = vmatprep.subr.mxu0 0.0
  %2644 = vmatpush2.msra.mxu0 0.0
  %2645 = vmatprep.subr.mxu0 0.0
  %2646 = vmatpush2.msra.mxu0 0.0
  %2647 = vmatprep.mubr.f32.mxu0 0.0
  %2648 = vmatmul.mubr.f32.gmra.mxu0 %v2581
  %v2649 = vpop.f32.mrf.mxu0
  %v2650 = vadd.f32 %v2578, %v2649
  %v2651 = vpop.f32.mrf.mxu0
  %2652 = vdwg.mxu0
  %v2653 = vld [vmem:[%s3] sm:$0xff]
  %v2654 = vld [vmem:[%s3 + $0x8] sm:$0xff]
  %v2655 = vld [vmem:[%s4] sm:$0x1]
  %v2657 = vlaneseq
  %v2658 = vshrl.u32 %v2657, 7
  %v2659 = vsub.s32 0, %v2658
  %v2660 = vrot.slane %v2655, %v2659
  %v2662 = vsel %vm112, %v2566, 0
  %2664 = vmatprep.subr.mxu0 0.0
  %2665 = vmatpush1.msra.mxu0 0.0
  %2666 = vmatprep.subr.mxu0 0.0
  %2667 = vmatpush1.msra.mxu0 0.0
  %2668 = vmatprep.subr.mxu0 0.0
  %2669 = vmatpush1.msra.mxu0 0.0
  %2670 = vmatprep.subr.mxu0 0.0
  %2671 = vmatpush1.msra.mxu0 0.0
  %2672 = vmatprep.subr.mxu0 0.0
  %2673 = vmatpush1.msra.mxu0 0.0
  %2674 = vmatprep.subr.mxu0 0.0
  %2675 = vmatpush1.msra.mxu0 0.0
  %2676 = vmatprep.subr.mxu0 0.0
  %2677 = vmatpush1.msra.mxu0 0.0
  %2678 = vmatprep.subr.mxu0 0.0
  %2679 = vmatpush1.msra.mxu0 0.0
  %2680 = vmatprep.subr.mxu0 0.0
  %2681 = vmatpush1.msra.mxu0 0.0
  %2682 = vmatprep.subr.mxu0 0.0
  %2683 = vmatpush1.msra.mxu0 0.0
  %2684 = vmatprep.subr.mxu0 0.0
  %2685 = vmatpush1.msra.mxu0 0.0
  %2686 = vmatprep.subr.mxu0 0.0
  %2687 = vmatpush1.msra.mxu0 0.0
  %2688 = vmatprep.subr.mxu0 0.0
  %2689 = vmatpush1.msra.mxu0 0.0
  %2690 = vmatprep.subr.mxu0 0.0
  %2691 = vmatpush1.msra.mxu0 0.0
  %2692 = vmatprep.subr.mxu0 0.0
  %2693 = vmatpush1.msra.mxu0 %v2654
  %2694 = vmatprep.subr.mxu0 0.0
  %2695 = vmatpush1.msra.mxu0 %v2653
  %2696 = vmatprep.subr.mxu0 0.0
  %2697 = vmatpush2.msra.mxu0 0.0
  %2698 = vmatprep.subr.mxu0 0.0
  %2699 = vmatpush2.msra.mxu0 0.0
  %2700 = vmatprep.subr.mxu0 0.0
  %2701 = vmatpush2.msra.mxu0 0.0
  %2702 = vmatprep.subr.mxu0 0.0
  %2703 = vmatpush2.msra.mxu0 0.0
  %2704 = vmatprep.subr.mxu0 0.0
  %2705 = vmatpush2.msra.mxu0 0.0
  %2706 = vmatprep.subr.mxu0 0.0
  %2707 = vmatpush2.msra.mxu0 0.0
  %2708 = vmatprep.subr.mxu0 0.0
  %2709 = vmatpush2.msra.mxu0 0.0
  %2710 = vmatprep.subr.mxu0 0.0
  %2711 = vmatpush2.msra.mxu0 0.0
  %2712 = vmatprep.subr.mxu0 0.0
  %2713 = vmatpush2.msra.mxu0 0.0
  %2714 = vmatprep.subr.mxu0 0.0
  %2715 = vmatpush2.msra.mxu0 0.0
  %2716 = vmatprep.subr.mxu0 0.0
  %2717 = vmatpush2.msra.mxu0 0.0
  %2718 = vmatprep.subr.mxu0 0.0
  %2719 = vmatpush2.msra.mxu0 0.0
  %2720 = vmatprep.subr.mxu0 0.0
  %2721 = vmatpush2.msra.mxu0 0.0
  %2722 = vmatprep.subr.mxu0 0.0
  %2723 = vmatpush2.msra.mxu0 0.0
  %2724 = vmatprep.subr.mxu0 0.0
  %2725 = vmatpush2.msra.mxu0 0.0
  %2726 = vmatprep.subr.mxu0 0.0
  %2727 = vmatpush2.msra.mxu0 0.0
  %2728 = vmatprep.mubr.f32.mxu0 0.0
  %2729 = vmatmul.mubr.f32.gmra.mxu0 %v2662
  %v2730 = vpop.f32.mrf.mxu0
  %v2731 = vadd.f32 %v2660, %v2730
  %v2732 = vpop.f32.mrf.mxu0
  %2733 = vdwg.mxu0
  %v2734 = vadd.f32 %v2650, %v2731
  %v2735 = vxor.u32 %v2734, 2147483648
  %v2736 = vmul.f32 %v2735, 1.442695
  %v2737 = vpow.pop %v2736
  %v2738 = vadd.f32 %v2737, 1.0
  %v2739 = vrcp.pop %v2738
  %v2740 = vmul.f32 1.0, %v2739
  %2742 = vrot.lane.b32.xlu0 %v2731, 96
  %v2743 = vpop.permute.xlu0 %2742
  %v2745 = vmul.f32 %v2740, %v2743
  %2747 = vrot.lane.b32.xlu0 %v2745, 32
  %v2748 = vpop.permute.xlu0 %2747
  %v2750 = vadd.f32 %v2650, %v2748
  %v2751 = vtanh.pop %v2750
  %v2752 = vsub.f32 1.0, %v2740
  %2754 = vrot.lane.b32.xlu0 %v2751, 112
  %v2755 = vpop.permute.xlu0 %2754
  %v2757 = vmul.f32 %v2752, %v2755
  %v2758 = vmul.f32 %v2740, %v2563
  %v2759 = vadd.f32 %v2757, %v2758
  %2761 = vrot.lane.b32.xlu0 %v2759, 112
  %v2762 = vpop.permute.xlu0 %2761
  %s2764 = scalar_lea.vmem %s5, 26
  %2765 = vst.msk [vmem:[%s2764] sm:$0x3] %vm216, %v2762
  %s2766 = scalar_lea.vmem %s0, 28
  %v2767 = vld [vmem:[%s2766] sm:$0x3]
  %v2768 = vld [vmem:[%s1] sm:$0xff]
  %v2769 = vld [vmem:[%s2] sm:$0x1]
  %v2771 = vlaneseq
  %v2772 = vshrl.u32 %v2771, 7
  %v2773 = vsub.s32 0, %v2772
  %v2774 = vrot.slane %v2769, %v2773
  %v2777 = vsel %vm29, %v2767, 0
  %2779 = vmatprep.subr.mxu0 0.0
  %2780 = vmatpush1.msra.mxu0 0.0
  %2781 = vmatprep.subr.mxu0 0.0
  %2782 = vmatpush1.msra.mxu0 0.0
  %2783 = vmatprep.subr.mxu0 0.0
  %2784 = vmatpush1.msra.mxu0 0.0
  %2785 = vmatprep.subr.mxu0 0.0
  %2786 = vmatpush1.msra.mxu0 0.0
  %2787 = vmatprep.subr.mxu0 0.0
  %2788 = vmatpush1.msra.mxu0 0.0
  %2789 = vmatprep.subr.mxu0 0.0
  %2790 = vmatpush1.msra.mxu0 0.0
  %2791 = vmatprep.subr.mxu0 0.0
  %2792 = vmatpush1.msra.mxu0 0.0
  %2793 = vmatprep.subr.mxu0 0.0
  %2794 = vmatpush1.msra.mxu0 0.0
  %2795 = vmatprep.subr.mxu0 0.0
  %2796 = vmatpush1.msra.mxu0 0.0
  %2797 = vmatprep.subr.mxu0 0.0
  %2798 = vmatpush1.msra.mxu0 0.0
  %2799 = vmatprep.subr.mxu0 0.0
  %2800 = vmatpush1.msra.mxu0 0.0
  %2801 = vmatprep.subr.mxu0 0.0
  %2802 = vmatpush1.msra.mxu0 0.0
  %2803 = vmatprep.subr.mxu0 0.0
  %2804 = vmatpush1.msra.mxu0 0.0
  %2805 = vmatprep.subr.mxu0 0.0
  %2806 = vmatpush1.msra.mxu0 0.0
  %2807 = vmatprep.subr.mxu0 0.0
  %2808 = vmatpush1.msra.mxu0 0.0
  %2809 = vmatprep.subr.mxu0 0.0
  %2810 = vmatpush1.msra.mxu0 %v2768
  %2811 = vmatprep.subr.mxu0 0.0
  %2812 = vmatpush2.msra.mxu0 0.0
  %2813 = vmatprep.subr.mxu0 0.0
  %2814 = vmatpush2.msra.mxu0 0.0
  %2815 = vmatprep.subr.mxu0 0.0
  %2816 = vmatpush2.msra.mxu0 0.0
  %2817 = vmatprep.subr.mxu0 0.0
  %2818 = vmatpush2.msra.mxu0 0.0
  %2819 = vmatprep.subr.mxu0 0.0
  %2820 = vmatpush2.msra.mxu0 0.0
  %2821 = vmatprep.subr.mxu0 0.0
  %2822 = vmatpush2.msra.mxu0 0.0
  %2823 = vmatprep.subr.mxu0 0.0
  %2824 = vmatpush2.msra.mxu0 0.0
  %2825 = vmatprep.subr.mxu0 0.0
  %2826 = vmatpush2.msra.mxu0 0.0
  %2827 = vmatprep.subr.mxu0 0.0
  %2828 = vmatpush2.msra.mxu0 0.0
  %2829 = vmatprep.subr.mxu0 0.0
  %2830 = vmatpush2.msra.mxu0 0.0
  %2831 = vmatprep.subr.mxu0 0.0
  %2832 = vmatpush2.msra.mxu0 0.0
  %2833 = vmatprep.subr.mxu0 0.0
  %2834 = vmatpush2.msra.mxu0 0.0
  %2835 = vmatprep.subr.mxu0 0.0
  %2836 = vmatpush2.msra.mxu0 0.0
  %2837 = vmatprep.subr.mxu0 0.0
  %2838 = vmatpush2.msra.mxu0 0.0
  %2839 = vmatprep.subr.mxu0 0.0
  %2840 = vmatpush2.msra.mxu0 0.0
  %2841 = vmatprep.subr.mxu0 0.0
  %2842 = vmatpush2.msra.mxu0 0.0
  %2843 = vmatprep.mubr.f32.mxu0 0.0
  %2844 = vmatmul.mubr.f32.gmra.mxu0 %v2777
  %v2845 = vpop.f32.mrf.mxu0
  %v2846 = vadd.f32 %v2774, %v2845
  %v2847 = vpop.f32.mrf.mxu0
  %2848 = vdwg.mxu0
  %v2849 = vld [vmem:[%s3] sm:$0xff]
  %v2850 = vld [vmem:[%s3 + $0x8] sm:$0xff]
  %v2851 = vld [vmem:[%s4] sm:$0x1]
  %v2853 = vlaneseq
  %v2854 = vshrl.u32 %v2853, 7
  %v2855 = vsub.s32 0, %v2854
  %v2856 = vrot.slane %v2851, %v2855
  %v2858 = vsel %vm112, %v2762, 0
  %2860 = vmatprep.subr.mxu0 0.0
  %2861 = vmatpush1.msra.mxu0 0.0
  %2862 = vmatprep.subr.mxu0 0.0
  %2863 = vmatpush1.msra.mxu0 0.0
  %2864 = vmatprep.subr.mxu0 0.0
  %2865 = vmatpush1.msra.mxu0 0.0
  %2866 = vmatprep.subr.mxu0 0.0
  %2867 = vmatpush1.msra.mxu0 0.0
  %2868 = vmatprep.subr.mxu0 0.0
  %2869 = vmatpush1.msra.mxu0 0.0
  %2870 = vmatprep.subr.mxu0 0.0
  %2871 = vmatpush1.msra.mxu0 0.0
  %2872 = vmatprep.subr.mxu0 0.0
  %2873 = vmatpush1.msra.mxu0 0.0
  %2874 = vmatprep.subr.mxu0 0.0
  %2875 = vmatpush1.msra.mxu0 0.0
  %2876 = vmatprep.subr.mxu0 0.0
  %2877 = vmatpush1.msra.mxu0 0.0
  %2878 = vmatprep.subr.mxu0 0.0
  %2879 = vmatpush1.msra.mxu0 0.0
  %2880 = vmatprep.subr.mxu0 0.0
  %2881 = vmatpush1.msra.mxu0 0.0
  %2882 = vmatprep.subr.mxu0 0.0
  %2883 = vmatpush1.msra.mxu0 0.0
  %2884 = vmatprep.subr.mxu0 0.0
  %2885 = vmatpush1.msra.mxu0 0.0
  %2886 = vmatprep.subr.mxu0 0.0
  %2887 = vmatpush1.msra.mxu0 0.0
  %2888 = vmatprep.subr.mxu0 0.0
  %2889 = vmatpush1.msra.mxu0 %v2850
  %2890 = vmatprep.subr.mxu0 0.0
  %2891 = vmatpush1.msra.mxu0 %v2849
  %2892 = vmatprep.subr.mxu0 0.0
  %2893 = vmatpush2.msra.mxu0 0.0
  %2894 = vmatprep.subr.mxu0 0.0
  %2895 = vmatpush2.msra.mxu0 0.0
  %2896 = vmatprep.subr.mxu0 0.0
  %2897 = vmatpush2.msra.mxu0 0.0
  %2898 = vmatprep.subr.mxu0 0.0
  %2899 = vmatpush2.msra.mxu0 0.0
  %2900 = vmatprep.subr.mxu0 0.0
  %2901 = vmatpush2.msra.mxu0 0.0
  %2902 = vmatprep.subr.mxu0 0.0
  %2903 = vmatpush2.msra.mxu0 0.0
  %2904 = vmatprep.subr.mxu0 0.0
  %2905 = vmatpush2.msra.mxu0 0.0
  %2906 = vmatprep.subr.mxu0 0.0
  %2907 = vmatpush2.msra.mxu0 0.0
  %2908 = vmatprep.subr.mxu0 0.0
  %2909 = vmatpush2.msra.mxu0 0.0
  %2910 = vmatprep.subr.mxu0 0.0
  %2911 = vmatpush2.msra.mxu0 0.0
  %2912 = vmatprep.subr.mxu0 0.0
  %2913 = vmatpush2.msra.mxu0 0.0
  %2914 = vmatprep.subr.mxu0 0.0
  %2915 = vmatpush2.msra.mxu0 0.0
  %2916 = vmatprep.subr.mxu0 0.0
  %2917 = vmatpush2.msra.mxu0 0.0
  %2918 = vmatprep.subr.mxu0 0.0
  %2919 = vmatpush2.msra.mxu0 0.0
  %2920 = vmatprep.subr.mxu0 0.0
  %2921 = vmatpush2.msra.mxu0 0.0
  %2922 = vmatprep.subr.mxu0 0.0
  %2923 = vmatpush2.msra.mxu0 0.0
  %2924 = vmatprep.mubr.f32.mxu0 0.0
  %2925 = vmatmul.mubr.f32.gmra.mxu0 %v2858
  %v2926 = vpop.f32.mrf.mxu0
  %v2927 = vadd.f32 %v2856, %v2926
  %v2928 = vpop.f32.mrf.mxu0
  %2929 = vdwg.mxu0
  %v2930 = vadd.f32 %v2846, %v2927
  %v2931 = vxor.u32 %v2930, 2147483648
  %v2932 = vmul.f32 %v2931, 1.442695
  %v2933 = vpow.pop %v2932
  %v2934 = vadd.f32 %v2933, 1.0
  %v2935 = vrcp.pop %v2934
  %v2936 = vmul.f32 1.0, %v2935
  %2938 = vrot.lane.b32.xlu0 %v2927, 96
  %v2939 = vpop.permute.xlu0 %2938
  %v2941 = vmul.f32 %v2936, %v2939
  %2943 = vrot.lane.b32.xlu0 %v2941, 32
  %v2944 = vpop.permute.xlu0 %2943
  %v2946 = vadd.f32 %v2846, %v2944
  %v2947 = vtanh.pop %v2946
  %v2948 = vsub.f32 1.0, %v2936
  %2950 = vrot.lane.b32.xlu0 %v2947, 112
  %v2951 = vpop.permute.xlu0 %2950
  %v2953 = vmul.f32 %v2948, %v2951
  %v2954 = vmul.f32 %v2936, %v2759
  %v2955 = vadd.f32 %v2953, %v2954
  %2957 = vrot.lane.b32.xlu0 %v2955, 112
  %v2958 = vpop.permute.xlu0 %2957
  %s2960 = scalar_lea.vmem %s5, 28
  %2961 = vst.msk [vmem:[%s2960] sm:$0x3] %vm216, %v2958
  %s2962 = scalar_lea.vmem %s0, 30
  %v2963 = vld [vmem:[%s2962] sm:$0x3]
  %v2964 = vld [vmem:[%s1] sm:$0xff]
  %v2965 = vld [vmem:[%s2] sm:$0x1]
  %v2967 = vlaneseq
  %v2968 = vshrl.u32 %v2967, 7
  %v2969 = vsub.s32 0, %v2968
  %v2970 = vrot.slane %v2965, %v2969
  %v2973 = vsel %vm29, %v2963, 0
  %2975 = vmatprep.subr.mxu0 0.0
  %2976 = vmatpush1.msra.mxu0 0.0
  %2977 = vmatprep.subr.mxu0 0.0
  %2978 = vmatpush1.msra.mxu0 0.0
  %2979 = vmatprep.subr.mxu0 0.0
  %2980 = vmatpush1.msra.mxu0 0.0
  %2981 = vmatprep.subr.mxu0 0.0
  %2982 = vmatpush1.msra.mxu0 0.0
  %2983 = vmatprep.subr.mxu0 0.0
  %2984 = vmatpush1.msra.mxu0 0.0
  %2985 = vmatprep.subr.mxu0 0.0
  %2986 = vmatpush1.msra.mxu0 0.0
  %2987 = vmatprep.subr.mxu0 0.0
  %2988 = vmatpush1.msra.mxu0 0.0
  %2989 = vmatprep.subr.mxu0 0.0
  %2990 = vmatpush1.msra.mxu0 0.0
  %2991 = vmatprep.subr.mxu0 0.0
  %2992 = vmatpush1.msra.mxu0 0.0
  %2993 = vmatprep.subr.mxu0 0.0
  %2994 = vmatpush1.msra.mxu0 0.0
  %2995 = vmatprep.subr.mxu0 0.0
  %2996 = vmatpush1.msra.mxu0 0.0
  %2997 = vmatprep.subr.mxu0 0.0
  %2998 = vmatpush1.msra.mxu0 0.0
  %2999 = vmatprep.subr.mxu0 0.0
  %3000 = vmatpush1.msra.mxu0 0.0
  %3001 = vmatprep.subr.mxu0 0.0
  %3002 = vmatpush1.msra.mxu0 0.0
  %3003 = vmatprep.subr.mxu0 0.0
  %3004 = vmatpush1.msra.mxu0 0.0
  %3005 = vmatprep.subr.mxu0 0.0
  %3006 = vmatpush1.msra.mxu0 %v2964
  %3007 = vmatprep.subr.mxu0 0.0
  %3008 = vmatpush2.msra.mxu0 0.0
  %3009 = vmatprep.subr.mxu0 0.0
  %3010 = vmatpush2.msra.mxu0 0.0
  %3011 = vmatprep.subr.mxu0 0.0
  %3012 = vmatpush2.msra.mxu0 0.0
  %3013 = vmatprep.subr.mxu0 0.0
  %3014 = vmatpush2.msra.mxu0 0.0
  %3015 = vmatprep.subr.mxu0 0.0
  %3016 = vmatpush2.msra.mxu0 0.0
  %3017 = vmatprep.subr.mxu0 0.0
  %3018 = vmatpush2.msra.mxu0 0.0
  %3019 = vmatprep.subr.mxu0 0.0
  %3020 = vmatpush2.msra.mxu0 0.0
  %3021 = vmatprep.subr.mxu0 0.0
  %3022 = vmatpush2.msra.mxu0 0.0
  %3023 = vmatprep.subr.mxu0 0.0
  %3024 = vmatpush2.msra.mxu0 0.0
  %3025 = vmatprep.subr.mxu0 0.0
  %3026 = vmatpush2.msra.mxu0 0.0
  %3027 = vmatprep.subr.mxu0 0.0
  %3028 = vmatpush2.msra.mxu0 0.0
  %3029 = vmatprep.subr.mxu0 0.0
  %3030 = vmatpush2.msra.mxu0 0.0
  %3031 = vmatprep.subr.mxu0 0.0
  %3032 = vmatpush2.msra.mxu0 0.0
  %3033 = vmatprep.subr.mxu0 0.0
  %3034 = vmatpush2.msra.mxu0 0.0
  %3035 = vmatprep.subr.mxu0 0.0
  %3036 = vmatpush2.msra.mxu0 0.0
  %3037 = vmatprep.subr.mxu0 0.0
  %3038 = vmatpush2.msra.mxu0 0.0
  %3039 = vmatprep.mubr.f32.mxu0 0.0
  %3040 = vmatmul.mubr.f32.gmra.mxu0 %v2973
  %v3041 = vpop.f32.mrf.mxu0
  %v3042 = vadd.f32 %v2970, %v3041
  %v3043 = vpop.f32.mrf.mxu0
  %3044 = vdwg.mxu0
  %v3045 = vld [vmem:[%s3] sm:$0xff]
  %v3046 = vld [vmem:[%s3 + $0x8] sm:$0xff]
  %v3047 = vld [vmem:[%s4] sm:$0x1]
  %v3049 = vlaneseq
  %v3050 = vshrl.u32 %v3049, 7
  %v3051 = vsub.s32 0, %v3050
  %v3052 = vrot.slane %v3047, %v3051
  %v3054 = vsel %vm112, %v2958, 0
  %3056 = vmatprep.subr.mxu0 0.0
  %3057 = vmatpush1.msra.mxu0 0.0
  %3058 = vmatprep.subr.mxu0 0.0
  %3059 = vmatpush1.msra.mxu0 0.0
  %3060 = vmatprep.subr.mxu0 0.0
  %3061 = vmatpush1.msra.mxu0 0.0
  %3062 = vmatprep.subr.mxu0 0.0
  %3063 = vmatpush1.msra.mxu0 0.0
  %3064 = vmatprep.subr.mxu0 0.0
  %3065 = vmatpush1.msra.mxu0 0.0
  %3066 = vmatprep.subr.mxu0 0.0
  %3067 = vmatpush1.msra.mxu0 0.0
  %3068 = vmatprep.subr.mxu0 0.0
  %3069 = vmatpush1.msra.mxu0 0.0
  %3070 = vmatprep.subr.mxu0 0.0
  %3071 = vmatpush1.msra.mxu0 0.0
  %3072 = vmatprep.subr.mxu0 0.0
  %3073 = vmatpush1.msra.mxu0 0.0
  %3074 = vmatprep.subr.mxu0 0.0
  %3075 = vmatpush1.msra.mxu0 0.0
  %3076 = vmatprep.subr.mxu0 0.0
  %3077 = vmatpush1.msra.mxu0 0.0
  %3078 = vmatprep.subr.mxu0 0.0
  %3079 = vmatpush1.msra.mxu0 0.0
  %3080 = vmatprep.subr.mxu0 0.0
  %3081 = vmatpush1.msra.mxu0 0.0
  %3082 = vmatprep.subr.mxu0 0.0
  %3083 = vmatpush1.msra.mxu0 0.0
  %3084 = vmatprep.subr.mxu0 0.0
  %3085 = vmatpush1.msra.mxu0 %v3046
  %3086 = vmatprep.subr.mxu0 0.0
  %3087 = vmatpush1.msra.mxu0 %v3045
  %3088 = vmatprep.subr.mxu0 0.0
  %3089 = vmatpush2.msra.mxu0 0.0
  %3090 = vmatprep.subr.mxu0 0.0
  %3091 = vmatpush2.msra.mxu0 0.0
  %3092 = vmatprep.subr.mxu0 0.0
  %3093 = vmatpush2.msra.mxu0 0.0
  %3094 = vmatprep.subr.mxu0 0.0
  %3095 = vmatpush2.msra.mxu0 0.0
  %3096 = vmatprep.subr.mxu0 0.0
  %3097 = vmatpush2.msra.mxu0 0.0
  %3098 = vmatprep.subr.mxu0 0.0
  %3099 = vmatpush2.msra.mxu0 0.0
  %3100 = vmatprep.subr.mxu0 0.0
  %3101 = vmatpush2.msra.mxu0 0.0
  %3102 = vmatprep.subr.mxu0 0.0
  %3103 = vmatpush2.msra.mxu0 0.0
  %3104 = vmatprep.subr.mxu0 0.0
  %3105 = vmatpush2.msra.mxu0 0.0
  %3106 = vmatprep.subr.mxu0 0.0
  %3107 = vmatpush2.msra.mxu0 0.0
  %3108 = vmatprep.subr.mxu0 0.0
  %3109 = vmatpush2.msra.mxu0 0.0
  %3110 = vmatprep.subr.mxu0 0.0
  %3111 = vmatpush2.msra.mxu0 0.0
  %3112 = vmatprep.subr.mxu0 0.0
  %3113 = vmatpush2.msra.mxu0 0.0
  %3114 = vmatprep.subr.mxu0 0.0
  %3115 = vmatpush2.msra.mxu0 0.0
  %3116 = vmatprep.subr.mxu0 0.0
  %3117 = vmatpush2.msra.mxu0 0.0
  %3118 = vmatprep.subr.mxu0 0.0
  %3119 = vmatpush2.msra.mxu0 0.0
  %3120 = vmatprep.mubr.f32.mxu0 0.0
  %3121 = vmatmul.mubr.f32.gmra.mxu0 %v3054
  %v3122 = vpop.f32.mrf.mxu0
  %v3123 = vadd.f32 %v3052, %v3122
  %v3124 = vpop.f32.mrf.mxu0
  %3125 = vdwg.mxu0
  %v3126 = vadd.f32 %v3042, %v3123
  %v3127 = vxor.u32 %v3126, 2147483648
  %v3128 = vmul.f32 %v3127, 1.442695
  %v3129 = vpow.pop %v3128
  %v3130 = vadd.f32 %v3129, 1.0
  %v3131 = vrcp.pop %v3130
  %v3132 = vmul.f32 1.0, %v3131
  %3134 = vrot.lane.b32.xlu0 %v3123, 96
  %v3135 = vpop.permute.xlu0 %3134
  %v3137 = vmul.f32 %v3132, %v3135
  %3139 = vrot.lane.b32.xlu0 %v3137, 32
  %v3140 = vpop.permute.xlu0 %3139
  %v3142 = vadd.f32 %v3042, %v3140
  %v3143 = vtanh.pop %v3142
  %v3144 = vsub.f32 1.0, %v3132
  %3146 = vrot.lane.b32.xlu0 %v3143, 112
  %v3147 = vpop.permute.xlu0 %3146
  %v3149 = vmul.f32 %v3144, %v3147
  %v3150 = vmul.f32 %v3132, %v2955
  %v3151 = vadd.f32 %v3149, %v3150
  %3153 = vrot.lane.b32.xlu0 %v3151, 112
  %v3154 = vpop.permute.xlu0 %3153
  %s3156 = scalar_lea.vmem %s5, 30
  %3157 = vst.msk [vmem:[%s3156] sm:$0x3] %vm216, %v3154
  // Predicated region
  $region22: #{model_forward.5} parent=0 // pred_check
    _
  $region23: #{model_forward.5} parent=0 // pred_check_branch
    %3159 = sbr.rel (0) target = $region25
  $region24: #{model_forward.5} parent=0 // pred_region
    _
  $region25: #{model_forward.5} parent=0 // pred_fallthru
    _
  // Predicated region
  $region26: #{model_forward.5} parent=0 // pred_check
    _
  $region27: #{model_forward.5} parent=0 // pred_check_branch
    %3161 = sbr.rel (0) target = $region29
  $region28: #{model_forward.5} parent=0 // pred_region
    _
  $region29: #{model_forward.5} parent=0 // pred_fallthru
    _

// kernel: model_forward.8
$region0: #{model_forward.8}
  #allocation0 [shape = 'u32[]', space=smem, size = 0x4, offset = 0x4, fixed_abs, tag = 'smem constant byte address 0x4 - core index']
  #allocation1 [shape = 'u32[144,128]{1,0:T(1,128)}', space=vmem, size = 0x12000, scoped, tag = 'internal scratch']
  %s0 = inlined_call_operand.vmem [shape: f32[2,1,16,8], index: 0, kind: input, shape index: {}]
  %s1 = inlined_call_operand.vmem [shape: f32[4,16,16], index: 1, kind: input, shape index: {}]
  %s2 = inlined_call_operand.vmem [shape: f32[32,128], index: 2, kind: input, shape index: {}]
  %s3 = inlined_call_operand.vmem [shape: f32[1,128], index: 3, kind: input, shape index: {}]
  %s4 = inlined_call_operand.vmem [shape: f32[32,128], index: 4, kind: input, shape index: {}]
  %s5 = inlined_call_operand.vmem [shape: f32[1,128], index: 5, kind: input, shape index: {}]
  %s6 = inlined_call_operand.vmem [shape: f32[64,128], index: 6, kind: input, shape index: {}]
  %s7 = inlined_call_operand.vmem [shape: f32[1,128], index: 7, kind: input, shape index: {}]
  %s8 = inlined_call_operand.vmem [shape: f32[64,128], index: 8, kind: input, shape index: {}]
  %s9 = inlined_call_operand.vmem [shape: f32[1,128], index: 9, kind: input, shape index: {}]
  %s10 = inlined_call_operand.vmem [shape: f32[64,128], index: 10, kind: input, shape index: {}]
  %s11 = inlined_call_operand.vmem [shape: f32[1,128], index: 11, kind: input, shape index: {}]
  %s12 = inlined_call_operand.vmem [shape: f32[64,128], index: 12, kind: input, shape index: {}]
  %s13 = inlined_call_operand.vmem [shape: f32[1,128], index: 13, kind: input, shape index: {}]
  %s14 = inlined_call_operand.vmem [shape: f32[64,16], index: 14, kind: input, shape index: {}]
  %s15 = inlined_call_operand.vmem [shape: f32[16,16], index: 15, kind: input, shape index: {}]
  %s16 = inlined_call_operand.vmem [shape: f32[1,16], index: 16, kind: input, shape index: {}]
  %s17 = inlined_call_operand.vmem [shape: f32[16,8], index: 17, kind: input, shape index: {}]
  %s18 = inlined_call_operand.vmem [shape: f32[1,8], index: 18, kind: input, shape index: {}]
  %s19 = inlined_call_operand.vmem [shape: f32[2,16,8], index: 19, kind: output, shape index: {}]
  %s20 = sld [smem:[#allocation0]]
  $region86: #{model_forward.8} parent=0
    _
  %s22 = ssub.s32 1, %s20
  %s23 = scalar_select 0, %s22, %s20
  // Predicated region
  $region2: #{model_forward.8} parent=0 // pred_check
    _
  $region3: #{model_forward.8} parent=0 // pred_check_branch
    %25 = sbr.rel (0) target = $region5
  $region4: #{model_forward.8} parent=0 // pred_region
    _
  $region5: #{model_forward.8} parent=0 // pred_fallthru
    _
  // Predicated region
  $region6: #{model_forward.8} parent=0 // pred_check
    _
  $region7: #{model_forward.8} parent=0 // pred_check_branch
    %27 = sbr.rel (0) target = $region9
  $region8: #{model_forward.8} parent=0 // pred_region
    _
  $region9: #{model_forward.8} parent=0 // pred_fallthru
    _
  // Predicated region
  $region10: #{model_forward.8} parent=0 // pred_check
    _
  $region11: #{model_forward.8} parent=0 // pred_check_branch
    %29 = sbr.rel (0) target = $region13
  $region12: #{model_forward.8} parent=0 // pred_region
    _
  $region13: #{model_forward.8} parent=0 // pred_fallthru
    _
  // Predicated region
  $region14: #{model_forward.8} parent=0 // pred_check
    _
  $region15: #{model_forward.8} parent=0 // pred_check_branch
    %31 = sbr.rel (0) target = $region17
  $region16: #{model_forward.8} parent=0 // pred_region
    _
  $region17: #{model_forward.8} parent=0 // pred_fallthru
    _
  // Predicated region
  $region18: #{model_forward.8} parent=0 // pred_check
    _
  $region19: #{model_forward.8} parent=0 // pred_check_branch
    %33 = sbr.rel (0) target = $region21
  $region20: #{model_forward.8} parent=0 // pred_region
    _
  $region21: #{model_forward.8} parent=0 // pred_fallthru
    _
  // Predicated region
  $region22: #{model_forward.8} parent=0 // pred_check
    _
  $region23: #{model_forward.8} parent=0 // pred_check_branch
    %35 = sbr.rel (0) target = $region25
  $region24: #{model_forward.8} parent=0 // pred_region
    _
  $region25: #{model_forward.8} parent=0 // pred_fallthru
    _
  // Predicated region
  $region26: #{model_forward.8} parent=0 // pred_check
    _
  $region27: #{model_forward.8} parent=0 // pred_check_branch
    %37 = sbr.rel (0) target = $region29
  $region28: #{model_forward.8} parent=0 // pred_region
    _
  $region29: #{model_forward.8} parent=0 // pred_fallthru
    _
  // Predicated region
  $region30: #{model_forward.8} parent=0 // pred_check
    _
  $region31: #{model_forward.8} parent=0 // pred_check_branch
    %39 = sbr.rel (0) target = $region33
  $region32: #{model_forward.8} parent=0 // pred_region
    _
  $region33: #{model_forward.8} parent=0 // pred_fallthru
    _
  // Predicated region
  $region34: #{model_forward.8} parent=0 // pred_check
    _
  $region35: #{model_forward.8} parent=0 // pred_check_branch
    %41 = sbr.rel (0) target = $region37
  $region36: #{model_forward.8} parent=0 // pred_region
    _
  $region37: #{model_forward.8} parent=0 // pred_fallthru
    _
  // Predicated region
  $region38: #{model_forward.8} parent=0 // pred_check
    _
  $region39: #{model_forward.8} parent=0 // pred_check_branch
    %43 = sbr.rel (0) target = $region41
  $region40: #{model_forward.8} parent=0 // pred_region
    _
  $region41: #{model_forward.8} parent=0 // pred_fallthru
    _
  // Predicated region
  $region42: #{model_forward.8} parent=0 // pred_check
    _
  $region43: #{model_forward.8} parent=0 // pred_check_branch
    %45 = sbr.rel (0) target = $region45
  $region44: #{model_forward.8} parent=0 // pred_region
    _
  $region45: #{model_forward.8} parent=0 // pred_fallthru
    _
  // Predicated region
  $region46: #{model_forward.8} parent=0 // pred_check
    _
  $region47: #{model_forward.8} parent=0 // pred_check_branch
    %47 = sbr.rel (0) target = $region49
  $region48: #{model_forward.8} parent=0 // pred_region
    _
  $region49: #{model_forward.8} parent=0 // pred_fallthru
    _
  // Predicated region
  $region50: #{model_forward.8} parent=0 // pred_check
    _
  $region51: #{model_forward.8} parent=0 // pred_check_branch
    %49 = sbr.rel (0) target = $region53
  $region52: #{model_forward.8} parent=0 // pred_region
    _
  $region53: #{model_forward.8} parent=0 // pred_fallthru
    _
  // Predicated region
  $region54: #{model_forward.8} parent=0 // pred_check
    _
  $region55: #{model_forward.8} parent=0 // pred_check_branch
    %51 = sbr.rel (0) target = $region57
  $region56: #{model_forward.8} parent=0 // pred_region
    _
  $region57: #{model_forward.8} parent=0 // pred_fallthru
    _
  // Predicated region
  $region58: #{model_forward.8} parent=0 // pred_check
    _
  $region59: #{model_forward.8} parent=0 // pred_check_branch
    %53 = sbr.rel (0) target = $region61
  $region60: #{model_forward.8} parent=0 // pred_region
    _
  $region61: #{model_forward.8} parent=0 // pred_fallthru
    _
  // Predicated region
  $region62: #{model_forward.8} parent=0 // pred_check
    _
  $region63: #{model_forward.8} parent=0 // pred_check_branch
    %55 = sbr.rel (0) target = $region65
  $region64: #{model_forward.8} parent=0 // pred_region
    _
  $region65: #{model_forward.8} parent=0 // pred_fallthru
    _
  // Predicated region
  $region66: #{model_forward.8} parent=0 // pred_check
    _
  $region67: #{model_forward.8} parent=0 // pred_check_branch
    %57 = sbr.rel (0) target = $region69
  $region68: #{model_forward.8} parent=0 // pred_region
    _
  $region69: #{model_forward.8} parent=0 // pred_fallthru
    _
  // Predicated region
  $region70: #{model_forward.8} parent=0 // pred_check
    _
  $region71: #{model_forward.8} parent=0 // pred_check_branch
    %59 = sbr.rel (0) target = $region73
  $region72: #{model_forward.8} parent=0 // pred_region
    _
  $region73: #{model_forward.8} parent=0 // pred_fallthru
    _
  // Predicated region
  $region74: #{model_forward.8} parent=0 // pred_check
    _
  $region75: #{model_forward.8} parent=0 // pred_check_branch
    %61 = sbr.rel (0) target = $region77
  $region76: #{model_forward.8} parent=0 // pred_region
    _
  $region77: #{model_forward.8} parent=0 // pred_fallthru
    _
  %v62 = vld [vmem:[%s0] sm:$0xff]
  %v63 = vld [vmem:[%s0 + $0x8] sm:$0xff]
  %s64 = scalar_lea.vmem %s0, 16
  %v65 = vld [vmem:[%s64] sm:$0xff]
  %v66 = vld [vmem:[%s64 + $0x8] sm:$0xff]
  %v67 = vld [vmem:[%s1] sm:$0xff]
  %v68 = vld [vmem:[%s1 + $0x8] sm:$0xff]
  %vm69 = vcmask 130048
  %v71 = vsel %vm69, %v67, 0
  %v74 = vsel %vm69, %v68, 0
  %76 = vmatprep.subr.mxu0 0.0
  %77 = vmatpush1.msra.mxu0 0.0
  %78 = vmatprep.subr.mxu0 0.0
  %79 = vmatpush1.msra.mxu0 0.0
  %80 = vmatprep.subr.mxu0 0.0
  %81 = vmatpush1.msra.mxu0 0.0
  %82 = vmatprep.subr.mxu0 0.0
  %83 = vmatpush1.msra.mxu0 0.0
  %84 = vmatprep.subr.mxu0 0.0
  %85 = vmatpush1.msra.mxu0 0.0
  %86 = vmatprep.subr.mxu0 0.0
  %87 = vmatpush1.msra.mxu0 0.0
  %88 = vmatprep.subr.mxu0 0.0
  %89 = vmatpush1.msra.mxu0 0.0
  %90 = vmatprep.subr.mxu0 0.0
  %91 = vmatpush1.msra.mxu0 0.0
  %92 = vmatprep.subr.mxu0 0.0
  %93 = vmatpush1.msra.mxu0 0.0
  %94 = vmatprep.subr.mxu0 0.0
  %95 = vmatpush1.msra.mxu0 0.0
  %96 = vmatprep.subr.mxu0 0.0
  %97 = vmatpush1.msra.mxu0 0.0
  %98 = vmatprep.subr.mxu0 0.0
  %99 = vmatpush1.msra.mxu0 0.0
  %100 = vmatprep.subr.mxu0 0.0
  %101 = vmatpush1.msra.mxu0 0.0
  %102 = vmatprep.subr.mxu0 0.0
  %103 = vmatpush1.msra.mxu0 0.0
  %104 = vmatprep.subr.mxu0 0.0
  %105 = vmatpush1.msra.mxu0 %v63
  %106 = vmatprep.subr.mxu0 0.0
  %107 = vmatpush1.msra.mxu0 %v62
  %108 = vmatprep.subr.mxu0 0.0
  %109 = vmatpush2.msra.mxu0 0.0
  %110 = vmatprep.subr.mxu0 0.0
  %111 = vmatpush2.msra.mxu0 0.0
  %112 = vmatprep.subr.mxu0 0.0
  %113 = vmatpush2.msra.mxu0 0.0
  %114 = vmatprep.subr.mxu0 0.0
  %115 = vmatpush2.msra.mxu0 0.0
  %116 = vmatprep.subr.mxu0 0.0
  %117 = vmatpush2.msra.mxu0 0.0
  %118 = vmatprep.subr.mxu0 0.0
  %119 = vmatpush2.msra.mxu0 0.0
  %120 = vmatprep.subr.mxu0 0.0
  %121 = vmatpush2.msra.mxu0 0.0
  %122 = vmatprep.subr.mxu0 0.0
  %123 = vmatpush2.msra.mxu0 0.0
  %124 = vmatprep.subr.mxu0 0.0
  %125 = vmatpush2.msra.mxu0 0.0
  %126 = vmatprep.subr.mxu0 0.0
  %127 = vmatpush2.msra.mxu0 0.0
  %128 = vmatprep.subr.mxu0 0.0
  %129 = vmatpush2.msra.mxu0 0.0
  %130 = vmatprep.subr.mxu0 0.0
  %131 = vmatpush2.msra.mxu0 0.0
  %132 = vmatprep.subr.mxu0 0.0
  %133 = vmatpush2.msra.mxu0 0.0
  %134 = vmatprep.subr.mxu0 0.0
  %135 = vmatpush2.msra.mxu0 0.0
  %136 = vmatprep.subr.mxu0 0.0
  %137 = vmatpush2.msra.mxu0 0.0
  %138 = vmatprep.subr.mxu0 0.0
  %139 = vmatpush2.msra.mxu0 0.0
  %140 = vmatprep.mubr.f32.mxu0 0.0
  %141 = vmatmul.mubr.f32.gmra.mxu0 %v71
  %v142 = vpop.f32.mrf.mxu0
  %v143 = vadd.f32 0.0, %v142
  %v144 = vpop.f32.mrf.mxu0
  %145 = vmatprep.mubr.f32.mxu0 0.0
  %146 = vmatmul.mubr.f32.gmra.mxu0 %v74
  %v147 = vpop.f32.mrf.mxu0
  %v148 = vadd.f32 0.0, %v147
  %v149 = vpop.f32.mrf.mxu0
  %150 = vdwg.mxu0
  %151 = vmatprep.subr.mxu0 0.0
  %152 = vmatpush1.msra.mxu0 0.0
  %153 = vmatprep.subr.mxu0 0.0
  %154 = vmatpush1.msra.mxu0 0.0
  %155 = vmatprep.subr.mxu0 0.0
  %156 = vmatpush1.msra.mxu0 0.0
  %157 = vmatprep.subr.mxu0 0.0
  %158 = vmatpush1.msra.mxu0 0.0
  %159 = vmatprep.subr.mxu0 0.0
  %160 = vmatpush1.msra.mxu0 0.0
  %161 = vmatprep.subr.mxu0 0.0
  %162 = vmatpush1.msra.mxu0 0.0
  %163 = vmatprep.subr.mxu0 0.0
  %164 = vmatpush1.msra.mxu0 0.0
  %165 = vmatprep.subr.mxu0 0.0
  %166 = vmatpush1.msra.mxu0 0.0
  %167 = vmatprep.subr.mxu0 0.0
  %168 = vmatpush1.msra.mxu0 0.0
  %169 = vmatprep.subr.mxu0 0.0
  %170 = vmatpush1.msra.mxu0 0.0
  %171 = vmatprep.subr.mxu0 0.0
  %172 = vmatpush1.msra.mxu0 0.0
  %173 = vmatprep.subr.mxu0 0.0
  %174 = vmatpush1.msra.mxu0 0.0
  %175 = vmatprep.subr.mxu0 0.0
  %176 = vmatpush1.msra.mxu0 0.0
  %177 = vmatprep.subr.mxu0 0.0
  %178 = vmatpush1.msra.mxu0 0.0
  %179 = vmatprep.subr.mxu0 0.0
  %180 = vmatpush1.msra.mxu0 %v66
  %181 = vmatprep.subr.mxu0 0.0
  %182 = vmatpush1.msra.mxu0 %v65
  %183 = vmatprep.subr.mxu0 0.0
  %184 = vmatpush2.msra.mxu0 0.0
  %185 = vmatprep.subr.mxu0 0.0
  %186 = vmatpush2.msra.mxu0 0.0
  %187 = vmatprep.subr.mxu0 0.0
  %188 = vmatpush2.msra.mxu0 0.0
  %189 = vmatprep.subr.mxu0 0.0
  %190 = vmatpush2.msra.mxu0 0.0
  %191 = vmatprep.subr.mxu0 0.0
  %192 = vmatpush2.msra.mxu0 0.0
  %193 = vmatprep.subr.mxu0 0.0
  %194 = vmatpush2.msra.mxu0 0.0
  %195 = vmatprep.subr.mxu0 0.0
  %196 = vmatpush2.msra.mxu0 0.0
  %197 = vmatprep.subr.mxu0 0.0
  %198 = vmatpush2.msra.mxu0 0.0
  %199 = vmatprep.subr.mxu0 0.0
  %200 = vmatpush2.msra.mxu0 0.0
  %201 = vmatprep.subr.mxu0 0.0
  %202 = vmatpush2.msra.mxu0 0.0
  %203 = vmatprep.subr.mxu0 0.0
  %204 = vmatpush2.msra.mxu0 0.0
  %205 = vmatprep.subr.mxu0 0.0
  %206 = vmatpush2.msra.mxu0 0.0
  %207 = vmatprep.subr.mxu0 0.0
  %208 = vmatpush2.msra.mxu0 0.0
  %209 = vmatprep.subr.mxu0 0.0
  %210 = vmatpush2.msra.mxu0 0.0
  %211 = vmatprep.subr.mxu0 0.0
  %212 = vmatpush2.msra.mxu0 0.0
  %213 = vmatprep.subr.mxu0 0.0
  %214 = vmatpush2.msra.mxu0 0.0
  %215 = vmatprep.mubr.f32.mxu0 0.0
  %216 = vmatmul.mubr.f32.gmra.mxu0 %v71
  %v217 = vpop.f32.mrf.mxu0
  %v218 = vadd.f32 0.0, %v217
  %v219 = vpop.f32.mrf.mxu0
  %220 = vmatprep.mubr.f32.mxu0 0.0
  %221 = vmatmul.mubr.f32.gmra.mxu0 %v74
  %v222 = vpop.f32.mrf.mxu0
  %v223 = vadd.f32 0.0, %v222
  %v224 = vpop.f32.mrf.mxu0
  %225 = vdwg.mxu0
  %s226 = scalar_lea.vmem %s1, 16
  %v227 = vld [vmem:[%s226] sm:$0xff]
  %v228 = vld [vmem:[%s226 + $0x8] sm:$0xff]
  %v230 = vsel %vm69, %v227, 0
  %v233 = vsel %vm69, %v228, 0
  %235 = vmatprep.subr.mxu0 0.0
  %236 = vmatpush1.msra.mxu0 0.0
  %237 = vmatprep.subr.mxu0 0.0
  %238 = vmatpush1.msra.mxu0 0.0
  %239 = vmatprep.subr.mxu0 0.0
  %240 = vmatpush1.msra.mxu0 0.0
  %241 = vmatprep.subr.mxu0 0.0
  %242 = vmatpush1.msra.mxu0 0.0
  %243 = vmatprep.subr.mxu0 0.0
  %244 = vmatpush1.msra.mxu0 0.0
  %245 = vmatprep.subr.mxu0 0.0
  %246 = vmatpush1.msra.mxu0 0.0
  %247 = vmatprep.subr.mxu0 0.0
  %248 = vmatpush1.msra.mxu0 0.0
  %249 = vmatprep.subr.mxu0 0.0
  %250 = vmatpush1.msra.mxu0 0.0
  %251 = vmatprep.subr.mxu0 0.0
  %252 = vmatpush1.msra.mxu0 0.0
  %253 = vmatprep.subr.mxu0 0.0
  %254 = vmatpush1.msra.mxu0 0.0
  %255 = vmatprep.subr.mxu0 0.0
  %256 = vmatpush1.msra.mxu0 0.0
  %257 = vmatprep.subr.mxu0 0.0
  %258 = vmatpush1.msra.mxu0 0.0
  %259 = vmatprep.subr.mxu0 0.0
  %260 = vmatpush1.msra.mxu0 0.0
  %261 = vmatprep.subr.mxu0 0.0
  %262 = vmatpush1.msra.mxu0 0.0
  %263 = vmatprep.subr.mxu0 0.0
  %264 = vmatpush1.msra.mxu0 %v63
  %265 = vmatprep.subr.mxu0 0.0
  %266 = vmatpush1.msra.mxu0 %v62
  %267 = vmatprep.subr.mxu0 0.0
  %268 = vmatpush2.msra.mxu0 0.0
  %269 = vmatprep.subr.mxu0 0.0
  %270 = vmatpush2.msra.mxu0 0.0
  %271 = vmatprep.subr.mxu0 0.0
  %272 = vmatpush2.msra.mxu0 0.0
  %273 = vmatprep.subr.mxu0 0.0
  %274 = vmatpush2.msra.mxu0 0.0
  %275 = vmatprep.subr.mxu0 0.0
  %276 = vmatpush2.msra.mxu0 0.0
  %277 = vmatprep.subr.mxu0 0.0
  %278 = vmatpush2.msra.mxu0 0.0
  %279 = vmatprep.subr.mxu0 0.0
  %280 = vmatpush2.msra.mxu0 0.0
  %281 = vmatprep.subr.mxu0 0.0
  %282 = vmatpush2.msra.mxu0 0.0
  %283 = vmatprep.subr.mxu0 0.0
  %284 = vmatpush2.msra.mxu0 0.0
  %285 = vmatprep.subr.mxu0 0.0
  %286 = vmatpush2.msra.mxu0 0.0
  %287 = vmatprep.subr.mxu0 0.0
  %288 = vmatpush2.msra.mxu0 0.0
  %289 = vmatprep.subr.mxu0 0.0
  %290 = vmatpush2.msra.mxu0 0.0
  %291 = vmatprep.subr.mxu0 0.0
  %292 = vmatpush2.msra.mxu0 0.0
  %293 = vmatprep.subr.mxu0 0.0
  %294 = vmatpush2.msra.mxu0 0.0
  %295 = vmatprep.subr.mxu0 0.0
  %296 = vmatpush2.msra.mxu0 0.0
  %297 = vmatprep.subr.mxu0 0.0
  %298 = vmatpush2.msra.mxu0 0.0
  %299 = vmatprep.mubr.f32.mxu0 0.0
  %300 = vmatmul.mubr.f32.gmra.mxu0 %v230
  %v301 = vpop.f32.mrf.mxu0
  %v302 = vadd.f32 0.0, %v301
  %v303 = vpop.f32.mrf.mxu0
  %304 = vmatprep.mubr.f32.mxu0 0.0
  %305 = vmatmul.mubr.f32.gmra.mxu0 %v233
  %v306 = vpop.f32.mrf.mxu0
  %v307 = vadd.f32 0.0, %v306
  %v308 = vpop.f32.mrf.mxu0
  %309 = vdwg.mxu0
  %310 = vmatprep.subr.mxu0 0.0
  %311 = vmatpush1.msra.mxu0 0.0
  %312 = vmatprep.subr.mxu0 0.0
  %313 = vmatpush1.msra.mxu0 0.0
  %314 = vmatprep.subr.mxu0 0.0
  %315 = vmatpush1.msra.mxu0 0.0
  %316 = vmatprep.subr.mxu0 0.0
  %317 = vmatpush1.msra.mxu0 0.0
  %318 = vmatprep.subr.mxu0 0.0
  %319 = vmatpush1.msra.mxu0 0.0
  %320 = vmatprep.subr.mxu0 0.0
  %321 = vmatpush1.msra.mxu0 0.0
  %322 = vmatprep.subr.mxu0 0.0
  %323 = vmatpush1.msra.mxu0 0.0
  %324 = vmatprep.subr.mxu0 0.0
  %325 = vmatpush1.msra.mxu0 0.0
  %326 = vmatprep.subr.mxu0 0.0
  %327 = vmatpush1.msra.mxu0 0.0
  %328 = vmatprep.subr.mxu0 0.0
  %329 = vmatpush1.msra.mxu0 0.0
  %330 = vmatprep.subr.mxu0 0.0
  %331 = vmatpush1.msra.mxu0 0.0
  %332 = vmatprep.subr.mxu0 0.0
  %333 = vmatpush1.msra.mxu0 0.0
  %334 = vmatprep.subr.mxu0 0.0
  %335 = vmatpush1.msra.mxu0 0.0
  %336 = vmatprep.subr.mxu0 0.0
  %337 = vmatpush1.msra.mxu0 0.0
  %338 = vmatprep.subr.mxu0 0.0
  %339 = vmatpush1.msra.mxu0 %v66
  %340 = vmatprep.subr.mxu0 0.0
  %341 = vmatpush1.msra.mxu0 %v65
  %342 = vmatprep.subr.mxu0 0.0
  %343 = vmatpush2.msra.mxu0 0.0
  %344 = vmatprep.subr.mxu0 0.0
  %345 = vmatpush2.msra.mxu0 0.0
  %346 = vmatprep.subr.mxu0 0.0
  %347 = vmatpush2.msra.mxu0 0.0
  %348 = vmatprep.subr.mxu0 0.0
  %349 = vmatpush2.msra.mxu0 0.0
  %350 = vmatprep.subr.mxu0 0.0
  %351 = vmatpush2.msra.mxu0 0.0
  %352 = vmatprep.subr.mxu0 0.0
  %353 = vmatpush2.msra.mxu0 0.0
  %354 = vmatprep.subr.mxu0 0.0
  %355 = vmatpush2.msra.mxu0 0.0
  %356 = vmatprep.subr.mxu0 0.0
  %357 = vmatpush2.msra.mxu0 0.0
  %358 = vmatprep.subr.mxu0 0.0
  %359 = vmatpush2.msra.mxu0 0.0
  %360 = vmatprep.subr.mxu0 0.0
  %361 = vmatpush2.msra.mxu0 0.0
  %362 = vmatprep.subr.mxu0 0.0
  %363 = vmatpush2.msra.mxu0 0.0
  %364 = vmatprep.subr.mxu0 0.0
  %365 = vmatpush2.msra.mxu0 0.0
  %366 = vmatprep.subr.mxu0 0.0
  %367 = vmatpush2.msra.mxu0 0.0
  %368 = vmatprep.subr.mxu0 0.0
  %369 = vmatpush2.msra.mxu0 0.0
  %370 = vmatprep.subr.mxu0 0.0
  %371 = vmatpush2.msra.mxu0 0.0
  %372 = vmatprep.subr.mxu0 0.0
  %373 = vmatpush2.msra.mxu0 0.0
  %374 = vmatprep.mubr.f32.mxu0 0.0
  %375 = vmatmul.mubr.f32.gmra.mxu0 %v230
  %v376 = vpop.f32.mrf.mxu0
  %v377 = vadd.f32 0.0, %v376
  %v378 = vpop.f32.mrf.mxu0
  %379 = vmatprep.mubr.f32.mxu0 0.0
  %380 = vmatmul.mubr.f32.gmra.mxu0 %v233
  %v381 = vpop.f32.mrf.mxu0
  %v382 = vadd.f32 0.0, %v381
  %v383 = vpop.f32.mrf.mxu0
  %384 = vdwg.mxu0
  %s385 = scalar_lea.vmem %s1, 32
  %v386 = vld [vmem:[%s385] sm:$0xff]
  %v387 = vld [vmem:[%s385 + $0x8] sm:$0xff]
  %v389 = vsel %vm69, %v386, 0
  %v392 = vsel %vm69, %v387, 0
  %394 = vmatprep.subr.mxu0 0.0
  %395 = vmatpush1.msra.mxu0 0.0
  %396 = vmatprep.subr.mxu0 0.0
  %397 = vmatpush1.msra.mxu0 0.0
  %398 = vmatprep.subr.mxu0 0.0
  %399 = vmatpush1.msra.mxu0 0.0
  %400 = vmatprep.subr.mxu0 0.0
  %401 = vmatpush1.msra.mxu0 0.0
  %402 = vmatprep.subr.mxu0 0.0
  %403 = vmatpush1.msra.mxu0 0.0
  %404 = vmatprep.subr.mxu0 0.0
  %405 = vmatpush1.msra.mxu0 0.0
  %406 = vmatprep.subr.mxu0 0.0
  %407 = vmatpush1.msra.mxu0 0.0
  %408 = vmatprep.subr.mxu0 0.0
  %409 = vmatpush1.msra.mxu0 0.0
  %410 = vmatprep.subr.mxu0 0.0
  %411 = vmatpush1.msra.mxu0 0.0
  %412 = vmatprep.subr.mxu0 0.0
  %413 = vmatpush1.msra.mxu0 0.0
  %414 = vmatprep.subr.mxu0 0.0
  %415 = vmatpush1.msra.mxu0 0.0
  %416 = vmatprep.subr.mxu0 0.0
  %417 = vmatpush1.msra.mxu0 0.0
  %418 = vmatprep.subr.mxu0 0.0
  %419 = vmatpush1.msra.mxu0 0.0
  %420 = vmatprep.subr.mxu0 0.0
  %421 = vmatpush1.msra.mxu0 0.0
  %422 = vmatprep.subr.mxu0 0.0
  %423 = vmatpush1.msra.mxu0 %v63
  %424 = vmatprep.subr.mxu0 0.0
  %425 = vmatpush1.msra.mxu0 %v62
  %426 = vmatprep.subr.mxu0 0.0
  %427 = vmatpush2.msra.mxu0 0.0
  %428 = vmatprep.subr.mxu0 0.0
  %429 = vmatpush2.msra.mxu0 0.0
  %430 = vmatprep.subr.mxu0 0.0
  %431 = vmatpush2.msra.mxu0 0.0
  %432 = vmatprep.subr.mxu0 0.0
  %433 = vmatpush2.msra.mxu0 0.0
  %434 = vmatprep.subr.mxu0 0.0
  %435 = vmatpush2.msra.mxu0 0.0
  %436 = vmatprep.subr.mxu0 0.0
  %437 = vmatpush2.msra.mxu0 0.0
  %438 = vmatprep.subr.mxu0 0.0
  %439 = vmatpush2.msra.mxu0 0.0
  %440 = vmatprep.subr.mxu0 0.0
  %441 = vmatpush2.msra.mxu0 0.0
  %442 = vmatprep.subr.mxu0 0.0
  %443 = vmatpush2.msra.mxu0 0.0
  %444 = vmatprep.subr.mxu0 0.0
  %445 = vmatpush2.msra.mxu0 0.0
  %446 = vmatprep.subr.mxu0 0.0
  %447 = vmatpush2.msra.mxu0 0.0
  %448 = vmatprep.subr.mxu0 0.0
  %449 = vmatpush2.msra.mxu0 0.0
  %450 = vmatprep.subr.mxu0 0.0
  %451 = vmatpush2.msra.mxu0 0.0
  %452 = vmatprep.subr.mxu0 0.0
  %453 = vmatpush2.msra.mxu0 0.0
  %454 = vmatprep.subr.mxu0 0.0
  %455 = vmatpush2.msra.mxu0 0.0
  %456 = vmatprep.subr.mxu0 0.0
  %457 = vmatpush2.msra.mxu0 0.0
  %458 = vmatprep.mubr.f32.mxu0 0.0
  %459 = vmatmul.mubr.f32.gmra.mxu0 %v389
  %v460 = vpop.f32.mrf.mxu0
  %v461 = vadd.f32 0.0, %v460
  %v462 = vpop.f32.mrf.mxu0
  %463 = vmatprep.mubr.f32.mxu0 0.0
  %464 = vmatmul.mubr.f32.gmra.mxu0 %v392
  %v465 = vpop.f32.mrf.mxu0
  %v466 = vadd.f32 0.0, %v465
  %v467 = vpop.f32.mrf.mxu0
  %468 = vdwg.mxu0
  %469 = vmatprep.subr.mxu0 0.0
  %470 = vmatpush1.msra.mxu0 0.0
  %471 = vmatprep.subr.mxu0 0.0
  %472 = vmatpush1.msra.mxu0 0.0
  %473 = vmatprep.subr.mxu0 0.0
  %474 = vmatpush1.msra.mxu0 0.0
  %475 = vmatprep.subr.mxu0 0.0
  %476 = vmatpush1.msra.mxu0 0.0
  %477 = vmatprep.subr.mxu0 0.0
  %478 = vmatpush1.msra.mxu0 0.0
  %479 = vmatprep.subr.mxu0 0.0
  %480 = vmatpush1.msra.mxu0 0.0
  %481 = vmatprep.subr.mxu0 0.0
  %482 = vmatpush1.msra.mxu0 0.0
  %483 = vmatprep.subr.mxu0 0.0
  %484 = vmatpush1.msra.mxu0 0.0
  %485 = vmatprep.subr.mxu0 0.0
  %486 = vmatpush1.msra.mxu0 0.0
  %487 = vmatprep.subr.mxu0 0.0
  %488 = vmatpush1.msra.mxu0 0.0
  %489 = vmatprep.subr.mxu0 0.0
  %490 = vmatpush1.msra.mxu0 0.0
  %491 = vmatprep.subr.mxu0 0.0
  %492 = vmatpush1.msra.mxu0 0.0
  %493 = vmatprep.subr.mxu0 0.0
  %494 = vmatpush1.msra.mxu0 0.0
  %495 = vmatprep.subr.mxu0 0.0
  %496 = vmatpush1.msra.mxu0 0.0
  %497 = vmatprep.subr.mxu0 0.0
  %498 = vmatpush1.msra.mxu0 %v66
  %499 = vmatprep.subr.mxu0 0.0
  %500 = vmatpush1.msra.mxu0 %v65
  %501 = vmatprep.subr.mxu0 0.0
  %502 = vmatpush2.msra.mxu0 0.0
  %503 = vmatprep.subr.mxu0 0.0
  %504 = vmatpush2.msra.mxu0 0.0
  %505 = vmatprep.subr.mxu0 0.0
  %506 = vmatpush2.msra.mxu0 0.0
  %507 = vmatprep.subr.mxu0 0.0
  %508 = vmatpush2.msra.mxu0 0.0
  %509 = vmatprep.subr.mxu0 0.0
  %510 = vmatpush2.msra.mxu0 0.0
  %511 = vmatprep.subr.mxu0 0.0
  %512 = vmatpush2.msra.mxu0 0.0
  %513 = vmatprep.subr.mxu0 0.0
  %514 = vmatpush2.msra.mxu0 0.0
  %515 = vmatprep.subr.mxu0 0.0
  %516 = vmatpush2.msra.mxu0 0.0
  %517 = vmatprep.subr.mxu0 0.0
  %518 = vmatpush2.msra.mxu0 0.0
  %519 = vmatprep.subr.mxu0 0.0
  %520 = vmatpush2.msra.mxu0 0.0
  %521 = vmatprep.subr.mxu0 0.0
  %522 = vmatpush2.msra.mxu0 0.0
  %523 = vmatprep.subr.mxu0 0.0
  %524 = vmatpush2.msra.mxu0 0.0
  %525 = vmatprep.subr.mxu0 0.0
  %526 = vmatpush2.msra.mxu0 0.0
  %527 = vmatprep.subr.mxu0 0.0
  %528 = vmatpush2.msra.mxu0 0.0
  %529 = vmatprep.subr.mxu0 0.0
  %530 = vmatpush2.msra.mxu0 0.0
  %531 = vmatprep.subr.mxu0 0.0
  %532 = vmatpush2.msra.mxu0 0.0
  %533 = vmatprep.mubr.f32.mxu0 0.0
  %534 = vmatmul.mubr.f32.gmra.mxu0 %v389
  %v535 = vpop.f32.mrf.mxu0
  %v536 = vadd.f32 0.0, %v535
  %v537 = vpop.f32.mrf.mxu0
  %538 = vmatprep.mubr.f32.mxu0 0.0
  %539 = vmatmul.mubr.f32.gmra.mxu0 %v392
  %v540 = vpop.f32.mrf.mxu0
  %v541 = vadd.f32 0.0, %v540
  %v542 = vpop.f32.mrf.mxu0
  %543 = vdwg.mxu0
  %s544 = scalar_lea.vmem %s1, 48
  %v545 = vld [vmem:[%s544] sm:$0xff]
  %v546 = vld [vmem:[%s544 + $0x8] sm:$0xff]
  %v548 = vsel %vm69, %v545, 0
  %v551 = vsel %vm69, %v546, 0
  %553 = vmatprep.subr.mxu0 0.0
  %554 = vmatpush1.msra.mxu0 0.0
  %555 = vmatprep.subr.mxu0 0.0
  %556 = vmatpush1.msra.mxu0 0.0
  %557 = vmatprep.subr.mxu0 0.0
  %558 = vmatpush1.msra.mxu0 0.0
  %559 = vmatprep.subr.mxu0 0.0
  %560 = vmatpush1.msra.mxu0 0.0
  %561 = vmatprep.subr.mxu0 0.0
  %562 = vmatpush1.msra.mxu0 0.0
  %563 = vmatprep.subr.mxu0 0.0
  %564 = vmatpush1.msra.mxu0 0.0
  %565 = vmatprep.subr.mxu0 0.0
  %566 = vmatpush1.msra.mxu0 0.0
  %567 = vmatprep.subr.mxu0 0.0
  %568 = vmatpush1.msra.mxu0 0.0
  %569 = vmatprep.subr.mxu0 0.0
  %570 = vmatpush1.msra.mxu0 0.0
  %571 = vmatprep.subr.mxu0 0.0
  %572 = vmatpush1.msra.mxu0 0.0
  %573 = vmatprep.subr.mxu0 0.0
  %574 = vmatpush1.msra.mxu0 0.0
  %575 = vmatprep.subr.mxu0 0.0
  %576 = vmatpush1.msra.mxu0 0.0
  %577 = vmatprep.subr.mxu0 0.0
  %578 = vmatpush1.msra.mxu0 0.0
  %579 = vmatprep.subr.mxu0 0.0
  %580 = vmatpush1.msra.mxu0 0.0
  %581 = vmatprep.subr.mxu0 0.0
  %582 = vmatpush1.msra.mxu0 %v63
  %583 = vmatprep.subr.mxu0 0.0
  %584 = vmatpush1.msra.mxu0 %v62
  %585 = vmatprep.subr.mxu0 0.0
  %586 = vmatpush2.msra.mxu0 0.0
  %587 = vmatprep.subr.mxu0 0.0
  %588 = vmatpush2.msra.mxu0 0.0
  %589 = vmatprep.subr.mxu0 0.0
  %590 = vmatpush2.msra.mxu0 0.0
  %591 = vmatprep.subr.mxu0 0.0
  %592 = vmatpush2.msra.mxu0 0.0
  %593 = vmatprep.subr.mxu0 0.0
  %594 = vmatpush2.msra.mxu0 0.0
  %595 = vmatprep.subr.mxu0 0.0
  %596 = vmatpush2.msra.mxu0 0.0
  %597 = vmatprep.subr.mxu0 0.0
  %598 = vmatpush2.msra.mxu0 0.0
  %599 = vmatprep.subr.mxu0 0.0
  %600 = vmatpush2.msra.mxu0 0.0
  %601 = vmatprep.subr.mxu0 0.0
  %602 = vmatpush2.msra.mxu0 0.0
  %603 = vmatprep.subr.mxu0 0.0
  %604 = vmatpush2.msra.mxu0 0.0
  %605 = vmatprep.subr.mxu0 0.0
  %606 = vmatpush2.msra.mxu0 0.0
  %607 = vmatprep.subr.mxu0 0.0
  %608 = vmatpush2.msra.mxu0 0.0
  %609 = vmatprep.subr.mxu0 0.0
  %610 = vmatpush2.msra.mxu0 0.0
  %611 = vmatprep.subr.mxu0 0.0
  %612 = vmatpush2.msra.mxu0 0.0
  %613 = vmatprep.subr.mxu0 0.0
  %614 = vmatpush2.msra.mxu0 0.0
  %615 = vmatprep.subr.mxu0 0.0
  %616 = vmatpush2.msra.mxu0 0.0
  %617 = vmatprep.mubr.f32.mxu0 0.0
  %618 = vmatmul.mubr.f32.gmra.mxu0 %v548
  %v619 = vpop.f32.mrf.mxu0
  %v620 = vadd.f32 0.0, %v619
  %v621 = vpop.f32.mrf.mxu0
  %622 = vmatprep.mubr.f32.mxu0 0.0
  %623 = vmatmul.mubr.f32.gmra.mxu0 %v551
  %v624 = vpop.f32.mrf.mxu0
  %v625 = vadd.f32 0.0, %v624
  %v626 = vpop.f32.mrf.mxu0
  %627 = vdwg.mxu0
  %628 = vmatprep.subr.mxu0 0.0
  %629 = vmatpush1.msra.mxu0 0.0
  %630 = vmatprep.subr.mxu0 0.0
  %631 = vmatpush1.msra.mxu0 0.0
  %632 = vmatprep.subr.mxu0 0.0
  %633 = vmatpush1.msra.mxu0 0.0
  %634 = vmatprep.subr.mxu0 0.0
  %635 = vmatpush1.msra.mxu0 0.0
  %636 = vmatprep.subr.mxu0 0.0
  %637 = vmatpush1.msra.mxu0 0.0
  %638 = vmatprep.subr.mxu0 0.0
  %639 = vmatpush1.msra.mxu0 0.0
  %640 = vmatprep.subr.mxu0 0.0
  %641 = vmatpush1.msra.mxu0 0.0
  %642 = vmatprep.subr.mxu0 0.0
  %643 = vmatpush1.msra.mxu0 0.0
  %644 = vmatprep.subr.mxu0 0.0
  %645 = vmatpush1.msra.mxu0 0.0
  %646 = vmatprep.subr.mxu0 0.0
  %647 = vmatpush1.msra.mxu0 0.0
  %648 = vmatprep.subr.mxu0 0.0
  %649 = vmatpush1.msra.mxu0 0.0
  %650 = vmatprep.subr.mxu0 0.0
  %651 = vmatpush1.msra.mxu0 0.0
  %652 = vmatprep.subr.mxu0 0.0
  %653 = vmatpush1.msra.mxu0 0.0
  %654 = vmatprep.subr.mxu0 0.0
  %655 = vmatpush1.msra.mxu0 0.0
  %656 = vmatprep.subr.mxu0 0.0
  %657 = vmatpush1.msra.mxu0 %v66
  %658 = vmatprep.subr.mxu0 0.0
  %659 = vmatpush1.msra.mxu0 %v65
  %660 = vmatprep.subr.mxu0 0.0
  %661 = vmatpush2.msra.mxu0 0.0
  %662 = vmatprep.subr.mxu0 0.0
  %663 = vmatpush2.msra.mxu0 0.0
  %664 = vmatprep.subr.mxu0 0.0
  %665 = vmatpush2.msra.mxu0 0.0
  %666 = vmatprep.subr.mxu0 0.0
  %667 = vmatpush2.msra.mxu0 0.0
  %668 = vmatprep.subr.mxu0 0.0
  %669 = vmatpush2.msra.mxu0 0.0
  %670 = vmatprep.subr.mxu0 0.0
  %671 = vmatpush2.msra.mxu0 0.0
  %672 = vmatprep.subr.mxu0 0.0
  %673 = vmatpush2.msra.mxu0 0.0
  %674 = vmatprep.subr.mxu0 0.0
  %675 = vmatpush2.msra.mxu0 0.0
  %676 = vmatprep.subr.mxu0 0.0
  %677 = vmatpush2.msra.mxu0 0.0
  %678 = vmatprep.subr.mxu0 0.0
  %679 = vmatpush2.msra.mxu0 0.0
  %680 = vmatprep.subr.mxu0 0.0
  %681 = vmatpush2.msra.mxu0 0.0
  %682 = vmatprep.subr.mxu0 0.0
  %683 = vmatpush2.msra.mxu0 0.0
  %684 = vmatprep.subr.mxu0 0.0
  %685 = vmatpush2.msra.mxu0 0.0
  %686 = vmatprep.subr.mxu0 0.0
  %687 = vmatpush2.msra.mxu0 0.0
  %688 = vmatprep.subr.mxu0 0.0
  %689 = vmatpush2.msra.mxu0 0.0
  %690 = vmatprep.subr.mxu0 0.0
  %691 = vmatpush2.msra.mxu0 0.0
  %692 = vmatprep.mubr.f32.mxu0 0.0
  %693 = vmatmul.mubr.f32.gmra.mxu0 %v548
  %v694 = vpop.f32.mrf.mxu0
  %v695 = vadd.f32 0.0, %v694
  %v696 = vpop.f32.mrf.mxu0
  %697 = vmatprep.mubr.f32.mxu0 0.0
  %698 = vmatmul.mubr.f32.gmra.mxu0 %v551
  %v699 = vpop.f32.mrf.mxu0
  %v700 = vadd.f32 0.0, %v699
  %v701 = vpop.f32.mrf.mxu0
  %702 = vdwg.mxu0
  %v703 = vadd.f32 %v143, %v302
  %v704 = vadd.f32 %v148, %v307
  %v705 = vadd.f32 %v218, %v377
  %v706 = vadd.f32 %v223, %v382
  %v707 = vadd.f32 %v703, %v461
  %v708 = vadd.f32 %v704, %v466
  %v709 = vadd.f32 %v705, %v536
  %v710 = vadd.f32 %v706, %v541
  %v711 = vadd.f32 %v707, %v620
  %v712 = vadd.f32 %v708, %v625
  %v713 = vadd.f32 %v709, %v695
  %v714 = vadd.f32 %v710, %v700
  %v715 = vsub.f32 %v143, %v461
  %v716 = vsub.f32 %v148, %v466
  %v717 = vsub.f32 %v218, %v536
  %v718 = vsub.f32 %v223, %v541
  %v719 = vsub.f32 %v143, %v302
  %v720 = vsub.f32 %v148, %v307
  %v721 = vsub.f32 %v218, %v377
  %v722 = vsub.f32 %v223, %v382
  %v723 = vadd.f32 %v719, %v461
  %v724 = vadd.f32 %v720, %v466
  %v725 = vadd.f32 %v721, %v536
  %v726 = vadd.f32 %v722, %v541
  %v727 = vsub.f32 %v723, %v620
  %v728 = vsub.f32 %v724, %v625
  %v729 = vsub.f32 %v725, %v695
  %v730 = vsub.f32 %v726, %v700
  %v731 = vsub.f32 %v620, %v302
  %v732 = vsub.f32 %v625, %v307
  %v733 = vsub.f32 %v695, %v377
  %v734 = vsub.f32 %v700, %v382
  %739 = vrot.lane.b32.xlu0 %v715, 8
  %v740 = vpop.permute.xlu0 %739
  %741 = vrot.lane.b32.xlu0 %v716, 8
  %v742 = vpop.permute.xlu0 %741
  %743 = vrot.lane.b32.xlu0 %v717, 8
  %v744 = vpop.permute.xlu0 %743
  %745 = vrot.lane.b32.xlu0 %v718, 8
  %v746 = vpop.permute.xlu0 %745
  %755 = vrot.lane.b32.xlu0 %v727, 16
  %v756 = vpop.permute.xlu0 %755
  %757 = vrot.lane.b32.xlu0 %v728, 16
  %v758 = vpop.permute.xlu0 %757
  %759 = vrot.lane.b32.xlu0 %v729, 16
  %v760 = vpop.permute.xlu0 %759
  %761 = vrot.lane.b32.xlu0 %v730, 16
  %v762 = vpop.permute.xlu0 %761
  %767 = vrot.lane.b32.xlu0 %v715, 24
  %v768 = vpop.permute.xlu0 %767
  %769 = vrot.lane.b32.xlu0 %v716, 24
  %v770 = vpop.permute.xlu0 %769
  %771 = vrot.lane.b32.xlu0 %v717, 24
  %v772 = vpop.permute.xlu0 %771
  %773 = vrot.lane.b32.xlu0 %v718, 24
  %v774 = vpop.permute.xlu0 %773
  %vm779 = vcmask 64512
  %v780 = vsel %vm779, %v711, %v740
  %v781 = vsel %vm779, %v712, %v742
  %v782 = vsel %vm779, %v713, %v744
  %v783 = vsel %vm779, %v714, %v746
  %v784 = vsel %vm69, %v780, %v756
  %v785 = vsel %vm69, %v781, %v758
  %v786 = vsel %vm69, %v782, %v760
  %v787 = vsel %vm69, %v783, %v762
  %vm788 = vcmask 195584
  %v789 = vsel %vm788, %v784, %v768
  %v790 = vsel %vm788, %v785, %v770
  %v791 = vsel %vm788, %v786, %v772
  %v792 = vsel %vm788, %v787, %v774
  %v793 = vsub.f32 0.0, %v731
  %v794 = vsub.f32 0.0, %v732
  %v795 = vsub.f32 0.0, %v733
  %v796 = vsub.f32 0.0, %v734
  %801 = vrot.lane.b32.xlu0 %v731, 8
  %v802 = vpop.permute.xlu0 %801
  %803 = vrot.lane.b32.xlu0 %v732, 8
  %v804 = vpop.permute.xlu0 %803
  %805 = vrot.lane.b32.xlu0 %v733, 8
  %v806 = vpop.permute.xlu0 %805
  %807 = vrot.lane.b32.xlu0 %v734, 8
  %v808 = vpop.permute.xlu0 %807
  %817 = vrot.lane.b32.xlu0 %v793, 24
  %v818 = vpop.permute.xlu0 %817
  %819 = vrot.lane.b32.xlu0 %v794, 24
  %v820 = vpop.permute.xlu0 %819
  %821 = vrot.lane.b32.xlu0 %v795, 24
  %v822 = vpop.permute.xlu0 %821
  %823 = vrot.lane.b32.xlu0 %v796, 24
  %v824 = vpop.permute.xlu0 %823
  %v829 = vsel %vm779, 0.0, %v802
  %v830 = vsel %vm779, 0.0, %v804
  %v831 = vsel %vm779, 0.0, %v806
  %v832 = vsel %vm779, 0.0, %v808
  %v833 = vsel %vm69, %v829, 0.0
  %v834 = vsel %vm69, %v830, 0.0
  %v835 = vsel %vm69, %v831, 0.0
  %v836 = vsel %vm69, %v832, 0.0
  %v837 = vsel %vm788, %v833, %v818
  %v838 = vsel %vm788, %v834, %v820
  %v839 = vsel %vm788, %v835, %v822
  %v840 = vsel %vm788, %v836, %v824
  %v841 = vld [vmem:[%s2] sm:$0xff]
  %v842 = vld [vmem:[%s2 + $0x8] sm:$0xff]
  %v843 = vld [vmem:[%s2 + $0x10] sm:$0xff]
  %v844 = vld [vmem:[%s2 + $0x18] sm:$0xff]
  %v845 = vld [vmem:[%s3] sm:$0x1]
  %v847 = vlaneseq
  %v848 = vshrl.u32 %v847, 7
  %v849 = vsub.s32 0, %v848
  %v850 = vrot.slane %v845, %v849
  %vm852 = vcmask 261120
  %v854 = vsel %vm852, %v789, 0
  %v857 = vsel %vm852, %v790, 0
  %v860 = vsel %vm852, %v791, 0
  %v863 = vsel %vm852, %v792, 0
  %865 = vmatprep.subr.mxu0 0.0
  %866 = vmatpush1.msra.mxu0 0.0
  %867 = vmatprep.subr.mxu0 0.0
  %868 = vmatpush1.msra.mxu0 0.0
  %869 = vmatprep.subr.mxu0 0.0
  %870 = vmatpush1.msra.mxu0 0.0
  %871 = vmatprep.subr.mxu0 0.0
  %872 = vmatpush1.msra.mxu0 0.0
  %873 = vmatprep.subr.mxu0 0.0
  %874 = vmatpush1.msra.mxu0 0.0
  %875 = vmatprep.subr.mxu0 0.0
  %876 = vmatpush1.msra.mxu0 0.0
  %877 = vmatprep.subr.mxu0 0.0
  %878 = vmatpush1.msra.mxu0 0.0
  %879 = vmatprep.subr.mxu0 0.0
  %880 = vmatpush1.msra.mxu0 0.0
  %881 = vmatprep.subr.mxu0 0.0
  %882 = vmatpush1.msra.mxu0 0.0
  %883 = vmatprep.subr.mxu0 0.0
  %884 = vmatpush1.msra.mxu0 0.0
  %885 = vmatprep.subr.mxu0 0.0
  %886 = vmatpush1.msra.mxu0 0.0
  %887 = vmatprep.subr.mxu0 0.0
  %888 = vmatpush1.msra.mxu0 0.0
  %889 = vmatprep.subr.mxu0 0.0
  %890 = vmatpush1.msra.mxu0 %v844
  %891 = vmatprep.subr.mxu0 0.0
  %892 = vmatpush1.msra.mxu0 %v843
  %893 = vmatprep.subr.mxu0 0.0
  %894 = vmatpush1.msra.mxu0 %v842
  %895 = vmatprep.subr.mxu0 0.0
  %896 = vmatpush1.msra.mxu0 %v841
  %897 = vmatprep.subr.mxu0 0.0
  %898 = vmatpush2.msra.mxu0 0.0
  %899 = vmatprep.subr.mxu0 0.0
  %900 = vmatpush2.msra.mxu0 0.0
  %901 = vmatprep.subr.mxu0 0.0
  %902 = vmatpush2.msra.mxu0 0.0
  %903 = vmatprep.subr.mxu0 0.0
  %904 = vmatpush2.msra.mxu0 0.0
  %905 = vmatprep.subr.mxu0 0.0
  %906 = vmatpush2.msra.mxu0 0.0
  %907 = vmatprep.subr.mxu0 0.0
  %908 = vmatpush2.msra.mxu0 0.0
  %909 = vmatprep.subr.mxu0 0.0
  %910 = vmatpush2.msra.mxu0 0.0
  %911 = vmatprep.subr.mxu0 0.0
  %912 = vmatpush2.msra.mxu0 0.0
  %913 = vmatprep.subr.mxu0 0.0
  %914 = vmatpush2.msra.mxu0 0.0
  %915 = vmatprep.subr.mxu0 0.0
  %916 = vmatpush2.msra.mxu0 0.0
  %917 = vmatprep.subr.mxu0 0.0
  %918 = vmatpush2.msra.mxu0 0.0
  %919 = vmatprep.subr.mxu0 0.0
  %920 = vmatpush2.msra.mxu0 0.0
  %921 = vmatprep.subr.mxu0 0.0
  %922 = vmatpush2.msra.mxu0 0.0
  %923 = vmatprep.subr.mxu0 0.0
  %924 = vmatpush2.msra.mxu0 0.0
  %925 = vmatprep.subr.mxu0 0.0
  %926 = vmatpush2.msra.mxu0 0.0
  %927 = vmatprep.subr.mxu0 0.0
  %928 = vmatpush2.msra.mxu0 0.0
  %929 = vmatprep.mubr.f32.mxu0 0.0
  %930 = vmatmul.mubr.f32.gmra.mxu0 %v854
  %v931 = vpop.f32.mrf.mxu0
  %v932 = vadd.f32 %v850, %v931
  %v933 = vpop.f32.mrf.mxu0
  %934 = vmatprep.mubr.f32.mxu0 0.0
  %935 = vmatmul.mubr.f32.gmra.mxu0 %v857
  %v936 = vpop.f32.mrf.mxu0
  %v937 = vadd.f32 %v850, %v936
  %v938 = vpop.f32.mrf.mxu0
  %939 = vmatprep.mubr.f32.mxu0 0.0
  %940 = vmatmul.mubr.f32.gmra.mxu0 %v860
  %v941 = vpop.f32.mrf.mxu0
  %v942 = vadd.f32 %v850, %v941
  %v943 = vpop.f32.mrf.mxu0
  %944 = vmatprep.mubr.f32.mxu0 0.0
  %945 = vmatmul.mubr.f32.gmra.mxu0 %v863
  %v946 = vpop.f32.mrf.mxu0
  %v947 = vadd.f32 %v850, %v946
  %v948 = vpop.f32.mrf.mxu0
  %949 = vdwg.mxu0
  %v950 = vxor.u32 %v932, 2147483648
  %v951 = vxor.u32 %v937, 2147483648
  %v952 = vxor.u32 %v942, 2147483648
  %v953 = vxor.u32 %v947, 2147483648
  %v954 = vmul.f32 %v950, 1.442695
  %v955 = vpow.pop %v954
  %v956 = vmul.f32 %v951, 1.442695
  %v957 = vpow.pop %v956
  %v958 = vmul.f32 %v952, 1.442695
  %v959 = vpow.pop %v958
  %v960 = vmul.f32 %v953, 1.442695
  %v961 = vpow.pop %v960
  %v962 = vadd.f32 %v955, 1.0
  %v963 = vadd.f32 %v957, 1.0
  %v964 = vadd.f32 %v959, 1.0
  %v965 = vadd.f32 %v961, 1.0
  %v966 = vrcp.pop %v962
  %v967 = vmul.f32 1.0, %v966
  %v968 = vrcp.pop %v963
  %v969 = vmul.f32 1.0, %v968
  %v970 = vrcp.pop %v964
  %v971 = vmul.f32 1.0, %v970
  %v972 = vrcp.pop %v965
  %v973 = vmul.f32 1.0, %v972
  %978 = vrot.lane.b32.xlu0 %v967, 64
  %v979 = vpop.permute.xlu0 %978
  %980 = vrot.lane.b32.xlu0 %v969, 64
  %v981 = vpop.permute.xlu0 %980
  %982 = vrot.lane.b32.xlu0 %v971, 64
  %v983 = vpop.permute.xlu0 %982
  %984 = vrot.lane.b32.xlu0 %v973, 64
  %v985 = vpop.permute.xlu0 %984
  %v990 = vmul.f32 %v932, %v979
  %v991 = vmul.f32 %v937, %v981
  %v992 = vmul.f32 %v942, %v983
  %v993 = vmul.f32 %v947, %v985
  %v994 = vld [vmem:[%s4] sm:$0xff]
  %v995 = vld [vmem:[%s4 + $0x8] sm:$0xff]
  %v996 = vld [vmem:[%s4 + $0x10] sm:$0xff]
  %v997 = vld [vmem:[%s4 + $0x18] sm:$0xff]
  %v998 = vld [vmem:[%s5] sm:$0x1]
  %v1000 = vlaneseq
  %v1001 = vshrl.u32 %v1000, 7
  %v1002 = vsub.s32 0, %v1001
  %v1003 = vrot.slane %v998, %v1002
  %v1006 = vsel %vm852, %v837, 0
  %v1009 = vsel %vm852, %v838, 0
  %v1012 = vsel %vm852, %v839, 0
  %v1015 = vsel %vm852, %v840, 0
  %1017 = vmatprep.subr.mxu0 0.0
  %1018 = vmatpush1.msra.mxu0 0.0
  %1019 = vmatprep.subr.mxu0 0.0
  %1020 = vmatpush1.msra.mxu0 0.0
  %1021 = vmatprep.subr.mxu0 0.0
  %1022 = vmatpush1.msra.mxu0 0.0
  %1023 = vmatprep.subr.mxu0 0.0
  %1024 = vmatpush1.msra.mxu0 0.0
  %1025 = vmatprep.subr.mxu0 0.0
  %1026 = vmatpush1.msra.mxu0 0.0
  %1027 = vmatprep.subr.mxu0 0.0
  %1028 = vmatpush1.msra.mxu0 0.0
  %1029 = vmatprep.subr.mxu0 0.0
  %1030 = vmatpush1.msra.mxu0 0.0
  %1031 = vmatprep.subr.mxu0 0.0
  %1032 = vmatpush1.msra.mxu0 0.0
  %1033 = vmatprep.subr.mxu0 0.0
  %1034 = vmatpush1.msra.mxu0 0.0
  %1035 = vmatprep.subr.mxu0 0.0
  %1036 = vmatpush1.msra.mxu0 0.0
  %1037 = vmatprep.subr.mxu0 0.0
  %1038 = vmatpush1.msra.mxu0 0.0
  %1039 = vmatprep.subr.mxu0 0.0
  %1040 = vmatpush1.msra.mxu0 0.0
  %1041 = vmatprep.subr.mxu0 0.0
  %1042 = vmatpush1.msra.mxu0 %v997
  %1043 = vmatprep.subr.mxu0 0.0
  %1044 = vmatpush1.msra.mxu0 %v996
  %1045 = vmatprep.subr.mxu0 0.0
  %1046 = vmatpush1.msra.mxu0 %v995
  %1047 = vmatprep.subr.mxu0 0.0
  %1048 = vmatpush1.msra.mxu0 %v994
  %1049 = vmatprep.subr.mxu0 0.0
  %1050 = vmatpush2.msra.mxu0 0.0
  %1051 = vmatprep.subr.mxu0 0.0
  %1052 = vmatpush2.msra.mxu0 0.0
  %1053 = vmatprep.subr.mxu0 0.0
  %1054 = vmatpush2.msra.mxu0 0.0
  %1055 = vmatprep.subr.mxu0 0.0
  %1056 = vmatpush2.msra.mxu0 0.0
  %1057 = vmatprep.subr.mxu0 0.0
  %1058 = vmatpush2.msra.mxu0 0.0
  %1059 = vmatprep.subr.mxu0 0.0
  %1060 = vmatpush2.msra.mxu0 0.0
  %1061 = vmatprep.subr.mxu0 0.0
  %1062 = vmatpush2.msra.mxu0 0.0
  %1063 = vmatprep.subr.mxu0 0.0
  %1064 = vmatpush2.msra.mxu0 0.0
  %1065 = vmatprep.subr.mxu0 0.0
  %1066 = vmatpush2.msra.mxu0 0.0
  %1067 = vmatprep.subr.mxu0 0.0
  %1068 = vmatpush2.msra.mxu0 0.0
  %1069 = vmatprep.subr.mxu0 0.0
  %1070 = vmatpush2.msra.mxu0 0.0
  %1071 = vmatprep.subr.mxu0 0.0
  %1072 = vmatpush2.msra.mxu0 0.0
  %1073 = vmatprep.subr.mxu0 0.0
  %1074 = vmatpush2.msra.mxu0 0.0
  %1075 = vmatprep.subr.mxu0 0.0
  %1076 = vmatpush2.msra.mxu0 0.0
  %1077 = vmatprep.subr.mxu0 0.0
  %1078 = vmatpush2.msra.mxu0 0.0
  %1079 = vmatprep.subr.mxu0 0.0
  %1080 = vmatpush2.msra.mxu0 0.0
  %1081 = vmatprep.mubr.f32.mxu0 0.0
  %1082 = vmatmul.mubr.f32.gmra.mxu0 %v1006
  %v1083 = vpop.f32.mrf.mxu0
  %v1084 = vadd.f32 %v1003, %v1083
  %v1085 = vpop.f32.mrf.mxu0
  %1086 = vmatprep.mubr.f32.mxu0 0.0
  %1087 = vmatmul.mubr.f32.gmra.mxu0 %v1009
  %v1088 = vpop.f32.mrf.mxu0
  %v1089 = vadd.f32 %v1003, %v1088
  %v1090 = vpop.f32.mrf.mxu0
  %1091 = vmatprep.mubr.f32.mxu0 0.0
  %1092 = vmatmul.mubr.f32.gmra.mxu0 %v1012
  %v1093 = vpop.f32.mrf.mxu0
  %v1094 = vadd.f32 %v1003, %v1093
  %v1095 = vpop.f32.mrf.mxu0
  %1096 = vmatprep.mubr.f32.mxu0 0.0
  %1097 = vmatmul.mubr.f32.gmra.mxu0 %v1015
  %v1098 = vpop.f32.mrf.mxu0
  %v1099 = vadd.f32 %v1003, %v1098
  %v1100 = vpop.f32.mrf.mxu0
  %1101 = vdwg.mxu0
  %v1102 = vxor.u32 %v1084, 2147483648
  %v1103 = vxor.u32 %v1089, 2147483648
  %v1104 = vxor.u32 %v1094, 2147483648
  %v1105 = vxor.u32 %v1099, 2147483648
  %v1106 = vmul.f32 %v1102, 1.442695
  %v1107 = vpow.pop %v1106
  %v1108 = vmul.f32 %v1103, 1.442695
  %v1109 = vpow.pop %v1108
  %v1110 = vmul.f32 %v1104, 1.442695
  %v1111 = vpow.pop %v1110
  %v1112 = vmul.f32 %v1105, 1.442695
  %v1113 = vpow.pop %v1112
  %v1114 = vadd.f32 %v1107, 1.0
  %v1115 = vadd.f32 %v1109, 1.0
  %v1116 = vadd.f32 %v1111, 1.0
  %v1117 = vadd.f32 %v1113, 1.0
  %v1118 = vrcp.pop %v1114
  %v1119 = vmul.f32 1.0, %v1118
  %v1120 = vrcp.pop %v1115
  %v1121 = vmul.f32 1.0, %v1120
  %v1122 = vrcp.pop %v1116
  %v1123 = vmul.f32 1.0, %v1122
  %v1124 = vrcp.pop %v1117
  %v1125 = vmul.f32 1.0, %v1124
  %1130 = vrot.lane.b32.xlu0 %v1119, 64
  %v1131 = vpop.permute.xlu0 %1130
  %1132 = vrot.lane.b32.xlu0 %v1121, 64
  %v1133 = vpop.permute.xlu0 %1132
  %1134 = vrot.lane.b32.xlu0 %v1123, 64
  %v1135 = vpop.permute.xlu0 %1134
  %1136 = vrot.lane.b32.xlu0 %v1125, 64
  %v1137 = vpop.permute.xlu0 %1136
  %v1142 = vmul.f32 %v1084, %v1131
  %v1143 = vmul.f32 %v1089, %v1133
  %v1144 = vmul.f32 %v1094, %v1135
  %v1145 = vmul.f32 %v1099, %v1137
  %v1146 = vld [vmem:[%s6] sm:$0xff]
  %v1147 = vld [vmem:[%s6 + $0x8] sm:$0xff]
  %v1148 = vld [vmem:[%s6 + $0x10] sm:$0xff]
  %v1149 = vld [vmem:[%s6 + $0x18] sm:$0xff]
  %v1150 = vld [vmem:[%s6 + $0x20] sm:$0xff]
  %v1151 = vld [vmem:[%s6 + $0x28] sm:$0xff]
  %v1152 = vld [vmem:[%s6 + $0x30] sm:$0xff]
  %v1153 = vld [vmem:[%s6 + $0x38] sm:$0xff]
  %v1154 = vld [vmem:[%s7] sm:$0x1]
  %v1156 = vlaneseq
  %v1157 = vshrl.u32 %v1156, 7
  %v1158 = vsub.s32 0, %v1157
  %v1159 = vrot.slane %v1154, %v1158
  %vm1161 = vcmask 523264
  %v1163 = vsel %vm1161, %v990, 0
  %v1166 = vsel %vm1161, %v991, 0
  %v1169 = vsel %vm1161, %v992, 0
  %v1172 = vsel %vm1161, %v993, 0
  %1174 = vmatprep.subr.mxu0 0.0
  %1175 = vmatpush1.msra.mxu0 0.0
  %1176 = vmatprep.subr.mxu0 0.0
  %1177 = vmatpush1.msra.mxu0 0.0
  %1178 = vmatprep.subr.mxu0 0.0
  %1179 = vmatpush1.msra.mxu0 0.0
  %1180 = vmatprep.subr.mxu0 0.0
  %1181 = vmatpush1.msra.mxu0 0.0
  %1182 = vmatprep.subr.mxu0 0.0
  %1183 = vmatpush1.msra.mxu0 0.0
  %1184 = vmatprep.subr.mxu0 0.0
  %1185 = vmatpush1.msra.mxu0 0.0
  %1186 = vmatprep.subr.mxu0 0.0
  %1187 = vmatpush1.msra.mxu0 0.0
  %1188 = vmatprep.subr.mxu0 0.0
  %1189 = vmatpush1.msra.mxu0 0.0
  %1190 = vmatprep.subr.mxu0 0.0
  %1191 = vmatpush1.msra.mxu0 %v1153
  %1192 = vmatprep.subr.mxu0 0.0
  %1193 = vmatpush1.msra.mxu0 %v1152
  %1194 = vmatprep.subr.mxu0 0.0
  %1195 = vmatpush1.msra.mxu0 %v1151
  %1196 = vmatprep.subr.mxu0 0.0
  %1197 = vmatpush1.msra.mxu0 %v1150
  %1198 = vmatprep.subr.mxu0 0.0
  %1199 = vmatpush1.msra.mxu0 %v1149
  %1200 = vmatprep.subr.mxu0 0.0
  %1201 = vmatpush1.msra.mxu0 %v1148
  %1202 = vmatprep.subr.mxu0 0.0
  %1203 = vmatpush1.msra.mxu0 %v1147
  %1204 = vmatprep.subr.mxu0 0.0
  %1205 = vmatpush1.msra.mxu0 %v1146
  %1206 = vmatprep.subr.mxu0 0.0
  %1207 = vmatpush2.msra.mxu0 0.0
  %1208 = vmatprep.subr.mxu0 0.0
  %1209 = vmatpush2.msra.mxu0 0.0
  %1210 = vmatprep.subr.mxu0 0.0
  %1211 = vmatpush2.msra.mxu0 0.0
  %1212 = vmatprep.subr.mxu0 0.0
  %1213 = vmatpush2.msra.mxu0 0.0
  %1214 = vmatprep.subr.mxu0 0.0
  %1215 = vmatpush2.msra.mxu0 0.0
  %1216 = vmatprep.subr.mxu0 0.0
  %1217 = vmatpush2.msra.mxu0 0.0
  %1218 = vmatprep.subr.mxu0 0.0
  %1219 = vmatpush2.msra.mxu0 0.0
  %1220 = vmatprep.subr.mxu0 0.0
  %1221 = vmatpush2.msra.mxu0 0.0
  %1222 = vmatprep.subr.mxu0 0.0
  %1223 = vmatpush2.msra.mxu0 0.0
  %1224 = vmatprep.subr.mxu0 0.0
  %1225 = vmatpush2.msra.mxu0 0.0
  %1226 = vmatprep.subr.mxu0 0.0
  %1227 = vmatpush2.msra.mxu0 0.0
  %1228 = vmatprep.subr.mxu0 0.0
  %1229 = vmatpush2.msra.mxu0 0.0
  %1230 = vmatprep.subr.mxu0 0.0
  %1231 = vmatpush2.msra.mxu0 0.0
  %1232 = vmatprep.subr.mxu0 0.0
  %1233 = vmatpush2.msra.mxu0 0.0
  %1234 = vmatprep.subr.mxu0 0.0
  %1235 = vmatpush2.msra.mxu0 0.0
  %1236 = vmatprep.subr.mxu0 0.0
  %1237 = vmatpush2.msra.mxu0 0.0
  %1238 = vmatprep.mubr.f32.mxu0 0.0
  %1239 = vmatmul.mubr.f32.gmra.mxu0 %v1163
  %v1240 = vpop.f32.mrf.mxu0
  %v1241 = vadd.f32 %v1159, %v1240
  %v1242 = vpop.f32.mrf.mxu0
  %1243 = vmatprep.mubr.f32.mxu0 0.0
  %1244 = vmatmul.mubr.f32.gmra.mxu0 %v1166
  %v1245 = vpop.f32.mrf.mxu0
  %v1246 = vadd.f32 %v1159, %v1245
  %v1247 = vpop.f32.mrf.mxu0
  %1248 = vmatprep.mubr.f32.mxu0 0.0
  %1249 = vmatmul.mubr.f32.gmra.mxu0 %v1169
  %v1250 = vpop.f32.mrf.mxu0
  %v1251 = vadd.f32 %v1159, %v1250
  %v1252 = vpop.f32.mrf.mxu0
  %1253 = vmatprep.mubr.f32.mxu0 0.0
  %1254 = vmatmul.mubr.f32.gmra.mxu0 %v1172
  %v1255 = vpop.f32.mrf.mxu0
  %v1256 = vadd.f32 %v1159, %v1255
  %v1257 = vpop.f32.mrf.mxu0
  %1258 = vdwg.mxu0
  %v1259 = vxor.u32 %v1241, 2147483648
  %v1260 = vxor.u32 %v1246, 2147483648
  %v1261 = vxor.u32 %v1251, 2147483648
  %v1262 = vxor.u32 %v1256, 2147483648
  %v1263 = vmul.f32 %v1259, 1.442695
  %v1264 = vpow.pop %v1263
  %v1265 = vmul.f32 %v1260, 1.442695
  %v1266 = vpow.pop %v1265
  %v1267 = vmul.f32 %v1261, 1.442695
  %v1268 = vpow.pop %v1267
  %v1269 = vmul.f32 %v1262, 1.442695
  %v1270 = vpow.pop %v1269
  %v1271 = vadd.f32 %v1264, 1.0
  %v1272 = vadd.f32 %v1266, 1.0
  %v1273 = vadd.f32 %v1268, 1.0
  %v1274 = vadd.f32 %v1270, 1.0
  %v1275 = vrcp.pop %v1271
  %v1276 = vmul.f32 1.0, %v1275
  %v1277 = vrcp.pop %v1272
  %v1278 = vmul.f32 1.0, %v1277
  %v1279 = vrcp.pop %v1273
  %v1280 = vmul.f32 1.0, %v1279
  %v1281 = vrcp.pop %v1274
  %v1282 = vmul.f32 1.0, %v1281
  %1287 = vrot.lane.b32.xlu0 %v1276, 64
  %v1288 = vpop.permute.xlu0 %1287
  %1289 = vrot.lane.b32.xlu0 %v1278, 64
  %v1290 = vpop.permute.xlu0 %1289
  %1291 = vrot.lane.b32.xlu0 %v1280, 64
  %v1292 = vpop.permute.xlu0 %1291
  %1293 = vrot.lane.b32.xlu0 %v1282, 64
  %v1294 = vpop.permute.xlu0 %1293
  %v1299 = vmul.f32 %v1241, %v1288
  %v1300 = vmul.f32 %v1246, %v1290
  %v1301 = vmul.f32 %v1251, %v1292
  %v1302 = vmul.f32 %v1256, %v1294
  %v1303 = vld [vmem:[%s8] sm:$0xff]
  %v1304 = vld [vmem:[%s8 + $0x8] sm:$0xff]
  %v1305 = vld [vmem:[%s8 + $0x10] sm:$0xff]
  %v1306 = vld [vmem:[%s8 + $0x18] sm:$0xff]
  %v1307 = vld [vmem:[%s8 + $0x20] sm:$0xff]
  %v1308 = vld [vmem:[%s8 + $0x28] sm:$0xff]
  %v1309 = vld [vmem:[%s8 + $0x30] sm:$0xff]
  %v1310 = vld [vmem:[%s8 + $0x38] sm:$0xff]
  %v1311 = vld [vmem:[%s9] sm:$0x1]
  %v1313 = vlaneseq
  %v1314 = vshrl.u32 %v1313, 7
  %v1315 = vsub.s32 0, %v1314
  %v1316 = vrot.slane %v1311, %v1315
  %v1319 = vsel %vm1161, %v1142, 0
  %v1322 = vsel %vm1161, %v1143, 0
  %v1325 = vsel %vm1161, %v1144, 0
  %v1328 = vsel %vm1161, %v1145, 0
  %1330 = vmatprep.subr.mxu0 0.0
  %1331 = vmatpush1.msra.mxu0 0.0
  %1332 = vmatprep.subr.mxu0 0.0
  %1333 = vmatpush1.msra.mxu0 0.0
  %1334 = vmatprep.subr.mxu0 0.0
  %1335 = vmatpush1.msra.mxu0 0.0
  %1336 = vmatprep.subr.mxu0 0.0
  %1337 = vmatpush1.msra.mxu0 0.0
  %1338 = vmatprep.subr.mxu0 0.0
  %1339 = vmatpush1.msra.mxu0 0.0
  %1340 = vmatprep.subr.mxu0 0.0
  %1341 = vmatpush1.msra.mxu0 0.0
  %1342 = vmatprep.subr.mxu0 0.0
  %1343 = vmatpush1.msra.mxu0 0.0
  %1344 = vmatprep.subr.mxu0 0.0
  %1345 = vmatpush1.msra.mxu0 0.0
  %1346 = vmatprep.subr.mxu0 0.0
  %1347 = vmatpush1.msra.mxu0 %v1310
  %1348 = vmatprep.subr.mxu0 0.0
  %1349 = vmatpush1.msra.mxu0 %v1309
  %1350 = vmatprep.subr.mxu0 0.0
  %1351 = vmatpush1.msra.mxu0 %v1308
  %1352 = vmatprep.subr.mxu0 0.0
  %1353 = vmatpush1.msra.mxu0 %v1307
  %1354 = vmatprep.subr.mxu0 0.0
  %1355 = vmatpush1.msra.mxu0 %v1306
  %1356 = vmatprep.subr.mxu0 0.0
  %1357 = vmatpush1.msra.mxu0 %v1305
  %1358 = vmatprep.subr.mxu0 0.0
  %1359 = vmatpush1.msra.mxu0 %v1304
  %1360 = vmatprep.subr.mxu0 0.0
  %1361 = vmatpush1.msra.mxu0 %v1303
  %1362 = vmatprep.subr.mxu0 0.0
  %1363 = vmatpush2.msra.mxu0 0.0
  %1364 = vmatprep.subr.mxu0 0.0
  %1365 = vmatpush2.msra.mxu0 0.0
  %1366 = vmatprep.subr.mxu0 0.0
  %1367 = vmatpush2.msra.mxu0 0.0
  %1368 = vmatprep.subr.mxu0 0.0
  %1369 = vmatpush2.msra.mxu0 0.0
  %1370 = vmatprep.subr.mxu0 0.0
  %1371 = vmatpush2.msra.mxu0 0.0
  %1372 = vmatprep.subr.mxu0 0.0
  %1373 = vmatpush2.msra.mxu0 0.0
  %1374 = vmatprep.subr.mxu0 0.0
  %1375 = vmatpush2.msra.mxu0 0.0
  %1376 = vmatprep.subr.mxu0 0.0
  %1377 = vmatpush2.msra.mxu0 0.0
  %1378 = vmatprep.subr.mxu0 0.0
  %1379 = vmatpush2.msra.mxu0 0.0
  %1380 = vmatprep.subr.mxu0 0.0
  %1381 = vmatpush2.msra.mxu0 0.0
  %1382 = vmatprep.subr.mxu0 0.0
  %1383 = vmatpush2.msra.mxu0 0.0
  %1384 = vmatprep.subr.mxu0 0.0
  %1385 = vmatpush2.msra.mxu0 0.0
  %1386 = vmatprep.subr.mxu0 0.0
  %1387 = vmatpush2.msra.mxu0 0.0
  %1388 = vmatprep.subr.mxu0 0.0
  %1389 = vmatpush2.msra.mxu0 0.0
  %1390 = vmatprep.subr.mxu0 0.0
  %1391 = vmatpush2.msra.mxu0 0.0
  %1392 = vmatprep.subr.mxu0 0.0
  %1393 = vmatpush2.msra.mxu0 0.0
  %1394 = vmatprep.mubr.f32.mxu0 0.0
  %1395 = vmatmul.mubr.f32.gmra.mxu0 %v1319
  %v1396 = vpop.f32.mrf.mxu0
  %v1397 = vadd.f32 %v1316, %v1396
  %v1398 = vpop.f32.mrf.mxu0
  %1399 = vmatprep.mubr.f32.mxu0 0.0
  %1400 = vmatmul.mubr.f32.gmra.mxu0 %v1322
  %v1401 = vpop.f32.mrf.mxu0
  %v1402 = vadd.f32 %v1316, %v1401
  %v1403 = vpop.f32.mrf.mxu0
  %1404 = vmatprep.mubr.f32.mxu0 0.0
  %1405 = vmatmul.mubr.f32.gmra.mxu0 %v1325
  %v1406 = vpop.f32.mrf.mxu0
  %v1407 = vadd.f32 %v1316, %v1406
  %v1408 = vpop.f32.mrf.mxu0
  %1409 = vmatprep.mubr.f32.mxu0 0.0
  %1410 = vmatmul.mubr.f32.gmra.mxu0 %v1328
  %v1411 = vpop.f32.mrf.mxu0
  %v1412 = vadd.f32 %v1316, %v1411
  %v1413 = vpop.f32.mrf.mxu0
  %1414 = vdwg.mxu0
  %v1415 = vxor.u32 %v1397, 2147483648
  %v1416 = vxor.u32 %v1402, 2147483648
  %v1417 = vxor.u32 %v1407, 2147483648
  %v1418 = vxor.u32 %v1412, 2147483648
  %v1419 = vmul.f32 %v1415, 1.442695
  %v1420 = vpow.pop %v1419
  %v1421 = vmul.f32 %v1416, 1.442695
  %v1422 = vpow.pop %v1421
  %v1423 = vmul.f32 %v1417, 1.442695
  %v1424 = vpow.pop %v1423
  %v1425 = vmul.f32 %v1418, 1.442695
  %v1426 = vpow.pop %v1425
  %v1427 = vadd.f32 %v1420, 1.0
  %v1428 = vadd.f32 %v1422, 1.0
  %v1429 = vadd.f32 %v1424, 1.0
  %v1430 = vadd.f32 %v1426, 1.0
  %v1431 = vrcp.pop %v1427
  %v1432 = vmul.f32 1.0, %v1431
  %v1433 = vrcp.pop %v1428
  %v1434 = vmul.f32 1.0, %v1433
  %v1435 = vrcp.pop %v1429
  %v1436 = vmul.f32 1.0, %v1435
  %v1437 = vrcp.pop %v1430
  %v1438 = vmul.f32 1.0, %v1437
  %1443 = vrot.lane.b32.xlu0 %v1432, 64
  %v1444 = vpop.permute.xlu0 %1443
  %1445 = vrot.lane.b32.xlu0 %v1434, 64
  %v1446 = vpop.permute.xlu0 %1445
  %1447 = vrot.lane.b32.xlu0 %v1436, 64
  %v1448 = vpop.permute.xlu0 %1447
  %1449 = vrot.lane.b32.xlu0 %v1438, 64
  %v1450 = vpop.permute.xlu0 %1449
  %v1455 = vmul.f32 %v1397, %v1444
  %v1456 = vmul.f32 %v1402, %v1446
  %v1457 = vmul.f32 %v1407, %v1448
  %v1458 = vmul.f32 %v1412, %v1450
  %v1459 = vld [vmem:[%s10] sm:$0xff]
  %v1460 = vld [vmem:[%s10 + $0x8] sm:$0xff]
  %v1461 = vld [vmem:[%s10 + $0x10] sm:$0xff]
  %v1462 = vld [vmem:[%s10 + $0x18] sm:$0xff]
  %v1463 = vld [vmem:[%s10 + $0x20] sm:$0xff]
  %v1464 = vld [vmem:[%s10 + $0x28] sm:$0xff]
  %v1465 = vld [vmem:[%s10 + $0x30] sm:$0xff]
  %v1466 = vld [vmem:[%s10 + $0x38] sm:$0xff]
  %v1467 = vld [vmem:[%s11] sm:$0x1]
  %v1469 = vlaneseq
  %v1470 = vshrl.u32 %v1469, 7
  %v1471 = vsub.s32 0, %v1470
  %v1472 = vrot.slane %v1467, %v1471
  %v1475 = vsel %vm1161, %v1299, 0
  %v1478 = vsel %vm1161, %v1300, 0
  %v1481 = vsel %vm1161, %v1301, 0
  %v1484 = vsel %vm1161, %v1302, 0
  %1486 = vmatprep.subr.mxu0 0.0
  %1487 = vmatpush1.msra.mxu0 0.0
  %1488 = vmatprep.subr.mxu0 0.0
  %1489 = vmatpush1.msra.mxu0 0.0
  %1490 = vmatprep.subr.mxu0 0.0
  %1491 = vmatpush1.msra.mxu0 0.0
  %1492 = vmatprep.subr.mxu0 0.0
  %1493 = vmatpush1.msra.mxu0 0.0
  %1494 = vmatprep.subr.mxu0 0.0
  %1495 = vmatpush1.msra.mxu0 0.0
  %1496 = vmatprep.subr.mxu0 0.0
  %1497 = vmatpush1.msra.mxu0 0.0
  %1498 = vmatprep.subr.mxu0 0.0
  %1499 = vmatpush1.msra.mxu0 0.0
  %1500 = vmatprep.subr.mxu0 0.0
  %1501 = vmatpush1.msra.mxu0 0.0
  %1502 = vmatprep.subr.mxu0 0.0
  %1503 = vmatpush1.msra.mxu0 %v1466
  %1504 = vmatprep.subr.mxu0 0.0
  %1505 = vmatpush1.msra.mxu0 %v1465
  %1506 = vmatprep.subr.mxu0 0.0
  %1507 = vmatpush1.msra.mxu0 %v1464
  %1508 = vmatprep.subr.mxu0 0.0
  %1509 = vmatpush1.msra.mxu0 %v1463
  %1510 = vmatprep.subr.mxu0 0.0
  %1511 = vmatpush1.msra.mxu0 %v1462
  %1512 = vmatprep.subr.mxu0 0.0
  %1513 = vmatpush1.msra.mxu0 %v1461
  %1514 = vmatprep.subr.mxu0 0.0
  %1515 = vmatpush1.msra.mxu0 %v1460
  %1516 = vmatprep.subr.mxu0 0.0
  %1517 = vmatpush1.msra.mxu0 %v1459
  %1518 = vmatprep.subr.mxu0 0.0
  %1519 = vmatpush2.msra.mxu0 0.0
  %1520 = vmatprep.subr.mxu0 0.0
  %1521 = vmatpush2.msra.mxu0 0.0
  %1522 = vmatprep.subr.mxu0 0.0
  %1523 = vmatpush2.msra.mxu0 0.0
  %1524 = vmatprep.subr.mxu0 0.0
  %1525 = vmatpush2.msra.mxu0 0.0
  %1526 = vmatprep.subr.mxu0 0.0
  %1527 = vmatpush2.msra.mxu0 0.0
  %1528 = vmatprep.subr.mxu0 0.0
  %1529 = vmatpush2.msra.mxu0 0.0
  %1530 = vmatprep.subr.mxu0 0.0
  %1531 = vmatpush2.msra.mxu0 0.0
  %1532 = vmatprep.subr.mxu0 0.0
  %1533 = vmatpush2.msra.mxu0 0.0
  %1534 = vmatprep.subr.mxu0 0.0
  %1535 = vmatpush2.msra.mxu0 0.0
  %1536 = vmatprep.subr.mxu0 0.0
  %1537 = vmatpush2.msra.mxu0 0.0
  %1538 = vmatprep.subr.mxu0 0.0
  %1539 = vmatpush2.msra.mxu0 0.0
  %1540 = vmatprep.subr.mxu0 0.0
  %1541 = vmatpush2.msra.mxu0 0.0
  %1542 = vmatprep.subr.mxu0 0.0
  %1543 = vmatpush2.msra.mxu0 0.0
  %1544 = vmatprep.subr.mxu0 0.0
  %1545 = vmatpush2.msra.mxu0 0.0
  %1546 = vmatprep.subr.mxu0 0.0
  %1547 = vmatpush2.msra.mxu0 0.0
  %1548 = vmatprep.subr.mxu0 0.0
  %1549 = vmatpush2.msra.mxu0 0.0
  %1550 = vmatprep.mubr.f32.mxu0 0.0
  %1551 = vmatmul.mubr.f32.gmra.mxu0 %v1475
  %v1552 = vpop.f32.mrf.mxu0
  %v1553 = vadd.f32 %v1472, %v1552
  %v1554 = vpop.f32.mrf.mxu0
  %1555 = vmatprep.mubr.f32.mxu0 0.0
  %1556 = vmatmul.mubr.f32.gmra.mxu0 %v1478
  %v1557 = vpop.f32.mrf.mxu0
  %v1558 = vadd.f32 %v1472, %v1557
  %v1559 = vpop.f32.mrf.mxu0
  %1560 = vmatprep.mubr.f32.mxu0 0.0
  %1561 = vmatmul.mubr.f32.gmra.mxu0 %v1481
  %v1562 = vpop.f32.mrf.mxu0
  %v1563 = vadd.f32 %v1472, %v1562
  %v1564 = vpop.f32.mrf.mxu0
  %1565 = vmatprep.mubr.f32.mxu0 0.0
  %1566 = vmatmul.mubr.f32.gmra.mxu0 %v1484
  %v1567 = vpop.f32.mrf.mxu0
  %v1568 = vadd.f32 %v1472, %v1567
  %v1569 = vpop.f32.mrf.mxu0
  %1570 = vdwg.mxu0
  %v1571 = vxor.u32 %v1553, 2147483648
  %v1572 = vxor.u32 %v1558, 2147483648
  %v1573 = vxor.u32 %v1563, 2147483648
  %v1574 = vxor.u32 %v1568, 2147483648
  %v1575 = vmul.f32 %v1571, 1.442695
  %v1576 = vpow.pop %v1575
  %v1577 = vmul.f32 %v1572, 1.442695
  %v1578 = vpow.pop %v1577
  %v1579 = vmul.f32 %v1573, 1.442695
  %v1580 = vpow.pop %v1579
  %v1581 = vmul.f32 %v1574, 1.442695
  %v1582 = vpow.pop %v1581
  %v1583 = vadd.f32 %v1576, 1.0
  %v1584 = vadd.f32 %v1578, 1.0
  %v1585 = vadd.f32 %v1580, 1.0
  %v1586 = vadd.f32 %v1582, 1.0
  %v1587 = vrcp.pop %v1583
  %v1588 = vmul.f32 1.0, %v1587
  %v1589 = vrcp.pop %v1584
  %v1590 = vmul.f32 1.0, %v1589
  %v1591 = vrcp.pop %v1585
  %v1592 = vmul.f32 1.0, %v1591
  %v1593 = vrcp.pop %v1586
  %v1594 = vmul.f32 1.0, %v1593
  %1599 = vrot.lane.b32.xlu0 %v1588, 64
  %v1600 = vpop.permute.xlu0 %1599
  %1601 = vrot.lane.b32.xlu0 %v1590, 64
  %v1602 = vpop.permute.xlu0 %1601
  %1603 = vrot.lane.b32.xlu0 %v1592, 64
  %v1604 = vpop.permute.xlu0 %1603
  %1605 = vrot.lane.b32.xlu0 %v1594, 64
  %v1606 = vpop.permute.xlu0 %1605
  %v1611 = vmul.f32 %v1553, %v1600
  %v1612 = vmul.f32 %v1558, %v1602
  %v1613 = vmul.f32 %v1563, %v1604
  %v1614 = vmul.f32 %v1568, %v1606
  %v1615 = vld [vmem:[%s12] sm:$0xff]
  %v1616 = vld [vmem:[%s12 + $0x8] sm:$0xff]
  %v1617 = vld [vmem:[%s12 + $0x10] sm:$0xff]
  %v1618 = vld [vmem:[%s12 + $0x18] sm:$0xff]
  %v1619 = vld [vmem:[%s12 + $0x20] sm:$0xff]
  %v1620 = vld [vmem:[%s12 + $0x28] sm:$0xff]
  %v1621 = vld [vmem:[%s12 + $0x30] sm:$0xff]
  %v1622 = vld [vmem:[%s12 + $0x38] sm:$0xff]
  %v1623 = vld [vmem:[%s13] sm:$0x1]
  %v1625 = vlaneseq
  %v1626 = vshrl.u32 %v1625, 7
  %v1627 = vsub.s32 0, %v1626
  %v1628 = vrot.slane %v1623, %v1627
  %v1631 = vsel %vm1161, %v1455, 0
  %v1634 = vsel %vm1161, %v1456, 0
  %v1637 = vsel %vm1161, %v1457, 0
  %v1640 = vsel %vm1161, %v1458, 0
  %1642 = vmatprep.subr.mxu0 0.0
  %1643 = vmatpush1.msra.mxu0 0.0
  %1644 = vmatprep.subr.mxu0 0.0
  %1645 = vmatpush1.msra.mxu0 0.0
  %1646 = vmatprep.subr.mxu0 0.0
  %1647 = vmatpush1.msra.mxu0 0.0
  %1648 = vmatprep.subr.mxu0 0.0
  %1649 = vmatpush1.msra.mxu0 0.0
  %1650 = vmatprep.subr.mxu0 0.0
  %1651 = vmatpush1.msra.mxu0 0.0
  %1652 = vmatprep.subr.mxu0 0.0
  %1653 = vmatpush1.msra.mxu0 0.0
  %1654 = vmatprep.subr.mxu0 0.0
  %1655 = vmatpush1.msra.mxu0 0.0
  %1656 = vmatprep.subr.mxu0 0.0
  %1657 = vmatpush1.msra.mxu0 0.0
  %1658 = vmatprep.subr.mxu0 0.0
  %1659 = vmatpush1.msra.mxu0 %v1622
  %1660 = vmatprep.subr.mxu0 0.0
  %1661 = vmatpush1.msra.mxu0 %v1621
  %1662 = vmatprep.subr.mxu0 0.0
  %1663 = vmatpush1.msra.mxu0 %v1620
  %1664 = vmatprep.subr.mxu0 0.0
  %1665 = vmatpush1.msra.mxu0 %v1619
  %1666 = vmatprep.subr.mxu0 0.0
  %1667 = vmatpush1.msra.mxu0 %v1618
  %1668 = vmatprep.subr.mxu0 0.0
  %1669 = vmatpush1.msra.mxu0 %v1617
  %1670 = vmatprep.subr.mxu0 0.0
  %1671 = vmatpush1.msra.mxu0 %v1616
  %1672 = vmatprep.subr.mxu0 0.0
  %1673 = vmatpush1.msra.mxu0 %v1615
  %1674 = vmatprep.subr.mxu0 0.0
  %1675 = vmatpush2.msra.mxu0 0.0
  %1676 = vmatprep.subr.mxu0 0.0
  %1677 = vmatpush2.msra.mxu0 0.0
  %1678 = vmatprep.subr.mxu0 0.0
  %1679 = vmatpush2.msra.mxu0 0.0
  %1680 = vmatprep.subr.mxu0 0.0
  %1681 = vmatpush2.msra.mxu0 0.0
  %1682 = vmatprep.subr.mxu0 0.0
  %1683 = vmatpush2.msra.mxu0 0.0
  %1684 = vmatprep.subr.mxu0 0.0
  %1685 = vmatpush2.msra.mxu0 0.0
  %1686 = vmatprep.subr.mxu0 0.0
  %1687 = vmatpush2.msra.mxu0 0.0
  %1688 = vmatprep.subr.mxu0 0.0
  %1689 = vmatpush2.msra.mxu0 0.0
  %1690 = vmatprep.subr.mxu0 0.0
  %1691 = vmatpush2.msra.mxu0 0.0
  %1692 = vmatprep.subr.mxu0 0.0
  %1693 = vmatpush2.msra.mxu0 0.0
  %1694 = vmatprep.subr.mxu0 0.0
  %1695 = vmatpush2.msra.mxu0 0.0
  %1696 = vmatprep.subr.mxu0 0.0
  %1697 = vmatpush2.msra.mxu0 0.0
  %1698 = vmatprep.subr.mxu0 0.0
  %1699 = vmatpush2.msra.mxu0 0.0
  %1700 = vmatprep.subr.mxu0 0.0
  %1701 = vmatpush2.msra.mxu0 0.0
  %1702 = vmatprep.subr.mxu0 0.0
  %1703 = vmatpush2.msra.mxu0 0.0
  %1704 = vmatprep.subr.mxu0 0.0
  %1705 = vmatpush2.msra.mxu0 0.0
  %1706 = vmatprep.mubr.f32.mxu0 0.0
  %1707 = vmatmul.mubr.f32.gmra.mxu0 %v1631
  %v1708 = vpop.f32.mrf.mxu0
  %v1709 = vadd.f32 %v1628, %v1708
  %v1710 = vpop.f32.mrf.mxu0
  %1711 = vmatprep.mubr.f32.mxu0 0.0
  %1712 = vmatmul.mubr.f32.gmra.mxu0 %v1634
  %v1713 = vpop.f32.mrf.mxu0
  %v1714 = vadd.f32 %v1628, %v1713
  %v1715 = vpop.f32.mrf.mxu0
  %1716 = vmatprep.mubr.f32.mxu0 0.0
  %1717 = vmatmul.mubr.f32.gmra.mxu0 %v1637
  %v1718 = vpop.f32.mrf.mxu0
  %v1719 = vadd.f32 %v1628, %v1718
  %v1720 = vpop.f32.mrf.mxu0
  %1721 = vmatprep.mubr.f32.mxu0 0.0
  %1722 = vmatmul.mubr.f32.gmra.mxu0 %v1640
  %v1723 = vpop.f32.mrf.mxu0
  %v1724 = vadd.f32 %v1628, %v1723
  %v1725 = vpop.f32.mrf.mxu0
  %1726 = vdwg.mxu0
  %v1727 = vxor.u32 %v1709, 2147483648
  %v1728 = vxor.u32 %v1714, 2147483648
  %v1729 = vxor.u32 %v1719, 2147483648
  %v1730 = vxor.u32 %v1724, 2147483648
  %v1731 = vmul.f32 %v1727, 1.442695
  %v1732 = vpow.pop %v1731
  %v1733 = vmul.f32 %v1728, 1.442695
  %v1734 = vpow.pop %v1733
  %v1735 = vmul.f32 %v1729, 1.442695
  %v1736 = vpow.pop %v1735
  %v1737 = vmul.f32 %v1730, 1.442695
  %v1738 = vpow.pop %v1737
  %v1739 = vadd.f32 %v1732, 1.0
  %v1740 = vadd.f32 %v1734, 1.0
  %v1741 = vadd.f32 %v1736, 1.0
  %v1742 = vadd.f32 %v1738, 1.0
  %v1743 = vrcp.pop %v1739
  %v1744 = vmul.f32 1.0, %v1743
  %v1745 = vrcp.pop %v1740
  %v1746 = vmul.f32 1.0, %v1745
  %v1747 = vrcp.pop %v1741
  %v1748 = vmul.f32 1.0, %v1747
  %v1749 = vrcp.pop %v1742
  %v1750 = vmul.f32 1.0, %v1749
  %1755 = vrot.lane.b32.xlu0 %v1744, 64
  %v1756 = vpop.permute.xlu0 %1755
  %1757 = vrot.lane.b32.xlu0 %v1746, 64
  %v1758 = vpop.permute.xlu0 %1757
  %1759 = vrot.lane.b32.xlu0 %v1748, 64
  %v1760 = vpop.permute.xlu0 %1759
  %1761 = vrot.lane.b32.xlu0 %v1750, 64
  %v1762 = vpop.permute.xlu0 %1761
  %v1767 = vmul.f32 %v1709, %v1756
  %v1768 = vmul.f32 %v1714, %v1758
  %v1769 = vmul.f32 %v1719, %v1760
  %v1770 = vmul.f32 %v1724, %v1762
  %v1771 = vmul.f32 %v1611, 2.0
  %v1772 = vmul.f32 %v1612, 2.0
  %v1773 = vmul.f32 %v1613, 2.0
  %v1774 = vmul.f32 %v1614, 2.0
  %1779 = vrot.lane.b32.xlu0 %v1771, 112
  %v1780 = vpop.permute.xlu0 %1779
  %1781 = vrot.lane.b32.xlu0 %v1772, 112
  %v1782 = vpop.permute.xlu0 %1781
  %1783 = vrot.lane.b32.xlu0 %v1773, 112
  %v1784 = vpop.permute.xlu0 %1783
  %1785 = vrot.lane.b32.xlu0 %v1774, 112
  %v1786 = vpop.permute.xlu0 %1785
  %v1791 = vadd.f32 %v1611, %v1780
  %v1792 = vadd.f32 %v1612, %v1782
  %v1793 = vadd.f32 %v1613, %v1784
  %v1794 = vadd.f32 %v1614, %v1786
  %1799 = vrot.lane.b32.xlu0 %v1611, 96
  %v1800 = vpop.permute.xlu0 %1799
  %1801 = vrot.lane.b32.xlu0 %v1612, 96
  %v1802 = vpop.permute.xlu0 %1801
  %1803 = vrot.lane.b32.xlu0 %v1613, 96
  %v1804 = vpop.permute.xlu0 %1803
  %1805 = vrot.lane.b32.xlu0 %v1614, 96
  %v1806 = vpop.permute.xlu0 %1805
  %v1811 = vadd.f32 %v1791, %v1800
  %v1812 = vadd.f32 %v1792, %v1802
  %v1813 = vadd.f32 %v1793, %v1804
  %v1814 = vadd.f32 %v1794, %v1806
  %v1815 = vmul.f32 %v1811, 0.25
  %v1816 = vmul.f32 %v1812, 0.25
  %v1817 = vmul.f32 %v1813, 0.25
  %v1818 = vmul.f32 %v1814, 0.25
  %v1819 = vmul.f32 %v1767, 2.0
  %v1820 = vmul.f32 %v1768, 2.0
  %v1821 = vmul.f32 %v1769, 2.0
  %v1822 = vmul.f32 %v1770, 2.0
  %1827 = vrot.lane.b32.xlu0 %v1819, 112
  %v1828 = vpop.permute.xlu0 %1827
  %1829 = vrot.lane.b32.xlu0 %v1820, 112
  %v1830 = vpop.permute.xlu0 %1829
  %1831 = vrot.lane.b32.xlu0 %v1821, 112
  %v1832 = vpop.permute.xlu0 %1831
  %1833 = vrot.lane.b32.xlu0 %v1822, 112
  %v1834 = vpop.permute.xlu0 %1833
  %v1839 = vsub.f32 %v1611, %v1828
  %v1840 = vsub.f32 %v1612, %v1830
  %v1841 = vsub.f32 %v1613, %v1832
  %v1842 = vsub.f32 %v1614, %v1834
  %v1843 = vsub.f32 %v1839, %v1800
  %v1844 = vsub.f32 %v1840, %v1802
  %v1845 = vsub.f32 %v1841, %v1804
  %v1846 = vsub.f32 %v1842, %v1806
  %v1847 = vmul.f32 %v1843, 0.25
  %v1848 = vmul.f32 %v1844, 0.25
  %v1849 = vmul.f32 %v1845, 0.25
  %v1850 = vmul.f32 %v1846, 0.25
  %v1851 = vsub.f32 %v1611, %v1780
  %v1852 = vsub.f32 %v1612, %v1782
  %v1853 = vsub.f32 %v1613, %v1784
  %v1854 = vsub.f32 %v1614, %v1786
  %v1855 = vadd.f32 %v1851, %v1800
  %v1856 = vadd.f32 %v1852, %v1802
  %v1857 = vadd.f32 %v1853, %v1804
  %v1858 = vadd.f32 %v1854, %v1806
  %v1859 = vmul.f32 %v1855, 0.25
  %v1860 = vmul.f32 %v1856, 0.25
  %v1861 = vmul.f32 %v1857, 0.25
  %v1862 = vmul.f32 %v1858, 0.25
  %v1863 = vadd.f32 %v1611, %v1828
  %v1864 = vadd.f32 %v1612, %v1830
  %v1865 = vadd.f32 %v1613, %v1832
  %v1866 = vadd.f32 %v1614, %v1834
  %v1867 = vsub.f32 %v1863, %v1800
  %v1868 = vsub.f32 %v1864, %v1802
  %v1869 = vsub.f32 %v1865, %v1804
  %v1870 = vsub.f32 %v1866, %v1806
  %v1871 = vmul.f32 %v1867, 0.25
  %v1872 = vmul.f32 %v1868, 0.25
  %v1873 = vmul.f32 %v1869, 0.25
  %v1874 = vmul.f32 %v1870, 0.25
  %1879 = vrot.lane.b32.xlu0 %v1847, 16
  %v1880 = vpop.permute.xlu0 %1879
  %1881 = vrot.lane.b32.xlu0 %v1848, 16
  %v1882 = vpop.permute.xlu0 %1881
  %1883 = vrot.lane.b32.xlu0 %v1849, 16
  %v1884 = vpop.permute.xlu0 %1883
  %1885 = vrot.lane.b32.xlu0 %v1850, 16
  %v1886 = vpop.permute.xlu0 %1885
  %1895 = vrot.lane.b32.xlu0 %v1859, 32
  %v1896 = vpop.permute.xlu0 %1895
  %1897 = vrot.lane.b32.xlu0 %v1860, 32
  %v1898 = vpop.permute.xlu0 %1897
  %1899 = vrot.lane.b32.xlu0 %v1861, 32
  %v1900 = vpop.permute.xlu0 %1899
  %1901 = vrot.lane.b32.xlu0 %v1862, 32
  %v1902 = vpop.permute.xlu0 %1901
  %1911 = vrot.lane.b32.xlu0 %v1871, 48
  %v1912 = vpop.permute.xlu0 %1911
  %1913 = vrot.lane.b32.xlu0 %v1872, 48
  %v1914 = vpop.permute.xlu0 %1913
  %1915 = vrot.lane.b32.xlu0 %v1873, 48
  %v1916 = vpop.permute.xlu0 %1915
  %1917 = vrot.lane.b32.xlu0 %v1874, 48
  %v1918 = vpop.permute.xlu0 %1917
  %v1923 = vsel %vm69, %v1815, %v1880
  %v1924 = vsel %vm69, %v1816, %v1882
  %v1925 = vsel %vm69, %v1817, %v1884
  %v1926 = vsel %vm69, %v1818, %v1886
  %v1927 = vsel %vm852, %v1923, %v1896
  %v1928 = vsel %vm852, %v1924, %v1898
  %v1929 = vsel %vm852, %v1925, %v1900
  %v1930 = vsel %vm852, %v1926, %v1902
  %vm1931 = vcmask 392192
  %v1932 = vsel %vm1931, %v1927, %v1912
  %v1933 = vsel %vm1931, %v1928, %v1914
  %v1934 = vsel %vm1931, %v1929, %v1916
  %v1935 = vsel %vm1931, %v1930, %v1918
  %v1936 = vld [vmem:[%s14] sm:$0xff]
  %v1937 = vld [vmem:[%s14 + $0x8] sm:$0xff]
  %v1938 = vld [vmem:[%s14 + $0x10] sm:$0xff]
  %v1939 = vld [vmem:[%s14 + $0x18] sm:$0xff]
  %v1940 = vld [vmem:[%s14 + $0x20] sm:$0xff]
  %v1941 = vld [vmem:[%s14 + $0x28] sm:$0xff]
  %v1942 = vld [vmem:[%s14 + $0x30] sm:$0xff]
  %v1943 = vld [vmem:[%s14 + $0x38] sm:$0xff]
  %v1945 = vsel %vm1161, %v1932, 0
  %v1948 = vsel %vm1161, %v1933, 0
  %v1951 = vsel %vm1161, %v1934, 0
  %v1954 = vsel %vm1161, %v1935, 0
  %1956 = vmatprep.subr.mxu0 0.0
  %1957 = vmatpush1.msra.mxu0 0.0
  %1958 = vmatprep.subr.mxu0 0.0
  %1959 = vmatpush1.msra.mxu0 0.0
  %1960 = vmatprep.subr.mxu0 0.0
  %1961 = vmatpush1.msra.mxu0 0.0
  %1962 = vmatprep.subr.mxu0 0.0
  %1963 = vmatpush1.msra.mxu0 0.0
  %1964 = vmatprep.subr.mxu0 0.0
  %1965 = vmatpush1.msra.mxu0 0.0
  %1966 = vmatprep.subr.mxu0 0.0
  %1967 = vmatpush1.msra.mxu0 0.0
  %1968 = vmatprep.subr.mxu0 0.0
  %1969 = vmatpush1.msra.mxu0 0.0
  %1970 = vmatprep.subr.mxu0 0.0
  %1971 = vmatpush1.msra.mxu0 0.0
  %1972 = vmatprep.subr.mxu0 0.0
  %1973 = vmatpush1.msra.mxu0 %v1943
  %1974 = vmatprep.subr.mxu0 0.0
  %1975 = vmatpush1.msra.mxu0 %v1942
  %1976 = vmatprep.subr.mxu0 0.0
  %1977 = vmatpush1.msra.mxu0 %v1941
  %1978 = vmatprep.subr.mxu0 0.0
  %1979 = vmatpush1.msra.mxu0 %v1940
  %1980 = vmatprep.subr.mxu0 0.0
  %1981 = vmatpush1.msra.mxu0 %v1939
  %1982 = vmatprep.subr.mxu0 0.0
  %1983 = vmatpush1.msra.mxu0 %v1938
  %1984 = vmatprep.subr.mxu0 0.0
  %1985 = vmatpush1.msra.mxu0 %v1937
  %1986 = vmatprep.subr.mxu0 0.0
  %1987 = vmatpush1.msra.mxu0 %v1936
  %1988 = vmatprep.subr.mxu0 0.0
  %1989 = vmatpush2.msra.mxu0 0.0
  %1990 = vmatprep.subr.mxu0 0.0
  %1991 = vmatpush2.msra.mxu0 0.0
  %1992 = vmatprep.subr.mxu0 0.0
  %1993 = vmatpush2.msra.mxu0 0.0
  %1994 = vmatprep.subr.mxu0 0.0
  %1995 = vmatpush2.msra.mxu0 0.0
  %1996 = vmatprep.subr.mxu0 0.0
  %1997 = vmatpush2.msra.mxu0 0.0
  %1998 = vmatprep.subr.mxu0 0.0
  %1999 = vmatpush2.msra.mxu0 0.0
  %2000 = vmatprep.subr.mxu0 0.0
  %2001 = vmatpush2.msra.mxu0 0.0
  %2002 = vmatprep.subr.mxu0 0.0
  %2003 = vmatpush2.msra.mxu0 0.0
  %2004 = vmatprep.subr.mxu0 0.0
  %2005 = vmatpush2.msra.mxu0 0.0
  %2006 = vmatprep.subr.mxu0 0.0
  %2007 = vmatpush2.msra.mxu0 0.0
  %2008 = vmatprep.subr.mxu0 0.0
  %2009 = vmatpush2.msra.mxu0 0.0
  %2010 = vmatprep.subr.mxu0 0.0
  %2011 = vmatpush2.msra.mxu0 0.0
  %2012 = vmatprep.subr.mxu0 0.0
  %2013 = vmatpush2.msra.mxu0 0.0
  %2014 = vmatprep.subr.mxu0 0.0
  %2015 = vmatpush2.msra.mxu0 0.0
  %2016 = vmatprep.subr.mxu0 0.0
  %2017 = vmatpush2.msra.mxu0 0.0
  %2018 = vmatprep.subr.mxu0 0.0
  %2019 = vmatpush2.msra.mxu0 0.0
  %2020 = vmatprep.mubr.f32.mxu0 0.0
  %2021 = vmatmul.mubr.f32.gmra.mxu0 %v1945
  %v2022 = vpop.f32.mrf.mxu0
  %v2023 = vadd.f32 0.0, %v2022
  %v2024 = vpop.f32.mrf.mxu0
  %2025 = vmatprep.mubr.f32.mxu0 0.0
  %2026 = vmatmul.mubr.f32.gmra.mxu0 %v1948
  %v2027 = vpop.f32.mrf.mxu0
  %v2028 = vadd.f32 0.0, %v2027
  %v2029 = vpop.f32.mrf.mxu0
  %2030 = vmatprep.mubr.f32.mxu0 0.0
  %2031 = vmatmul.mubr.f32.gmra.mxu0 %v1951
  %v2032 = vpop.f32.mrf.mxu0
  %v2033 = vadd.f32 0.0, %v2032
  %v2034 = vpop.f32.mrf.mxu0
  %2035 = vmatprep.mubr.f32.mxu0 0.0
  %2036 = vmatmul.mubr.f32.gmra.mxu0 %v1954
  %v2037 = vpop.f32.mrf.mxu0
  %v2038 = vadd.f32 0.0, %v2037
  %v2039 = vpop.f32.mrf.mxu0
  %2040 = vdwg.mxu0
  %v2041 = vld [vmem:[%s15] sm:$0xff]
  %v2042 = vld [vmem:[%s15 + $0x8] sm:$0xff]
  %v2043 = vld [vmem:[%s16] sm:$0x1]
  %v2045 = vlaneseq
  %v2046 = vshrl.u32 %v2045, 7
  %v2047 = vsub.s32 0, %v2046
  %v2048 = vrot.slane %v2043, %v2047
  %v2051 = vsel %vm69, %v2023, 0
  %v2054 = vsel %vm69, %v2028, 0
  %v2057 = vsel %vm69, %v2033, 0
  %v2060 = vsel %vm69, %v2038, 0
  %2062 = vmatprep.subr.mxu0 0.0
  %2063 = vmatpush1.msra.mxu0 0.0
  %2064 = vmatprep.subr.mxu0 0.0
  %2065 = vmatpush1.msra.mxu0 0.0
  %2066 = vmatprep.subr.mxu0 0.0
  %2067 = vmatpush1.msra.mxu0 0.0
  %2068 = vmatprep.subr.mxu0 0.0
  %2069 = vmatpush1.msra.mxu0 0.0
  %2070 = vmatprep.subr.mxu0 0.0
  %2071 = vmatpush1.msra.mxu0 0.0
  %2072 = vmatprep.subr.mxu0 0.0
  %2073 = vmatpush1.msra.mxu0 0.0
  %2074 = vmatprep.subr.mxu0 0.0
  %2075 = vmatpush1.msra.mxu0 0.0
  %2076 = vmatprep.subr.mxu0 0.0
  %2077 = vmatpush1.msra.mxu0 0.0
  %2078 = vmatprep.subr.mxu0 0.0
  %2079 = vmatpush1.msra.mxu0 0.0
  %2080 = vmatprep.subr.mxu0 0.0
  %2081 = vmatpush1.msra.mxu0 0.0
  %2082 = vmatprep.subr.mxu0 0.0
  %2083 = vmatpush1.msra.mxu0 0.0
  %2084 = vmatprep.subr.mxu0 0.0
  %2085 = vmatpush1.msra.mxu0 0.0
  %2086 = vmatprep.subr.mxu0 0.0
  %2087 = vmatpush1.msra.mxu0 0.0
  %2088 = vmatprep.subr.mxu0 0.0
  %2089 = vmatpush1.msra.mxu0 0.0
  %2090 = vmatprep.subr.mxu0 0.0
  %2091 = vmatpush1.msra.mxu0 %v2042
  %2092 = vmatprep.subr.mxu0 0.0
  %2093 = vmatpush1.msra.mxu0 %v2041
  %2094 = vmatprep.subr.mxu0 0.0
  %2095 = vmatpush2.msra.mxu0 0.0
  %2096 = vmatprep.subr.mxu0 0.0
  %2097 = vmatpush2.msra.mxu0 0.0
  %2098 = vmatprep.subr.mxu0 0.0
  %2099 = vmatpush2.msra.mxu0 0.0
  %2100 = vmatprep.subr.mxu0 0.0
  %2101 = vmatpush2.msra.mxu0 0.0
  %2102 = vmatprep.subr.mxu0 0.0
  %2103 = vmatpush2.msra.mxu0 0.0
  %2104 = vmatprep.subr.mxu0 0.0
  %2105 = vmatpush2.msra.mxu0 0.0
  %2106 = vmatprep.subr.mxu0 0.0
  %2107 = vmatpush2.msra.mxu0 0.0
  %2108 = vmatprep.subr.mxu0 0.0
  %2109 = vmatpush2.msra.mxu0 0.0
  %2110 = vmatprep.subr.mxu0 0.0
  %2111 = vmatpush2.msra.mxu0 0.0
  %2112 = vmatprep.subr.mxu0 0.0
  %2113 = vmatpush2.msra.mxu0 0.0
  %2114 = vmatprep.subr.mxu0 0.0
  %2115 = vmatpush2.msra.mxu0 0.0
  %2116 = vmatprep.subr.mxu0 0.0
  %2117 = vmatpush2.msra.mxu0 0.0
  %2118 = vmatprep.subr.mxu0 0.0
  %2119 = vmatpush2.msra.mxu0 0.0
  %2120 = vmatprep.subr.mxu0 0.0
  %2121 = vmatpush2.msra.mxu0 0.0
  %2122 = vmatprep.subr.mxu0 0.0
  %2123 = vmatpush2.msra.mxu0 0.0
  %2124 = vmatprep.subr.mxu0 0.0
  %2125 = vmatpush2.msra.mxu0 0.0
  %2126 = vmatprep.mubr.f32.mxu0 0.0
  %2127 = vmatmul.mubr.f32.gmra.mxu0 %v2051
  %v2128 = vpop.f32.mrf.mxu0
  %v2129 = vadd.f32 %v2048, %v2128
  %v2130 = vpop.f32.mrf.mxu0
  %2131 = vmatprep.mubr.f32.mxu0 0.0
  %2132 = vmatmul.mubr.f32.gmra.mxu0 %v2054
  %v2133 = vpop.f32.mrf.mxu0
  %v2134 = vadd.f32 %v2048, %v2133
  %v2135 = vpop.f32.mrf.mxu0
  %2136 = vmatprep.mubr.f32.mxu0 0.0
  %2137 = vmatmul.mubr.f32.gmra.mxu0 %v2057
  %v2138 = vpop.f32.mrf.mxu0
  %v2139 = vadd.f32 %v2048, %v2138
  %v2140 = vpop.f32.mrf.mxu0
  %2141 = vmatprep.mubr.f32.mxu0 0.0
  %2142 = vmatmul.mubr.f32.gmra.mxu0 %v2060
  %v2143 = vpop.f32.mrf.mxu0
  %v2144 = vadd.f32 %v2048, %v2143
  %v2145 = vpop.f32.mrf.mxu0
  %2146 = vdwg.mxu0
  %v2147 = vxor.u32 %v2129, 2147483648
  %v2148 = vxor.u32 %v2134, 2147483648
  %v2149 = vxor.u32 %v2139, 2147483648
  %v2150 = vxor.u32 %v2144, 2147483648
  %v2151 = vmul.f32 %v2147, 1.442695
  %v2152 = vpow.pop %v2151
  %v2153 = vmul.f32 %v2148, 1.442695
  %v2154 = vpow.pop %v2153
  %v2155 = vmul.f32 %v2149, 1.442695
  %v2156 = vpow.pop %v2155
  %v2157 = vmul.f32 %v2150, 1.442695
  %v2158 = vpow.pop %v2157
  %v2159 = vadd.f32 %v2152, 1.0
  %v2160 = vadd.f32 %v2154, 1.0
  %v2161 = vadd.f32 %v2156, 1.0
  %v2162 = vadd.f32 %v2158, 1.0
  %v2163 = vrcp.pop %v2159
  %v2164 = vmul.f32 1.0, %v2163
  %v2165 = vrcp.pop %v2160
  %v2166 = vmul.f32 1.0, %v2165
  %v2167 = vrcp.pop %v2161
  %v2168 = vmul.f32 1.0, %v2167
  %v2169 = vrcp.pop %v2162
  %v2170 = vmul.f32 1.0, %v2169
  %v2171 = vld [vmem:[%s17] sm:$0xff]
  %v2172 = vld [vmem:[%s17 + $0x8] sm:$0xff]
  %v2173 = vld [vmem:[%s18] sm:$0x1]
  %v2175 = vlaneseq
  %v2176 = vshrl.u32 %v2175, 7
  %v2177 = vsub.s32 0, %v2176
  %v2178 = vrot.slane %v2173, %v2177
  %v2181 = vsel %vm69, %v2164, 0
  %v2184 = vsel %vm69, %v2166, 0
  %v2187 = vsel %vm69, %v2168, 0
  %v2190 = vsel %vm69, %v2170, 0
  %2192 = vmatprep.subr.mxu0 0.0
  %2193 = vmatpush1.msra.mxu0 0.0
  %2194 = vmatprep.subr.mxu0 0.0
  %2195 = vmatpush1.msra.mxu0 0.0
  %2196 = vmatprep.subr.mxu0 0.0
  %2197 = vmatpush1.msra.mxu0 0.0
  %2198 = vmatprep.subr.mxu0 0.0
  %2199 = vmatpush1.msra.mxu0 0.0
  %2200 = vmatprep.subr.mxu0 0.0
  %2201 = vmatpush1.msra.mxu0 0.0
  %2202 = vmatprep.subr.mxu0 0.0
  %2203 = vmatpush1.msra.mxu0 0.0
  %2204 = vmatprep.subr.mxu0 0.0
  %2205 = vmatpush1.msra.mxu0 0.0
  %2206 = vmatprep.subr.mxu0 0.0
  %2207 = vmatpush1.msra.mxu0 0.0
  %2208 = vmatprep.subr.mxu0 0.0
  %2209 = vmatpush1.msra.mxu0 0.0
  %2210 = vmatprep.subr.mxu0 0.0
  %2211 = vmatpush1.msra.mxu0 0.0
  %2212 = vmatprep.subr.mxu0 0.0
  %2213 = vmatpush1.msra.mxu0 0.0
  %2214 = vmatprep.subr.mxu0 0.0
  %2215 = vmatpush1.msra.mxu0 0.0
  %2216 = vmatprep.subr.mxu0 0.0
  %2217 = vmatpush1.msra.mxu0 0.0
  %2218 = vmatprep.subr.mxu0 0.0
  %2219 = vmatpush1.msra.mxu0 0.0
  %2220 = vmatprep.subr.mxu0 0.0
  %2221 = vmatpush1.msra.mxu0 %v2172
  %2222 = vmatprep.subr.mxu0 0.0
  %2223 = vmatpush1.msra.mxu0 %v2171
  %2224 = vmatprep.subr.mxu0 0.0
  %2225 = vmatpush2.msra.mxu0 0.0
  %2226 = vmatprep.subr.mxu0 0.0
  %2227 = vmatpush2.msra.mxu0 0.0
  %2228 = vmatprep.subr.mxu0 0.0
  %2229 = vmatpush2.msra.mxu0 0.0
  %2230 = vmatprep.subr.mxu0 0.0
  %2231 = vmatpush2.msra.mxu0 0.0
  %2232 = vmatprep.subr.mxu0 0.0
  %2233 = vmatpush2.msra.mxu0 0.0
  %2234 = vmatprep.subr.mxu0 0.0
  %2235 = vmatpush2.msra.mxu0 0.0
  %2236 = vmatprep.subr.mxu0 0.0
  %2237 = vmatpush2.msra.mxu0 0.0
  %2238 = vmatprep.subr.mxu0 0.0
  %2239 = vmatpush2.msra.mxu0 0.0
  %2240 = vmatprep.subr.mxu0 0.0
  %2241 = vmatpush2.msra.mxu0 0.0
  %2242 = vmatprep.subr.mxu0 0.0
  %2243 = vmatpush2.msra.mxu0 0.0
  %2244 = vmatprep.subr.mxu0 0.0
  %2245 = vmatpush2.msra.mxu0 0.0
  %2246 = vmatprep.subr.mxu0 0.0
  %2247 = vmatpush2.msra.mxu0 0.0
  %2248 = vmatprep.subr.mxu0 0.0
  %2249 = vmatpush2.msra.mxu0 0.0
  %2250 = vmatprep.subr.mxu0 0.0
  %2251 = vmatpush2.msra.mxu0 0.0
  %2252 = vmatprep.subr.mxu0 0.0
  %2253 = vmatpush2.msra.mxu0 0.0
  %2254 = vmatprep.subr.mxu0 0.0
  %2255 = vmatpush2.msra.mxu0 0.0
  %2256 = vmatprep.mubr.f32.mxu0 0.0
  %2257 = vmatmul.mubr.f32.gmra.mxu0 %v2181
  %v2258 = vpop.f32.mrf.mxu0
  %v2259 = vadd.f32 %v2178, %v2258
  %v2260 = vpop.f32.mrf.mxu0
  %2261 = vmatprep.mubr.f32.mxu0 0.0
  %2262 = vmatmul.mubr.f32.gmra.mxu0 %v2184
  %v2263 = vpop.f32.mrf.mxu0
  %v2264 = vadd.f32 %v2178, %v2263
  %v2265 = vpop.f32.mrf.mxu0
  %2266 = vmatprep.mubr.f32.mxu0 0.0
  %2267 = vmatmul.mubr.f32.gmra.mxu0 %v2187
  %v2268 = vpop.f32.mrf.mxu0
  %v2269 = vadd.f32 %v2178, %v2268
  %v2270 = vpop.f32.mrf.mxu0
  %2271 = vmatprep.mubr.f32.mxu0 0.0
  %2272 = vmatmul.mubr.f32.gmra.mxu0 %v2190
  %v2273 = vpop.f32.mrf.mxu0
  %v2274 = vadd.f32 %v2178, %v2273
  %v2275 = vpop.f32.mrf.mxu0
  %2276 = vdwg.mxu0
  %2277 = vst.msk [vmem:[%s19] sm:$0xff] %vm779, %v2259
  %2278 = vst.msk [vmem:[%s19 + $0x8] sm:$0xff] %vm779, %v2264
  %s2279 = scalar_lea.vmem %s19, 16
  %2280 = vst.msk [vmem:[%s2279] sm:$0xff] %vm779, %v2269
  %2281 = vst.msk [vmem:[%s2279 + $0x8] sm:$0xff] %vm779, %v2274
  // Predicated region
  $region78: #{model_forward.8} parent=0 // pred_check
    _
  $region79: #{model_forward.8} parent=0 // pred_check_branch
    %2283 = sbr.rel (0) target = $region81
  $region80: #{model_forward.8} parent=0 // pred_region
    _
  $region81: #{model_forward.8} parent=0 // pred_fallthru
    _
  // Predicated region
  $region82: #{model_forward.8} parent=0 // pred_check
    _
  $region83: #{model_forward.8} parent=0 // pred_check_branch
    %2285 = sbr.rel (0) target = $region85
  $region84: #{model_forward.8} parent=0 // pred_region
    _
  $region85: #{model_forward.8} parent=0 // pred_fallthru
    _

// kernel: model_forward.7
$region0: #{model_forward.7}
  #allocation0 [shape = 'u32[]', space=smem, size = 0x4, offset = 0x4, fixed_abs, tag = 'smem constant byte address 0x4 - core index']
  #allocation1 [shape = 'u32[144,128]{1,0:T(1,128)}', space=vmem, size = 0x12000, scoped, tag = 'internal scratch']
  %s0 = inlined_call_operand.vmem [shape: f32[2,1,16,8], index: 0, kind: input, shape index: {}]
  %s1 = inlined_call_operand.vmem [shape: f32[4,16,16], index: 1, kind: input, shape index: {}]
  %s2 = inlined_call_operand.vmem [shape: f32[32,128], index: 2, kind: input, shape index: {}]
  %s3 = inlined_call_operand.vmem [shape: f32[1,128], index: 3, kind: input, shape index: {}]
  %s4 = inlined_call_operand.vmem [shape: f32[32,128], index: 4, kind: input, shape index: {}]
  %s5 = inlined_call_operand.vmem [shape: f32[1,128], index: 5, kind: input, shape index: {}]
  %s6 = inlined_call_operand.vmem [shape: f32[64,128], index: 6, kind: input, shape index: {}]
  %s7 = inlined_call_operand.vmem [shape: f32[1,128], index: 7, kind: input, shape index: {}]
  %s8 = inlined_call_operand.vmem [shape: f32[64,128], index: 8, kind: input, shape index: {}]
  %s9 = inlined_call_operand.vmem [shape: f32[1,128], index: 9, kind: input, shape index: {}]
  %s10 = inlined_call_operand.vmem [shape: f32[64,128], index: 10, kind: input, shape index: {}]
  %s11 = inlined_call_operand.vmem [shape: f32[1,128], index: 11, kind: input, shape index: {}]
  %s12 = inlined_call_operand.vmem [shape: f32[64,128], index: 12, kind: input, shape index: {}]
  %s13 = inlined_call_operand.vmem [shape: f32[1,128], index: 13, kind: input, shape index: {}]
  %s14 = inlined_call_operand.vmem [shape: f32[64,16], index: 14, kind: input, shape index: {}]
  %s15 = inlined_call_operand.vmem [shape: f32[16,16], index: 15, kind: input, shape index: {}]
  %s16 = inlined_call_operand.vmem [shape: f32[1,16], index: 16, kind: input, shape index: {}]
  %s17 = inlined_call_operand.vmem [shape: f32[16,8], index: 17, kind: input, shape index: {}]
  %s18 = inlined_call_operand.vmem [shape: f32[1,8], index: 18, kind: input, shape index: {}]
  %s19 = inlined_call_operand.vmem [shape: f32[8,8], index: 19, kind: input, shape index: {}]
  %s20 = inlined_call_operand.vmem [shape: f32[1,8], index: 20, kind: input, shape index: {}]
  %s21 = inlined_call_operand.vmem [shape: f32[16,8], index: 21, kind: input, shape index: {}]
  %s22 = inlined_call_operand.vmem [shape: f32[1,8], index: 22, kind: input, shape index: {}]
  %s23 = inlined_call_operand.vmem [shape: f32[2,16,8], index: 23, kind: output, shape index: {0}]
  %s24 = inlined_call_operand.vmem [shape: f32[2,1,16,8], index: 24, kind: output, shape index: {1}]
  %25 = xla_tuple %s23, %s24
  %s26 = sld [smem:[#allocation0]]
  $region110: #{model_forward.7} parent=0
    _
  %s28 = ssub.s32 1, %s26
  %s29 = scalar_select 0, %s28, %s26
  // Predicated region
  $region2: #{model_forward.7} parent=0 // pred_check
    _
  $region3: #{model_forward.7} parent=0 // pred_check_branch
    %31 = sbr.rel (0) target = $region5
  $region4: #{model_forward.7} parent=0 // pred_region
    _
  $region5: #{model_forward.7} parent=0 // pred_fallthru
    _
  // Predicated region
  $region6: #{model_forward.7} parent=0 // pred_check
    _
  $region7: #{model_forward.7} parent=0 // pred_check_branch
    %33 = sbr.rel (0) target = $region9
  $region8: #{model_forward.7} parent=0 // pred_region
    _
  $region9: #{model_forward.7} parent=0 // pred_fallthru
    _
  // Predicated region
  $region10: #{model_forward.7} parent=0 // pred_check
    _
  $region11: #{model_forward.7} parent=0 // pred_check_branch
    %35 = sbr.rel (0) target = $region13
  $region12: #{model_forward.7} parent=0 // pred_region
    _
  $region13: #{model_forward.7} parent=0 // pred_fallthru
    _
  // Predicated region
  $region14: #{model_forward.7} parent=0 // pred_check
    _
  $region15: #{model_forward.7} parent=0 // pred_check_branch
    %37 = sbr.rel (0) target = $region17
  $region16: #{model_forward.7} parent=0 // pred_region
    _
  $region17: #{model_forward.7} parent=0 // pred_fallthru
    _
  // Predicated region
  $region18: #{model_forward.7} parent=0 // pred_check
    _
  $region19: #{model_forward.7} parent=0 // pred_check_branch
    %39 = sbr.rel (0) target = $region21
  $region20: #{model_forward.7} parent=0 // pred_region
    _
  $region21: #{model_forward.7} parent=0 // pred_fallthru
    _
  // Predicated region
  $region22: #{model_forward.7} parent=0 // pred_check
    _
  $region23: #{model_forward.7} parent=0 // pred_check_branch
    %41 = sbr.rel (0) target = $region25
  $region24: #{model_forward.7} parent=0 // pred_region
    _
  $region25: #{model_forward.7} parent=0 // pred_fallthru
    _
  // Predicated region
  $region26: #{model_forward.7} parent=0 // pred_check
    _
  $region27: #{model_forward.7} parent=0 // pred_check_branch
    %43 = sbr.rel (0) target = $region29
  $region28: #{model_forward.7} parent=0 // pred_region
    _
  $region29: #{model_forward.7} parent=0 // pred_fallthru
    _
  // Predicated region
  $region30: #{model_forward.7} parent=0 // pred_check
    _
  $region31: #{model_forward.7} parent=0 // pred_check_branch
    %45 = sbr.rel (0) target = $region33
  $region32: #{model_forward.7} parent=0 // pred_region
    _
  $region33: #{model_forward.7} parent=0 // pred_fallthru
    _
  // Predicated region
  $region34: #{model_forward.7} parent=0 // pred_check
    _
  $region35: #{model_forward.7} parent=0 // pred_check_branch
    %47 = sbr.rel (0) target = $region37
  $region36: #{model_forward.7} parent=0 // pred_region
    _
  $region37: #{model_forward.7} parent=0 // pred_fallthru
    _
  // Predicated region
  $region38: #{model_forward.7} parent=0 // pred_check
    _
  $region39: #{model_forward.7} parent=0 // pred_check_branch
    %49 = sbr.rel (0) target = $region41
  $region40: #{model_forward.7} parent=0 // pred_region
    _
  $region41: #{model_forward.7} parent=0 // pred_fallthru
    _
  // Predicated region
  $region42: #{model_forward.7} parent=0 // pred_check
    _
  $region43: #{model_forward.7} parent=0 // pred_check_branch
    %51 = sbr.rel (0) target = $region45
  $region44: #{model_forward.7} parent=0 // pred_region
    _
  $region45: #{model_forward.7} parent=0 // pred_fallthru
    _
  // Predicated region
  $region46: #{model_forward.7} parent=0 // pred_check
    _
  $region47: #{model_forward.7} parent=0 // pred_check_branch
    %53 = sbr.rel (0) target = $region49
  $region48: #{model_forward.7} parent=0 // pred_region
    _
  $region49: #{model_forward.7} parent=0 // pred_fallthru
    _
  // Predicated region
  $region50: #{model_forward.7} parent=0 // pred_check
    _
  $region51: #{model_forward.7} parent=0 // pred_check_branch
    %55 = sbr.rel (0) target = $region53
  $region52: #{model_forward.7} parent=0 // pred_region
    _
  $region53: #{model_forward.7} parent=0 // pred_fallthru
    _
  // Predicated region
  $region54: #{model_forward.7} parent=0 // pred_check
    _
  $region55: #{model_forward.7} parent=0 // pred_check_branch
    %57 = sbr.rel (0) target = $region57
  $region56: #{model_forward.7} parent=0 // pred_region
    _
  $region57: #{model_forward.7} parent=0 // pred_fallthru
    _
  // Predicated region
  $region58: #{model_forward.7} parent=0 // pred_check
    _
  $region59: #{model_forward.7} parent=0 // pred_check_branch
    %59 = sbr.rel (0) target = $region61
  $region60: #{model_forward.7} parent=0 // pred_region
    _
  $region61: #{model_forward.7} parent=0 // pred_fallthru
    _
  // Predicated region
  $region62: #{model_forward.7} parent=0 // pred_check
    _
  $region63: #{model_forward.7} parent=0 // pred_check_branch
    %61 = sbr.rel (0) target = $region65
  $region64: #{model_forward.7} parent=0 // pred_region
    _
  $region65: #{model_forward.7} parent=0 // pred_fallthru
    _
  // Predicated region
  $region66: #{model_forward.7} parent=0 // pred_check
    _
  $region67: #{model_forward.7} parent=0 // pred_check_branch
    %63 = sbr.rel (0) target = $region69
  $region68: #{model_forward.7} parent=0 // pred_region
    _
  $region69: #{model_forward.7} parent=0 // pred_fallthru
    _
  // Predicated region
  $region70: #{model_forward.7} parent=0 // pred_check
    _
  $region71: #{model_forward.7} parent=0 // pred_check_branch
    %65 = sbr.rel (0) target = $region73
  $region72: #{model_forward.7} parent=0 // pred_region
    _
  $region73: #{model_forward.7} parent=0 // pred_fallthru
    _
  // Predicated region
  $region74: #{model_forward.7} parent=0 // pred_check
    _
  $region75: #{model_forward.7} parent=0 // pred_check_branch
    %67 = sbr.rel (0) target = $region77
  $region76: #{model_forward.7} parent=0 // pred_region
    _
  $region77: #{model_forward.7} parent=0 // pred_fallthru
    _
  // Predicated region
  $region78: #{model_forward.7} parent=0 // pred_check
    _
  $region79: #{model_forward.7} parent=0 // pred_check_branch
    %69 = sbr.rel (0) target = $region81
  $region80: #{model_forward.7} parent=0 // pred_region
    _
  $region81: #{model_forward.7} parent=0 // pred_fallthru
    _
  // Predicated region
  $region82: #{model_forward.7} parent=0 // pred_check
    _
  $region83: #{model_forward.7} parent=0 // pred_check_branch
    %71 = sbr.rel (0) target = $region85
  $region84: #{model_forward.7} parent=0 // pred_region
    _
  $region85: #{model_forward.7} parent=0 // pred_fallthru
    _
  // Predicated region
  $region86: #{model_forward.7} parent=0 // pred_check
    _
  $region87: #{model_forward.7} parent=0 // pred_check_branch
    %73 = sbr.rel (0) target = $region89
  $region88: #{model_forward.7} parent=0 // pred_region
    _
  $region89: #{model_forward.7} parent=0 // pred_fallthru
    _
  // Predicated region
  $region90: #{model_forward.7} parent=0 // pred_check
    _
  $region91: #{model_forward.7} parent=0 // pred_check_branch
    %75 = sbr.rel (0) target = $region93
  $region92: #{model_forward.7} parent=0 // pred_region
    _
  $region93: #{model_forward.7} parent=0 // pred_fallthru
    _
  %v76 = vld [vmem:[%s0] sm:$0xff]
  %v77 = vld [vmem:[%s0 + $0x8] sm:$0xff]
  %s78 = scalar_lea.vmem %s0, 16
  %v79 = vld [vmem:[%s78] sm:$0xff]
  %v80 = vld [vmem:[%s78 + $0x8] sm:$0xff]
  %v81 = vld [vmem:[%s1] sm:$0xff]
  %v82 = vld [vmem:[%s1 + $0x8] sm:$0xff]
  %vm83 = vcmask 130048
  %v85 = vsel %vm83, %v81, 0
  %v88 = vsel %vm83, %v82, 0
  %90 = vmatprep.subr.mxu0 0.0
  %91 = vmatpush1.msra.mxu0 0.0
  %92 = vmatprep.subr.mxu0 0.0
  %93 = vmatpush1.msra.mxu0 0.0
  %94 = vmatprep.subr.mxu0 0.0
  %95 = vmatpush1.msra.mxu0 0.0
  %96 = vmatprep.subr.mxu0 0.0
  %97 = vmatpush1.msra.mxu0 0.0
  %98 = vmatprep.subr.mxu0 0.0
  %99 = vmatpush1.msra.mxu0 0.0
  %100 = vmatprep.subr.mxu0 0.0
  %101 = vmatpush1.msra.mxu0 0.0
  %102 = vmatprep.subr.mxu0 0.0
  %103 = vmatpush1.msra.mxu0 0.0
  %104 = vmatprep.subr.mxu0 0.0
  %105 = vmatpush1.msra.mxu0 0.0
  %106 = vmatprep.subr.mxu0 0.0
  %107 = vmatpush1.msra.mxu0 0.0
  %108 = vmatprep.subr.mxu0 0.0
  %109 = vmatpush1.msra.mxu0 0.0
  %110 = vmatprep.subr.mxu0 0.0
  %111 = vmatpush1.msra.mxu0 0.0
  %112 = vmatprep.subr.mxu0 0.0
  %113 = vmatpush1.msra.mxu0 0.0
  %114 = vmatprep.subr.mxu0 0.0
  %115 = vmatpush1.msra.mxu0 0.0
  %116 = vmatprep.subr.mxu0 0.0
  %117 = vmatpush1.msra.mxu0 0.0
  %118 = vmatprep.subr.mxu0 0.0
  %119 = vmatpush1.msra.mxu0 %v77
  %120 = vmatprep.subr.mxu0 0.0
  %121 = vmatpush1.msra.mxu0 %v76
  %122 = vmatprep.subr.mxu0 0.0
  %123 = vmatpush2.msra.mxu0 0.0
  %124 = vmatprep.subr.mxu0 0.0
  %125 = vmatpush2.msra.mxu0 0.0
  %126 = vmatprep.subr.mxu0 0.0
  %127 = vmatpush2.msra.mxu0 0.0
  %128 = vmatprep.subr.mxu0 0.0
  %129 = vmatpush2.msra.mxu0 0.0
  %130 = vmatprep.subr.mxu0 0.0
  %131 = vmatpush2.msra.mxu0 0.0
  %132 = vmatprep.subr.mxu0 0.0
  %133 = vmatpush2.msra.mxu0 0.0
  %134 = vmatprep.subr.mxu0 0.0
  %135 = vmatpush2.msra.mxu0 0.0
  %136 = vmatprep.subr.mxu0 0.0
  %137 = vmatpush2.msra.mxu0 0.0
  %138 = vmatprep.subr.mxu0 0.0
  %139 = vmatpush2.msra.mxu0 0.0
  %140 = vmatprep.subr.mxu0 0.0
  %141 = vmatpush2.msra.mxu0 0.0
  %142 = vmatprep.subr.mxu0 0.0
  %143 = vmatpush2.msra.mxu0 0.0
  %144 = vmatprep.subr.mxu0 0.0
  %145 = vmatpush2.msra.mxu0 0.0
  %146 = vmatprep.subr.mxu0 0.0
  %147 = vmatpush2.msra.mxu0 0.0
  %148 = vmatprep.subr.mxu0 0.0
  %149 = vmatpush2.msra.mxu0 0.0
  %150 = vmatprep.subr.mxu0 0.0
  %151 = vmatpush2.msra.mxu0 0.0
  %152 = vmatprep.subr.mxu0 0.0
  %153 = vmatpush2.msra.mxu0 0.0
  %154 = vmatprep.mubr.f32.mxu0 0.0
  %155 = vmatmul.mubr.f32.gmra.mxu0 %v85
  %v156 = vpop.f32.mrf.mxu0
  %v157 = vadd.f32 0.0, %v156
  %v158 = vpop.f32.mrf.mxu0
  %159 = vmatprep.mubr.f32.mxu0 0.0
  %160 = vmatmul.mubr.f32.gmra.mxu0 %v88
  %v161 = vpop.f32.mrf.mxu0
  %v162 = vadd.f32 0.0, %v161
  %v163 = vpop.f32.mrf.mxu0
  %164 = vdwg.mxu0
  %165 = vmatprep.subr.mxu0 0.0
  %166 = vmatpush1.msra.mxu0 0.0
  %167 = vmatprep.subr.mxu0 0.0
  %168 = vmatpush1.msra.mxu0 0.0
  %169 = vmatprep.subr.mxu0 0.0
  %170 = vmatpush1.msra.mxu0 0.0
  %171 = vmatprep.subr.mxu0 0.0
  %172 = vmatpush1.msra.mxu0 0.0
  %173 = vmatprep.subr.mxu0 0.0
  %174 = vmatpush1.msra.mxu0 0.0
  %175 = vmatprep.subr.mxu0 0.0
  %176 = vmatpush1.msra.mxu0 0.0
  %177 = vmatprep.subr.mxu0 0.0
  %178 = vmatpush1.msra.mxu0 0.0
  %179 = vmatprep.subr.mxu0 0.0
  %180 = vmatpush1.msra.mxu0 0.0
  %181 = vmatprep.subr.mxu0 0.0
  %182 = vmatpush1.msra.mxu0 0.0
  %183 = vmatprep.subr.mxu0 0.0
  %184 = vmatpush1.msra.mxu0 0.0
  %185 = vmatprep.subr.mxu0 0.0
  %186 = vmatpush1.msra.mxu0 0.0
  %187 = vmatprep.subr.mxu0 0.0
  %188 = vmatpush1.msra.mxu0 0.0
  %189 = vmatprep.subr.mxu0 0.0
  %190 = vmatpush1.msra.mxu0 0.0
  %191 = vmatprep.subr.mxu0 0.0
  %192 = vmatpush1.msra.mxu0 0.0
  %193 = vmatprep.subr.mxu0 0.0
  %194 = vmatpush1.msra.mxu0 %v80
  %195 = vmatprep.subr.mxu0 0.0
  %196 = vmatpush1.msra.mxu0 %v79
  %197 = vmatprep.subr.mxu0 0.0
  %198 = vmatpush2.msra.mxu0 0.0
  %199 = vmatprep.subr.mxu0 0.0
  %200 = vmatpush2.msra.mxu0 0.0
  %201 = vmatprep.subr.mxu0 0.0
  %202 = vmatpush2.msra.mxu0 0.0
  %203 = vmatprep.subr.mxu0 0.0
  %204 = vmatpush2.msra.mxu0 0.0
  %205 = vmatprep.subr.mxu0 0.0
  %206 = vmatpush2.msra.mxu0 0.0
  %207 = vmatprep.subr.mxu0 0.0
  %208 = vmatpush2.msra.mxu0 0.0
  %209 = vmatprep.subr.mxu0 0.0
  %210 = vmatpush2.msra.mxu0 0.0
  %211 = vmatprep.subr.mxu0 0.0
  %212 = vmatpush2.msra.mxu0 0.0
  %213 = vmatprep.subr.mxu0 0.0
  %214 = vmatpush2.msra.mxu0 0.0
  %215 = vmatprep.subr.mxu0 0.0
  %216 = vmatpush2.msra.mxu0 0.0
  %217 = vmatprep.subr.mxu0 0.0
  %218 = vmatpush2.msra.mxu0 0.0
  %219 = vmatprep.subr.mxu0 0.0
  %220 = vmatpush2.msra.mxu0 0.0
  %221 = vmatprep.subr.mxu0 0.0
  %222 = vmatpush2.msra.mxu0 0.0
  %223 = vmatprep.subr.mxu0 0.0
  %224 = vmatpush2.msra.mxu0 0.0
  %225 = vmatprep.subr.mxu0 0.0
  %226 = vmatpush2.msra.mxu0 0.0
  %227 = vmatprep.subr.mxu0 0.0
  %228 = vmatpush2.msra.mxu0 0.0
  %229 = vmatprep.mubr.f32.mxu0 0.0
  %230 = vmatmul.mubr.f32.gmra.mxu0 %v85
  %v231 = vpop.f32.mrf.mxu0
  %v232 = vadd.f32 0.0, %v231
  %v233 = vpop.f32.mrf.mxu0
  %234 = vmatprep.mubr.f32.mxu0 0.0
  %235 = vmatmul.mubr.f32.gmra.mxu0 %v88
  %v236 = vpop.f32.mrf.mxu0
  %v237 = vadd.f32 0.0, %v236
  %v238 = vpop.f32.mrf.mxu0
  %239 = vdwg.mxu0
  %s240 = scalar_lea.vmem %s1, 16
  %v241 = vld [vmem:[%s240] sm:$0xff]
  %v242 = vld [vmem:[%s240 + $0x8] sm:$0xff]
  %v244 = vsel %vm83, %v241, 0
  %v247 = vsel %vm83, %v242, 0
  %249 = vmatprep.subr.mxu0 0.0
  %250 = vmatpush1.msra.mxu0 0.0
  %251 = vmatprep.subr.mxu0 0.0
  %252 = vmatpush1.msra.mxu0 0.0
  %253 = vmatprep.subr.mxu0 0.0
  %254 = vmatpush1.msra.mxu0 0.0
  %255 = vmatprep.subr.mxu0 0.0
  %256 = vmatpush1.msra.mxu0 0.0
  %257 = vmatprep.subr.mxu0 0.0
  %258 = vmatpush1.msra.mxu0 0.0
  %259 = vmatprep.subr.mxu0 0.0
  %260 = vmatpush1.msra.mxu0 0.0
  %261 = vmatprep.subr.mxu0 0.0
  %262 = vmatpush1.msra.mxu0 0.0
  %263 = vmatprep.subr.mxu0 0.0
  %264 = vmatpush1.msra.mxu0 0.0
  %265 = vmatprep.subr.mxu0 0.0
  %266 = vmatpush1.msra.mxu0 0.0
  %267 = vmatprep.subr.mxu0 0.0
  %268 = vmatpush1.msra.mxu0 0.0
  %269 = vmatprep.subr.mxu0 0.0
  %270 = vmatpush1.msra.mxu0 0.0
  %271 = vmatprep.subr.mxu0 0.0
  %272 = vmatpush1.msra.mxu0 0.0
  %273 = vmatprep.subr.mxu0 0.0
  %274 = vmatpush1.msra.mxu0 0.0
  %275 = vmatprep.subr.mxu0 0.0
  %276 = vmatpush1.msra.mxu0 0.0
  %277 = vmatprep.subr.mxu0 0.0
  %278 = vmatpush1.msra.mxu0 %v77
  %279 = vmatprep.subr.mxu0 0.0
  %280 = vmatpush1.msra.mxu0 %v76
  %281 = vmatprep.subr.mxu0 0.0
  %282 = vmatpush2.msra.mxu0 0.0
  %283 = vmatprep.subr.mxu0 0.0
  %284 = vmatpush2.msra.mxu0 0.0
  %285 = vmatprep.subr.mxu0 0.0
  %286 = vmatpush2.msra.mxu0 0.0
  %287 = vmatprep.subr.mxu0 0.0
  %288 = vmatpush2.msra.mxu0 0.0
  %289 = vmatprep.subr.mxu0 0.0
  %290 = vmatpush2.msra.mxu0 0.0
  %291 = vmatprep.subr.mxu0 0.0
  %292 = vmatpush2.msra.mxu0 0.0
  %293 = vmatprep.subr.mxu0 0.0
  %294 = vmatpush2.msra.mxu0 0.0
  %295 = vmatprep.subr.mxu0 0.0
  %296 = vmatpush2.msra.mxu0 0.0
  %297 = vmatprep.subr.mxu0 0.0
  %298 = vmatpush2.msra.mxu0 0.0
  %299 = vmatprep.subr.mxu0 0.0
  %300 = vmatpush2.msra.mxu0 0.0
  %301 = vmatprep.subr.mxu0 0.0
  %302 = vmatpush2.msra.mxu0 0.0
  %303 = vmatprep.subr.mxu0 0.0
  %304 = vmatpush2.msra.mxu0 0.0
  %305 = vmatprep.subr.mxu0 0.0
  %306 = vmatpush2.msra.mxu0 0.0
  %307 = vmatprep.subr.mxu0 0.0
  %308 = vmatpush2.msra.mxu0 0.0
  %309 = vmatprep.subr.mxu0 0.0
  %310 = vmatpush2.msra.mxu0 0.0
  %311 = vmatprep.subr.mxu0 0.0
  %312 = vmatpush2.msra.mxu0 0.0
  %313 = vmatprep.mubr.f32.mxu0 0.0
  %314 = vmatmul.mubr.f32.gmra.mxu0 %v244
  %v315 = vpop.f32.mrf.mxu0
  %v316 = vadd.f32 0.0, %v315
  %v317 = vpop.f32.mrf.mxu0
  %318 = vmatprep.mubr.f32.mxu0 0.0
  %319 = vmatmul.mubr.f32.gmra.mxu0 %v247
  %v320 = vpop.f32.mrf.mxu0
  %v321 = vadd.f32 0.0, %v320
  %v322 = vpop.f32.mrf.mxu0
  %323 = vdwg.mxu0
  %324 = vmatprep.subr.mxu0 0.0
  %325 = vmatpush1.msra.mxu0 0.0
  %326 = vmatprep.subr.mxu0 0.0
  %327 = vmatpush1.msra.mxu0 0.0
  %328 = vmatprep.subr.mxu0 0.0
  %329 = vmatpush1.msra.mxu0 0.0
  %330 = vmatprep.subr.mxu0 0.0
  %331 = vmatpush1.msra.mxu0 0.0
  %332 = vmatprep.subr.mxu0 0.0
  %333 = vmatpush1.msra.mxu0 0.0
  %334 = vmatprep.subr.mxu0 0.0
  %335 = vmatpush1.msra.mxu0 0.0
  %336 = vmatprep.subr.mxu0 0.0
  %337 = vmatpush1.msra.mxu0 0.0
  %338 = vmatprep.subr.mxu0 0.0
  %339 = vmatpush1.msra.mxu0 0.0
  %340 = vmatprep.subr.mxu0 0.0
  %341 = vmatpush1.msra.mxu0 0.0
  %342 = vmatprep.subr.mxu0 0.0
  %343 = vmatpush1.msra.mxu0 0.0
  %344 = vmatprep.subr.mxu0 0.0
  %345 = vmatpush1.msra.mxu0 0.0
  %346 = vmatprep.subr.mxu0 0.0
  %347 = vmatpush1.msra.mxu0 0.0
  %348 = vmatprep.subr.mxu0 0.0
  %349 = vmatpush1.msra.mxu0 0.0
  %350 = vmatprep.subr.mxu0 0.0
  %351 = vmatpush1.msra.mxu0 0.0
  %352 = vmatprep.subr.mxu0 0.0
  %353 = vmatpush1.msra.mxu0 %v80
  %354 = vmatprep.subr.mxu0 0.0
  %355 = vmatpush1.msra.mxu0 %v79
  %356 = vmatprep.subr.mxu0 0.0
  %357 = vmatpush2.msra.mxu0 0.0
  %358 = vmatprep.subr.mxu0 0.0
  %359 = vmatpush2.msra.mxu0 0.0
  %360 = vmatprep.subr.mxu0 0.0
  %361 = vmatpush2.msra.mxu0 0.0
  %362 = vmatprep.subr.mxu0 0.0
  %363 = vmatpush2.msra.mxu0 0.0
  %364 = vmatprep.subr.mxu0 0.0
  %365 = vmatpush2.msra.mxu0 0.0
  %366 = vmatprep.subr.mxu0 0.0
  %367 = vmatpush2.msra.mxu0 0.0
  %368 = vmatprep.subr.mxu0 0.0
  %369 = vmatpush2.msra.mxu0 0.0
  %370 = vmatprep.subr.mxu0 0.0
  %371 = vmatpush2.msra.mxu0 0.0
  %372 = vmatprep.subr.mxu0 0.0
  %373 = vmatpush2.msra.mxu0 0.0
  %374 = vmatprep.subr.mxu0 0.0
  %375 = vmatpush2.msra.mxu0 0.0
  %376 = vmatprep.subr.mxu0 0.0
  %377 = vmatpush2.msra.mxu0 0.0
  %378 = vmatprep.subr.mxu0 0.0
  %379 = vmatpush2.msra.mxu0 0.0
  %380 = vmatprep.subr.mxu0 0.0
  %381 = vmatpush2.msra.mxu0 0.0
  %382 = vmatprep.subr.mxu0 0.0
  %383 = vmatpush2.msra.mxu0 0.0
  %384 = vmatprep.subr.mxu0 0.0
  %385 = vmatpush2.msra.mxu0 0.0
  %386 = vmatprep.subr.mxu0 0.0
  %387 = vmatpush2.msra.mxu0 0.0
  %388 = vmatprep.mubr.f32.mxu0 0.0
  %389 = vmatmul.mubr.f32.gmra.mxu0 %v244
  %v390 = vpop.f32.mrf.mxu0
  %v391 = vadd.f32 0.0, %v390
  %v392 = vpop.f32.mrf.mxu0
  %393 = vmatprep.mubr.f32.mxu0 0.0
  %394 = vmatmul.mubr.f32.gmra.mxu0 %v247
  %v395 = vpop.f32.mrf.mxu0
  %v396 = vadd.f32 0.0, %v395
  %v397 = vpop.f32.mrf.mxu0
  %398 = vdwg.mxu0
  %s399 = scalar_lea.vmem %s1, 32
  %v400 = vld [vmem:[%s399] sm:$0xff]
  %v401 = vld [vmem:[%s399 + $0x8] sm:$0xff]
  %v403 = vsel %vm83, %v400, 0
  %v406 = vsel %vm83, %v401, 0
  %408 = vmatprep.subr.mxu0 0.0
  %409 = vmatpush1.msra.mxu0 0.0
  %410 = vmatprep.subr.mxu0 0.0
  %411 = vmatpush1.msra.mxu0 0.0
  %412 = vmatprep.subr.mxu0 0.0
  %413 = vmatpush1.msra.mxu0 0.0
  %414 = vmatprep.subr.mxu0 0.0
  %415 = vmatpush1.msra.mxu0 0.0
  %416 = vmatprep.subr.mxu0 0.0
  %417 = vmatpush1.msra.mxu0 0.0
  %418 = vmatprep.subr.mxu0 0.0
  %419 = vmatpush1.msra.mxu0 0.0
  %420 = vmatprep.subr.mxu0 0.0
  %421 = vmatpush1.msra.mxu0 0.0
  %422 = vmatprep.subr.mxu0 0.0
  %423 = vmatpush1.msra.mxu0 0.0
  %424 = vmatprep.subr.mxu0 0.0
  %425 = vmatpush1.msra.mxu0 0.0
  %426 = vmatprep.subr.mxu0 0.0
  %427 = vmatpush1.msra.mxu0 0.0
  %428 = vmatprep.subr.mxu0 0.0
  %429 = vmatpush1.msra.mxu0 0.0
  %430 = vmatprep.subr.mxu0 0.0
  %431 = vmatpush1.msra.mxu0 0.0
  %432 = vmatprep.subr.mxu0 0.0
  %433 = vmatpush1.msra.mxu0 0.0
  %434 = vmatprep.subr.mxu0 0.0
  %435 = vmatpush1.msra.mxu0 0.0
  %436 = vmatprep.subr.mxu0 0.0
  %437 = vmatpush1.msra.mxu0 %v77
  %438 = vmatprep.subr.mxu0 0.0
  %439 = vmatpush1.msra.mxu0 %v76
  %440 = vmatprep.subr.mxu0 0.0
  %441 = vmatpush2.msra.mxu0 0.0
  %442 = vmatprep.subr.mxu0 0.0
  %443 = vmatpush2.msra.mxu0 0.0
  %444 = vmatprep.subr.mxu0 0.0
  %445 = vmatpush2.msra.mxu0 0.0
  %446 = vmatprep.subr.mxu0 0.0
  %447 = vmatpush2.msra.mxu0 0.0
  %448 = vmatprep.subr.mxu0 0.0
  %449 = vmatpush2.msra.mxu0 0.0
  %450 = vmatprep.subr.mxu0 0.0
  %451 = vmatpush2.msra.mxu0 0.0
  %452 = vmatprep.subr.mxu0 0.0
  %453 = vmatpush2.msra.mxu0 0.0
  %454 = vmatprep.subr.mxu0 0.0
  %455 = vmatpush2.msra.mxu0 0.0
  %456 = vmatprep.subr.mxu0 0.0
  %457 = vmatpush2.msra.mxu0 0.0
  %458 = vmatprep.subr.mxu0 0.0
  %459 = vmatpush2.msra.mxu0 0.0
  %460 = vmatprep.subr.mxu0 0.0
  %461 = vmatpush2.msra.mxu0 0.0
  %462 = vmatprep.subr.mxu0 0.0
  %463 = vmatpush2.msra.mxu0 0.0
  %464 = vmatprep.subr.mxu0 0.0
  %465 = vmatpush2.msra.mxu0 0.0
  %466 = vmatprep.subr.mxu0 0.0
  %467 = vmatpush2.msra.mxu0 0.0
  %468 = vmatprep.subr.mxu0 0.0
  %469 = vmatpush2.msra.mxu0 0.0
  %470 = vmatprep.subr.mxu0 0.0
  %471 = vmatpush2.msra.mxu0 0.0
  %472 = vmatprep.mubr.f32.mxu0 0.0
  %473 = vmatmul.mubr.f32.gmra.mxu0 %v403
  %v474 = vpop.f32.mrf.mxu0
  %v475 = vadd.f32 0.0, %v474
  %v476 = vpop.f32.mrf.mxu0
  %477 = vmatprep.mubr.f32.mxu0 0.0
  %478 = vmatmul.mubr.f32.gmra.mxu0 %v406
  %v479 = vpop.f32.mrf.mxu0
  %v480 = vadd.f32 0.0, %v479
  %v481 = vpop.f32.mrf.mxu0
  %482 = vdwg.mxu0
  %483 = vmatprep.subr.mxu0 0.0
  %484 = vmatpush1.msra.mxu0 0.0
  %485 = vmatprep.subr.mxu0 0.0
  %486 = vmatpush1.msra.mxu0 0.0
  %487 = vmatprep.subr.mxu0 0.0
  %488 = vmatpush1.msra.mxu0 0.0
  %489 = vmatprep.subr.mxu0 0.0
  %490 = vmatpush1.msra.mxu0 0.0
  %491 = vmatprep.subr.mxu0 0.0
  %492 = vmatpush1.msra.mxu0 0.0
  %493 = vmatprep.subr.mxu0 0.0
  %494 = vmatpush1.msra.mxu0 0.0
  %495 = vmatprep.subr.mxu0 0.0
  %496 = vmatpush1.msra.mxu0 0.0
  %497 = vmatprep.subr.mxu0 0.0
  %498 = vmatpush1.msra.mxu0 0.0
  %499 = vmatprep.subr.mxu0 0.0
  %500 = vmatpush1.msra.mxu0 0.0
  %501 = vmatprep.subr.mxu0 0.0
  %502 = vmatpush1.msra.mxu0 0.0
  %503 = vmatprep.subr.mxu0 0.0
  %504 = vmatpush1.msra.mxu0 0.0
  %505 = vmatprep.subr.mxu0 0.0
  %506 = vmatpush1.msra.mxu0 0.0
  %507 = vmatprep.subr.mxu0 0.0
  %508 = vmatpush1.msra.mxu0 0.0
  %509 = vmatprep.subr.mxu0 0.0
  %510 = vmatpush1.msra.mxu0 0.0
  %511 = vmatprep.subr.mxu0 0.0
  %512 = vmatpush1.msra.mxu0 %v80
  %513 = vmatprep.subr.mxu0 0.0
  %514 = vmatpush1.msra.mxu0 %v79
  %515 = vmatprep.subr.mxu0 0.0
  %516 = vmatpush2.msra.mxu0 0.0
  %517 = vmatprep.subr.mxu0 0.0
  %518 = vmatpush2.msra.mxu0 0.0
  %519 = vmatprep.subr.mxu0 0.0
  %520 = vmatpush2.msra.mxu0 0.0
  %521 = vmatprep.subr.mxu0 0.0
  %522 = vmatpush2.msra.mxu0 0.0
  %523 = vmatprep.subr.mxu0 0.0
  %524 = vmatpush2.msra.mxu0 0.0
  %525 = vmatprep.subr.mxu0 0.0
  %526 = vmatpush2.msra.mxu0 0.0
  %527 = vmatprep.subr.mxu0 0.0
  %528 = vmatpush2.msra.mxu0 0.0
  %529 = vmatprep.subr.mxu0 0.0
  %530 = vmatpush2.msra.mxu0 0.0
  %531 = vmatprep.subr.mxu0 0.0
  %532 = vmatpush2.msra.mxu0 0.0
  %533 = vmatprep.subr.mxu0 0.0
  %534 = vmatpush2.msra.mxu0 0.0
  %535 = vmatprep.subr.mxu0 0.0
  %536 = vmatpush2.msra.mxu0 0.0
  %537 = vmatprep.subr.mxu0 0.0
  %538 = vmatpush2.msra.mxu0 0.0
  %539 = vmatprep.subr.mxu0 0.0
  %540 = vmatpush2.msra.mxu0 0.0
  %541 = vmatprep.subr.mxu0 0.0
  %542 = vmatpush2.msra.mxu0 0.0
  %543 = vmatprep.subr.mxu0 0.0
  %544 = vmatpush2.msra.mxu0 0.0
  %545 = vmatprep.subr.mxu0 0.0
  %546 = vmatpush2.msra.mxu0 0.0
  %547 = vmatprep.mubr.f32.mxu0 0.0
  %548 = vmatmul.mubr.f32.gmra.mxu0 %v403
  %v549 = vpop.f32.mrf.mxu0
  %v550 = vadd.f32 0.0, %v549
  %v551 = vpop.f32.mrf.mxu0
  %552 = vmatprep.mubr.f32.mxu0 0.0
  %553 = vmatmul.mubr.f32.gmra.mxu0 %v406
  %v554 = vpop.f32.mrf.mxu0
  %v555 = vadd.f32 0.0, %v554
  %v556 = vpop.f32.mrf.mxu0
  %557 = vdwg.mxu0
  %s558 = scalar_lea.vmem %s1, 48
  %v559 = vld [vmem:[%s558] sm:$0xff]
  %v560 = vld [vmem:[%s558 + $0x8] sm:$0xff]
  %v562 = vsel %vm83, %v559, 0
  %v565 = vsel %vm83, %v560, 0
  %567 = vmatprep.subr.mxu0 0.0
  %568 = vmatpush1.msra.mxu0 0.0
  %569 = vmatprep.subr.mxu0 0.0
  %570 = vmatpush1.msra.mxu0 0.0
  %571 = vmatprep.subr.mxu0 0.0
  %572 = vmatpush1.msra.mxu0 0.0
  %573 = vmatprep.subr.mxu0 0.0
  %574 = vmatpush1.msra.mxu0 0.0
  %575 = vmatprep.subr.mxu0 0.0
  %576 = vmatpush1.msra.mxu0 0.0
  %577 = vmatprep.subr.mxu0 0.0
  %578 = vmatpush1.msra.mxu0 0.0
  %579 = vmatprep.subr.mxu0 0.0
  %580 = vmatpush1.msra.mxu0 0.0
  %581 = vmatprep.subr.mxu0 0.0
  %582 = vmatpush1.msra.mxu0 0.0
  %583 = vmatprep.subr.mxu0 0.0
  %584 = vmatpush1.msra.mxu0 0.0
  %585 = vmatprep.subr.mxu0 0.0
  %586 = vmatpush1.msra.mxu0 0.0
  %587 = vmatprep.subr.mxu0 0.0
  %588 = vmatpush1.msra.mxu0 0.0
  %589 = vmatprep.subr.mxu0 0.0
  %590 = vmatpush1.msra.mxu0 0.0
  %591 = vmatprep.subr.mxu0 0.0
  %592 = vmatpush1.msra.mxu0 0.0
  %593 = vmatprep.subr.mxu0 0.0
  %594 = vmatpush1.msra.mxu0 0.0
  %595 = vmatprep.subr.mxu0 0.0
  %596 = vmatpush1.msra.mxu0 %v77
  %597 = vmatprep.subr.mxu0 0.0
  %598 = vmatpush1.msra.mxu0 %v76
  %599 = vmatprep.subr.mxu0 0.0
  %600 = vmatpush2.msra.mxu0 0.0
  %601 = vmatprep.subr.mxu0 0.0
  %602 = vmatpush2.msra.mxu0 0.0
  %603 = vmatprep.subr.mxu0 0.0
  %604 = vmatpush2.msra.mxu0 0.0
  %605 = vmatprep.subr.mxu0 0.0
  %606 = vmatpush2.msra.mxu0 0.0
  %607 = vmatprep.subr.mxu0 0.0
  %608 = vmatpush2.msra.mxu0 0.0
  %609 = vmatprep.subr.mxu0 0.0
  %610 = vmatpush2.msra.mxu0 0.0
  %611 = vmatprep.subr.mxu0 0.0
  %612 = vmatpush2.msra.mxu0 0.0
  %613 = vmatprep.subr.mxu0 0.0
  %614 = vmatpush2.msra.mxu0 0.0
  %615 = vmatprep.subr.mxu0 0.0
  %616 = vmatpush2.msra.mxu0 0.0
  %617 = vmatprep.subr.mxu0 0.0
  %618 = vmatpush2.msra.mxu0 0.0
  %619 = vmatprep.subr.mxu0 0.0
  %620 = vmatpush2.msra.mxu0 0.0
  %621 = vmatprep.subr.mxu0 0.0
  %622 = vmatpush2.msra.mxu0 0.0
  %623 = vmatprep.subr.mxu0 0.0
  %624 = vmatpush2.msra.mxu0 0.0
  %625 = vmatprep.subr.mxu0 0.0
  %626 = vmatpush2.msra.mxu0 0.0
  %627 = vmatprep.subr.mxu0 0.0
  %628 = vmatpush2.msra.mxu0 0.0
  %629 = vmatprep.subr.mxu0 0.0
  %630 = vmatpush2.msra.mxu0 0.0
  %631 = vmatprep.mubr.f32.mxu0 0.0
  %632 = vmatmul.mubr.f32.gmra.mxu0 %v562
  %v633 = vpop.f32.mrf.mxu0
  %v634 = vadd.f32 0.0, %v633
  %v635 = vpop.f32.mrf.mxu0
  %636 = vmatprep.mubr.f32.mxu0 0.0
  %637 = vmatmul.mubr.f32.gmra.mxu0 %v565
  %v638 = vpop.f32.mrf.mxu0
  %v639 = vadd.f32 0.0, %v638
  %v640 = vpop.f32.mrf.mxu0
  %641 = vdwg.mxu0
  %642 = vmatprep.subr.mxu0 0.0
  %643 = vmatpush1.msra.mxu0 0.0
  %644 = vmatprep.subr.mxu0 0.0
  %645 = vmatpush1.msra.mxu0 0.0
  %646 = vmatprep.subr.mxu0 0.0
  %647 = vmatpush1.msra.mxu0 0.0
  %648 = vmatprep.subr.mxu0 0.0
  %649 = vmatpush1.msra.mxu0 0.0
  %650 = vmatprep.subr.mxu0 0.0
  %651 = vmatpush1.msra.mxu0 0.0
  %652 = vmatprep.subr.mxu0 0.0
  %653 = vmatpush1.msra.mxu0 0.0
  %654 = vmatprep.subr.mxu0 0.0
  %655 = vmatpush1.msra.mxu0 0.0
  %656 = vmatprep.subr.mxu0 0.0
  %657 = vmatpush1.msra.mxu0 0.0
  %658 = vmatprep.subr.mxu0 0.0
  %659 = vmatpush1.msra.mxu0 0.0
  %660 = vmatprep.subr.mxu0 0.0
  %661 = vmatpush1.msra.mxu0 0.0
  %662 = vmatprep.subr.mxu0 0.0
  %663 = vmatpush1.msra.mxu0 0.0
  %664 = vmatprep.subr.mxu0 0.0
  %665 = vmatpush1.msra.mxu0 0.0
  %666 = vmatprep.subr.mxu0 0.0
  %667 = vmatpush1.msra.mxu0 0.0
  %668 = vmatprep.subr.mxu0 0.0
  %669 = vmatpush1.msra.mxu0 0.0
  %670 = vmatprep.subr.mxu0 0.0
  %671 = vmatpush1.msra.mxu0 %v80
  %672 = vmatprep.subr.mxu0 0.0
  %673 = vmatpush1.msra.mxu0 %v79
  %674 = vmatprep.subr.mxu0 0.0
  %675 = vmatpush2.msra.mxu0 0.0
  %676 = vmatprep.subr.mxu0 0.0
  %677 = vmatpush2.msra.mxu0 0.0
  %678 = vmatprep.subr.mxu0 0.0
  %679 = vmatpush2.msra.mxu0 0.0
  %680 = vmatprep.subr.mxu0 0.0
  %681 = vmatpush2.msra.mxu0 0.0
  %682 = vmatprep.subr.mxu0 0.0
  %683 = vmatpush2.msra.mxu0 0.0
  %684 = vmatprep.subr.mxu0 0.0
  %685 = vmatpush2.msra.mxu0 0.0
  %686 = vmatprep.subr.mxu0 0.0
  %687 = vmatpush2.msra.mxu0 0.0
  %688 = vmatprep.subr.mxu0 0.0
  %689 = vmatpush2.msra.mxu0 0.0
  %690 = vmatprep.subr.mxu0 0.0
  %691 = vmatpush2.msra.mxu0 0.0
  %692 = vmatprep.subr.mxu0 0.0
  %693 = vmatpush2.msra.mxu0 0.0
  %694 = vmatprep.subr.mxu0 0.0
  %695 = vmatpush2.msra.mxu0 0.0
  %696 = vmatprep.subr.mxu0 0.0
  %697 = vmatpush2.msra.mxu0 0.0
  %698 = vmatprep.subr.mxu0 0.0
  %699 = vmatpush2.msra.mxu0 0.0
  %700 = vmatprep.subr.mxu0 0.0
  %701 = vmatpush2.msra.mxu0 0.0
  %702 = vmatprep.subr.mxu0 0.0
  %703 = vmatpush2.msra.mxu0 0.0
  %704 = vmatprep.subr.mxu0 0.0
  %705 = vmatpush2.msra.mxu0 0.0
  %706 = vmatprep.mubr.f32.mxu0 0.0
  %707 = vmatmul.mubr.f32.gmra.mxu0 %v562
  %v708 = vpop.f32.mrf.mxu0
  %v709 = vadd.f32 0.0, %v708
  %v710 = vpop.f32.mrf.mxu0
  %711 = vmatprep.mubr.f32.mxu0 0.0
  %712 = vmatmul.mubr.f32.gmra.mxu0 %v565
  %v713 = vpop.f32.mrf.mxu0
  %v714 = vadd.f32 0.0, %v713
  %v715 = vpop.f32.mrf.mxu0
  %716 = vdwg.mxu0
  %v717 = vadd.f32 %v157, %v316
  %v718 = vadd.f32 %v162, %v321
  %v719 = vadd.f32 %v232, %v391
  %v720 = vadd.f32 %v237, %v396
  %v721 = vadd.f32 %v717, %v475
  %v722 = vadd.f32 %v718, %v480
  %v723 = vadd.f32 %v719, %v550
  %v724 = vadd.f32 %v720, %v555
  %v725 = vadd.f32 %v721, %v634
  %v726 = vadd.f32 %v722, %v639
  %v727 = vadd.f32 %v723, %v709
  %v728 = vadd.f32 %v724, %v714
  %v729 = vsub.f32 %v157, %v475
  %v730 = vsub.f32 %v162, %v480
  %v731 = vsub.f32 %v232, %v550
  %v732 = vsub.f32 %v237, %v555
  %v733 = vsub.f32 %v157, %v316
  %v734 = vsub.f32 %v162, %v321
  %v735 = vsub.f32 %v232, %v391
  %v736 = vsub.f32 %v237, %v396
  %v737 = vadd.f32 %v733, %v475
  %v738 = vadd.f32 %v734, %v480
  %v739 = vadd.f32 %v735, %v550
  %v740 = vadd.f32 %v736, %v555
  %v741 = vsub.f32 %v737, %v634
  %v742 = vsub.f32 %v738, %v639
  %v743 = vsub.f32 %v739, %v709
  %v744 = vsub.f32 %v740, %v714
  %v745 = vsub.f32 %v634, %v316
  %v746 = vsub.f32 %v639, %v321
  %v747 = vsub.f32 %v709, %v391
  %v748 = vsub.f32 %v714, %v396
  %753 = vrot.lane.b32.xlu0 %v729, 8
  %v754 = vpop.permute.xlu0 %753
  %755 = vrot.lane.b32.xlu0 %v730, 8
  %v756 = vpop.permute.xlu0 %755
  %757 = vrot.lane.b32.xlu0 %v731, 8
  %v758 = vpop.permute.xlu0 %757
  %759 = vrot.lane.b32.xlu0 %v732, 8
  %v760 = vpop.permute.xlu0 %759
  %769 = vrot.lane.b32.xlu0 %v741, 16
  %v770 = vpop.permute.xlu0 %769
  %771 = vrot.lane.b32.xlu0 %v742, 16
  %v772 = vpop.permute.xlu0 %771
  %773 = vrot.lane.b32.xlu0 %v743, 16
  %v774 = vpop.permute.xlu0 %773
  %775 = vrot.lane.b32.xlu0 %v744, 16
  %v776 = vpop.permute.xlu0 %775
  %781 = vrot.lane.b32.xlu0 %v729, 24
  %v782 = vpop.permute.xlu0 %781
  %783 = vrot.lane.b32.xlu0 %v730, 24
  %v784 = vpop.permute.xlu0 %783
  %785 = vrot.lane.b32.xlu0 %v731, 24
  %v786 = vpop.permute.xlu0 %785
  %787 = vrot.lane.b32.xlu0 %v732, 24
  %v788 = vpop.permute.xlu0 %787
  %vm793 = vcmask 64512
  %v794 = vsel %vm793, %v725, %v754
  %v795 = vsel %vm793, %v726, %v756
  %v796 = vsel %vm793, %v727, %v758
  %v797 = vsel %vm793, %v728, %v760
  %v798 = vsel %vm83, %v794, %v770
  %v799 = vsel %vm83, %v795, %v772
  %v800 = vsel %vm83, %v796, %v774
  %v801 = vsel %vm83, %v797, %v776
  %vm802 = vcmask 195584
  %v803 = vsel %vm802, %v798, %v782
  %v804 = vsel %vm802, %v799, %v784
  %v805 = vsel %vm802, %v800, %v786
  %v806 = vsel %vm802, %v801, %v788
  %v807 = vsub.f32 0.0, %v745
  %v808 = vsub.f32 0.0, %v746
  %v809 = vsub.f32 0.0, %v747
  %v810 = vsub.f32 0.0, %v748
  %815 = vrot.lane.b32.xlu0 %v745, 8
  %v816 = vpop.permute.xlu0 %815
  %817 = vrot.lane.b32.xlu0 %v746, 8
  %v818 = vpop.permute.xlu0 %817
  %819 = vrot.lane.b32.xlu0 %v747, 8
  %v820 = vpop.permute.xlu0 %819
  %821 = vrot.lane.b32.xlu0 %v748, 8
  %v822 = vpop.permute.xlu0 %821
  %831 = vrot.lane.b32.xlu0 %v807, 24
  %v832 = vpop.permute.xlu0 %831
  %833 = vrot.lane.b32.xlu0 %v808, 24
  %v834 = vpop.permute.xlu0 %833
  %835 = vrot.lane.b32.xlu0 %v809, 24
  %v836 = vpop.permute.xlu0 %835
  %837 = vrot.lane.b32.xlu0 %v810, 24
  %v838 = vpop.permute.xlu0 %837
  %v843 = vsel %vm793, 0.0, %v816
  %v844 = vsel %vm793, 0.0, %v818
  %v845 = vsel %vm793, 0.0, %v820
  %v846 = vsel %vm793, 0.0, %v822
  %v847 = vsel %vm83, %v843, 0.0
  %v848 = vsel %vm83, %v844, 0.0
  %v849 = vsel %vm83, %v845, 0.0
  %v850 = vsel %vm83, %v846, 0.0
  %v851 = vsel %vm802, %v847, %v832
  %v852 = vsel %vm802, %v848, %v834
  %v853 = vsel %vm802, %v849, %v836
  %v854 = vsel %vm802, %v850, %v838
  %v855 = vld [vmem:[%s2] sm:$0xff]
  %v856 = vld [vmem:[%s2 + $0x8] sm:$0xff]
  %v857 = vld [vmem:[%s2 + $0x10] sm:$0xff]
  %v858 = vld [vmem:[%s2 + $0x18] sm:$0xff]
  %v859 = vld [vmem:[%s3] sm:$0x1]
  %v861 = vlaneseq
  %v862 = vshrl.u32 %v861, 7
  %v863 = vsub.s32 0, %v862
  %v864 = vrot.slane %v859, %v863
  %vm866 = vcmask 261120
  %v868 = vsel %vm866, %v803, 0
  %v871 = vsel %vm866, %v804, 0
  %v874 = vsel %vm866, %v805, 0
  %v877 = vsel %vm866, %v806, 0
  %879 = vmatprep.subr.mxu0 0.0
  %880 = vmatpush1.msra.mxu0 0.0
  %881 = vmatprep.subr.mxu0 0.0
  %882 = vmatpush1.msra.mxu0 0.0
  %883 = vmatprep.subr.mxu0 0.0
  %884 = vmatpush1.msra.mxu0 0.0
  %885 = vmatprep.subr.mxu0 0.0
  %886 = vmatpush1.msra.mxu0 0.0
  %887 = vmatprep.subr.mxu0 0.0
  %888 = vmatpush1.msra.mxu0 0.0
  %889 = vmatprep.subr.mxu0 0.0
  %890 = vmatpush1.msra.mxu0 0.0
  %891 = vmatprep.subr.mxu0 0.0
  %892 = vmatpush1.msra.mxu0 0.0
  %893 = vmatprep.subr.mxu0 0.0
  %894 = vmatpush1.msra.mxu0 0.0
  %895 = vmatprep.subr.mxu0 0.0
  %896 = vmatpush1.msra.mxu0 0.0
  %897 = vmatprep.subr.mxu0 0.0
  %898 = vmatpush1.msra.mxu0 0.0
  %899 = vmatprep.subr.mxu0 0.0
  %900 = vmatpush1.msra.mxu0 0.0
  %901 = vmatprep.subr.mxu0 0.0
  %902 = vmatpush1.msra.mxu0 0.0
  %903 = vmatprep.subr.mxu0 0.0
  %904 = vmatpush1.msra.mxu0 %v858
  %905 = vmatprep.subr.mxu0 0.0
  %906 = vmatpush1.msra.mxu0 %v857
  %907 = vmatprep.subr.mxu0 0.0
  %908 = vmatpush1.msra.mxu0 %v856
  %909 = vmatprep.subr.mxu0 0.0
  %910 = vmatpush1.msra.mxu0 %v855
  %911 = vmatprep.subr.mxu0 0.0
  %912 = vmatpush2.msra.mxu0 0.0
  %913 = vmatprep.subr.mxu0 0.0
  %914 = vmatpush2.msra.mxu0 0.0
  %915 = vmatprep.subr.mxu0 0.0
  %916 = vmatpush2.msra.mxu0 0.0
  %917 = vmatprep.subr.mxu0 0.0
  %918 = vmatpush2.msra.mxu0 0.0
  %919 = vmatprep.subr.mxu0 0.0
  %920 = vmatpush2.msra.mxu0 0.0
  %921 = vmatprep.subr.mxu0 0.0
  %922 = vmatpush2.msra.mxu0 0.0
  %923 = vmatprep.subr.mxu0 0.0
  %924 = vmatpush2.msra.mxu0 0.0
  %925 = vmatprep.subr.mxu0 0.0
  %926 = vmatpush2.msra.mxu0 0.0
  %927 = vmatprep.subr.mxu0 0.0
  %928 = vmatpush2.msra.mxu0 0.0
  %929 = vmatprep.subr.mxu0 0.0
  %930 = vmatpush2.msra.mxu0 0.0
  %931 = vmatprep.subr.mxu0 0.0
  %932 = vmatpush2.msra.mxu0 0.0
  %933 = vmatprep.subr.mxu0 0.0
  %934 = vmatpush2.msra.mxu0 0.0
  %935 = vmatprep.subr.mxu0 0.0
  %936 = vmatpush2.msra.mxu0 0.0
  %937 = vmatprep.subr.mxu0 0.0
  %938 = vmatpush2.msra.mxu0 0.0
  %939 = vmatprep.subr.mxu0 0.0
  %940 = vmatpush2.msra.mxu0 0.0
  %941 = vmatprep.subr.mxu0 0.0
  %942 = vmatpush2.msra.mxu0 0.0
  %943 = vmatprep.mubr.f32.mxu0 0.0
  %944 = vmatmul.mubr.f32.gmra.mxu0 %v868
  %v945 = vpop.f32.mrf.mxu0
  %v946 = vadd.f32 %v864, %v945
  %v947 = vpop.f32.mrf.mxu0
  %948 = vmatprep.mubr.f32.mxu0 0.0
  %949 = vmatmul.mubr.f32.gmra.mxu0 %v871
  %v950 = vpop.f32.mrf.mxu0
  %v951 = vadd.f32 %v864, %v950
  %v952 = vpop.f32.mrf.mxu0
  %953 = vmatprep.mubr.f32.mxu0 0.0
  %954 = vmatmul.mubr.f32.gmra.mxu0 %v874
  %v955 = vpop.f32.mrf.mxu0
  %v956 = vadd.f32 %v864, %v955
  %v957 = vpop.f32.mrf.mxu0
  %958 = vmatprep.mubr.f32.mxu0 0.0
  %959 = vmatmul.mubr.f32.gmra.mxu0 %v877
  %v960 = vpop.f32.mrf.mxu0
  %v961 = vadd.f32 %v864, %v960
  %v962 = vpop.f32.mrf.mxu0
  %963 = vdwg.mxu0
  %v964 = vxor.u32 %v946, 2147483648
  %v965 = vxor.u32 %v951, 2147483648
  %v966 = vxor.u32 %v956, 2147483648
  %v967 = vxor.u32 %v961, 2147483648
  %v968 = vmul.f32 %v964, 1.442695
  %v969 = vpow.pop %v968
  %v970 = vmul.f32 %v965, 1.442695
  %v971 = vpow.pop %v970
  %v972 = vmul.f32 %v966, 1.442695
  %v973 = vpow.pop %v972
  %v974 = vmul.f32 %v967, 1.442695
  %v975 = vpow.pop %v974
  %v976 = vadd.f32 %v969, 1.0
  %v977 = vadd.f32 %v971, 1.0
  %v978 = vadd.f32 %v973, 1.0
  %v979 = vadd.f32 %v975, 1.0
  %v980 = vrcp.pop %v976
  %v981 = vmul.f32 1.0, %v980
  %v982 = vrcp.pop %v977
  %v983 = vmul.f32 1.0, %v982
  %v984 = vrcp.pop %v978
  %v985 = vmul.f32 1.0, %v984
  %v986 = vrcp.pop %v979
  %v987 = vmul.f32 1.0, %v986
  %992 = vrot.lane.b32.xlu0 %v981, 64
  %v993 = vpop.permute.xlu0 %992
  %994 = vrot.lane.b32.xlu0 %v983, 64
  %v995 = vpop.permute.xlu0 %994
  %996 = vrot.lane.b32.xlu0 %v985, 64
  %v997 = vpop.permute.xlu0 %996
  %998 = vrot.lane.b32.xlu0 %v987, 64
  %v999 = vpop.permute.xlu0 %998
  %v1004 = vmul.f32 %v946, %v993
  %v1005 = vmul.f32 %v951, %v995
  %v1006 = vmul.f32 %v956, %v997
  %v1007 = vmul.f32 %v961, %v999
  %v1008 = vld [vmem:[%s4] sm:$0xff]
  %v1009 = vld [vmem:[%s4 + $0x8] sm:$0xff]
  %v1010 = vld [vmem:[%s4 + $0x10] sm:$0xff]
  %v1011 = vld [vmem:[%s4 + $0x18] sm:$0xff]
  %v1012 = vld [vmem:[%s5] sm:$0x1]
  %v1014 = vlaneseq
  %v1015 = vshrl.u32 %v1014, 7
  %v1016 = vsub.s32 0, %v1015
  %v1017 = vrot.slane %v1012, %v1016
  %v1020 = vsel %vm866, %v851, 0
  %v1023 = vsel %vm866, %v852, 0
  %v1026 = vsel %vm866, %v853, 0
  %v1029 = vsel %vm866, %v854, 0
  %1031 = vmatprep.subr.mxu0 0.0
  %1032 = vmatpush1.msra.mxu0 0.0
  %1033 = vmatprep.subr.mxu0 0.0
  %1034 = vmatpush1.msra.mxu0 0.0
  %1035 = vmatprep.subr.mxu0 0.0
  %1036 = vmatpush1.msra.mxu0 0.0
  %1037 = vmatprep.subr.mxu0 0.0
  %1038 = vmatpush1.msra.mxu0 0.0
  %1039 = vmatprep.subr.mxu0 0.0
  %1040 = vmatpush1.msra.mxu0 0.0
  %1041 = vmatprep.subr.mxu0 0.0
  %1042 = vmatpush1.msra.mxu0 0.0
  %1043 = vmatprep.subr.mxu0 0.0
  %1044 = vmatpush1.msra.mxu0 0.0
  %1045 = vmatprep.subr.mxu0 0.0
  %1046 = vmatpush1.msra.mxu0 0.0
  %1047 = vmatprep.subr.mxu0 0.0
  %1048 = vmatpush1.msra.mxu0 0.0
  %1049 = vmatprep.subr.mxu0 0.0
  %1050 = vmatpush1.msra.mxu0 0.0
  %1051 = vmatprep.subr.mxu0 0.0
  %1052 = vmatpush1.msra.mxu0 0.0
  %1053 = vmatprep.subr.mxu0 0.0
  %1054 = vmatpush1.msra.mxu0 0.0
  %1055 = vmatprep.subr.mxu0 0.0
  %1056 = vmatpush1.msra.mxu0 %v1011
  %1057 = vmatprep.subr.mxu0 0.0
  %1058 = vmatpush1.msra.mxu0 %v1010
  %1059 = vmatprep.subr.mxu0 0.0
  %1060 = vmatpush1.msra.mxu0 %v1009
  %1061 = vmatprep.subr.mxu0 0.0
  %1062 = vmatpush1.msra.mxu0 %v1008
  %1063 = vmatprep.subr.mxu0 0.0
  %1064 = vmatpush2.msra.mxu0 0.0
  %1065 = vmatprep.subr.mxu0 0.0
  %1066 = vmatpush2.msra.mxu0 0.0
  %1067 = vmatprep.subr.mxu0 0.0
  %1068 = vmatpush2.msra.mxu0 0.0
  %1069 = vmatprep.subr.mxu0 0.0
  %1070 = vmatpush2.msra.mxu0 0.0
  %1071 = vmatprep.subr.mxu0 0.0
  %1072 = vmatpush2.msra.mxu0 0.0
  %1073 = vmatprep.subr.mxu0 0.0
  %1074 = vmatpush2.msra.mxu0 0.0
  %1075 = vmatprep.subr.mxu0 0.0
  %1076 = vmatpush2.msra.mxu0 0.0
  %1077 = vmatprep.subr.mxu0 0.0
  %1078 = vmatpush2.msra.mxu0 0.0
  %1079 = vmatprep.subr.mxu0 0.0
  %1080 = vmatpush2.msra.mxu0 0.0
  %1081 = vmatprep.subr.mxu0 0.0
  %1082 = vmatpush2.msra.mxu0 0.0
  %1083 = vmatprep.subr.mxu0 0.0
  %1084 = vmatpush2.msra.mxu0 0.0
  %1085 = vmatprep.subr.mxu0 0.0
  %1086 = vmatpush2.msra.mxu0 0.0
  %1087 = vmatprep.subr.mxu0 0.0
  %1088 = vmatpush2.msra.mxu0 0.0
  %1089 = vmatprep.subr.mxu0 0.0
  %1090 = vmatpush2.msra.mxu0 0.0
  %1091 = vmatprep.subr.mxu0 0.0
  %1092 = vmatpush2.msra.mxu0 0.0
  %1093 = vmatprep.subr.mxu0 0.0
  %1094 = vmatpush2.msra.mxu0 0.0
  %1095 = vmatprep.mubr.f32.mxu0 0.0
  %1096 = vmatmul.mubr.f32.gmra.mxu0 %v1020
  %v1097 = vpop.f32.mrf.mxu0
  %v1098 = vadd.f32 %v1017, %v1097
  %v1099 = vpop.f32.mrf.mxu0
  %1100 = vmatprep.mubr.f32.mxu0 0.0
  %1101 = vmatmul.mubr.f32.gmra.mxu0 %v1023
  %v1102 = vpop.f32.mrf.mxu0
  %v1103 = vadd.f32 %v1017, %v1102
  %v1104 = vpop.f32.mrf.mxu0
  %1105 = vmatprep.mubr.f32.mxu0 0.0
  %1106 = vmatmul.mubr.f32.gmra.mxu0 %v1026
  %v1107 = vpop.f32.mrf.mxu0
  %v1108 = vadd.f32 %v1017, %v1107
  %v1109 = vpop.f32.mrf.mxu0
  %1110 = vmatprep.mubr.f32.mxu0 0.0
  %1111 = vmatmul.mubr.f32.gmra.mxu0 %v1029
  %v1112 = vpop.f32.mrf.mxu0
  %v1113 = vadd.f32 %v1017, %v1112
  %v1114 = vpop.f32.mrf.mxu0
  %1115 = vdwg.mxu0
  %v1116 = vxor.u32 %v1098, 2147483648
  %v1117 = vxor.u32 %v1103, 2147483648
  %v1118 = vxor.u32 %v1108, 2147483648
  %v1119 = vxor.u32 %v1113, 2147483648
  %v1120 = vmul.f32 %v1116, 1.442695
  %v1121 = vpow.pop %v1120
  %v1122 = vmul.f32 %v1117, 1.442695
  %v1123 = vpow.pop %v1122
  %v1124 = vmul.f32 %v1118, 1.442695
  %v1125 = vpow.pop %v1124
  %v1126 = vmul.f32 %v1119, 1.442695
  %v1127 = vpow.pop %v1126
  %v1128 = vadd.f32 %v1121, 1.0
  %v1129 = vadd.f32 %v1123, 1.0
  %v1130 = vadd.f32 %v1125, 1.0
  %v1131 = vadd.f32 %v1127, 1.0
  %v1132 = vrcp.pop %v1128
  %v1133 = vmul.f32 1.0, %v1132
  %v1134 = vrcp.pop %v1129
  %v1135 = vmul.f32 1.0, %v1134
  %v1136 = vrcp.pop %v1130
  %v1137 = vmul.f32 1.0, %v1136
  %v1138 = vrcp.pop %v1131
  %v1139 = vmul.f32 1.0, %v1138
  %1144 = vrot.lane.b32.xlu0 %v1133, 64
  %v1145 = vpop.permute.xlu0 %1144
  %1146 = vrot.lane.b32.xlu0 %v1135, 64
  %v1147 = vpop.permute.xlu0 %1146
  %1148 = vrot.lane.b32.xlu0 %v1137, 64
  %v1149 = vpop.permute.xlu0 %1148
  %1150 = vrot.lane.b32.xlu0 %v1139, 64
  %v1151 = vpop.permute.xlu0 %1150
  %v1156 = vmul.f32 %v1098, %v1145
  %v1157 = vmul.f32 %v1103, %v1147
  %v1158 = vmul.f32 %v1108, %v1149
  %v1159 = vmul.f32 %v1113, %v1151
  %v1160 = vld [vmem:[%s6] sm:$0xff]
  %v1161 = vld [vmem:[%s6 + $0x8] sm:$0xff]
  %v1162 = vld [vmem:[%s6 + $0x10] sm:$0xff]
  %v1163 = vld [vmem:[%s6 + $0x18] sm:$0xff]
  %v1164 = vld [vmem:[%s6 + $0x20] sm:$0xff]
  %v1165 = vld [vmem:[%s6 + $0x28] sm:$0xff]
  %v1166 = vld [vmem:[%s6 + $0x30] sm:$0xff]
  %v1167 = vld [vmem:[%s6 + $0x38] sm:$0xff]
  %v1168 = vld [vmem:[%s7] sm:$0x1]
  %v1170 = vlaneseq
  %v1171 = vshrl.u32 %v1170, 7
  %v1172 = vsub.s32 0, %v1171
  %v1173 = vrot.slane %v1168, %v1172
  %vm1175 = vcmask 523264
  %v1177 = vsel %vm1175, %v1004, 0
  %v1180 = vsel %vm1175, %v1005, 0
  %v1183 = vsel %vm1175, %v1006, 0
  %v1186 = vsel %vm1175, %v1007, 0
  %1188 = vmatprep.subr.mxu0 0.0
  %1189 = vmatpush1.msra.mxu0 0.0
  %1190 = vmatprep.subr.mxu0 0.0
  %1191 = vmatpush1.msra.mxu0 0.0
  %1192 = vmatprep.subr.mxu0 0.0
  %1193 = vmatpush1.msra.mxu0 0.0
  %1194 = vmatprep.subr.mxu0 0.0
  %1195 = vmatpush1.msra.mxu0 0.0
  %1196 = vmatprep.subr.mxu0 0.0
  %1197 = vmatpush1.msra.mxu0 0.0
  %1198 = vmatprep.subr.mxu0 0.0
  %1199 = vmatpush1.msra.mxu0 0.0
  %1200 = vmatprep.subr.mxu0 0.0
  %1201 = vmatpush1.msra.mxu0 0.0
  %1202 = vmatprep.subr.mxu0 0.0
  %1203 = vmatpush1.msra.mxu0 0.0
  %1204 = vmatprep.subr.mxu0 0.0
  %1205 = vmatpush1.msra.mxu0 %v1167
  %1206 = vmatprep.subr.mxu0 0.0
  %1207 = vmatpush1.msra.mxu0 %v1166
  %1208 = vmatprep.subr.mxu0 0.0
  %1209 = vmatpush1.msra.mxu0 %v1165
  %1210 = vmatprep.subr.mxu0 0.0
  %1211 = vmatpush1.msra.mxu0 %v1164
  %1212 = vmatprep.subr.mxu0 0.0
  %1213 = vmatpush1.msra.mxu0 %v1163
  %1214 = vmatprep.subr.mxu0 0.0
  %1215 = vmatpush1.msra.mxu0 %v1162
  %1216 = vmatprep.subr.mxu0 0.0
  %1217 = vmatpush1.msra.mxu0 %v1161
  %1218 = vmatprep.subr.mxu0 0.0
  %1219 = vmatpush1.msra.mxu0 %v1160
  %1220 = vmatprep.subr.mxu0 0.0
  %1221 = vmatpush2.msra.mxu0 0.0
  %1222 = vmatprep.subr.mxu0 0.0
  %1223 = vmatpush2.msra.mxu0 0.0
  %1224 = vmatprep.subr.mxu0 0.0
  %1225 = vmatpush2.msra.mxu0 0.0
  %1226 = vmatprep.subr.mxu0 0.0
  %1227 = vmatpush2.msra.mxu0 0.0
  %1228 = vmatprep.subr.mxu0 0.0
  %1229 = vmatpush2.msra.mxu0 0.0
  %1230 = vmatprep.subr.mxu0 0.0
  %1231 = vmatpush2.msra.mxu0 0.0
  %1232 = vmatprep.subr.mxu0 0.0
  %1233 = vmatpush2.msra.mxu0 0.0
  %1234 = vmatprep.subr.mxu0 0.0
  %1235 = vmatpush2.msra.mxu0 0.0
  %1236 = vmatprep.subr.mxu0 0.0
  %1237 = vmatpush2.msra.mxu0 0.0
  %1238 = vmatprep.subr.mxu0 0.0
  %1239 = vmatpush2.msra.mxu0 0.0
  %1240 = vmatprep.subr.mxu0 0.0
  %1241 = vmatpush2.msra.mxu0 0.0
  %1242 = vmatprep.subr.mxu0 0.0
  %1243 = vmatpush2.msra.mxu0 0.0
  %1244 = vmatprep.subr.mxu0 0.0
  %1245 = vmatpush2.msra.mxu0 0.0
  %1246 = vmatprep.subr.mxu0 0.0
  %1247 = vmatpush2.msra.mxu0 0.0
  %1248 = vmatprep.subr.mxu0 0.0
  %1249 = vmatpush2.msra.mxu0 0.0
  %1250 = vmatprep.subr.mxu0 0.0
  %1251 = vmatpush2.msra.mxu0 0.0
  %1252 = vmatprep.mubr.f32.mxu0 0.0
  %1253 = vmatmul.mubr.f32.gmra.mxu0 %v1177
  %v1254 = vpop.f32.mrf.mxu0
  %v1255 = vadd.f32 %v1173, %v1254
  %v1256 = vpop.f32.mrf.mxu0
  %1257 = vmatprep.mubr.f32.mxu0 0.0
  %1258 = vmatmul.mubr.f32.gmra.mxu0 %v1180
  %v1259 = vpop.f32.mrf.mxu0
  %v1260 = vadd.f32 %v1173, %v1259
  %v1261 = vpop.f32.mrf.mxu0
  %1262 = vmatprep.mubr.f32.mxu0 0.0
  %1263 = vmatmul.mubr.f32.gmra.mxu0 %v1183
  %v1264 = vpop.f32.mrf.mxu0
  %v1265 = vadd.f32 %v1173, %v1264
  %v1266 = vpop.f32.mrf.mxu0
  %1267 = vmatprep.mubr.f32.mxu0 0.0
  %1268 = vmatmul.mubr.f32.gmra.mxu0 %v1186
  %v1269 = vpop.f32.mrf.mxu0
  %v1270 = vadd.f32 %v1173, %v1269
  %v1271 = vpop.f32.mrf.mxu0
  %1272 = vdwg.mxu0
  %v1273 = vxor.u32 %v1255, 2147483648
  %v1274 = vxor.u32 %v1260, 2147483648
  %v1275 = vxor.u32 %v1265, 2147483648
  %v1276 = vxor.u32 %v1270, 2147483648
  %v1277 = vmul.f32 %v1273, 1.442695
  %v1278 = vpow.pop %v1277
  %v1279 = vmul.f32 %v1274, 1.442695
  %v1280 = vpow.pop %v1279
  %v1281 = vmul.f32 %v1275, 1.442695
  %v1282 = vpow.pop %v1281
  %v1283 = vmul.f32 %v1276, 1.442695
  %v1284 = vpow.pop %v1283
  %v1285 = vadd.f32 %v1278, 1.0
  %v1286 = vadd.f32 %v1280, 1.0
  %v1287 = vadd.f32 %v1282, 1.0
  %v1288 = vadd.f32 %v1284, 1.0
  %v1289 = vrcp.pop %v1285
  %v1290 = vmul.f32 1.0, %v1289
  %v1291 = vrcp.pop %v1286
  %v1292 = vmul.f32 1.0, %v1291
  %v1293 = vrcp.pop %v1287
  %v1294 = vmul.f32 1.0, %v1293
  %v1295 = vrcp.pop %v1288
  %v1296 = vmul.f32 1.0, %v1295
  %1301 = vrot.lane.b32.xlu0 %v1290, 64
  %v1302 = vpop.permute.xlu0 %1301
  %1303 = vrot.lane.b32.xlu0 %v1292, 64
  %v1304 = vpop.permute.xlu0 %1303
  %1305 = vrot.lane.b32.xlu0 %v1294, 64
  %v1306 = vpop.permute.xlu0 %1305
  %1307 = vrot.lane.b32.xlu0 %v1296, 64
  %v1308 = vpop.permute.xlu0 %1307
  %v1313 = vmul.f32 %v1255, %v1302
  %v1314 = vmul.f32 %v1260, %v1304
  %v1315 = vmul.f32 %v1265, %v1306
  %v1316 = vmul.f32 %v1270, %v1308
  %v1317 = vld [vmem:[%s8] sm:$0xff]
  %v1318 = vld [vmem:[%s8 + $0x8] sm:$0xff]
  %v1319 = vld [vmem:[%s8 + $0x10] sm:$0xff]
  %v1320 = vld [vmem:[%s8 + $0x18] sm:$0xff]
  %v1321 = vld [vmem:[%s8 + $0x20] sm:$0xff]
  %v1322 = vld [vmem:[%s8 + $0x28] sm:$0xff]
  %v1323 = vld [vmem:[%s8 + $0x30] sm:$0xff]
  %v1324 = vld [vmem:[%s8 + $0x38] sm:$0xff]
  %v1325 = vld [vmem:[%s9] sm:$0x1]
  %v1327 = vlaneseq
  %v1328 = vshrl.u32 %v1327, 7
  %v1329 = vsub.s32 0, %v1328
  %v1330 = vrot.slane %v1325, %v1329
  %v1333 = vsel %vm1175, %v1156, 0
  %v1336 = vsel %vm1175, %v1157, 0
  %v1339 = vsel %vm1175, %v1158, 0
  %v1342 = vsel %vm1175, %v1159, 0
  %1344 = vmatprep.subr.mxu0 0.0
  %1345 = vmatpush1.msra.mxu0 0.0
  %1346 = vmatprep.subr.mxu0 0.0
  %1347 = vmatpush1.msra.mxu0 0.0
  %1348 = vmatprep.subr.mxu0 0.0
  %1349 = vmatpush1.msra.mxu0 0.0
  %1350 = vmatprep.subr.mxu0 0.0
  %1351 = vmatpush1.msra.mxu0 0.0
  %1352 = vmatprep.subr.mxu0 0.0
  %1353 = vmatpush1.msra.mxu0 0.0
  %1354 = vmatprep.subr.mxu0 0.0
  %1355 = vmatpush1.msra.mxu0 0.0
  %1356 = vmatprep.subr.mxu0 0.0
  %1357 = vmatpush1.msra.mxu0 0.0
  %1358 = vmatprep.subr.mxu0 0.0
  %1359 = vmatpush1.msra.mxu0 0.0
  %1360 = vmatprep.subr.mxu0 0.0
  %1361 = vmatpush1.msra.mxu0 %v1324
  %1362 = vmatprep.subr.mxu0 0.0
  %1363 = vmatpush1.msra.mxu0 %v1323
  %1364 = vmatprep.subr.mxu0 0.0
  %1365 = vmatpush1.msra.mxu0 %v1322
  %1366 = vmatprep.subr.mxu0 0.0
  %1367 = vmatpush1.msra.mxu0 %v1321
  %1368 = vmatprep.subr.mxu0 0.0
  %1369 = vmatpush1.msra.mxu0 %v1320
  %1370 = vmatprep.subr.mxu0 0.0
  %1371 = vmatpush1.msra.mxu0 %v1319
  %1372 = vmatprep.subr.mxu0 0.0
  %1373 = vmatpush1.msra.mxu0 %v1318
  %1374 = vmatprep.subr.mxu0 0.0
  %1375 = vmatpush1.msra.mxu0 %v1317
  %1376 = vmatprep.subr.mxu0 0.0
  %1377 = vmatpush2.msra.mxu0 0.0
  %1378 = vmatprep.subr.mxu0 0.0
  %1379 = vmatpush2.msra.mxu0 0.0
  %1380 = vmatprep.subr.mxu0 0.0
  %1381 = vmatpush2.msra.mxu0 0.0
  %1382 = vmatprep.subr.mxu0 0.0
  %1383 = vmatpush2.msra.mxu0 0.0
  %1384 = vmatprep.subr.mxu0 0.0
  %1385 = vmatpush2.msra.mxu0 0.0
  %1386 = vmatprep.subr.mxu0 0.0
  %1387 = vmatpush2.msra.mxu0 0.0
  %1388 = vmatprep.subr.mxu0 0.0
  %1389 = vmatpush2.msra.mxu0 0.0
  %1390 = vmatprep.subr.mxu0 0.0
  %1391 = vmatpush2.msra.mxu0 0.0
  %1392 = vmatprep.subr.mxu0 0.0
  %1393 = vmatpush2.msra.mxu0 0.0
  %1394 = vmatprep.subr.mxu0 0.0
  %1395 = vmatpush2.msra.mxu0 0.0
  %1396 = vmatprep.subr.mxu0 0.0
  %1397 = vmatpush2.msra.mxu0 0.0
  %1398 = vmatprep.subr.mxu0 0.0
  %1399 = vmatpush2.msra.mxu0 0.0
  %1400 = vmatprep.subr.mxu0 0.0
  %1401 = vmatpush2.msra.mxu0 0.0
  %1402 = vmatprep.subr.mxu0 0.0
  %1403 = vmatpush2.msra.mxu0 0.0
  %1404 = vmatprep.subr.mxu0 0.0
  %1405 = vmatpush2.msra.mxu0 0.0
  %1406 = vmatprep.subr.mxu0 0.0
  %1407 = vmatpush2.msra.mxu0 0.0
  %1408 = vmatprep.mubr.f32.mxu0 0.0
  %1409 = vmatmul.mubr.f32.gmra.mxu0 %v1333
  %v1410 = vpop.f32.mrf.mxu0
  %v1411 = vadd.f32 %v1330, %v1410
  %v1412 = vpop.f32.mrf.mxu0
  %1413 = vmatprep.mubr.f32.mxu0 0.0
  %1414 = vmatmul.mubr.f32.gmra.mxu0 %v1336
  %v1415 = vpop.f32.mrf.mxu0
  %v1416 = vadd.f32 %v1330, %v1415
  %v1417 = vpop.f32.mrf.mxu0
  %1418 = vmatprep.mubr.f32.mxu0 0.0
  %1419 = vmatmul.mubr.f32.gmra.mxu0 %v1339
  %v1420 = vpop.f32.mrf.mxu0
  %v1421 = vadd.f32 %v1330, %v1420
  %v1422 = vpop.f32.mrf.mxu0
  %1423 = vmatprep.mubr.f32.mxu0 0.0
  %1424 = vmatmul.mubr.f32.gmra.mxu0 %v1342
  %v1425 = vpop.f32.mrf.mxu0
  %v1426 = vadd.f32 %v1330, %v1425
  %v1427 = vpop.f32.mrf.mxu0
  %1428 = vdwg.mxu0
  %v1429 = vxor.u32 %v1411, 2147483648
  %v1430 = vxor.u32 %v1416, 2147483648
  %v1431 = vxor.u32 %v1421, 2147483648
  %v1432 = vxor.u32 %v1426, 2147483648
  %v1433 = vmul.f32 %v1429, 1.442695
  %v1434 = vpow.pop %v1433
  %v1435 = vmul.f32 %v1430, 1.442695
  %v1436 = vpow.pop %v1435
  %v1437 = vmul.f32 %v1431, 1.442695
  %v1438 = vpow.pop %v1437
  %v1439 = vmul.f32 %v1432, 1.442695
  %v1440 = vpow.pop %v1439
  %v1441 = vadd.f32 %v1434, 1.0
  %v1442 = vadd.f32 %v1436, 1.0
  %v1443 = vadd.f32 %v1438, 1.0
  %v1444 = vadd.f32 %v1440, 1.0
  %v1445 = vrcp.pop %v1441
  %v1446 = vmul.f32 1.0, %v1445
  %v1447 = vrcp.pop %v1442
  %v1448 = vmul.f32 1.0, %v1447
  %v1449 = vrcp.pop %v1443
  %v1450 = vmul.f32 1.0, %v1449
  %v1451 = vrcp.pop %v1444
  %v1452 = vmul.f32 1.0, %v1451
  %1457 = vrot.lane.b32.xlu0 %v1446, 64
  %v1458 = vpop.permute.xlu0 %1457
  %1459 = vrot.lane.b32.xlu0 %v1448, 64
  %v1460 = vpop.permute.xlu0 %1459
  %1461 = vrot.lane.b32.xlu0 %v1450, 64
  %v1462 = vpop.permute.xlu0 %1461
  %1463 = vrot.lane.b32.xlu0 %v1452, 64
  %v1464 = vpop.permute.xlu0 %1463
  %v1469 = vmul.f32 %v1411, %v1458
  %v1470 = vmul.f32 %v1416, %v1460
  %v1471 = vmul.f32 %v1421, %v1462
  %v1472 = vmul.f32 %v1426, %v1464
  %v1473 = vld [vmem:[%s10] sm:$0xff]
  %v1474 = vld [vmem:[%s10 + $0x8] sm:$0xff]
  %v1475 = vld [vmem:[%s10 + $0x10] sm:$0xff]
  %v1476 = vld [vmem:[%s10 + $0x18] sm:$0xff]
  %v1477 = vld [vmem:[%s10 + $0x20] sm:$0xff]
  %v1478 = vld [vmem:[%s10 + $0x28] sm:$0xff]
  %v1479 = vld [vmem:[%s10 + $0x30] sm:$0xff]
  %v1480 = vld [vmem:[%s10 + $0x38] sm:$0xff]
  %v1481 = vld [vmem:[%s11] sm:$0x1]
  %v1483 = vlaneseq
  %v1484 = vshrl.u32 %v1483, 7
  %v1485 = vsub.s32 0, %v1484
  %v1486 = vrot.slane %v1481, %v1485
  %v1489 = vsel %vm1175, %v1313, 0
  %v1492 = vsel %vm1175, %v1314, 0
  %v1495 = vsel %vm1175, %v1315, 0
  %v1498 = vsel %vm1175, %v1316, 0
  %1500 = vmatprep.subr.mxu0 0.0
  %1501 = vmatpush1.msra.mxu0 0.0
  %1502 = vmatprep.subr.mxu0 0.0
  %1503 = vmatpush1.msra.mxu0 0.0
  %1504 = vmatprep.subr.mxu0 0.0
  %1505 = vmatpush1.msra.mxu0 0.0
  %1506 = vmatprep.subr.mxu0 0.0
  %1507 = vmatpush1.msra.mxu0 0.0
  %1508 = vmatprep.subr.mxu0 0.0
  %1509 = vmatpush1.msra.mxu0 0.0
  %1510 = vmatprep.subr.mxu0 0.0
  %1511 = vmatpush1.msra.mxu0 0.0
  %1512 = vmatprep.subr.mxu0 0.0
  %1513 = vmatpush1.msra.mxu0 0.0
  %1514 = vmatprep.subr.mxu0 0.0
  %1515 = vmatpush1.msra.mxu0 0.0
  %1516 = vmatprep.subr.mxu0 0.0
  %1517 = vmatpush1.msra.mxu0 %v1480
  %1518 = vmatprep.subr.mxu0 0.0
  %1519 = vmatpush1.msra.mxu0 %v1479
  %1520 = vmatprep.subr.mxu0 0.0
  %1521 = vmatpush1.msra.mxu0 %v1478
  %1522 = vmatprep.subr.mxu0 0.0
  %1523 = vmatpush1.msra.mxu0 %v1477
  %1524 = vmatprep.subr.mxu0 0.0
  %1525 = vmatpush1.msra.mxu0 %v1476
  %1526 = vmatprep.subr.mxu0 0.0
  %1527 = vmatpush1.msra.mxu0 %v1475
  %1528 = vmatprep.subr.mxu0 0.0
  %1529 = vmatpush1.msra.mxu0 %v1474
  %1530 = vmatprep.subr.mxu0 0.0
  %1531 = vmatpush1.msra.mxu0 %v1473
  %1532 = vmatprep.subr.mxu0 0.0
  %1533 = vmatpush2.msra.mxu0 0.0
  %1534 = vmatprep.subr.mxu0 0.0
  %1535 = vmatpush2.msra.mxu0 0.0
  %1536 = vmatprep.subr.mxu0 0.0
  %1537 = vmatpush2.msra.mxu0 0.0
  %1538 = vmatprep.subr.mxu0 0.0
  %1539 = vmatpush2.msra.mxu0 0.0
  %1540 = vmatprep.subr.mxu0 0.0
  %1541 = vmatpush2.msra.mxu0 0.0
  %1542 = vmatprep.subr.mxu0 0.0
  %1543 = vmatpush2.msra.mxu0 0.0
  %1544 = vmatprep.subr.mxu0 0.0
  %1545 = vmatpush2.msra.mxu0 0.0
  %1546 = vmatprep.subr.mxu0 0.0
  %1547 = vmatpush2.msra.mxu0 0.0
  %1548 = vmatprep.subr.mxu0 0.0
  %1549 = vmatpush2.msra.mxu0 0.0
  %1550 = vmatprep.subr.mxu0 0.0
  %1551 = vmatpush2.msra.mxu0 0.0
  %1552 = vmatprep.subr.mxu0 0.0
  %1553 = vmatpush2.msra.mxu0 0.0
  %1554 = vmatprep.subr.mxu0 0.0
  %1555 = vmatpush2.msra.mxu0 0.0
  %1556 = vmatprep.subr.mxu0 0.0
  %1557 = vmatpush2.msra.mxu0 0.0
  %1558 = vmatprep.subr.mxu0 0.0
  %1559 = vmatpush2.msra.mxu0 0.0
  %1560 = vmatprep.subr.mxu0 0.0
  %1561 = vmatpush2.msra.mxu0 0.0
  %1562 = vmatprep.subr.mxu0 0.0
  %1563 = vmatpush2.msra.mxu0 0.0
  %1564 = vmatprep.mubr.f32.mxu0 0.0
  %1565 = vmatmul.mubr.f32.gmra.mxu0 %v1489
  %v1566 = vpop.f32.mrf.mxu0
  %v1567 = vadd.f32 %v1486, %v1566
  %v1568 = vpop.f32.mrf.mxu0
  %1569 = vmatprep.mubr.f32.mxu0 0.0
  %1570 = vmatmul.mubr.f32.gmra.mxu0 %v1492
  %v1571 = vpop.f32.mrf.mxu0
  %v1572 = vadd.f32 %v1486, %v1571
  %v1573 = vpop.f32.mrf.mxu0
  %1574 = vmatprep.mubr.f32.mxu0 0.0
  %1575 = vmatmul.mubr.f32.gmra.mxu0 %v1495
  %v1576 = vpop.f32.mrf.mxu0
  %v1577 = vadd.f32 %v1486, %v1576
  %v1578 = vpop.f32.mrf.mxu0
  %1579 = vmatprep.mubr.f32.mxu0 0.0
  %1580 = vmatmul.mubr.f32.gmra.mxu0 %v1498
  %v1581 = vpop.f32.mrf.mxu0
  %v1582 = vadd.f32 %v1486, %v1581
  %v1583 = vpop.f32.mrf.mxu0
  %1584 = vdwg.mxu0
  %v1585 = vxor.u32 %v1567, 2147483648
  %v1586 = vxor.u32 %v1572, 2147483648
  %v1587 = vxor.u32 %v1577, 2147483648
  %v1588 = vxor.u32 %v1582, 2147483648
  %v1589 = vmul.f32 %v1585, 1.442695
  %v1590 = vpow.pop %v1589
  %v1591 = vmul.f32 %v1586, 1.442695
  %v1592 = vpow.pop %v1591
  %v1593 = vmul.f32 %v1587, 1.442695
  %v1594 = vpow.pop %v1593
  %v1595 = vmul.f32 %v1588, 1.442695
  %v1596 = vpow.pop %v1595
  %v1597 = vadd.f32 %v1590, 1.0
  %v1598 = vadd.f32 %v1592, 1.0
  %v1599 = vadd.f32 %v1594, 1.0
  %v1600 = vadd.f32 %v1596, 1.0
  %v1601 = vrcp.pop %v1597
  %v1602 = vmul.f32 1.0, %v1601
  %v1603 = vrcp.pop %v1598
  %v1604 = vmul.f32 1.0, %v1603
  %v1605 = vrcp.pop %v1599
  %v1606 = vmul.f32 1.0, %v1605
  %v1607 = vrcp.pop %v1600
  %v1608 = vmul.f32 1.0, %v1607
  %1613 = vrot.lane.b32.xlu0 %v1602, 64
  %v1614 = vpop.permute.xlu0 %1613
  %1615 = vrot.lane.b32.xlu0 %v1604, 64
  %v1616 = vpop.permute.xlu0 %1615
  %1617 = vrot.lane.b32.xlu0 %v1606, 64
  %v1618 = vpop.permute.xlu0 %1617
  %1619 = vrot.lane.b32.xlu0 %v1608, 64
  %v1620 = vpop.permute.xlu0 %1619
  %v1625 = vmul.f32 %v1567, %v1614
  %v1626 = vmul.f32 %v1572, %v1616
  %v1627 = vmul.f32 %v1577, %v1618
  %v1628 = vmul.f32 %v1582, %v1620
  %v1629 = vld [vmem:[%s12] sm:$0xff]
  %v1630 = vld [vmem:[%s12 + $0x8] sm:$0xff]
  %v1631 = vld [vmem:[%s12 + $0x10] sm:$0xff]
  %v1632 = vld [vmem:[%s12 + $0x18] sm:$0xff]
  %v1633 = vld [vmem:[%s12 + $0x20] sm:$0xff]
  %v1634 = vld [vmem:[%s12 + $0x28] sm:$0xff]
  %v1635 = vld [vmem:[%s12 + $0x30] sm:$0xff]
  %v1636 = vld [vmem:[%s12 + $0x38] sm:$0xff]
  %v1637 = vld [vmem:[%s13] sm:$0x1]
  %v1639 = vlaneseq
  %v1640 = vshrl.u32 %v1639, 7
  %v1641 = vsub.s32 0, %v1640
  %v1642 = vrot.slane %v1637, %v1641
  %v1645 = vsel %vm1175, %v1469, 0
  %v1648 = vsel %vm1175, %v1470, 0
  %v1651 = vsel %vm1175, %v1471, 0
  %v1654 = vsel %vm1175, %v1472, 0
  %1656 = vmatprep.subr.mxu0 0.0
  %1657 = vmatpush1.msra.mxu0 0.0
  %1658 = vmatprep.subr.mxu0 0.0
  %1659 = vmatpush1.msra.mxu0 0.0
  %1660 = vmatprep.subr.mxu0 0.0
  %1661 = vmatpush1.msra.mxu0 0.0
  %1662 = vmatprep.subr.mxu0 0.0
  %1663 = vmatpush1.msra.mxu0 0.0
  %1664 = vmatprep.subr.mxu0 0.0
  %1665 = vmatpush1.msra.mxu0 0.0
  %1666 = vmatprep.subr.mxu0 0.0
  %1667 = vmatpush1.msra.mxu0 0.0
  %1668 = vmatprep.subr.mxu0 0.0
  %1669 = vmatpush1.msra.mxu0 0.0
  %1670 = vmatprep.subr.mxu0 0.0
  %1671 = vmatpush1.msra.mxu0 0.0
  %1672 = vmatprep.subr.mxu0 0.0
  %1673 = vmatpush1.msra.mxu0 %v1636
  %1674 = vmatprep.subr.mxu0 0.0
  %1675 = vmatpush1.msra.mxu0 %v1635
  %1676 = vmatprep.subr.mxu0 0.0
  %1677 = vmatpush1.msra.mxu0 %v1634
  %1678 = vmatprep.subr.mxu0 0.0
  %1679 = vmatpush1.msra.mxu0 %v1633
  %1680 = vmatprep.subr.mxu0 0.0
  %1681 = vmatpush1.msra.mxu0 %v1632
  %1682 = vmatprep.subr.mxu0 0.0
  %1683 = vmatpush1.msra.mxu0 %v1631
  %1684 = vmatprep.subr.mxu0 0.0
  %1685 = vmatpush1.msra.mxu0 %v1630
  %1686 = vmatprep.subr.mxu0 0.0
  %1687 = vmatpush1.msra.mxu0 %v1629
  %1688 = vmatprep.subr.mxu0 0.0
  %1689 = vmatpush2.msra.mxu0 0.0
  %1690 = vmatprep.subr.mxu0 0.0
  %1691 = vmatpush2.msra.mxu0 0.0
  %1692 = vmatprep.subr.mxu0 0.0
  %1693 = vmatpush2.msra.mxu0 0.0
  %1694 = vmatprep.subr.mxu0 0.0
  %1695 = vmatpush2.msra.mxu0 0.0
  %1696 = vmatprep.subr.mxu0 0.0
  %1697 = vmatpush2.msra.mxu0 0.0
  %1698 = vmatprep.subr.mxu0 0.0
  %1699 = vmatpush2.msra.mxu0 0.0
  %1700 = vmatprep.subr.mxu0 0.0
  %1701 = vmatpush2.msra.mxu0 0.0
  %1702 = vmatprep.subr.mxu0 0.0
  %1703 = vmatpush2.msra.mxu0 0.0
  %1704 = vmatprep.subr.mxu0 0.0
  %1705 = vmatpush2.msra.mxu0 0.0
  %1706 = vmatprep.subr.mxu0 0.0
  %1707 = vmatpush2.msra.mxu0 0.0
  %1708 = vmatprep.subr.mxu0 0.0
  %1709 = vmatpush2.msra.mxu0 0.0
  %1710 = vmatprep.subr.mxu0 0.0
  %1711 = vmatpush2.msra.mxu0 0.0
  %1712 = vmatprep.subr.mxu0 0.0
  %1713 = vmatpush2.msra.mxu0 0.0
  %1714 = vmatprep.subr.mxu0 0.0
  %1715 = vmatpush2.msra.mxu0 0.0
  %1716 = vmatprep.subr.mxu0 0.0
  %1717 = vmatpush2.msra.mxu0 0.0
  %1718 = vmatprep.subr.mxu0 0.0
  %1719 = vmatpush2.msra.mxu0 0.0
  %1720 = vmatprep.mubr.f32.mxu0 0.0
  %1721 = vmatmul.mubr.f32.gmra.mxu0 %v1645
  %v1722 = vpop.f32.mrf.mxu0
  %v1723 = vadd.f32 %v1642, %v1722
  %v1724 = vpop.f32.mrf.mxu0
  %1725 = vmatprep.mubr.f32.mxu0 0.0
  %1726 = vmatmul.mubr.f32.gmra.mxu0 %v1648
  %v1727 = vpop.f32.mrf.mxu0
  %v1728 = vadd.f32 %v1642, %v1727
  %v1729 = vpop.f32.mrf.mxu0
  %1730 = vmatprep.mubr.f32.mxu0 0.0
  %1731 = vmatmul.mubr.f32.gmra.mxu0 %v1651
  %v1732 = vpop.f32.mrf.mxu0
  %v1733 = vadd.f32 %v1642, %v1732
  %v1734 = vpop.f32.mrf.mxu0
  %1735 = vmatprep.mubr.f32.mxu0 0.0
  %1736 = vmatmul.mubr.f32.gmra.mxu0 %v1654
  %v1737 = vpop.f32.mrf.mxu0
  %v1738 = vadd.f32 %v1642, %v1737
  %v1739 = vpop.f32.mrf.mxu0
  %1740 = vdwg.mxu0
  %v1741 = vxor.u32 %v1723, 2147483648
  %v1742 = vxor.u32 %v1728, 2147483648
  %v1743 = vxor.u32 %v1733, 2147483648
  %v1744 = vxor.u32 %v1738, 2147483648
  %v1745 = vmul.f32 %v1741, 1.442695
  %v1746 = vpow.pop %v1745
  %v1747 = vmul.f32 %v1742, 1.442695
  %v1748 = vpow.pop %v1747
  %v1749 = vmul.f32 %v1743, 1.442695
  %v1750 = vpow.pop %v1749
  %v1751 = vmul.f32 %v1744, 1.442695
  %v1752 = vpow.pop %v1751
  %v1753 = vadd.f32 %v1746, 1.0
  %v1754 = vadd.f32 %v1748, 1.0
  %v1755 = vadd.f32 %v1750, 1.0
  %v1756 = vadd.f32 %v1752, 1.0
  %v1757 = vrcp.pop %v1753
  %v1758 = vmul.f32 1.0, %v1757
  %v1759 = vrcp.pop %v1754
  %v1760 = vmul.f32 1.0, %v1759
  %v1761 = vrcp.pop %v1755
  %v1762 = vmul.f32 1.0, %v1761
  %v1763 = vrcp.pop %v1756
  %v1764 = vmul.f32 1.0, %v1763
  %1769 = vrot.lane.b32.xlu0 %v1758, 64
  %v1770 = vpop.permute.xlu0 %1769
  %1771 = vrot.lane.b32.xlu0 %v1760, 64
  %v1772 = vpop.permute.xlu0 %1771
  %1773 = vrot.lane.b32.xlu0 %v1762, 64
  %v1774 = vpop.permute.xlu0 %1773
  %1775 = vrot.lane.b32.xlu0 %v1764, 64
  %v1776 = vpop.permute.xlu0 %1775
  %v1781 = vmul.f32 %v1723, %v1770
  %v1782 = vmul.f32 %v1728, %v1772
  %v1783 = vmul.f32 %v1733, %v1774
  %v1784 = vmul.f32 %v1738, %v1776
  %v1785 = vmul.f32 %v1625, 2.0
  %v1786 = vmul.f32 %v1626, 2.0
  %v1787 = vmul.f32 %v1627, 2.0
  %v1788 = vmul.f32 %v1628, 2.0
  %1793 = vrot.lane.b32.xlu0 %v1785, 112
  %v1794 = vpop.permute.xlu0 %1793
  %1795 = vrot.lane.b32.xlu0 %v1786, 112
  %v1796 = vpop.permute.xlu0 %1795
  %1797 = vrot.lane.b32.xlu0 %v1787, 112
  %v1798 = vpop.permute.xlu0 %1797
  %1799 = vrot.lane.b32.xlu0 %v1788, 112
  %v1800 = vpop.permute.xlu0 %1799
  %v1805 = vadd.f32 %v1625, %v1794
  %v1806 = vadd.f32 %v1626, %v1796
  %v1807 = vadd.f32 %v1627, %v1798
  %v1808 = vadd.f32 %v1628, %v1800
  %1813 = vrot.lane.b32.xlu0 %v1625, 96
  %v1814 = vpop.permute.xlu0 %1813
  %1815 = vrot.lane.b32.xlu0 %v1626, 96
  %v1816 = vpop.permute.xlu0 %1815
  %1817 = vrot.lane.b32.xlu0 %v1627, 96
  %v1818 = vpop.permute.xlu0 %1817
  %1819 = vrot.lane.b32.xlu0 %v1628, 96
  %v1820 = vpop.permute.xlu0 %1819
  %v1825 = vadd.f32 %v1805, %v1814
  %v1826 = vadd.f32 %v1806, %v1816
  %v1827 = vadd.f32 %v1807, %v1818
  %v1828 = vadd.f32 %v1808, %v1820
  %v1829 = vmul.f32 %v1825, 0.25
  %v1830 = vmul.f32 %v1826, 0.25
  %v1831 = vmul.f32 %v1827, 0.25
  %v1832 = vmul.f32 %v1828, 0.25
  %v1833 = vmul.f32 %v1781, 2.0
  %v1834 = vmul.f32 %v1782, 2.0
  %v1835 = vmul.f32 %v1783, 2.0
  %v1836 = vmul.f32 %v1784, 2.0
  %1841 = vrot.lane.b32.xlu0 %v1833, 112
  %v1842 = vpop.permute.xlu0 %1841
  %1843 = vrot.lane.b32.xlu0 %v1834, 112
  %v1844 = vpop.permute.xlu0 %1843
  %1845 = vrot.lane.b32.xlu0 %v1835, 112
  %v1846 = vpop.permute.xlu0 %1845
  %1847 = vrot.lane.b32.xlu0 %v1836, 112
  %v1848 = vpop.permute.xlu0 %1847
  %v1853 = vsub.f32 %v1625, %v1842
  %v1854 = vsub.f32 %v1626, %v1844
  %v1855 = vsub.f32 %v1627, %v1846
  %v1856 = vsub.f32 %v1628, %v1848
  %v1857 = vsub.f32 %v1853, %v1814
  %v1858 = vsub.f32 %v1854, %v1816
  %v1859 = vsub.f32 %v1855, %v1818
  %v1860 = vsub.f32 %v1856, %v1820
  %v1861 = vmul.f32 %v1857, 0.25
  %v1862 = vmul.f32 %v1858, 0.25
  %v1863 = vmul.f32 %v1859, 0.25
  %v1864 = vmul.f32 %v1860, 0.25
  %v1865 = vsub.f32 %v1625, %v1794
  %v1866 = vsub.f32 %v1626, %v1796
  %v1867 = vsub.f32 %v1627, %v1798
  %v1868 = vsub.f32 %v1628, %v1800
  %v1869 = vadd.f32 %v1865, %v1814
  %v1870 = vadd.f32 %v1866, %v1816
  %v1871 = vadd.f32 %v1867, %v1818
  %v1872 = vadd.f32 %v1868, %v1820
  %v1873 = vmul.f32 %v1869, 0.25
  %v1874 = vmul.f32 %v1870, 0.25
  %v1875 = vmul.f32 %v1871, 0.25
  %v1876 = vmul.f32 %v1872, 0.25
  %v1877 = vadd.f32 %v1625, %v1842
  %v1878 = vadd.f32 %v1626, %v1844
  %v1879 = vadd.f32 %v1627, %v1846
  %v1880 = vadd.f32 %v1628, %v1848
  %v1881 = vsub.f32 %v1877, %v1814
  %v1882 = vsub.f32 %v1878, %v1816
  %v1883 = vsub.f32 %v1879, %v1818
  %v1884 = vsub.f32 %v1880, %v1820
  %v1885 = vmul.f32 %v1881, 0.25
  %v1886 = vmul.f32 %v1882, 0.25
  %v1887 = vmul.f32 %v1883, 0.25
  %v1888 = vmul.f32 %v1884, 0.25
  %1893 = vrot.lane.b32.xlu0 %v1861, 16
  %v1894 = vpop.permute.xlu0 %1893
  %1895 = vrot.lane.b32.xlu0 %v1862, 16
  %v1896 = vpop.permute.xlu0 %1895
  %1897 = vrot.lane.b32.xlu0 %v1863, 16
  %v1898 = vpop.permute.xlu0 %1897
  %1899 = vrot.lane.b32.xlu0 %v1864, 16
  %v1900 = vpop.permute.xlu0 %1899
  %1909 = vrot.lane.b32.xlu0 %v1873, 32
  %v1910 = vpop.permute.xlu0 %1909
  %1911 = vrot.lane.b32.xlu0 %v1874, 32
  %v1912 = vpop.permute.xlu0 %1911
  %1913 = vrot.lane.b32.xlu0 %v1875, 32
  %v1914 = vpop.permute.xlu0 %1913
  %1915 = vrot.lane.b32.xlu0 %v1876, 32
  %v1916 = vpop.permute.xlu0 %1915
  %1925 = vrot.lane.b32.xlu0 %v1885, 48
  %v1926 = vpop.permute.xlu0 %1925
  %1927 = vrot.lane.b32.xlu0 %v1886, 48
  %v1928 = vpop.permute.xlu0 %1927
  %1929 = vrot.lane.b32.xlu0 %v1887, 48
  %v1930 = vpop.permute.xlu0 %1929
  %1931 = vrot.lane.b32.xlu0 %v1888, 48
  %v1932 = vpop.permute.xlu0 %1931
  %v1937 = vsel %vm83, %v1829, %v1894
  %v1938 = vsel %vm83, %v1830, %v1896
  %v1939 = vsel %vm83, %v1831, %v1898
  %v1940 = vsel %vm83, %v1832, %v1900
  %v1941 = vsel %vm866, %v1937, %v1910
  %v1942 = vsel %vm866, %v1938, %v1912
  %v1943 = vsel %vm866, %v1939, %v1914
  %v1944 = vsel %vm866, %v1940, %v1916
  %vm1945 = vcmask 392192
  %v1946 = vsel %vm1945, %v1941, %v1926
  %v1947 = vsel %vm1945, %v1942, %v1928
  %v1948 = vsel %vm1945, %v1943, %v1930
  %v1949 = vsel %vm1945, %v1944, %v1932
  %v1950 = vld [vmem:[%s14] sm:$0xff]
  %v1951 = vld [vmem:[%s14 + $0x8] sm:$0xff]
  %v1952 = vld [vmem:[%s14 + $0x10] sm:$0xff]
  %v1953 = vld [vmem:[%s14 + $0x18] sm:$0xff]
  %v1954 = vld [vmem:[%s14 + $0x20] sm:$0xff]
  %v1955 = vld [vmem:[%s14 + $0x28] sm:$0xff]
  %v1956 = vld [vmem:[%s14 + $0x30] sm:$0xff]
  %v1957 = vld [vmem:[%s14 + $0x38] sm:$0xff]
  %v1959 = vsel %vm1175, %v1946, 0
  %v1962 = vsel %vm1175, %v1947, 0
  %v1965 = vsel %vm1175, %v1948, 0
  %v1968 = vsel %vm1175, %v1949, 0
  %1970 = vmatprep.subr.mxu0 0.0
  %1971 = vmatpush1.msra.mxu0 0.0
  %1972 = vmatprep.subr.mxu0 0.0
  %1973 = vmatpush1.msra.mxu0 0.0
  %1974 = vmatprep.subr.mxu0 0.0
  %1975 = vmatpush1.msra.mxu0 0.0
  %1976 = vmatprep.subr.mxu0 0.0
  %1977 = vmatpush1.msra.mxu0 0.0
  %1978 = vmatprep.subr.mxu0 0.0
  %1979 = vmatpush1.msra.mxu0 0.0
  %1980 = vmatprep.subr.mxu0 0.0
  %1981 = vmatpush1.msra.mxu0 0.0
  %1982 = vmatprep.subr.mxu0 0.0
  %1983 = vmatpush1.msra.mxu0 0.0
  %1984 = vmatprep.subr.mxu0 0.0
  %1985 = vmatpush1.msra.mxu0 0.0
  %1986 = vmatprep.subr.mxu0 0.0
  %1987 = vmatpush1.msra.mxu0 %v1957
  %1988 = vmatprep.subr.mxu0 0.0
  %1989 = vmatpush1.msra.mxu0 %v1956
  %1990 = vmatprep.subr.mxu0 0.0
  %1991 = vmatpush1.msra.mxu0 %v1955
  %1992 = vmatprep.subr.mxu0 0.0
  %1993 = vmatpush1.msra.mxu0 %v1954
  %1994 = vmatprep.subr.mxu0 0.0
  %1995 = vmatpush1.msra.mxu0 %v1953
  %1996 = vmatprep.subr.mxu0 0.0
  %1997 = vmatpush1.msra.mxu0 %v1952
  %1998 = vmatprep.subr.mxu0 0.0
  %1999 = vmatpush1.msra.mxu0 %v1951
  %2000 = vmatprep.subr.mxu0 0.0
  %2001 = vmatpush1.msra.mxu0 %v1950
  %2002 = vmatprep.subr.mxu0 0.0
  %2003 = vmatpush2.msra.mxu0 0.0
  %2004 = vmatprep.subr.mxu0 0.0
  %2005 = vmatpush2.msra.mxu0 0.0
  %2006 = vmatprep.subr.mxu0 0.0
  %2007 = vmatpush2.msra.mxu0 0.0
  %2008 = vmatprep.subr.mxu0 0.0
  %2009 = vmatpush2.msra.mxu0 0.0
  %2010 = vmatprep.subr.mxu0 0.0
  %2011 = vmatpush2.msra.mxu0 0.0
  %2012 = vmatprep.subr.mxu0 0.0
  %2013 = vmatpush2.msra.mxu0 0.0
  %2014 = vmatprep.subr.mxu0 0.0
  %2015 = vmatpush2.msra.mxu0 0.0
  %2016 = vmatprep.subr.mxu0 0.0
  %2017 = vmatpush2.msra.mxu0 0.0
  %2018 = vmatprep.subr.mxu0 0.0
  %2019 = vmatpush2.msra.mxu0 0.0
  %2020 = vmatprep.subr.mxu0 0.0
  %2021 = vmatpush2.msra.mxu0 0.0
  %2022 = vmatprep.subr.mxu0 0.0
  %2023 = vmatpush2.msra.mxu0 0.0
  %2024 = vmatprep.subr.mxu0 0.0
  %2025 = vmatpush2.msra.mxu0 0.0
  %2026 = vmatprep.subr.mxu0 0.0
  %2027 = vmatpush2.msra.mxu0 0.0
  %2028 = vmatprep.subr.mxu0 0.0
  %2029 = vmatpush2.msra.mxu0 0.0
  %2030 = vmatprep.subr.mxu0 0.0
  %2031 = vmatpush2.msra.mxu0 0.0
  %2032 = vmatprep.subr.mxu0 0.0
  %2033 = vmatpush2.msra.mxu0 0.0
  %2034 = vmatprep.mubr.f32.mxu0 0.0
  %2035 = vmatmul.mubr.f32.gmra.mxu0 %v1959
  %v2036 = vpop.f32.mrf.mxu0
  %v2037 = vadd.f32 0.0, %v2036
  %v2038 = vpop.f32.mrf.mxu0
  %2039 = vmatprep.mubr.f32.mxu0 0.0
  %2040 = vmatmul.mubr.f32.gmra.mxu0 %v1962
  %v2041 = vpop.f32.mrf.mxu0
  %v2042 = vadd.f32 0.0, %v2041
  %v2043 = vpop.f32.mrf.mxu0
  %2044 = vmatprep.mubr.f32.mxu0 0.0
  %2045 = vmatmul.mubr.f32.gmra.mxu0 %v1965
  %v2046 = vpop.f32.mrf.mxu0
  %v2047 = vadd.f32 0.0, %v2046
  %v2048 = vpop.f32.mrf.mxu0
  %2049 = vmatprep.mubr.f32.mxu0 0.0
  %2050 = vmatmul.mubr.f32.gmra.mxu0 %v1968
  %v2051 = vpop.f32.mrf.mxu0
  %v2052 = vadd.f32 0.0, %v2051
  %v2053 = vpop.f32.mrf.mxu0
  %2054 = vdwg.mxu0
  %v2055 = vld [vmem:[%s15] sm:$0xff]
  %v2056 = vld [vmem:[%s15 + $0x8] sm:$0xff]
  %v2057 = vld [vmem:[%s16] sm:$0x1]
  %v2059 = vlaneseq
  %v2060 = vshrl.u32 %v2059, 7
  %v2061 = vsub.s32 0, %v2060
  %v2062 = vrot.slane %v2057, %v2061
  %v2065 = vsel %vm83, %v2037, 0
  %v2068 = vsel %vm83, %v2042, 0
  %v2071 = vsel %vm83, %v2047, 0
  %v2074 = vsel %vm83, %v2052, 0
  %2076 = vmatprep.subr.mxu0 0.0
  %2077 = vmatpush1.msra.mxu0 0.0
  %2078 = vmatprep.subr.mxu0 0.0
  %2079 = vmatpush1.msra.mxu0 0.0
  %2080 = vmatprep.subr.mxu0 0.0
  %2081 = vmatpush1.msra.mxu0 0.0
  %2082 = vmatprep.subr.mxu0 0.0
  %2083 = vmatpush1.msra.mxu0 0.0
  %2084 = vmatprep.subr.mxu0 0.0
  %2085 = vmatpush1.msra.mxu0 0.0
  %2086 = vmatprep.subr.mxu0 0.0
  %2087 = vmatpush1.msra.mxu0 0.0
  %2088 = vmatprep.subr.mxu0 0.0
  %2089 = vmatpush1.msra.mxu0 0.0
  %2090 = vmatprep.subr.mxu0 0.0
  %2091 = vmatpush1.msra.mxu0 0.0
  %2092 = vmatprep.subr.mxu0 0.0
  %2093 = vmatpush1.msra.mxu0 0.0
  %2094 = vmatprep.subr.mxu0 0.0
  %2095 = vmatpush1.msra.mxu0 0.0
  %2096 = vmatprep.subr.mxu0 0.0
  %2097 = vmatpush1.msra.mxu0 0.0
  %2098 = vmatprep.subr.mxu0 0.0
  %2099 = vmatpush1.msra.mxu0 0.0
  %2100 = vmatprep.subr.mxu0 0.0
  %2101 = vmatpush1.msra.mxu0 0.0
  %2102 = vmatprep.subr.mxu0 0.0
  %2103 = vmatpush1.msra.mxu0 0.0
  %2104 = vmatprep.subr.mxu0 0.0
  %2105 = vmatpush1.msra.mxu0 %v2056
  %2106 = vmatprep.subr.mxu0 0.0
  %2107 = vmatpush1.msra.mxu0 %v2055
  %2108 = vmatprep.subr.mxu0 0.0
  %2109 = vmatpush2.msra.mxu0 0.0
  %2110 = vmatprep.subr.mxu0 0.0
  %2111 = vmatpush2.msra.mxu0 0.0
  %2112 = vmatprep.subr.mxu0 0.0
  %2113 = vmatpush2.msra.mxu0 0.0
  %2114 = vmatprep.subr.mxu0 0.0
  %2115 = vmatpush2.msra.mxu0 0.0
  %2116 = vmatprep.subr.mxu0 0.0
  %2117 = vmatpush2.msra.mxu0 0.0
  %2118 = vmatprep.subr.mxu0 0.0
  %2119 = vmatpush2.msra.mxu0 0.0
  %2120 = vmatprep.subr.mxu0 0.0
  %2121 = vmatpush2.msra.mxu0 0.0
  %2122 = vmatprep.subr.mxu0 0.0
  %2123 = vmatpush2.msra.mxu0 0.0
  %2124 = vmatprep.subr.mxu0 0.0
  %2125 = vmatpush2.msra.mxu0 0.0
  %2126 = vmatprep.subr.mxu0 0.0
  %2127 = vmatpush2.msra.mxu0 0.0
  %2128 = vmatprep.subr.mxu0 0.0
  %2129 = vmatpush2.msra.mxu0 0.0
  %2130 = vmatprep.subr.mxu0 0.0
  %2131 = vmatpush2.msra.mxu0 0.0
  %2132 = vmatprep.subr.mxu0 0.0
  %2133 = vmatpush2.msra.mxu0 0.0
  %2134 = vmatprep.subr.mxu0 0.0
  %2135 = vmatpush2.msra.mxu0 0.0
  %2136 = vmatprep.subr.mxu0 0.0
  %2137 = vmatpush2.msra.mxu0 0.0
  %2138 = vmatprep.subr.mxu0 0.0
  %2139 = vmatpush2.msra.mxu0 0.0
  %2140 = vmatprep.mubr.f32.mxu0 0.0
  %2141 = vmatmul.mubr.f32.gmra.mxu0 %v2065
  %v2142 = vpop.f32.mrf.mxu0
  %v2143 = vadd.f32 %v2062, %v2142
  %v2144 = vpop.f32.mrf.mxu0
  %2145 = vmatprep.mubr.f32.mxu0 0.0
  %2146 = vmatmul.mubr.f32.gmra.mxu0 %v2068
  %v2147 = vpop.f32.mrf.mxu0
  %v2148 = vadd.f32 %v2062, %v2147
  %v2149 = vpop.f32.mrf.mxu0
  %2150 = vmatprep.mubr.f32.mxu0 0.0
  %2151 = vmatmul.mubr.f32.gmra.mxu0 %v2071
  %v2152 = vpop.f32.mrf.mxu0
  %v2153 = vadd.f32 %v2062, %v2152
  %v2154 = vpop.f32.mrf.mxu0
  %2155 = vmatprep.mubr.f32.mxu0 0.0
  %2156 = vmatmul.mubr.f32.gmra.mxu0 %v2074
  %v2157 = vpop.f32.mrf.mxu0
  %v2158 = vadd.f32 %v2062, %v2157
  %v2159 = vpop.f32.mrf.mxu0
  %2160 = vdwg.mxu0
  %v2161 = vxor.u32 %v2143, 2147483648
  %v2162 = vxor.u32 %v2148, 2147483648
  %v2163 = vxor.u32 %v2153, 2147483648
  %v2164 = vxor.u32 %v2158, 2147483648
  %v2165 = vmul.f32 %v2161, 1.442695
  %v2166 = vpow.pop %v2165
  %v2167 = vmul.f32 %v2162, 1.442695
  %v2168 = vpow.pop %v2167
  %v2169 = vmul.f32 %v2163, 1.442695
  %v2170 = vpow.pop %v2169
  %v2171 = vmul.f32 %v2164, 1.442695
  %v2172 = vpow.pop %v2171
  %v2173 = vadd.f32 %v2166, 1.0
  %v2174 = vadd.f32 %v2168, 1.0
  %v2175 = vadd.f32 %v2170, 1.0
  %v2176 = vadd.f32 %v2172, 1.0
  %v2177 = vrcp.pop %v2173
  %v2178 = vmul.f32 1.0, %v2177
  %v2179 = vrcp.pop %v2174
  %v2180 = vmul.f32 1.0, %v2179
  %v2181 = vrcp.pop %v2175
  %v2182 = vmul.f32 1.0, %v2181
  %v2183 = vrcp.pop %v2176
  %v2184 = vmul.f32 1.0, %v2183
  %v2185 = vld [vmem:[%s17] sm:$0xff]
  %v2186 = vld [vmem:[%s17 + $0x8] sm:$0xff]
  %v2187 = vld [vmem:[%s18] sm:$0x1]
  %v2189 = vlaneseq
  %v2190 = vshrl.u32 %v2189, 7
  %v2191 = vsub.s32 0, %v2190
  %v2192 = vrot.slane %v2187, %v2191
  %v2195 = vsel %vm83, %v2178, 0
  %v2198 = vsel %vm83, %v2180, 0
  %v2201 = vsel %vm83, %v2182, 0
  %v2204 = vsel %vm83, %v2184, 0
  %2206 = vmatprep.subr.mxu0 0.0
  %2207 = vmatpush1.msra.mxu0 0.0
  %2208 = vmatprep.subr.mxu0 0.0
  %2209 = vmatpush1.msra.mxu0 0.0
  %2210 = vmatprep.subr.mxu0 0.0
  %2211 = vmatpush1.msra.mxu0 0.0
  %2212 = vmatprep.subr.mxu0 0.0
  %2213 = vmatpush1.msra.mxu0 0.0
  %2214 = vmatprep.subr.mxu0 0.0
  %2215 = vmatpush1.msra.mxu0 0.0
  %2216 = vmatprep.subr.mxu0 0.0
  %2217 = vmatpush1.msra.mxu0 0.0
  %2218 = vmatprep.subr.mxu0 0.0
  %2219 = vmatpush1.msra.mxu0 0.0
  %2220 = vmatprep.subr.mxu0 0.0
  %2221 = vmatpush1.msra.mxu0 0.0
  %2222 = vmatprep.subr.mxu0 0.0
  %2223 = vmatpush1.msra.mxu0 0.0
  %2224 = vmatprep.subr.mxu0 0.0
  %2225 = vmatpush1.msra.mxu0 0.0
  %2226 = vmatprep.subr.mxu0 0.0
  %2227 = vmatpush1.msra.mxu0 0.0
  %2228 = vmatprep.subr.mxu0 0.0
  %2229 = vmatpush1.msra.mxu0 0.0
  %2230 = vmatprep.subr.mxu0 0.0
  %2231 = vmatpush1.msra.mxu0 0.0
  %2232 = vmatprep.subr.mxu0 0.0
  %2233 = vmatpush1.msra.mxu0 0.0
  %2234 = vmatprep.subr.mxu0 0.0
  %2235 = vmatpush1.msra.mxu0 %v2186
  %2236 = vmatprep.subr.mxu0 0.0
  %2237 = vmatpush1.msra.mxu0 %v2185
  %2238 = vmatprep.subr.mxu0 0.0
  %2239 = vmatpush2.msra.mxu0 0.0
  %2240 = vmatprep.subr.mxu0 0.0
  %2241 = vmatpush2.msra.mxu0 0.0
  %2242 = vmatprep.subr.mxu0 0.0
  %2243 = vmatpush2.msra.mxu0 0.0
  %2244 = vmatprep.subr.mxu0 0.0
  %2245 = vmatpush2.msra.mxu0 0.0
  %2246 = vmatprep.subr.mxu0 0.0
  %2247 = vmatpush2.msra.mxu0 0.0
  %2248 = vmatprep.subr.mxu0 0.0
  %2249 = vmatpush2.msra.mxu0 0.0
  %2250 = vmatprep.subr.mxu0 0.0
  %2251 = vmatpush2.msra.mxu0 0.0
  %2252 = vmatprep.subr.mxu0 0.0
  %2253 = vmatpush2.msra.mxu0 0.0
  %2254 = vmatprep.subr.mxu0 0.0
  %2255 = vmatpush2.msra.mxu0 0.0
  %2256 = vmatprep.subr.mxu0 0.0
  %2257 = vmatpush2.msra.mxu0 0.0
  %2258 = vmatprep.subr.mxu0 0.0
  %2259 = vmatpush2.msra.mxu0 0.0
  %2260 = vmatprep.subr.mxu0 0.0
  %2261 = vmatpush2.msra.mxu0 0.0
  %2262 = vmatprep.subr.mxu0 0.0
  %2263 = vmatpush2.msra.mxu0 0.0
  %2264 = vmatprep.subr.mxu0 0.0
  %2265 = vmatpush2.msra.mxu0 0.0
  %2266 = vmatprep.subr.mxu0 0.0
  %2267 = vmatpush2.msra.mxu0 0.0
  %2268 = vmatprep.subr.mxu0 0.0
  %2269 = vmatpush2.msra.mxu0 0.0
  %2270 = vmatprep.mubr.f32.mxu0 0.0
  %2271 = vmatmul.mubr.f32.gmra.mxu0 %v2195
  %v2272 = vpop.f32.mrf.mxu0
  %v2273 = vadd.f32 %v2192, %v2272
  %v2274 = vpop.f32.mrf.mxu0
  %2275 = vmatprep.mubr.f32.mxu0 0.0
  %2276 = vmatmul.mubr.f32.gmra.mxu0 %v2198
  %v2277 = vpop.f32.mrf.mxu0
  %v2278 = vadd.f32 %v2192, %v2277
  %v2279 = vpop.f32.mrf.mxu0
  %2280 = vmatprep.mubr.f32.mxu0 0.0
  %2281 = vmatmul.mubr.f32.gmra.mxu0 %v2201
  %v2282 = vpop.f32.mrf.mxu0
  %v2283 = vadd.f32 %v2192, %v2282
  %v2284 = vpop.f32.mrf.mxu0
  %2285 = vmatprep.mubr.f32.mxu0 0.0
  %2286 = vmatmul.mubr.f32.gmra.mxu0 %v2204
  %v2287 = vpop.f32.mrf.mxu0
  %v2288 = vadd.f32 %v2192, %v2287
  %v2289 = vpop.f32.mrf.mxu0
  %2290 = vdwg.mxu0
  %2291 = vst.msk [vmem:[%s23] sm:$0xff] %vm793, %v2273
  %2292 = vst.msk [vmem:[%s23 + $0x8] sm:$0xff] %vm793, %v2278
  %s2293 = scalar_lea.vmem %s23, 16
  %2294 = vst.msk [vmem:[%s2293] sm:$0xff] %vm793, %v2283
  %2295 = vst.msk [vmem:[%s2293 + $0x8] sm:$0xff] %vm793, %v2288
  %v2296 = vld [vmem:[%s19] sm:$0xff]
  %v2297 = vld [vmem:[%s20] sm:$0x1]
  %v2299 = vlaneseq
  %v2300 = vshrl.u32 %v2299, 7
  %v2301 = vsub.s32 0, %v2300
  %v2302 = vrot.slane %v2297, %v2301
  %v2305 = vsel %vm793, %v76, 0
  %v2308 = vsel %vm793, %v77, 0
  %v2311 = vsel %vm793, %v79, 0
  %v2314 = vsel %vm793, %v80, 0
  %2316 = vmatprep.subr.mxu0 0.0
  %2317 = vmatpush1.msra.mxu0 0.0
  %2318 = vmatprep.subr.mxu0 0.0
  %2319 = vmatpush1.msra.mxu0 0.0
  %2320 = vmatprep.subr.mxu0 0.0
  %2321 = vmatpush1.msra.mxu0 0.0
  %2322 = vmatprep.subr.mxu0 0.0
  %2323 = vmatpush1.msra.mxu0 0.0
  %2324 = vmatprep.subr.mxu0 0.0
  %2325 = vmatpush1.msra.mxu0 0.0
  %2326 = vmatprep.subr.mxu0 0.0
  %2327 = vmatpush1.msra.mxu0 0.0
  %2328 = vmatprep.subr.mxu0 0.0
  %2329 = vmatpush1.msra.mxu0 0.0
  %2330 = vmatprep.subr.mxu0 0.0
  %2331 = vmatpush1.msra.mxu0 0.0
  %2332 = vmatprep.subr.mxu0 0.0
  %2333 = vmatpush1.msra.mxu0 0.0
  %2334 = vmatprep.subr.mxu0 0.0
  %2335 = vmatpush1.msra.mxu0 0.0
  %2336 = vmatprep.subr.mxu0 0.0
  %2337 = vmatpush1.msra.mxu0 0.0
  %2338 = vmatprep.subr.mxu0 0.0
  %2339 = vmatpush1.msra.mxu0 0.0
  %2340 = vmatprep.subr.mxu0 0.0
  %2341 = vmatpush1.msra.mxu0 0.0
  %2342 = vmatprep.subr.mxu0 0.0
  %2343 = vmatpush1.msra.mxu0 0.0
  %2344 = vmatprep.subr.mxu0 0.0
  %2345 = vmatpush1.msra.mxu0 0.0
  %2346 = vmatprep.subr.mxu0 0.0
  %2347 = vmatpush1.msra.mxu0 %v2296
  %2348 = vmatprep.subr.mxu0 0.0
  %2349 = vmatpush2.msra.mxu0 0.0
  %2350 = vmatprep.subr.mxu0 0.0
  %2351 = vmatpush2.msra.mxu0 0.0
  %2352 = vmatprep.subr.mxu0 0.0
  %2353 = vmatpush2.msra.mxu0 0.0
  %2354 = vmatprep.subr.mxu0 0.0
  %2355 = vmatpush2.msra.mxu0 0.0
  %2356 = vmatprep.subr.mxu0 0.0
  %2357 = vmatpush2.msra.mxu0 0.0
  %2358 = vmatprep.subr.mxu0 0.0
  %2359 = vmatpush2.msra.mxu0 0.0
  %2360 = vmatprep.subr.mxu0 0.0
  %2361 = vmatpush2.msra.mxu0 0.0
  %2362 = vmatprep.subr.mxu0 0.0
  %2363 = vmatpush2.msra.mxu0 0.0
  %2364 = vmatprep.subr.mxu0 0.0
  %2365 = vmatpush2.msra.mxu0 0.0
  %2366 = vmatprep.subr.mxu0 0.0
  %2367 = vmatpush2.msra.mxu0 0.0
  %2368 = vmatprep.subr.mxu0 0.0
  %2369 = vmatpush2.msra.mxu0 0.0
  %2370 = vmatprep.subr.mxu0 0.0
  %2371 = vmatpush2.msra.mxu0 0.0
  %2372 = vmatprep.subr.mxu0 0.0
  %2373 = vmatpush2.msra.mxu0 0.0
  %2374 = vmatprep.subr.mxu0 0.0
  %2375 = vmatpush2.msra.mxu0 0.0
  %2376 = vmatprep.subr.mxu0 0.0
  %2377 = vmatpush2.msra.mxu0 0.0
  %2378 = vmatprep.subr.mxu0 0.0
  %2379 = vmatpush2.msra.mxu0 0.0
  %2380 = vmatprep.mubr.f32.mxu0 0.0
  %2381 = vmatmul.mubr.f32.gmra.mxu0 %v2305
  %v2382 = vpop.f32.mrf.mxu0
  %v2383 = vadd.f32 %v2302, %v2382
  %v2384 = vpop.f32.mrf.mxu0
  %2385 = vmatprep.mubr.f32.mxu0 0.0
  %2386 = vmatmul.mubr.f32.gmra.mxu0 %v2308
  %v2387 = vpop.f32.mrf.mxu0
  %v2388 = vadd.f32 %v2302, %v2387
  %v2389 = vpop.f32.mrf.mxu0
  %2390 = vmatprep.mubr.f32.mxu0 0.0
  %2391 = vmatmul.mubr.f32.gmra.mxu0 %v2311
  %v2392 = vpop.f32.mrf.mxu0
  %v2393 = vadd.f32 %v2302, %v2392
  %v2394 = vpop.f32.mrf.mxu0
  %2395 = vmatprep.mubr.f32.mxu0 0.0
  %2396 = vmatmul.mubr.f32.gmra.mxu0 %v2314
  %v2397 = vpop.f32.mrf.mxu0
  %v2398 = vadd.f32 %v2302, %v2397
  %v2399 = vpop.f32.mrf.mxu0
  %2400 = vdwg.mxu0
  %v2401 = vld [vmem:[%s21] sm:$0xff]
  %v2402 = vld [vmem:[%s21 + $0x8] sm:$0xff]
  %v2403 = vld [vmem:[%s22] sm:$0x1]
  %v2405 = vlaneseq
  %v2406 = vshrl.u32 %v2405, 7
  %v2407 = vsub.s32 0, %v2406
  %v2408 = vrot.slane %v2403, %v2407
  %2410 = vmatprep.subr.mxu0 0.0
  %2411 = vmatpush1.msra.mxu0 0.0
  %2412 = vmatprep.subr.mxu0 0.0
  %2413 = vmatpush1.msra.mxu0 0.0
  %2414 = vmatprep.subr.mxu0 0.0
  %2415 = vmatpush1.msra.mxu0 0.0
  %2416 = vmatprep.subr.mxu0 0.0
  %2417 = vmatpush1.msra.mxu0 0.0
  %2418 = vmatprep.subr.mxu0 0.0
  %2419 = vmatpush1.msra.mxu0 0.0
  %2420 = vmatprep.subr.mxu0 0.0
  %2421 = vmatpush1.msra.mxu0 0.0
  %2422 = vmatprep.subr.mxu0 0.0
  %2423 = vmatpush1.msra.mxu0 0.0
  %2424 = vmatprep.subr.mxu0 0.0
  %2425 = vmatpush1.msra.mxu0 0.0
  %2426 = vmatprep.subr.mxu0 0.0
  %2427 = vmatpush1.msra.mxu0 0.0
  %2428 = vmatprep.subr.mxu0 0.0
  %2429 = vmatpush1.msra.mxu0 0.0
  %2430 = vmatprep.subr.mxu0 0.0
  %2431 = vmatpush1.msra.mxu0 0.0
  %2432 = vmatprep.subr.mxu0 0.0
  %2433 = vmatpush1.msra.mxu0 0.0
  %2434 = vmatprep.subr.mxu0 0.0
  %2435 = vmatpush1.msra.mxu0 0.0
  %2436 = vmatprep.subr.mxu0 0.0
  %2437 = vmatpush1.msra.mxu0 0.0
  %2438 = vmatprep.subr.mxu0 0.0
  %2439 = vmatpush1.msra.mxu0 %v2402
  %2440 = vmatprep.subr.mxu0 0.0
  %2441 = vmatpush1.msra.mxu0 %v2401
  %2442 = vmatprep.subr.mxu0 0.0
  %2443 = vmatpush2.msra.mxu0 0.0
  %2444 = vmatprep.subr.mxu0 0.0
  %2445 = vmatpush2.msra.mxu0 0.0
  %2446 = vmatprep.subr.mxu0 0.0
  %2447 = vmatpush2.msra.mxu0 0.0
  %2448 = vmatprep.subr.mxu0 0.0
  %2449 = vmatpush2.msra.mxu0 0.0
  %2450 = vmatprep.subr.mxu0 0.0
  %2451 = vmatpush2.msra.mxu0 0.0
  %2452 = vmatprep.subr.mxu0 0.0
  %2453 = vmatpush2.msra.mxu0 0.0
  %2454 = vmatprep.subr.mxu0 0.0
  %2455 = vmatpush2.msra.mxu0 0.0
  %2456 = vmatprep.subr.mxu0 0.0
  %2457 = vmatpush2.msra.mxu0 0.0
  %2458 = vmatprep.subr.mxu0 0.0
  %2459 = vmatpush2.msra.mxu0 0.0
  %2460 = vmatprep.subr.mxu0 0.0
  %2461 = vmatpush2.msra.mxu0 0.0
  %2462 = vmatprep.subr.mxu0 0.0
  %2463 = vmatpush2.msra.mxu0 0.0
  %2464 = vmatprep.subr.mxu0 0.0
  %2465 = vmatpush2.msra.mxu0 0.0
  %2466 = vmatprep.subr.mxu0 0.0
  %2467 = vmatpush2.msra.mxu0 0.0
  %2468 = vmatprep.subr.mxu0 0.0
  %2469 = vmatpush2.msra.mxu0 0.0
  %2470 = vmatprep.subr.mxu0 0.0
  %2471 = vmatpush2.msra.mxu0 0.0
  %2472 = vmatprep.subr.mxu0 0.0
  %2473 = vmatpush2.msra.mxu0 0.0
  %2474 = vmatprep.mubr.f32.mxu0 0.0
  %2475 = vmatmul.mubr.f32.gmra.mxu0 %v2065
  %v2476 = vpop.f32.mrf.mxu0
  %v2477 = vadd.f32 %v2408, %v2476
  %v2478 = vpop.f32.mrf.mxu0
  %2479 = vmatprep.mubr.f32.mxu0 0.0
  %2480 = vmatmul.mubr.f32.gmra.mxu0 %v2068
  %v2481 = vpop.f32.mrf.mxu0
  %v2482 = vadd.f32 %v2408, %v2481
  %v2483 = vpop.f32.mrf.mxu0
  %2484 = vmatprep.mubr.f32.mxu0 0.0
  %2485 = vmatmul.mubr.f32.gmra.mxu0 %v2071
  %v2486 = vpop.f32.mrf.mxu0
  %v2487 = vadd.f32 %v2408, %v2486
  %v2488 = vpop.f32.mrf.mxu0
  %2489 = vmatprep.mubr.f32.mxu0 0.0
  %2490 = vmatmul.mubr.f32.gmra.mxu0 %v2074
  %v2491 = vpop.f32.mrf.mxu0
  %v2492 = vadd.f32 %v2408, %v2491
  %v2493 = vpop.f32.mrf.mxu0
  %2494 = vdwg.mxu0
  %v2495 = vsub.f32 %v2477, %v2383
  %v2496 = vsub.f32 %v2482, %v2388
  %v2497 = vsub.f32 %v2487, %v2393
  %v2498 = vsub.f32 %v2492, %v2398
  %v2499 = vxor.u32 %v2495, 2147483648
  %v2500 = vxor.u32 %v2496, 2147483648
  %v2501 = vxor.u32 %v2497, 2147483648
  %v2502 = vxor.u32 %v2498, 2147483648
  %v2503 = vmul.f32 %v2499, 1.442695
  %v2504 = vpow.pop %v2503
  %v2505 = vmul.f32 %v2500, 1.442695
  %v2506 = vpow.pop %v2505
  %v2507 = vmul.f32 %v2501, 1.442695
  %v2508 = vpow.pop %v2507
  %v2509 = vmul.f32 %v2502, 1.442695
  %v2510 = vpow.pop %v2509
  %v2511 = vadd.f32 %v2504, 1.0
  %v2512 = vadd.f32 %v2506, 1.0
  %v2513 = vadd.f32 %v2508, 1.0
  %v2514 = vadd.f32 %v2510, 1.0
  %v2515 = vrcp.pop %v2511
  %v2516 = vmul.f32 1.0, %v2515
  %v2517 = vrcp.pop %v2512
  %v2518 = vmul.f32 1.0, %v2517
  %v2519 = vrcp.pop %v2513
  %v2520 = vmul.f32 1.0, %v2519
  %v2521 = vrcp.pop %v2514
  %v2522 = vmul.f32 1.0, %v2521
  %2523 = vst.msk [vmem:[%s24] sm:$0xff] %vm793, %v2516
  %2524 = vst.msk [vmem:[%s24 + $0x8] sm:$0xff] %vm793, %v2518
  %s2525 = scalar_lea.vmem %s24, 16
  %2526 = vst.msk [vmem:[%s2525] sm:$0xff] %vm793, %v2520
  %2527 = vst.msk [vmem:[%s2525 + $0x8] sm:$0xff] %vm793, %v2522
  // Predicated region
  $region94: #{model_forward.7} parent=0 // pred_check
    _
  $region95: #{model_forward.7} parent=0 // pred_check_branch
    %2529 = sbr.rel (0) target = $region97
  $region96: #{model_forward.7} parent=0 // pred_region
    _
  $region97: #{model_forward.7} parent=0 // pred_fallthru
    _
  // Predicated region
  $region98: #{model_forward.7} parent=0 // pred_check
    _
  $region99: #{model_forward.7} parent=0 // pred_check_branch
    %2531 = sbr.rel (0) target = $region101
  $region100: #{model_forward.7} parent=0 // pred_region
    _
  $region101: #{model_forward.7} parent=0 // pred_fallthru
    _
  // Predicated region
  $region102: #{model_forward.7} parent=0 // pred_check
    _
  $region103: #{model_forward.7} parent=0 // pred_check_branch
    %2533 = sbr.rel (0) target = $region105
  $region104: #{model_forward.7} parent=0 // pred_region
    _
  $region105: #{model_forward.7} parent=0 // pred_fallthru
    _
  // Predicated region
  $region106: #{model_forward.7} parent=0 // pred_check
    _
  $region107: #{model_forward.7} parent=0 // pred_check_branch
    %2535 = sbr.rel (0) target = $region109
  $region108: #{model_forward.7} parent=0 // pred_region
    _
  $region109: #{model_forward.7} parent=0 // pred_fallthru
    _

</llo_original>
